<compile_context>
chip_gen: v6e
topology: v6e:2x2x1
jax: 0.10.0
libtpu: 0.0.40
codegen_flags: <defaults>
</compile_context>

<pallas_src>
import functools

import jax
import jax.numpy as jnp
from jax import lax
from jax.experimental import pallas as pl
from jax.experimental.pallas import tpu as pltpu


# ----------------------------------------------------------------------------
# Fused Pallas kernel
# ----------------------------------------------------------------------------
def _fused_kernel(x_ref, w1_ref, b1_ref, w2_ref, b2_ref,
                  wf1_ref, bf1_ref, wf2_ref, bf2_ref, wf3_ref, bf3_ref,
                  o_ref,
                  pad_ref, hsc3_ref, feat_ref,
                  *, B, H, W, HW, C1, C2, P):
    """conv1+ReLU -> conv2+ReLU -> flatten -> fc1+ReLU -> fc2+ReLU -> fc3."""
    N = B * HW
    f32 = jnp.float32
    bf16 = jnp.bfloat16

    # ---- conv1 (3x3, pad=1) + ReLU: im2col built on host -> one MXU matmul --
    h1 = jnp.dot(x_ref[...], w1_ref[...], preferred_element_type=f32)
    h1 = jnp.maximum(h1 + b1_ref[...], 0.0)               # (N, C1) f32

    # ---- conv2 (3x3, pad=1) + ReLU: 9 shifted reads + mask + one matmul -----
    # Rows live in the flattened (b, h, w) space.  A tap shift s = dy*W + dx
    # can cross a batch boundary, but only when that tap is out-of-image, and
    # such taps are always zeroed by the validity mask below.  P >= W + 1
    # (max |shift|) guarantees shifted reads never leave the padded scratch.
    pad_ref[0:P, :] = jnp.zeros((P, C1), f32)              # zero margins only
    pad_ref[P + N:P + N + P, :] = jnp.zeros((P, C1), f32)
    pad_ref[P:P + N, :] = h1

    # In-kernel validity masks (no mask input / DMA / lane-padded VMEM).
    row = lax.broadcasted_iota(jnp.int32, (N, 1), 0)
    if (HW & (HW - 1)) == 0 and (W & (W - 1)) == 0:        # powers of two
        pos = row & (HW - 1)
        ww = pos & (W - 1)
        hh = pos >> (W.bit_length() - 1)
    else:                                                  # generic fallback
        pos = row % HW
        ww = pos % W
        hh = pos // W

    taps = []
    for dy in (-1, 0, 1):
        for dx in (-1, 0, 1):
            s = dy * W + dx
            sh = pad_ref[P + s:P + s + N, :]               # (N, C1) static slice
            if not (dy == 0 and dx == 0):
                valid = ((hh + dy >= 0) & (hh + dy < H) &
                         (ww + dx >= 0) & (ww + dx < W))
                sh = sh * valid.astype(f32)                # (N,1) mask broadcast
            taps.append(sh)
    taps2 = jnp.concatenate(taps, axis=1).astype(bf16)     # (N, 9*C1)

    h2 = jnp.dot(taps2, w2_ref[...], preferred_element_type=f32)
    h2 = jnp.maximum(h2 + b2_ref[...], 0.0).astype(bf16)   # (N, C2)

    # ---- flatten to a lane-dense (B, HW*C2) slab ----------------------------
    # feat[b, p*C2 + c] = conv2_out[b, p, c]; fc1's weight is host-reordered to
    # this position-major layout (equivalent to torch's view(B, -1) flatten).
    for b in range(B):
        hsc3_ref[b] = h2[b * HW:(b + 1) * HW, :]           # one (HW, C2) store
    for p in range(HW):
        feat_ref[:, p * C2:(p + 1) * C2] = hsc3_ref[:, p, :]   # (B, C2) copy

    # ---- fc1 + ReLU -> fc2 + ReLU -> fc3 (bf16 inputs, f32 accumulation) ----
    z = jnp.dot(feat_ref[...], wf1_ref[...], preferred_element_type=f32)
    z = jnp.maximum(z + bf1_ref[...], 0.0).astype(bf16)
    z = jnp.dot(z, wf2_ref[...], preferred_element_type=f32)
    z = jnp.maximum(z + bf2_ref[...], 0.0).astype(bf16)
    z = jnp.dot(z, wf3_ref[...], preferred_element_type=f32) + bf3_ref[...]
    o_ref[...] = z


# ----------------------------------------------------------------------------
# Host-side glue
# ----------------------------------------------------------------------------
def chance_encoder_backbone_pallas(x, params):
    """Forward pass equivalent to ChanceEncoderBackbone.forward (NCHW input)."""
    B, c_in, H, W = x.shape
    HW = H * W
    N = B * HW
    C1, C2 = 32, 64
    P = W + 1                     # >= max |row shift| of a 3x3 tap (see kernel)
    assert P >= W + 1
    D1 = params["fc1_w"].shape[0]
    D2 = params["fc2_w"].shape[0]
    D3 = params["fc3_w"].shape[0]
    f32, bf16 = jnp.float32, jnp.bfloat16

    # Host-side im2col for conv1 (tiny): tap-major / channel-minor columns.
    xp = jnp.pad(x.astype(f32), ((0, 0), (0, 0), (1, 1), (1, 1)))
    cols = []
    for dy in range(3):
        for dx in range(3):
            win = xp[:, :, dy:dy + H, dx:dx + W]            # (B, c_in, H, W)
            cols.append(jnp.transpose(win, (0, 2, 3, 1)).reshape(N, c_in))
    im2col1 = jnp.concatenate(cols, axis=1).astype(bf16)    # (N, 9*c_in)

    # torch conv weight (O, I, kh, kw) -> tap-concatenated (9*I, O), bf16.
    w1c = jnp.transpose(params["conv1_w"], (2, 3, 1, 0)).reshape(9 * c_in, C1).astype(bf16)
    w2c = jnp.transpose(params["conv2_w"], (2, 3, 1, 0)).reshape(9 * C1, C2).astype(bf16)
    b1 = params["conv1_b"].reshape(1, C1).astype(f32)
    b2 = params["conv2_b"].reshape(1, C2).astype(f32)

    # fc1 weight reordered so the kernel's position-major (p, c) flatten matches
    # torch's x.view(B, -1) flatten over (C, H, W). Big fc weights in bf16.
    # TODO(synk): int8 (v5e/v6e) / fp8 (v7x) quantization of wf1 would halve the
    # dominant HBM transfer; kept bf16 here for accuracy simplicity.
    wf1 = (params["fc1_w"].reshape(D1, C2, H, W)
           .transpose(2, 3, 1, 0).reshape(HW * C2, D1)).astype(bf16)
    wf2 = params["fc2_w"].T.astype(bf16)
    wf3 = params["fc3_w"].T.astype(bf16)
    bf1 = params["fc1_b"].reshape(1, D1).astype(f32)
    bf2 = params["fc2_b"].reshape(1, D2).astype(f32)
    bf3 = params["fc3_b"].reshape(1, D3).astype(f32)

    kernel = functools.partial(_fused_kernel, B=B, H=H, W=W, HW=HW,
                               C1=C1, C2=C2, P=P)

    return pl.pallas_call(
        kernel,
        out_shape=jax.ShapeDtypeStruct((B, D3), f32),
        grid=(1,),
        in_specs=[
            pl.BlockSpec((N, 9 * c_in), lambda i: (0, 0)),
            pl.BlockSpec((9 * c_in, C1), lambda i: (0, 0)),
            pl.BlockSpec((1, C1), lambda i: (0, 0)),
            pl.BlockSpec((9 * C1, C2), lambda i: (0, 0)),
            pl.BlockSpec((1, C2), lambda i: (0, 0)),
            pl.BlockSpec((HW * C2, D1), lambda i: (0, 0)),
            pl.BlockSpec((1, D1), lambda i: (0, 0)),
            pl.BlockSpec((D1, D2), lambda i: (0, 0)),
            pl.BlockSpec((1, D2), lambda i: (0, 0)),
            pl.BlockSpec((D2, D3), lambda i: (0, 0)),
            pl.BlockSpec((1, D3), lambda i: (0, 0)),
        ],
        out_specs=pl.BlockSpec((B, D3), lambda i: (0, 0)),
        scratch_shapes=[
            pltpu.VMEM((N + 2 * P, C1), f32),   # zero-margin shift buffer, conv2
            pltpu.VMEM((B, HW, C2), bf16),      # conv2 output slab (flatten src)
            pltpu.VMEM((B, HW * C2), bf16),     # lane-dense fc1 operand
        ],
        compiler_params=pltpu.CompilerParams(dimension_semantics=("arbitrary",)),
    )(im2col1, w1c, b1, w2c, b2, wf1, bf1, wf2, bf2, wf3, bf3)


# ----------------------------------------------------------------------------
# Reference (pure JAX, mirrors the PyTorch forward exactly) + param init
# ----------------------------------------------------------------------------
def reference_forward(x, p):
    dn = ("NCHW", "OIHW", "NCHW")
    y = lax.conv_general_dilated(x, p["conv1_w"], (1, 1), ((1, 1), (1, 1)),
                                 dimension_numbers=dn,
                                 precision=lax.Precision.HIGHEST)
    y = jnp.maximum(y + p["conv1_b"][None, :, None, None], 0.0)
    y = lax.conv_general_dilated(y, p["conv2_w"], (1, 1), ((1, 1), (1, 1)),
                                 dimension_numbers=dn,
                                 precision=lax.Precision.HIGHEST)
    y = jnp.maximum(y + p["conv2_b"][None, :, None, None], 0.0)
    y = y.reshape(y.shape[0], -1)  # torch: view(B, -1) over (C, H, W)
    y = jnp.maximum(
        jnp.dot(y, p["fc1_w"].T, precision=lax.Precision.HIGHEST) + p["fc1_b"], 0.0)
    y = jnp.maximum(
        jnp.dot(y, p["fc2_w"].T, precision=lax.Precision.HIGHEST) + p["fc2_b"], 0.0)
    y = jnp.dot(y, p["fc3_w"].T, precision=lax.Precision.HIGHEST) + p["fc3_b"]
    return y


def init_params(key, input_dimensions, chance_encoding_dim=4):
    c_obs, H, W = input_dimensions
    c_in = c_obs * 2
    keys = jax.random.split(key, 10)

    def w(k, shape, fan_in):
        return jax.random.normal(k, shape, jnp.float32) / jnp.sqrt(fan_in)

    return {
        "conv1_w": w(keys[0], (32, c_in, 3, 3), c_in * 9),
        "conv1_b": w(keys[1], (32,), c_in * 9),
        "conv2_w": w(keys[2], (64, 32, 3, 3), 32 * 9),
        "conv2_b": w(keys[3], (64,), 32 * 9),
        "fc1_w": w(keys[4], (128, 64 * H * W), 64 * H * W),
        "fc1_b": w(keys[5], (128,), 64 * H * W),
        "fc2_w": w(keys[6], (64, 128), 128),
        "fc2_b": w(keys[7], (64,), 128),
        "fc3_w": w(keys[8], (chance_encoding_dim, 64), 64),
        "fc3_b": w(keys[9], (chance_encoding_dim,), 64),
    }


if __name__ == "__main__":
    input_dimensions = (2, 8, 8)   # (C_obs, H, W); forward input has 2*C_obs channels
    chance_encoding_dim = 4
    B = 2

    key = jax.random.PRNGKey(0)
    kx, kp = jax.random.split(key)
    x = jax.random.normal(
        kx, (B, input_dimensions[0] * 2, input_dimensions[1], input_dimensions[2]),
        jnp.float32)
    params = init_params(kp, input_dimensions, chance_encoding_dim)

    out = chance_encoder_backbone_pallas(x, params)
    out = jax.block_until_ready(out)

    ref = reference_forward(x, params)
    assert out.shape == (B, chance_encoding_dim), out.shape
    # Tolerance covers bf16 matmul inputs throughout (f32 accumulation).
    if not jnp.allclose(out, ref, rtol=5e-2, atol=5e-2):
        raise AssertionError("Pallas output does not match reference forward")

    print("KERNEL_OK")
</pallas_src>

<mosaic_0001>
module attributes {stable_mosaic.version = 11 : i64} {
  func.func @_fused_kernel(%arg0: i32, %arg1: memref<128x36xbf16, #tpu.memory_space<vmem>>, %arg2: memref<36x32xbf16, #tpu.memory_space<vmem>>, %arg3: memref<1x32xf32, #tpu.memory_space<vmem>>, %arg4: memref<288x64xbf16, #tpu.memory_space<vmem>>, %arg5: memref<1x64xf32, #tpu.memory_space<vmem>>, %arg6: memref<4096x128xbf16, #tpu.memory_space<vmem>>, %arg7: memref<1x128xf32, #tpu.memory_space<vmem>>, %arg8: memref<128x64xbf16, #tpu.memory_space<vmem>>, %arg9: memref<1x64xf32, #tpu.memory_space<vmem>>, %arg10: memref<64x4xbf16, #tpu.memory_space<vmem>>, %arg11: memref<1x4xf32, #tpu.memory_space<vmem>>, %arg12: memref<2x4xf32, #tpu.memory_space<vmem>>, %arg13: memref<146x32xf32, #tpu.memory_space<vmem>>, %arg14: memref<2x64x64xbf16, #tpu.memory_space<vmem>>, %arg15: memref<2x4096xbf16, #tpu.memory_space<vmem>>) attributes {dimension_semantics = [#tpu.dimension_semantics<arbitrary>], iteration_bounds = array<i64: 1>, scalar_prefetch = 0 : i64, scratch_operands = 3 : i64, tpu.core_type = #tpu.core_type<tc>, window_params = [{pipeline_mode = #tpu.pipeline_mode<synchronous>, transform_indices = @transform_0, window_bounds = array<i64: 128, 36>}, {pipeline_mode = #tpu.pipeline_mode<synchronous>, transform_indices = @transform_1, window_bounds = array<i64: 36, 32>}, {pipeline_mode = #tpu.pipeline_mode<synchronous>, transform_indices = @transform_2, window_bounds = array<i64: 1, 32>}, {pipeline_mode = #tpu.pipeline_mode<synchronous>, transform_indices = @transform_3, window_bounds = array<i64: 288, 64>}, {pipeline_mode = #tpu.pipeline_mode<synchronous>, transform_indices = @transform_4, window_bounds = array<i64: 1, 64>}, {pipeline_mode = #tpu.pipeline_mode<synchronous>, transform_indices = @transform_5, window_bounds = array<i64: 4096, 128>}, {pipeline_mode = #tpu.pipeline_mode<synchronous>, transform_indices = @transform_6, window_bounds = array<i64: 1, 128>}, {pipeline_mode = #tpu.pipeline_mode<synchronous>, transform_indices = @transform_7, window_bounds = array<i64: 128, 64>}, {pipeline_mode = #tpu.pipeline_mode<synchronous>, transform_indices = @transform_8, window_bounds = array<i64: 1, 64>}, {pipeline_mode = #tpu.pipeline_mode<synchronous>, transform_indices = @transform_9, window_bounds = array<i64: 64, 4>}, {pipeline_mode = #tpu.pipeline_mode<synchronous>, transform_indices = @transform_10, window_bounds = array<i64: 1, 4>}, {pipeline_mode = #tpu.pipeline_mode<synchronous>, transform_indices = @transform_11, window_bounds = array<i64: 2, 4>}]} {
    %c0 = arith.constant 0 : index
    %c0_0 = arith.constant 0 : index
    %0 = vector.load %arg1[%c0, %c0_0] : memref<128x36xbf16, #tpu.memory_space<vmem>>, vector<128x36xbf16>
    %c0_1 = arith.constant 0 : index
    %c0_2 = arith.constant 0 : index
    %1 = vector.load %arg2[%c0_1, %c0_2] : memref<36x32xbf16, #tpu.memory_space<vmem>>, vector<36x32xbf16>
    %cst = arith.constant dense<0.000000e+00> : vector<128x32xf32>
    %2 = tpu.matmul %0, %1, %cst {dimension_numbers = #tpu.dot_dimension_numbers<[1], [0], [0], [1], [0, 0, 1, 1], [], []>} : vector<128x36xbf16>, vector<36x32xbf16>, vector<128x32xf32> -> vector<128x32xf32>
    %c0_3 = arith.constant 0 : index
    %c0_4 = arith.constant 0 : index
    %3 = vector.load %arg3[%c0_3, %c0_4] : memref<1x32xf32, #tpu.memory_space<vmem>>, vector<1x32xf32>
    %4 = vector.broadcast %3 : vector<1x32xf32> to vector<128x32xf32>
    %5 = arith.addf %2, %4 : vector<128x32xf32>
    %cst_5 = arith.constant 0.000000e+00 : f32
    %6 = vector.broadcast %cst_5 : f32 to vector<128x32xf32>
    %7 = arith.maximumf %5, %6 : vector<128x32xf32>
    %cst_6 = arith.constant 0.000000e+00 : f32
    %8 = vector.broadcast %cst_6 : f32 to vector<9x32xf32>
    %c0_7 = arith.constant 0 : index
    %c0_8 = arith.constant 0 : index
    %9 = vector.load %arg13[%c0_7, %c0_8] : memref<146x32xf32, #tpu.memory_space<vmem>>, vector<9x32xf32>
    tpu.vector_store %arg13[%c0_7, %c0_8], %8 {strides = array<i32>} : memref<146x32xf32, #tpu.memory_space<vmem>>, vector<9x32xf32>,
    %cst_9 = arith.constant 0.000000e+00 : f32
    %10 = vector.broadcast %cst_9 : f32 to vector<9x32xf32>
    %c137 = arith.constant 137 : index
    %c0_10 = arith.constant 0 : index
    %11 = vector.load %arg13[%c137, %c0_10] : memref<146x32xf32, #tpu.memory_space<vmem>>, vector<9x32xf32>
    tpu.vector_store %arg13[%c137, %c0_10], %10 {strides = array<i32>} : memref<146x32xf32, #tpu.memory_space<vmem>>, vector<9x32xf32>,
    %c9 = arith.constant 9 : index
    %c0_11 = arith.constant 0 : index
    %12 = vector.load %arg13[%c9, %c0_11] : memref<146x32xf32, #tpu.memory_space<vmem>>, vector<128x32xf32>
    tpu.vector_store %arg13[%c9, %c0_11], %7 {strides = array<i32>} : memref<146x32xf32, #tpu.memory_space<vmem>>, vector<128x32xf32>,
    %13 = tpu.iota {dimensions = array<i32: 0>} : vector<128x1xi32>
    %c63_i32 = arith.constant 63 : i32
    %14 = vector.broadcast %c63_i32 : i32 to vector<128x1xi32>
    %15 = arith.andi %13, %14 : vector<128x1xi32>
    %c7_i32 = arith.constant 7 : i32
    %16 = vector.broadcast %c7_i32 : i32 to vector<128x1xi32>
    %17 = arith.andi %15, %16 : vector<128x1xi32>
    %c3_i32 = arith.constant 3 : i32
    %18 = vector.broadcast %c3_i32 : i32 to vector<128x1xi32>
    %19 = arith.shrsi %15, %18 : vector<128x1xi32>
    %c0_12 = arith.constant 0 : index
    %c0_13 = arith.constant 0 : index
    %20 = vector.load %arg13[%c0_12, %c0_13] : memref<146x32xf32, #tpu.memory_space<vmem>>, vector<128x32xf32>
    %c-1_i32 = arith.constant -1 : i32
    %21 = vector.broadcast %c-1_i32 : i32 to vector<128x1xi32>
    %22 = arith.addi %19, %21 : vector<128x1xi32>
    %c0_i32 = arith.constant 0 : i32
    %23 = vector.broadcast %c0_i32 : i32 to vector<128x1xi32>
    %24 = arith.cmpi sge, %22, %23 : vector<128x1xi32>
    %c-1_i32_14 = arith.constant -1 : i32
    %25 = vector.broadcast %c-1_i32_14 : i32 to vector<128x1xi32>
    %26 = arith.addi %19, %25 : vector<128x1xi32>
    %c8_i32 = arith.constant 8 : i32
    %27 = vector.broadcast %c8_i32 : i32 to vector<128x1xi32>
    %28 = arith.cmpi slt, %26, %27 : vector<128x1xi32>
    %29 = arith.andi %24, %28 : vector<128x1xi1>
    %c-1_i32_15 = arith.constant -1 : i32
    %30 = vector.broadcast %c-1_i32_15 : i32 to vector<128x1xi32>
    %31 = arith.addi %17, %30 : vector<128x1xi32>
    %c0_i32_16 = arith.constant 0 : i32
    %32 = vector.broadcast %c0_i32_16 : i32 to vector<128x1xi32>
    %33 = arith.cmpi sge, %31, %32 : vector<128x1xi32>
    %34 = arith.andi %29, %33 : vector<128x1xi1>
    %c-1_i32_17 = arith.constant -1 : i32
    %35 = vector.broadcast %c-1_i32_17 : i32 to vector<128x1xi32>
    %36 = arith.addi %17, %35 : vector<128x1xi32>
    %c8_i32_18 = arith.constant 8 : i32
    %37 = vector.broadcast %c8_i32_18 : i32 to vector<128x1xi32>
    %38 = arith.cmpi slt, %36, %37 : vector<128x1xi32>
    %39 = arith.andi %34, %38 : vector<128x1xi1>
    %40 = arith.extui %39 : vector<128x1xi1> to vector<128x1xi32>
    %41 = arith.sitofp %40 : vector<128x1xi32> to vector<128x1xf32>
    %42 = vector.broadcast %41 : vector<128x1xf32> to vector<128x32xf32>
    %43 = arith.mulf %20, %42 : vector<128x32xf32>
    %c1 = arith.constant 1 : index
    %c0_19 = arith.constant 0 : index
    %44 = vector.load %arg13[%c1, %c0_19] : memref<146x32xf32, #tpu.memory_space<vmem>>, vector<128x32xf32>
    %c-1_i32_20 = arith.constant -1 : i32
    %45 = vector.broadcast %c-1_i32_20 : i32 to vector<128x1xi32>
    %46 = arith.addi %19, %45 : vector<128x1xi32>
    %c0_i32_21 = arith.constant 0 : i32
    %47 = vector.broadcast %c0_i32_21 : i32 to vector<128x1xi32>
    %48 = arith.cmpi sge, %46, %47 : vector<128x1xi32>
    %c-1_i32_22 = arith.constant -1 : i32
    %49 = vector.broadcast %c-1_i32_22 : i32 to vector<128x1xi32>
    %50 = arith.addi %19, %49 : vector<128x1xi32>
    %c8_i32_23 = arith.constant 8 : i32
    %51 = vector.broadcast %c8_i32_23 : i32 to vector<128x1xi32>
    %52 = arith.cmpi slt, %50, %51 : vector<128x1xi32>
    %53 = arith.andi %48, %52 : vector<128x1xi1>
    %c0_i32_24 = arith.constant 0 : i32
    %54 = vector.broadcast %c0_i32_24 : i32 to vector<128x1xi32>
    %55 = arith.addi %17, %54 : vector<128x1xi32>
    %c0_i32_25 = arith.constant 0 : i32
    %56 = vector.broadcast %c0_i32_25 : i32 to vector<128x1xi32>
    %57 = arith.cmpi sge, %55, %56 : vector<128x1xi32>
    %58 = arith.andi %53, %57 : vector<128x1xi1>
    %c0_i32_26 = arith.constant 0 : i32
    %59 = vector.broadcast %c0_i32_26 : i32 to vector<128x1xi32>
    %60 = arith.addi %17, %59 : vector<128x1xi32>
    %c8_i32_27 = arith.constant 8 : i32
    %61 = vector.broadcast %c8_i32_27 : i32 to vector<128x1xi32>
    %62 = arith.cmpi slt, %60, %61 : vector<128x1xi32>
    %63 = arith.andi %58, %62 : vector<128x1xi1>
    %64 = arith.extui %63 : vector<128x1xi1> to vector<128x1xi32>
    %65 = arith.sitofp %64 : vector<128x1xi32> to vector<128x1xf32>
    %66 = vector.broadcast %65 : vector<128x1xf32> to vector<128x32xf32>
    %67 = arith.mulf %44, %66 : vector<128x32xf32>
    %c2 = arith.constant 2 : index
    %c0_28 = arith.constant 0 : index
    %68 = vector.load %arg13[%c2, %c0_28] : memref<146x32xf32, #tpu.memory_space<vmem>>, vector<128x32xf32>
    %c-1_i32_29 = arith.constant -1 : i32
    %69 = vector.broadcast %c-1_i32_29 : i32 to vector<128x1xi32>
    %70 = arith.addi %19, %69 : vector<128x1xi32>
    %c0_i32_30 = arith.constant 0 : i32
    %71 = vector.broadcast %c0_i32_30 : i32 to vector<128x1xi32>
    %72 = arith.cmpi sge, %70, %71 : vector<128x1xi32>
    %c-1_i32_31 = arith.constant -1 : i32
    %73 = vector.broadcast %c-1_i32_31 : i32 to vector<128x1xi32>
    %74 = arith.addi %19, %73 : vector<128x1xi32>
    %c8_i32_32 = arith.constant 8 : i32
    %75 = vector.broadcast %c8_i32_32 : i32 to vector<128x1xi32>
    %76 = arith.cmpi slt, %74, %75 : vector<128x1xi32>
    %77 = arith.andi %72, %76 : vector<128x1xi1>
    %c1_i32 = arith.constant 1 : i32
    %78 = vector.broadcast %c1_i32 : i32 to vector<128x1xi32>
    %79 = arith.addi %17, %78 : vector<128x1xi32>
    %c0_i32_33 = arith.constant 0 : i32
    %80 = vector.broadcast %c0_i32_33 : i32 to vector<128x1xi32>
    %81 = arith.cmpi sge, %79, %80 : vector<128x1xi32>
    %82 = arith.andi %77, %81 : vector<128x1xi1>
    %c1_i32_34 = arith.constant 1 : i32
    %83 = vector.broadcast %c1_i32_34 : i32 to vector<128x1xi32>
    %84 = arith.addi %17, %83 : vector<128x1xi32>
    %c8_i32_35 = arith.constant 8 : i32
    %85 = vector.broadcast %c8_i32_35 : i32 to vector<128x1xi32>
    %86 = arith.cmpi slt, %84, %85 : vector<128x1xi32>
    %87 = arith.andi %82, %86 : vector<128x1xi1>
    %88 = arith.extui %87 : vector<128x1xi1> to vector<128x1xi32>
    %89 = arith.sitofp %88 : vector<128x1xi32> to vector<128x1xf32>
    %90 = vector.broadcast %89 : vector<128x1xf32> to vector<128x32xf32>
    %91 = arith.mulf %68, %90 : vector<128x32xf32>
    %c8 = arith.constant 8 : index
    %c0_36 = arith.constant 0 : index
    %92 = vector.load %arg13[%c8, %c0_36] : memref<146x32xf32, #tpu.memory_space<vmem>>, vector<128x32xf32>
    %c0_i32_37 = arith.constant 0 : i32
    %93 = vector.broadcast %c0_i32_37 : i32 to vector<128x1xi32>
    %94 = arith.addi %19, %93 : vector<128x1xi32>
    %c0_i32_38 = arith.constant 0 : i32
    %95 = vector.broadcast %c0_i32_38 : i32 to vector<128x1xi32>
    %96 = arith.cmpi sge, %94, %95 : vector<128x1xi32>
    %c0_i32_39 = arith.constant 0 : i32
    %97 = vector.broadcast %c0_i32_39 : i32 to vector<128x1xi32>
    %98 = arith.addi %19, %97 : vector<128x1xi32>
    %c8_i32_40 = arith.constant 8 : i32
    %99 = vector.broadcast %c8_i32_40 : i32 to vector<128x1xi32>
    %100 = arith.cmpi slt, %98, %99 : vector<128x1xi32>
    %101 = arith.andi %96, %100 : vector<128x1xi1>
    %c-1_i32_41 = arith.constant -1 : i32
    %102 = vector.broadcast %c-1_i32_41 : i32 to vector<128x1xi32>
    %103 = arith.addi %17, %102 : vector<128x1xi32>
    %c0_i32_42 = arith.constant 0 : i32
    %104 = vector.broadcast %c0_i32_42 : i32 to vector<128x1xi32>
    %105 = arith.cmpi sge, %103, %104 : vector<128x1xi32>
    %106 = arith.andi %101, %105 : vector<128x1xi1>
    %c-1_i32_43 = arith.constant -1 : i32
    %107 = vector.broadcast %c-1_i32_43 : i32 to vector<128x1xi32>
    %108 = arith.addi %17, %107 : vector<128x1xi32>
    %c8_i32_44 = arith.constant 8 : i32
    %109 = vector.broadcast %c8_i32_44 : i32 to vector<128x1xi32>
    %110 = arith.cmpi slt, %108, %109 : vector<128x1xi32>
    %111 = arith.andi %106, %110 : vector<128x1xi1>
    %112 = arith.extui %111 : vector<128x1xi1> to vector<128x1xi32>
    %113 = arith.sitofp %112 : vector<128x1xi32> to vector<128x1xf32>
    %114 = vector.broadcast %113 : vector<128x1xf32> to vector<128x32xf32>
    %115 = arith.mulf %92, %114 : vector<128x32xf32>
    %c9_45 = arith.constant 9 : index
    %c0_46 = arith.constant 0 : index
    %116 = vector.load %arg13[%c9_45, %c0_46] : memref<146x32xf32, #tpu.memory_space<vmem>>, vector<128x32xf32>
    %c10 = arith.constant 10 : index
    %c0_47 = arith.constant 0 : index
    %117 = vector.load %arg13[%c10, %c0_47] : memref<146x32xf32, #tpu.memory_space<vmem>>, vector<128x32xf32>
    %c0_i32_48 = arith.constant 0 : i32
    %118 = vector.broadcast %c0_i32_48 : i32 to vector<128x1xi32>
    %119 = arith.addi %19, %118 : vector<128x1xi32>
    %c0_i32_49 = arith.constant 0 : i32
    %120 = vector.broadcast %c0_i32_49 : i32 to vector<128x1xi32>
    %121 = arith.cmpi sge, %119, %120 : vector<128x1xi32>
    %c0_i32_50 = arith.constant 0 : i32
    %122 = vector.broadcast %c0_i32_50 : i32 to vector<128x1xi32>
    %123 = arith.addi %19, %122 : vector<128x1xi32>
    %c8_i32_51 = arith.constant 8 : i32
    %124 = vector.broadcast %c8_i32_51 : i32 to vector<128x1xi32>
    %125 = arith.cmpi slt, %123, %124 : vector<128x1xi32>
    %126 = arith.andi %121, %125 : vector<128x1xi1>
    %c1_i32_52 = arith.constant 1 : i32
    %127 = vector.broadcast %c1_i32_52 : i32 to vector<128x1xi32>
    %128 = arith.addi %17, %127 : vector<128x1xi32>
    %c0_i32_53 = arith.constant 0 : i32
    %129 = vector.broadcast %c0_i32_53 : i32 to vector<128x1xi32>
    %130 = arith.cmpi sge, %128, %129 : vector<128x1xi32>
    %131 = arith.andi %126, %130 : vector<128x1xi1>
    %c1_i32_54 = arith.constant 1 : i32
    %132 = vector.broadcast %c1_i32_54 : i32 to vector<128x1xi32>
    %133 = arith.addi %17, %132 : vector<128x1xi32>
    %c8_i32_55 = arith.constant 8 : i32
    %134 = vector.broadcast %c8_i32_55 : i32 to vector<128x1xi32>
    %135 = arith.cmpi slt, %133, %134 : vector<128x1xi32>
    %136 = arith.andi %131, %135 : vector<128x1xi1>
    %137 = arith.extui %136 : vector<128x1xi1> to vector<128x1xi32>
    %138 = arith.sitofp %137 : vector<128x1xi32> to vector<128x1xf32>
    %139 = vector.broadcast %138 : vector<128x1xf32> to vector<128x32xf32>
    %140 = arith.mulf %117, %139 : vector<128x32xf32>
    %c16 = arith.constant 16 : index
    %c0_56 = arith.constant 0 : index
    %141 = vector.load %arg13[%c16, %c0_56] : memref<146x32xf32, #tpu.memory_space<vmem>>, vector<128x32xf32>
    %c1_i32_57 = arith.constant 1 : i32
    %142 = vector.broadcast %c1_i32_57 : i32 to vector<128x1xi32>
    %143 = arith.addi %19, %142 : vector<128x1xi32>
    %c0_i32_58 = arith.constant 0 : i32
    %144 = vector.broadcast %c0_i32_58 : i32 to vector<128x1xi32>
    %145 = arith.cmpi sge, %143, %144 : vector<128x1xi32>
    %c1_i32_59 = arith.constant 1 : i32
    %146 = vector.broadcast %c1_i32_59 : i32 to vector<128x1xi32>
    %147 = arith.addi %19, %146 : vector<128x1xi32>
    %c8_i32_60 = arith.constant 8 : i32
    %148 = vector.broadcast %c8_i32_60 : i32 to vector<128x1xi32>
    %149 = arith.cmpi slt, %147, %148 : vector<128x1xi32>
    %150 = arith.andi %145, %149 : vector<128x1xi1>
    %c-1_i32_61 = arith.constant -1 : i32
    %151 = vector.broadcast %c-1_i32_61 : i32 to vector<128x1xi32>
    %152 = arith.addi %17, %151 : vector<128x1xi32>
    %c0_i32_62 = arith.constant 0 : i32
    %153 = vector.broadcast %c0_i32_62 : i32 to vector<128x1xi32>
    %154 = arith.cmpi sge, %152, %153 : vector<128x1xi32>
    %155 = arith.andi %150, %154 : vector<128x1xi1>
    %c-1_i32_63 = arith.constant -1 : i32
    %156 = vector.broadcast %c-1_i32_63 : i32 to vector<128x1xi32>
    %157 = arith.addi %17, %156 : vector<128x1xi32>
    %c8_i32_64 = arith.constant 8 : i32
    %158 = vector.broadcast %c8_i32_64 : i32 to vector<128x1xi32>
    %159 = arith.cmpi slt, %157, %158 : vector<128x1xi32>
    %160 = arith.andi %155, %159 : vector<128x1xi1>
    %161 = arith.extui %160 : vector<128x1xi1> to vector<128x1xi32>
    %162 = arith.sitofp %161 : vector<128x1xi32> to vector<128x1xf32>
    %163 = vector.broadcast %162 : vector<128x1xf32> to vector<128x32xf32>
    %164 = arith.mulf %141, %163 : vector<128x32xf32>
    %c17 = arith.constant 17 : index
    %c0_65 = arith.constant 0 : index
    %165 = vector.load %arg13[%c17, %c0_65] : memref<146x32xf32, #tpu.memory_space<vmem>>, vector<128x32xf32>
    %c1_i32_66 = arith.constant 1 : i32
    %166 = vector.broadcast %c1_i32_66 : i32 to vector<128x1xi32>
    %167 = arith.addi %19, %166 : vector<128x1xi32>
    %c0_i32_67 = arith.constant 0 : i32
    %168 = vector.broadcast %c0_i32_67 : i32 to vector<128x1xi32>
    %169 = arith.cmpi sge, %167, %168 : vector<128x1xi32>
    %c1_i32_68 = arith.constant 1 : i32
    %170 = vector.broadcast %c1_i32_68 : i32 to vector<128x1xi32>
    %171 = arith.addi %19, %170 : vector<128x1xi32>
    %c8_i32_69 = arith.constant 8 : i32
    %172 = vector.broadcast %c8_i32_69 : i32 to vector<128x1xi32>
    %173 = arith.cmpi slt, %171, %172 : vector<128x1xi32>
    %174 = arith.andi %169, %173 : vector<128x1xi1>
    %c0_i32_70 = arith.constant 0 : i32
    %175 = vector.broadcast %c0_i32_70 : i32 to vector<128x1xi32>
    %176 = arith.addi %17, %175 : vector<128x1xi32>
    %c0_i32_71 = arith.constant 0 : i32
    %177 = vector.broadcast %c0_i32_71 : i32 to vector<128x1xi32>
    %178 = arith.cmpi sge, %176, %177 : vector<128x1xi32>
    %179 = arith.andi %174, %178 : vector<128x1xi1>
    %c0_i32_72 = arith.constant 0 : i32
    %180 = vector.broadcast %c0_i32_72 : i32 to vector<128x1xi32>
    %181 = arith.addi %17, %180 : vector<128x1xi32>
    %c8_i32_73 = arith.constant 8 : i32
    %182 = vector.broadcast %c8_i32_73 : i32 to vector<128x1xi32>
    %183 = arith.cmpi slt, %181, %182 : vector<128x1xi32>
    %184 = arith.andi %179, %183 : vector<128x1xi1>
    %185 = arith.extui %184 : vector<128x1xi1> to vector<128x1xi32>
    %186 = arith.sitofp %185 : vector<128x1xi32> to vector<128x1xf32>
    %187 = vector.broadcast %186 : vector<128x1xf32> to vector<128x32xf32>
    %188 = arith.mulf %165, %187 : vector<128x32xf32>
    %c18 = arith.constant 18 : index
    %c0_74 = arith.constant 0 : index
    %189 = vector.load %arg13[%c18, %c0_74] : memref<146x32xf32, #tpu.memory_space<vmem>>, vector<128x32xf32>
    %c1_i32_75 = arith.constant 1 : i32
    %190 = vector.broadcast %c1_i32_75 : i32 to vector<128x1xi32>
    %191 = arith.addi %19, %190 : vector<128x1xi32>
    %c0_i32_76 = arith.constant 0 : i32
    %192 = vector.broadcast %c0_i32_76 : i32 to vector<128x1xi32>
    %193 = arith.cmpi sge, %191, %192 : vector<128x1xi32>
    %c1_i32_77 = arith.constant 1 : i32
    %194 = vector.broadcast %c1_i32_77 : i32 to vector<128x1xi32>
    %195 = arith.addi %19, %194 : vector<128x1xi32>
    %c8_i32_78 = arith.constant 8 : i32
    %196 = vector.broadcast %c8_i32_78 : i32 to vector<128x1xi32>
    %197 = arith.cmpi slt, %195, %196 : vector<128x1xi32>
    %198 = arith.andi %193, %197 : vector<128x1xi1>
    %c1_i32_79 = arith.constant 1 : i32
    %199 = vector.broadcast %c1_i32_79 : i32 to vector<128x1xi32>
    %200 = arith.addi %17, %199 : vector<128x1xi32>
    %c0_i32_80 = arith.constant 0 : i32
    %201 = vector.broadcast %c0_i32_80 : i32 to vector<128x1xi32>
    %202 = arith.cmpi sge, %200, %201 : vector<128x1xi32>
    %203 = arith.andi %198, %202 : vector<128x1xi1>
    %c1_i32_81 = arith.constant 1 : i32
    %204 = vector.broadcast %c1_i32_81 : i32 to vector<128x1xi32>
    %205 = arith.addi %17, %204 : vector<128x1xi32>
    %c8_i32_82 = arith.constant 8 : i32
    %206 = vector.broadcast %c8_i32_82 : i32 to vector<128x1xi32>
    %207 = arith.cmpi slt, %205, %206 : vector<128x1xi32>
    %208 = arith.andi %203, %207 : vector<128x1xi1>
    %209 = arith.extui %208 : vector<128x1xi1> to vector<128x1xi32>
    %210 = arith.sitofp %209 : vector<128x1xi32> to vector<128x1xf32>
    %211 = vector.broadcast %210 : vector<128x1xf32> to vector<128x32xf32>
    %212 = arith.mulf %189, %211 : vector<128x32xf32>
    %213 = tpu.concatenate %43, %67, %91, %115, %116, %140, %164, %188, %212 in 1 : vector<128x32xf32>, vector<128x32xf32>, vector<128x32xf32>, vector<128x32xf32>, vector<128x32xf32>, vector<128x32xf32>, vector<128x32xf32>, vector<128x32xf32>, vector<128x32xf32> -> vector<128x288xf32>
    %214 = arith.truncf %213 : vector<128x288xf32> to vector<128x288xbf16>
    %c0_83 = arith.constant 0 : index
    %c0_84 = arith.constant 0 : index
    %215 = vector.load %arg4[%c0_83, %c0_84] : memref<288x64xbf16, #tpu.memory_space<vmem>>, vector<288x64xbf16>
    %cst_85 = arith.constant dense<0.000000e+00> : vector<128x64xf32>
    %216 = tpu.matmul %214, %215, %cst_85 {dimension_numbers = #tpu.dot_dimension_numbers<[1], [0], [0], [1], [0, 0, 1, 1], [], []>} : vector<128x288xbf16>, vector<288x64xbf16>, vector<128x64xf32> -> vector<128x64xf32>
    %c0_86 = arith.constant 0 : index
    %c0_87 = arith.constant 0 : index
    %217 = vector.load %arg5[%c0_86, %c0_87] : memref<1x64xf32, #tpu.memory_space<vmem>>, vector<1x64xf32>
    %218 = vector.broadcast %217 : vector<1x64xf32> to vector<128x64xf32>
    %219 = arith.addf %216, %218 : vector<128x64xf32>
    %cst_88 = arith.constant 0.000000e+00 : f32
    %220 = vector.broadcast %cst_88 : f32 to vector<128x64xf32>
    %221 = arith.maximumf %219, %220 : vector<128x64xf32>
    %222 = arith.truncf %221 : vector<128x64xf32> to vector<128x64xbf16>
    %223 = vector.extract_strided_slice %222 {offsets = [0, 0], sizes = [64, 64], strides = [1, 1]} : vector<128x64xbf16> to vector<64x64xbf16>
    %c0_89 = arith.constant 0 : index
    %c0_90 = arith.constant 0 : index
    %c0_91 = arith.constant 0 : index
    %224 = vector.load %arg14[%c0_89, %c0_90, %c0_91] : memref<2x64x64xbf16, #tpu.memory_space<vmem>>, vector<1x64x64xbf16>
    %225 = vector.shape_cast %224 : vector<1x64x64xbf16> to vector<64x64xbf16>
    %226 = vector.shape_cast %223 : vector<64x64xbf16> to vector<1x64x64xbf16>
    tpu.vector_store %arg14[%c0_89, %c0_90, %c0_91], %226 {strides = array<i32>} : memref<2x64x64xbf16, #tpu.memory_space<vmem>>, vector<1x64x64xbf16>,
    %227 = vector.extract_strided_slice %222 {offsets = [64, 0], sizes = [64, 64], strides = [1, 1]} : vector<128x64xbf16> to vector<64x64xbf16>
    %c1_92 = arith.constant 1 : index
    %c0_93 = arith.constant 0 : index
    %c0_94 = arith.constant 0 : index
    %228 = vector.load %arg14[%c1_92, %c0_93, %c0_94] : memref<2x64x64xbf16, #tpu.memory_space<vmem>>, vector<1x64x64xbf16>
    %229 = vector.shape_cast %228 : vector<1x64x64xbf16> to vector<64x64xbf16>
    %230 = vector.shape_cast %227 : vector<64x64xbf16> to vector<1x64x64xbf16>
    tpu.vector_store %arg14[%c1_92, %c0_93, %c0_94], %230 {strides = array<i32>} : memref<2x64x64xbf16, #tpu.memory_space<vmem>>, vector<1x64x64xbf16>,
    %c0_95 = arith.constant 0 : index
    %c0_96 = arith.constant 0 : index
    %c0_97 = arith.constant 0 : index
    %231 = vector.load %arg14[%c0_95, %c0_96, %c0_97] : memref<2x64x64xbf16, #tpu.memory_space<vmem>>, vector<2x1x64xbf16>
    %232 = vector.shape_cast %231 : vector<2x1x64xbf16> to vector<2x64xbf16>
    %c0_98 = arith.constant 0 : index
    %c0_99 = arith.constant 0 : index
    %233 = vector.load %arg15[%c0_98, %c0_99] : memref<2x4096xbf16, #tpu.memory_space<vmem>>, vector<2x64xbf16>
    tpu.vector_store %arg15[%c0_98, %c0_99], %232 {strides = array<i32>} : memref<2x4096xbf16, #tpu.memory_space<vmem>>, vector<2x64xbf16>,
    %c0_100 = arith.constant 0 : index
    %c1_101 = arith.constant 1 : index
    %c0_102 = arith.constant 0 : index
    %234 = vector.load %arg14[%c0_100, %c1_101, %c0_102] : memref<2x64x64xbf16, #tpu.memory_space<vmem>>, vector<2x1x64xbf16>
    %235 = vector.shape_cast %234 : vector<2x1x64xbf16> to vector<2x64xbf16>
    %c0_103 = arith.constant 0 : index
    %c64 = arith.constant 64 : index
    %236 = vector.load %arg15[%c0_103, %c64] : memref<2x4096xbf16, #tpu.memory_space<vmem>>, vector<2x64xbf16>
    tpu.vector_store %arg15[%c0_103, %c64], %235 {strides = array<i32>} : memref<2x4096xbf16, #tpu.memory_space<vmem>>, vector<2x64xbf16>,
    %c0_104 = arith.constant 0 : index
    %c2_105 = arith.constant 2 : index
    %c0_106 = arith.constant 0 : index
    %237 = vector.load %arg14[%c0_104, %c2_105, %c0_106] : memref<2x64x64xbf16, #tpu.memory_space<vmem>>, vector<2x1x64xbf16>
    %238 = vector.shape_cast %237 : vector<2x1x64xbf16> to vector<2x64xbf16>
    %c0_107 = arith.constant 0 : index
    %c128 = arith.constant 128 : index
    %239 = vector.load %arg15[%c0_107, %c128] : memref<2x4096xbf16, #tpu.memory_space<vmem>>, vector<2x64xbf16>
    tpu.vector_store %arg15[%c0_107, %c128], %238 {strides = array<i32>} : memref<2x4096xbf16, #tpu.memory_space<vmem>>, vector<2x64xbf16>,
    %c0_108 = arith.constant 0 : index
    %c3 = arith.constant 3 : index
    %c0_109 = arith.constant 0 : index
    %240 = vector.load %arg14[%c0_108, %c3, %c0_109] : memref<2x64x64xbf16, #tpu.memory_space<vmem>>, vector<2x1x64xbf16>
    %241 = vector.shape_cast %240 : vector<2x1x64xbf16> to vector<2x64xbf16>
    %c0_110 = arith.constant 0 : index
    %c192 = arith.constant 192 : index
    %242 = vector.load %arg15[%c0_110, %c192] : memref<2x4096xbf16, #tpu.memory_space<vmem>>, vector<2x64xbf16>
    tpu.vector_store %arg15[%c0_110, %c192], %241 {strides = array<i32>} : memref<2x4096xbf16, #tpu.memory_space<vmem>>, vector<2x64xbf16>,
    %c0_111 = arith.constant 0 : index
    %c4 = arith.constant 4 : index
    %c0_112 = arith.constant 0 : index
    %243 = vector.load %arg14[%c0_111, %c4, %c0_112] : memref<2x64x64xbf16, #tpu.memory_space<vmem>>, vector<2x1x64xbf16>
    %244 = vector.shape_cast %243 : vector<2x1x64xbf16> to vector<2x64xbf16>
    %c0_113 = arith.constant 0 : index
    %c256 = arith.constant 256 : index
    %245 = vector.load %arg15[%c0_113, %c256] : memref<2x4096xbf16, #tpu.memory_space<vmem>>, vector<2x64xbf16>
    tpu.vector_store %arg15[%c0_113, %c256], %244 {strides = array<i32>} : memref<2x4096xbf16, #tpu.memory_space<vmem>>, vector<2x64xbf16>,
    %c0_114 = arith.constant 0 : index
    %c5 = arith.constant 5 : index
    %c0_115 = arith.constant 0 : index
    %246 = vector.load %arg14[%c0_114, %c5, %c0_115] : memref<2x64x64xbf16, #tpu.memory_space<vmem>>, vector<2x1x64xbf16>
    %247 = vector.shape_cast %246 : vector<2x1x64xbf16> to vector<2x64xbf16>
    %c0_116 = arith.constant 0 : index
    %c320 = arith.constant 320 : index
    %248 = vector.load %arg15[%c0_116, %c320] : memref<2x4096xbf16, #tpu.memory_space<vmem>>, vector<2x64xbf16>
    tpu.vector_store %arg15[%c0_116, %c320], %247 {strides = array<i32>} : memref<2x4096xbf16, #tpu.memory_space<vmem>>, vector<2x64xbf16>,
    %c0_117 = arith.constant 0 : index
    %c6 = arith.constant 6 : index
    %c0_118 = arith.constant 0 : index
    %249 = vector.load %arg14[%c0_117, %c6, %c0_118] : memref<2x64x64xbf16, #tpu.memory_space<vmem>>, vector<2x1x64xbf16>
    %250 = vector.shape_cast %249 : vector<2x1x64xbf16> to vector<2x64xbf16>
    %c0_119 = arith.constant 0 : index
    %c384 = arith.constant 384 : index
    %251 = vector.load %arg15[%c0_119, %c384] : memref<2x4096xbf16, #tpu.memory_space<vmem>>, vector<2x64xbf16>
    tpu.vector_store %arg15[%c0_119, %c384], %250 {strides = array<i32>} : memref<2x4096xbf16, #tpu.memory_space<vmem>>, vector<2x64xbf16>,
    %c0_120 = arith.constant 0 : index
    %c7 = arith.constant 7 : index
    %c0_121 = arith.constant 0 : index
    %252 = vector.load %arg14[%c0_120, %c7, %c0_121] : memref<2x64x64xbf16, #tpu.memory_space<vmem>>, vector<2x1x64xbf16>
    %253 = vector.shape_cast %252 : vector<2x1x64xbf16> to vector<2x64xbf16>
    %c0_122 = arith.constant 0 : index
    %c448 = arith.constant 448 : index
    %254 = vector.load %arg15[%c0_122, %c448] : memref<2x4096xbf16, #tpu.memory_space<vmem>>, vector<2x64xbf16>
    tpu.vector_store %arg15[%c0_122, %c448], %253 {strides = array<i32>} : memref<2x4096xbf16, #tpu.memory_space<vmem>>, vector<2x64xbf16>,
    %c0_123 = arith.constant 0 : index
    %c8_124 = arith.constant 8 : index
    %c0_125 = arith.constant 0 : index
    %255 = vector.load %arg14[%c0_123, %c8_124, %c0_125] : memref<2x64x64xbf16, #tpu.memory_space<vmem>>, vector<2x1x64xbf16>
    %256 = vector.shape_cast %255 : vector<2x1x64xbf16> to vector<2x64xbf16>
    %c0_126 = arith.constant 0 : index
    %c512 = arith.constant 512 : index
    %257 = vector.load %arg15[%c0_126, %c512] : memref<2x4096xbf16, #tpu.memory_space<vmem>>, vector<2x64xbf16>
    tpu.vector_store %arg15[%c0_126, %c512], %256 {strides = array<i32>} : memref<2x4096xbf16, #tpu.memory_space<vmem>>, vector<2x64xbf16>,
    %c0_127 = arith.constant 0 : index
    %c9_128 = arith.constant 9 : index
    %c0_129 = arith.constant 0 : index
    %258 = vector.load %arg14[%c0_127, %c9_128, %c0_129] : memref<2x64x64xbf16, #tpu.memory_space<vmem>>, vector<2x1x64xbf16>
    %259 = vector.shape_cast %258 : vector<2x1x64xbf16> to vector<2x64xbf16>
    %c0_130 = arith.constant 0 : index
    %c576 = arith.constant 576 : index
    %260 = vector.load %arg15[%c0_130, %c576] : memref<2x4096xbf16, #tpu.memory_space<vmem>>, vector<2x64xbf16>
    tpu.vector_store %arg15[%c0_130, %c576], %259 {strides = array<i32>} : memref<2x4096xbf16, #tpu.memory_space<vmem>>, vector<2x64xbf16>,
    %c0_131 = arith.constant 0 : index
    %c10_132 = arith.constant 10 : index
    %c0_133 = arith.constant 0 : index
    %261 = vector.load %arg14[%c0_131, %c10_132, %c0_133] : memref<2x64x64xbf16, #tpu.memory_space<vmem>>, vector<2x1x64xbf16>
    %262 = vector.shape_cast %261 : vector<2x1x64xbf16> to vector<2x64xbf16>
    %c0_134 = arith.constant 0 : index
    %c640 = arith.constant 640 : index
    %263 = vector.load %arg15[%c0_134, %c640] : memref<2x4096xbf16, #tpu.memory_space<vmem>>, vector<2x64xbf16>
    tpu.vector_store %arg15[%c0_134, %c640], %262 {strides = array<i32>} : memref<2x4096xbf16, #tpu.memory_space<vmem>>, vector<2x64xbf16>,
    %c0_135 = arith.constant 0 : index
    %c11 = arith.constant 11 : index
    %c0_136 = arith.constant 0 : index
    %264 = vector.load %arg14[%c0_135, %c11, %c0_136] : memref<2x64x64xbf16, #tpu.memory_space<vmem>>, vector<2x1x64xbf16>
    %265 = vector.shape_cast %264 : vector<2x1x64xbf16> to vector<2x64xbf16>
    %c0_137 = arith.constant 0 : index
    %c704 = arith.constant 704 : index
    %266 = vector.load %arg15[%c0_137, %c704] : memref<2x4096xbf16, #tpu.memory_space<vmem>>, vector<2x64xbf16>
    tpu.vector_store %arg15[%c0_137, %c704], %265 {strides = array<i32>} : memref<2x4096xbf16, #tpu.memory_space<vmem>>, vector<2x64xbf16>,
    %c0_138 = arith.constant 0 : index
    %c12 = arith.constant 12 : index
    %c0_139 = arith.constant 0 : index
    %267 = vector.load %arg14[%c0_138, %c12, %c0_139] : memref<2x64x64xbf16, #tpu.memory_space<vmem>>, vector<2x1x64xbf16>
    %268 = vector.shape_cast %267 : vector<2x1x64xbf16> to vector<2x64xbf16>
    %c0_140 = arith.constant 0 : index
    %c768 = arith.constant 768 : index
    %269 = vector.load %arg15[%c0_140, %c768] : memref<2x4096xbf16, #tpu.memory_space<vmem>>, vector<2x64xbf16>
    tpu.vector_store %arg15[%c0_140, %c768], %268 {strides = array<i32>} : memref<2x4096xbf16, #tpu.memory_space<vmem>>, vector<2x64xbf16>,
    %c0_141 = arith.constant 0 : index
    %c13 = arith.constant 13 : index
    %c0_142 = arith.constant 0 : index
    %270 = vector.load %arg14[%c0_141, %c13, %c0_142] : memref<2x64x64xbf16, #tpu.memory_space<vmem>>, vector<2x1x64xbf16>
    %271 = vector.shape_cast %270 : vector<2x1x64xbf16> to vector<2x64xbf16>
    %c0_143 = arith.constant 0 : index
    %c832 = arith.constant 832 : index
    %272 = vector.load %arg15[%c0_143, %c832] : memref<2x4096xbf16, #tpu.memory_space<vmem>>, vector<2x64xbf16>
    tpu.vector_store %arg15[%c0_143, %c832], %271 {strides = array<i32>} : memref<2x4096xbf16, #tpu.memory_space<vmem>>, vector<2x64xbf16>,
    %c0_144 = arith.constant 0 : index
    %c14 = arith.constant 14 : index
    %c0_145 = arith.constant 0 : index
    %273 = vector.load %arg14[%c0_144, %c14, %c0_145] : memref<2x64x64xbf16, #tpu.memory_space<vmem>>, vector<2x1x64xbf16>
    %274 = vector.shape_cast %273 : vector<2x1x64xbf16> to vector<2x64xbf16>
    %c0_146 = arith.constant 0 : index
    %c896 = arith.constant 896 : index
    %275 = vector.load %arg15[%c0_146, %c896] : memref<2x4096xbf16, #tpu.memory_space<vmem>>, vector<2x64xbf16>
    tpu.vector_store %arg15[%c0_146, %c896], %274 {strides = array<i32>} : memref<2x4096xbf16, #tpu.memory_space<vmem>>, vector<2x64xbf16>,
    %c0_147 = arith.constant 0 : index
    %c15 = arith.constant 15 : index
    %c0_148 = arith.constant 0 : index
    %276 = vector.load %arg14[%c0_147, %c15, %c0_148] : memref<2x64x64xbf16, #tpu.memory_space<vmem>>, vector<2x1x64xbf16>
    %277 = vector.shape_cast %276 : vector<2x1x64xbf16> to vector<2x64xbf16>
    %c0_149 = arith.constant 0 : index
    %c960 = arith.constant 960 : index
    %278 = vector.load %arg15[%c0_149, %c960] : memref<2x4096xbf16, #tpu.memory_space<vmem>>, vector<2x64xbf16>
    tpu.vector_store %arg15[%c0_149, %c960], %277 {strides = array<i32>} : memref<2x4096xbf16, #tpu.memory_space<vmem>>, vector<2x64xbf16>,
    %c0_150 = arith.constant 0 : index
    %c16_151 = arith.constant 16 : index
    %c0_152 = arith.constant 0 : index
    %279 = vector.load %arg14[%c0_150, %c16_151, %c0_152] : memref<2x64x64xbf16, #tpu.memory_space<vmem>>, vector<2x1x64xbf16>
    %280 = vector.shape_cast %279 : vector<2x1x64xbf16> to vector<2x64xbf16>
    %c0_153 = arith.constant 0 : index
    %c1024 = arith.constant 1024 : index
    %281 = vector.load %arg15[%c0_153, %c1024] : memref<2x4096xbf16, #tpu.memory_space<vmem>>, vector<2x64xbf16>
    tpu.vector_store %arg15[%c0_153, %c1024], %280 {strides = array<i32>} : memref<2x4096xbf16, #tpu.memory_space<vmem>>, vector<2x64xbf16>,
    %c0_154 = arith.constant 0 : index
    %c17_155 = arith.constant 17 : index
    %c0_156 = arith.constant 0 : index
    %282 = vector.load %arg14[%c0_154, %c17_155, %c0_156] : memref<2x64x64xbf16, #tpu.memory_space<vmem>>, vector<2x1x64xbf16>
    %283 = vector.shape_cast %282 : vector<2x1x64xbf16> to vector<2x64xbf16>
    %c0_157 = arith.constant 0 : index
    %c1088 = arith.constant 1088 : index
    %284 = vector.load %arg15[%c0_157, %c1088] : memref<2x4096xbf16, #tpu.memory_space<vmem>>, vector<2x64xbf16>
    tpu.vector_store %arg15[%c0_157, %c1088], %283 {strides = array<i32>} : memref<2x4096xbf16, #tpu.memory_space<vmem>>, vector<2x64xbf16>,
    %c0_158 = arith.constant 0 : index
    %c18_159 = arith.constant 18 : index
    %c0_160 = arith.constant 0 : index
    %285 = vector.load %arg14[%c0_158, %c18_159, %c0_160] : memref<2x64x64xbf16, #tpu.memory_space<vmem>>, vector<2x1x64xbf16>
    %286 = vector.shape_cast %285 : vector<2x1x64xbf16> to vector<2x64xbf16>
    %c0_161 = arith.constant 0 : index
    %c1152 = arith.constant 1152 : index
    %287 = vector.load %arg15[%c0_161, %c1152] : memref<2x4096xbf16, #tpu.memory_space<vmem>>, vector<2x64xbf16>
    tpu.vector_store %arg15[%c0_161, %c1152], %286 {strides = array<i32>} : memref<2x4096xbf16, #tpu.memory_space<vmem>>, vector<2x64xbf16>,
    %c0_162 = arith.constant 0 : index
    %c19 = arith.constant 19 : index
    %c0_163 = arith.constant 0 : index
    %288 = vector.load %arg14[%c0_162, %c19, %c0_163] : memref<2x64x64xbf16, #tpu.memory_space<vmem>>, vector<2x1x64xbf16>
    %289 = vector.shape_cast %288 : vector<2x1x64xbf16> to vector<2x64xbf16>
    %c0_164 = arith.constant 0 : index
    %c1216 = arith.constant 1216 : index
    %290 = vector.load %arg15[%c0_164, %c1216] : memref<2x4096xbf16, #tpu.memory_space<vmem>>, vector<2x64xbf16>
    tpu.vector_store %arg15[%c0_164, %c1216], %289 {strides = array<i32>} : memref<2x4096xbf16, #tpu.memory_space<vmem>>, vector<2x64xbf16>,
    %c0_165 = arith.constant 0 : index
    %c20 = arith.constant 20 : index
    %c0_166 = arith.constant 0 : index
    %291 = vector.load %arg14[%c0_165, %c20, %c0_166] : memref<2x64x64xbf16, #tpu.memory_space<vmem>>, vector<2x1x64xbf16>
    %292 = vector.shape_cast %291 : vector<2x1x64xbf16> to vector<2x64xbf16>
    %c0_167 = arith.constant 0 : index
    %c1280 = arith.constant 1280 : index
    %293 = vector.load %arg15[%c0_167, %c1280] : memref<2x4096xbf16, #tpu.memory_space<vmem>>, vector<2x64xbf16>
    tpu.vector_store %arg15[%c0_167, %c1280], %292 {strides = array<i32>} : memref<2x4096xbf16, #tpu.memory_space<vmem>>, vector<2x64xbf16>,
    %c0_168 = arith.constant 0 : index
    %c21 = arith.constant 21 : index
    %c0_169 = arith.constant 0 : index
    %294 = vector.load %arg14[%c0_168, %c21, %c0_169] : memref<2x64x64xbf16, #tpu.memory_space<vmem>>, vector<2x1x64xbf16>
    %295 = vector.shape_cast %294 : vector<2x1x64xbf16> to vector<2x64xbf16>
    %c0_170 = arith.constant 0 : index
    %c1344 = arith.constant 1344 : index
    %296 = vector.load %arg15[%c0_170, %c1344] : memref<2x4096xbf16, #tpu.memory_space<vmem>>, vector<2x64xbf16>
    tpu.vector_store %arg15[%c0_170, %c1344], %295 {strides = array<i32>} : memref<2x4096xbf16, #tpu.memory_space<vmem>>, vector<2x64xbf16>,
    %c0_171 = arith.constant 0 : index
    %c22 = arith.constant 22 : index
    %c0_172 = arith.constant 0 : index
    %297 = vector.load %arg14[%c0_171, %c22, %c0_172] : memref<2x64x64xbf16, #tpu.memory_space<vmem>>, vector<2x1x64xbf16>
    %298 = vector.shape_cast %297 : vector<2x1x64xbf16> to vector<2x64xbf16>
    %c0_173 = arith.constant 0 : index
    %c1408 = arith.constant 1408 : index
    %299 = vector.load %arg15[%c0_173, %c1408] : memref<2x4096xbf16, #tpu.memory_space<vmem>>, vector<2x64xbf16>
    tpu.vector_store %arg15[%c0_173, %c1408], %298 {strides = array<i32>} : memref<2x4096xbf16, #tpu.memory_space<vmem>>, vector<2x64xbf16>,
    %c0_174 = arith.constant 0 : index
    %c23 = arith.constant 23 : index
    %c0_175 = arith.constant 0 : index
    %300 = vector.load %arg14[%c0_174, %c23, %c0_175] : memref<2x64x64xbf16, #tpu.memory_space<vmem>>, vector<2x1x64xbf16>
    %301 = vector.shape_cast %300 : vector<2x1x64xbf16> to vector<2x64xbf16>
    %c0_176 = arith.constant 0 : index
    %c1472 = arith.constant 1472 : index
    %302 = vector.load %arg15[%c0_176, %c1472] : memref<2x4096xbf16, #tpu.memory_space<vmem>>, vector<2x64xbf16>
    tpu.vector_store %arg15[%c0_176, %c1472], %301 {strides = array<i32>} : memref<2x4096xbf16, #tpu.memory_space<vmem>>, vector<2x64xbf16>,
    %c0_177 = arith.constant 0 : index
    %c24 = arith.constant 24 : index
    %c0_178 = arith.constant 0 : index
    %303 = vector.load %arg14[%c0_177, %c24, %c0_178] : memref<2x64x64xbf16, #tpu.memory_space<vmem>>, vector<2x1x64xbf16>
    %304 = vector.shape_cast %303 : vector<2x1x64xbf16> to vector<2x64xbf16>
    %c0_179 = arith.constant 0 : index
    %c1536 = arith.constant 1536 : index
    %305 = vector.load %arg15[%c0_179, %c1536] : memref<2x4096xbf16, #tpu.memory_space<vmem>>, vector<2x64xbf16>
    tpu.vector_store %arg15[%c0_179, %c1536], %304 {strides = array<i32>} : memref<2x4096xbf16, #tpu.memory_space<vmem>>, vector<2x64xbf16>,
    %c0_180 = arith.constant 0 : index
    %c25 = arith.constant 25 : index
    %c0_181 = arith.constant 0 : index
    %306 = vector.load %arg14[%c0_180, %c25, %c0_181] : memref<2x64x64xbf16, #tpu.memory_space<vmem>>, vector<2x1x64xbf16>
    %307 = vector.shape_cast %306 : vector<2x1x64xbf16> to vector<2x64xbf16>
    %c0_182 = arith.constant 0 : index
    %c1600 = arith.constant 1600 : index
    %308 = vector.load %arg15[%c0_182, %c1600] : memref<2x4096xbf16, #tpu.memory_space<vmem>>, vector<2x64xbf16>
    tpu.vector_store %arg15[%c0_182, %c1600], %307 {strides = array<i32>} : memref<2x4096xbf16, #tpu.memory_space<vmem>>, vector<2x64xbf16>,
    %c0_183 = arith.constant 0 : index
    %c26 = arith.constant 26 : index
    %c0_184 = arith.constant 0 : index
    %309 = vector.load %arg14[%c0_183, %c26, %c0_184] : memref<2x64x64xbf16, #tpu.memory_space<vmem>>, vector<2x1x64xbf16>
    %310 = vector.shape_cast %309 : vector<2x1x64xbf16> to vector<2x64xbf16>
    %c0_185 = arith.constant 0 : index
    %c1664 = arith.constant 1664 : index
    %311 = vector.load %arg15[%c0_185, %c1664] : memref<2x4096xbf16, #tpu.memory_space<vmem>>, vector<2x64xbf16>
    tpu.vector_store %arg15[%c0_185, %c1664], %310 {strides = array<i32>} : memref<2x4096xbf16, #tpu.memory_space<vmem>>, vector<2x64xbf16>,
    %c0_186 = arith.constant 0 : index
    %c27 = arith.constant 27 : index
    %c0_187 = arith.constant 0 : index
    %312 = vector.load %arg14[%c0_186, %c27, %c0_187] : memref<2x64x64xbf16, #tpu.memory_space<vmem>>, vector<2x1x64xbf16>
    %313 = vector.shape_cast %312 : vector<2x1x64xbf16> to vector<2x64xbf16>
    %c0_188 = arith.constant 0 : index
    %c1728 = arith.constant 1728 : index
    %314 = vector.load %arg15[%c0_188, %c1728] : memref<2x4096xbf16, #tpu.memory_space<vmem>>, vector<2x64xbf16>
    tpu.vector_store %arg15[%c0_188, %c1728], %313 {strides = array<i32>} : memref<2x4096xbf16, #tpu.memory_space<vmem>>, vector<2x64xbf16>,
    %c0_189 = arith.constant 0 : index
    %c28 = arith.constant 28 : index
    %c0_190 = arith.constant 0 : index
    %315 = vector.load %arg14[%c0_189, %c28, %c0_190] : memref<2x64x64xbf16, #tpu.memory_space<vmem>>, vector<2x1x64xbf16>
    %316 = vector.shape_cast %315 : vector<2x1x64xbf16> to vector<2x64xbf16>
    %c0_191 = arith.constant 0 : index
    %c1792 = arith.constant 1792 : index
    %317 = vector.load %arg15[%c0_191, %c1792] : memref<2x4096xbf16, #tpu.memory_space<vmem>>, vector<2x64xbf16>
    tpu.vector_store %arg15[%c0_191, %c1792], %316 {strides = array<i32>} : memref<2x4096xbf16, #tpu.memory_space<vmem>>, vector<2x64xbf16>,
    %c0_192 = arith.constant 0 : index
    %c29 = arith.constant 29 : index
    %c0_193 = arith.constant 0 : index
    %318 = vector.load %arg14[%c0_192, %c29, %c0_193] : memref<2x64x64xbf16, #tpu.memory_space<vmem>>, vector<2x1x64xbf16>
    %319 = vector.shape_cast %318 : vector<2x1x64xbf16> to vector<2x64xbf16>
    %c0_194 = arith.constant 0 : index
    %c1856 = arith.constant 1856 : index
    %320 = vector.load %arg15[%c0_194, %c1856] : memref<2x4096xbf16, #tpu.memory_space<vmem>>, vector<2x64xbf16>
    tpu.vector_store %arg15[%c0_194, %c1856], %319 {strides = array<i32>} : memref<2x4096xbf16, #tpu.memory_space<vmem>>, vector<2x64xbf16>,
    %c0_195 = arith.constant 0 : index
    %c30 = arith.constant 30 : index
    %c0_196 = arith.constant 0 : index
    %321 = vector.load %arg14[%c0_195, %c30, %c0_196] : memref<2x64x64xbf16, #tpu.memory_space<vmem>>, vector<2x1x64xbf16>
    %322 = vector.shape_cast %321 : vector<2x1x64xbf16> to vector<2x64xbf16>
    %c0_197 = arith.constant 0 : index
    %c1920 = arith.constant 1920 : index
    %323 = vector.load %arg15[%c0_197, %c1920] : memref<2x4096xbf16, #tpu.memory_space<vmem>>, vector<2x64xbf16>
    tpu.vector_store %arg15[%c0_197, %c1920], %322 {strides = array<i32>} : memref<2x4096xbf16, #tpu.memory_space<vmem>>, vector<2x64xbf16>,
    %c0_198 = arith.constant 0 : index
    %c31 = arith.constant 31 : index
    %c0_199 = arith.constant 0 : index
    %324 = vector.load %arg14[%c0_198, %c31, %c0_199] : memref<2x64x64xbf16, #tpu.memory_space<vmem>>, vector<2x1x64xbf16>
    %325 = vector.shape_cast %324 : vector<2x1x64xbf16> to vector<2x64xbf16>
    %c0_200 = arith.constant 0 : index
    %c1984 = arith.constant 1984 : index
    %326 = vector.load %arg15[%c0_200, %c1984] : memref<2x4096xbf16, #tpu.memory_space<vmem>>, vector<2x64xbf16>
    tpu.vector_store %arg15[%c0_200, %c1984], %325 {strides = array<i32>} : memref<2x4096xbf16, #tpu.memory_space<vmem>>, vector<2x64xbf16>,
    %c0_201 = arith.constant 0 : index
    %c32 = arith.constant 32 : index
    %c0_202 = arith.constant 0 : index
    %327 = vector.load %arg14[%c0_201, %c32, %c0_202] : memref<2x64x64xbf16, #tpu.memory_space<vmem>>, vector<2x1x64xbf16>
    %328 = vector.shape_cast %327 : vector<2x1x64xbf16> to vector<2x64xbf16>
    %c0_203 = arith.constant 0 : index
    %c2048 = arith.constant 2048 : index
    %329 = vector.load %arg15[%c0_203, %c2048] : memref<2x4096xbf16, #tpu.memory_space<vmem>>, vector<2x64xbf16>
    tpu.vector_store %arg15[%c0_203, %c2048], %328 {strides = array<i32>} : memref<2x4096xbf16, #tpu.memory_space<vmem>>, vector<2x64xbf16>,
    %c0_204 = arith.constant 0 : index
    %c33 = arith.constant 33 : index
    %c0_205 = arith.constant 0 : index
    %330 = vector.load %arg14[%c0_204, %c33, %c0_205] : memref<2x64x64xbf16, #tpu.memory_space<vmem>>, vector<2x1x64xbf16>
    %331 = vector.shape_cast %330 : vector<2x1x64xbf16> to vector<2x64xbf16>
    %c0_206 = arith.constant 0 : index
    %c2112 = arith.constant 2112 : index
    %332 = vector.load %arg15[%c0_206, %c2112] : memref<2x4096xbf16, #tpu.memory_space<vmem>>, vector<2x64xbf16>
    tpu.vector_store %arg15[%c0_206, %c2112], %331 {strides = array<i32>} : memref<2x4096xbf16, #tpu.memory_space<vmem>>, vector<2x64xbf16>,
    %c0_207 = arith.constant 0 : index
    %c34 = arith.constant 34 : index
    %c0_208 = arith.constant 0 : index
    %333 = vector.load %arg14[%c0_207, %c34, %c0_208] : memref<2x64x64xbf16, #tpu.memory_space<vmem>>, vector<2x1x64xbf16>
    %334 = vector.shape_cast %333 : vector<2x1x64xbf16> to vector<2x64xbf16>
    %c0_209 = arith.constant 0 : index
    %c2176 = arith.constant 2176 : index
    %335 = vector.load %arg15[%c0_209, %c2176] : memref<2x4096xbf16, #tpu.memory_space<vmem>>, vector<2x64xbf16>
    tpu.vector_store %arg15[%c0_209, %c2176], %334 {strides = array<i32>} : memref<2x4096xbf16, #tpu.memory_space<vmem>>, vector<2x64xbf16>,
    %c0_210 = arith.constant 0 : index
    %c35 = arith.constant 35 : index
    %c0_211 = arith.constant 0 : index
    %336 = vector.load %arg14[%c0_210, %c35, %c0_211] : memref<2x64x64xbf16, #tpu.memory_space<vmem>>, vector<2x1x64xbf16>
    %337 = vector.shape_cast %336 : vector<2x1x64xbf16> to vector<2x64xbf16>
    %c0_212 = arith.constant 0 : index
    %c2240 = arith.constant 2240 : index
    %338 = vector.load %arg15[%c0_212, %c2240] : memref<2x4096xbf16, #tpu.memory_space<vmem>>, vector<2x64xbf16>
    tpu.vector_store %arg15[%c0_212, %c2240], %337 {strides = array<i32>} : memref<2x4096xbf16, #tpu.memory_space<vmem>>, vector<2x64xbf16>,
    %c0_213 = arith.constant 0 : index
    %c36 = arith.constant 36 : index
    %c0_214 = arith.constant 0 : index
    %339 = vector.load %arg14[%c0_213, %c36, %c0_214] : memref<2x64x64xbf16, #tpu.memory_space<vmem>>, vector<2x1x64xbf16>
    %340 = vector.shape_cast %339 : vector<2x1x64xbf16> to vector<2x64xbf16>
    %c0_215 = arith.constant 0 : index
    %c2304 = arith.constant 2304 : index
    %341 = vector.load %arg15[%c0_215, %c2304] : memref<2x4096xbf16, #tpu.memory_space<vmem>>, vector<2x64xbf16>
    tpu.vector_store %arg15[%c0_215, %c2304], %340 {strides = array<i32>} : memref<2x4096xbf16, #tpu.memory_space<vmem>>, vector<2x64xbf16>,
    %c0_216 = arith.constant 0 : index
    %c37 = arith.constant 37 : index
    %c0_217 = arith.constant 0 : index
    %342 = vector.load %arg14[%c0_216, %c37, %c0_217] : memref<2x64x64xbf16, #tpu.memory_space<vmem>>, vector<2x1x64xbf16>
    %343 = vector.shape_cast %342 : vector<2x1x64xbf16> to vector<2x64xbf16>
    %c0_218 = arith.constant 0 : index
    %c2368 = arith.constant 2368 : index
    %344 = vector.load %arg15[%c0_218, %c2368] : memref<2x4096xbf16, #tpu.memory_space<vmem>>, vector<2x64xbf16>
    tpu.vector_store %arg15[%c0_218, %c2368], %343 {strides = array<i32>} : memref<2x4096xbf16, #tpu.memory_space<vmem>>, vector<2x64xbf16>,
    %c0_219 = arith.constant 0 : index
    %c38 = arith.constant 38 : index
    %c0_220 = arith.constant 0 : index
    %345 = vector.load %arg14[%c0_219, %c38, %c0_220] : memref<2x64x64xbf16, #tpu.memory_space<vmem>>, vector<2x1x64xbf16>
    %346 = vector.shape_cast %345 : vector<2x1x64xbf16> to vector<2x64xbf16>
    %c0_221 = arith.constant 0 : index
    %c2432 = arith.constant 2432 : index
    %347 = vector.load %arg15[%c0_221, %c2432] : memref<2x4096xbf16, #tpu.memory_space<vmem>>, vector<2x64xbf16>
    tpu.vector_store %arg15[%c0_221, %c2432], %346 {strides = array<i32>} : memref<2x4096xbf16, #tpu.memory_space<vmem>>, vector<2x64xbf16>,
    %c0_222 = arith.constant 0 : index
    %c39 = arith.constant 39 : index
    %c0_223 = arith.constant 0 : index
    %348 = vector.load %arg14[%c0_222, %c39, %c0_223] : memref<2x64x64xbf16, #tpu.memory_space<vmem>>, vector<2x1x64xbf16>
    %349 = vector.shape_cast %348 : vector<2x1x64xbf16> to vector<2x64xbf16>
    %c0_224 = arith.constant 0 : index
    %c2496 = arith.constant 2496 : index
    %350 = vector.load %arg15[%c0_224, %c2496] : memref<2x4096xbf16, #tpu.memory_space<vmem>>, vector<2x64xbf16>
    tpu.vector_store %arg15[%c0_224, %c2496], %349 {strides = array<i32>} : memref<2x4096xbf16, #tpu.memory_space<vmem>>, vector<2x64xbf16>,
    %c0_225 = arith.constant 0 : index
    %c40 = arith.constant 40 : index
    %c0_226 = arith.constant 0 : index
    %351 = vector.load %arg14[%c0_225, %c40, %c0_226] : memref<2x64x64xbf16, #tpu.memory_space<vmem>>, vector<2x1x64xbf16>
    %352 = vector.shape_cast %351 : vector<2x1x64xbf16> to vector<2x64xbf16>
    %c0_227 = arith.constant 0 : index
    %c2560 = arith.constant 2560 : index
    %353 = vector.load %arg15[%c0_227, %c2560] : memref<2x4096xbf16, #tpu.memory_space<vmem>>, vector<2x64xbf16>
    tpu.vector_store %arg15[%c0_227, %c2560], %352 {strides = array<i32>} : memref<2x4096xbf16, #tpu.memory_space<vmem>>, vector<2x64xbf16>,
    %c0_228 = arith.constant 0 : index
    %c41 = arith.constant 41 : index
    %c0_229 = arith.constant 0 : index
    %354 = vector.load %arg14[%c0_228, %c41, %c0_229] : memref<2x64x64xbf16, #tpu.memory_space<vmem>>, vector<2x1x64xbf16>
    %355 = vector.shape_cast %354 : vector<2x1x64xbf16> to vector<2x64xbf16>
    %c0_230 = arith.constant 0 : index
    %c2624 = arith.constant 2624 : index
    %356 = vector.load %arg15[%c0_230, %c2624] : memref<2x4096xbf16, #tpu.memory_space<vmem>>, vector<2x64xbf16>
    tpu.vector_store %arg15[%c0_230, %c2624], %355 {strides = array<i32>} : memref<2x4096xbf16, #tpu.memory_space<vmem>>, vector<2x64xbf16>,
    %c0_231 = arith.constant 0 : index
    %c42 = arith.constant 42 : index
    %c0_232 = arith.constant 0 : index
    %357 = vector.load %arg14[%c0_231, %c42, %c0_232] : memref<2x64x64xbf16, #tpu.memory_space<vmem>>, vector<2x1x64xbf16>
    %358 = vector.shape_cast %357 : vector<2x1x64xbf16> to vector<2x64xbf16>
    %c0_233 = arith.constant 0 : index
    %c2688 = arith.constant 2688 : index
    %359 = vector.load %arg15[%c0_233, %c2688] : memref<2x4096xbf16, #tpu.memory_space<vmem>>, vector<2x64xbf16>
    tpu.vector_store %arg15[%c0_233, %c2688], %358 {strides = array<i32>} : memref<2x4096xbf16, #tpu.memory_space<vmem>>, vector<2x64xbf16>,
    %c0_234 = arith.constant 0 : index
    %c43 = arith.constant 43 : index
    %c0_235 = arith.constant 0 : index
    %360 = vector.load %arg14[%c0_234, %c43, %c0_235] : memref<2x64x64xbf16, #tpu.memory_space<vmem>>, vector<2x1x64xbf16>
    %361 = vector.shape_cast %360 : vector<2x1x64xbf16> to vector<2x64xbf16>
    %c0_236 = arith.constant 0 : index
    %c2752 = arith.constant 2752 : index
    %362 = vector.load %arg15[%c0_236, %c2752] : memref<2x4096xbf16, #tpu.memory_space<vmem>>, vector<2x64xbf16>
    tpu.vector_store %arg15[%c0_236, %c2752], %361 {strides = array<i32>} : memref<2x4096xbf16, #tpu.memory_space<vmem>>, vector<2x64xbf16>,
    %c0_237 = arith.constant 0 : index
    %c44 = arith.constant 44 : index
    %c0_238 = arith.constant 0 : index
    %363 = vector.load %arg14[%c0_237, %c44, %c0_238] : memref<2x64x64xbf16, #tpu.memory_space<vmem>>, vector<2x1x64xbf16>
    %364 = vector.shape_cast %363 : vector<2x1x64xbf16> to vector<2x64xbf16>
    %c0_239 = arith.constant 0 : index
    %c2816 = arith.constant 2816 : index
    %365 = vector.load %arg15[%c0_239, %c2816] : memref<2x4096xbf16, #tpu.memory_space<vmem>>, vector<2x64xbf16>
    tpu.vector_store %arg15[%c0_239, %c2816], %364 {strides = array<i32>} : memref<2x4096xbf16, #tpu.memory_space<vmem>>, vector<2x64xbf16>,
    %c0_240 = arith.constant 0 : index
    %c45 = arith.constant 45 : index
    %c0_241 = arith.constant 0 : index
    %366 = vector.load %arg14[%c0_240, %c45, %c0_241] : memref<2x64x64xbf16, #tpu.memory_space<vmem>>, vector<2x1x64xbf16>
    %367 = vector.shape_cast %366 : vector<2x1x64xbf16> to vector<2x64xbf16>
    %c0_242 = arith.constant 0 : index
    %c2880 = arith.constant 2880 : index
    %368 = vector.load %arg15[%c0_242, %c2880] : memref<2x4096xbf16, #tpu.memory_space<vmem>>, vector<2x64xbf16>
    tpu.vector_store %arg15[%c0_242, %c2880], %367 {strides = array<i32>} : memref<2x4096xbf16, #tpu.memory_space<vmem>>, vector<2x64xbf16>,
    %c0_243 = arith.constant 0 : index
    %c46 = arith.constant 46 : index
    %c0_244 = arith.constant 0 : index
    %369 = vector.load %arg14[%c0_243, %c46, %c0_244] : memref<2x64x64xbf16, #tpu.memory_space<vmem>>, vector<2x1x64xbf16>
    %370 = vector.shape_cast %369 : vector<2x1x64xbf16> to vector<2x64xbf16>
    %c0_245 = arith.constant 0 : index
    %c2944 = arith.constant 2944 : index
    %371 = vector.load %arg15[%c0_245, %c2944] : memref<2x4096xbf16, #tpu.memory_space<vmem>>, vector<2x64xbf16>
    tpu.vector_store %arg15[%c0_245, %c2944], %370 {strides = array<i32>} : memref<2x4096xbf16, #tpu.memory_space<vmem>>, vector<2x64xbf16>,
    %c0_246 = arith.constant 0 : index
    %c47 = arith.constant 47 : index
    %c0_247 = arith.constant 0 : index
    %372 = vector.load %arg14[%c0_246, %c47, %c0_247] : memref<2x64x64xbf16, #tpu.memory_space<vmem>>, vector<2x1x64xbf16>
    %373 = vector.shape_cast %372 : vector<2x1x64xbf16> to vector<2x64xbf16>
    %c0_248 = arith.constant 0 : index
    %c3008 = arith.constant 3008 : index
    %374 = vector.load %arg15[%c0_248, %c3008] : memref<2x4096xbf16, #tpu.memory_space<vmem>>, vector<2x64xbf16>
    tpu.vector_store %arg15[%c0_248, %c3008], %373 {strides = array<i32>} : memref<2x4096xbf16, #tpu.memory_space<vmem>>, vector<2x64xbf16>,
    %c0_249 = arith.constant 0 : index
    %c48 = arith.constant 48 : index
    %c0_250 = arith.constant 0 : index
    %375 = vector.load %arg14[%c0_249, %c48, %c0_250] : memref<2x64x64xbf16, #tpu.memory_space<vmem>>, vector<2x1x64xbf16>
    %376 = vector.shape_cast %375 : vector<2x1x64xbf16> to vector<2x64xbf16>
    %c0_251 = arith.constant 0 : index
    %c3072 = arith.constant 3072 : index
    %377 = vector.load %arg15[%c0_251, %c3072] : memref<2x4096xbf16, #tpu.memory_space<vmem>>, vector<2x64xbf16>
    tpu.vector_store %arg15[%c0_251, %c3072], %376 {strides = array<i32>} : memref<2x4096xbf16, #tpu.memory_space<vmem>>, vector<2x64xbf16>,
    %c0_252 = arith.constant 0 : index
    %c49 = arith.constant 49 : index
    %c0_253 = arith.constant 0 : index
    %378 = vector.load %arg14[%c0_252, %c49, %c0_253] : memref<2x64x64xbf16, #tpu.memory_space<vmem>>, vector<2x1x64xbf16>
    %379 = vector.shape_cast %378 : vector<2x1x64xbf16> to vector<2x64xbf16>
    %c0_254 = arith.constant 0 : index
    %c3136 = arith.constant 3136 : index
    %380 = vector.load %arg15[%c0_254, %c3136] : memref<2x4096xbf16, #tpu.memory_space<vmem>>, vector<2x64xbf16>
    tpu.vector_store %arg15[%c0_254, %c3136], %379 {strides = array<i32>} : memref<2x4096xbf16, #tpu.memory_space<vmem>>, vector<2x64xbf16>,
    %c0_255 = arith.constant 0 : index
    %c50 = arith.constant 50 : index
    %c0_256 = arith.constant 0 : index
    %381 = vector.load %arg14[%c0_255, %c50, %c0_256] : memref<2x64x64xbf16, #tpu.memory_space<vmem>>, vector<2x1x64xbf16>
    %382 = vector.shape_cast %381 : vector<2x1x64xbf16> to vector<2x64xbf16>
    %c0_257 = arith.constant 0 : index
    %c3200 = arith.constant 3200 : index
    %383 = vector.load %arg15[%c0_257, %c3200] : memref<2x4096xbf16, #tpu.memory_space<vmem>>, vector<2x64xbf16>
    tpu.vector_store %arg15[%c0_257, %c3200], %382 {strides = array<i32>} : memref<2x4096xbf16, #tpu.memory_space<vmem>>, vector<2x64xbf16>,
    %c0_258 = arith.constant 0 : index
    %c51 = arith.constant 51 : index
    %c0_259 = arith.constant 0 : index
    %384 = vector.load %arg14[%c0_258, %c51, %c0_259] : memref<2x64x64xbf16, #tpu.memory_space<vmem>>, vector<2x1x64xbf16>
    %385 = vector.shape_cast %384 : vector<2x1x64xbf16> to vector<2x64xbf16>
    %c0_260 = arith.constant 0 : index
    %c3264 = arith.constant 3264 : index
    %386 = vector.load %arg15[%c0_260, %c3264] : memref<2x4096xbf16, #tpu.memory_space<vmem>>, vector<2x64xbf16>
    tpu.vector_store %arg15[%c0_260, %c3264], %385 {strides = array<i32>} : memref<2x4096xbf16, #tpu.memory_space<vmem>>, vector<2x64xbf16>,
    %c0_261 = arith.constant 0 : index
    %c52 = arith.constant 52 : index
    %c0_262 = arith.constant 0 : index
    %387 = vector.load %arg14[%c0_261, %c52, %c0_262] : memref<2x64x64xbf16, #tpu.memory_space<vmem>>, vector<2x1x64xbf16>
    %388 = vector.shape_cast %387 : vector<2x1x64xbf16> to vector<2x64xbf16>
    %c0_263 = arith.constant 0 : index
    %c3328 = arith.constant 3328 : index
    %389 = vector.load %arg15[%c0_263, %c3328] : memref<2x4096xbf16, #tpu.memory_space<vmem>>, vector<2x64xbf16>
    tpu.vector_store %arg15[%c0_263, %c3328], %388 {strides = array<i32>} : memref<2x4096xbf16, #tpu.memory_space<vmem>>, vector<2x64xbf16>,
    %c0_264 = arith.constant 0 : index
    %c53 = arith.constant 53 : index
    %c0_265 = arith.constant 0 : index
    %390 = vector.load %arg14[%c0_264, %c53, %c0_265] : memref<2x64x64xbf16, #tpu.memory_space<vmem>>, vector<2x1x64xbf16>
    %391 = vector.shape_cast %390 : vector<2x1x64xbf16> to vector<2x64xbf16>
    %c0_266 = arith.constant 0 : index
    %c3392 = arith.constant 3392 : index
    %392 = vector.load %arg15[%c0_266, %c3392] : memref<2x4096xbf16, #tpu.memory_space<vmem>>, vector<2x64xbf16>
    tpu.vector_store %arg15[%c0_266, %c3392], %391 {strides = array<i32>} : memref<2x4096xbf16, #tpu.memory_space<vmem>>, vector<2x64xbf16>,
    %c0_267 = arith.constant 0 : index
    %c54 = arith.constant 54 : index
    %c0_268 = arith.constant 0 : index
    %393 = vector.load %arg14[%c0_267, %c54, %c0_268] : memref<2x64x64xbf16, #tpu.memory_space<vmem>>, vector<2x1x64xbf16>
    %394 = vector.shape_cast %393 : vector<2x1x64xbf16> to vector<2x64xbf16>
    %c0_269 = arith.constant 0 : index
    %c3456 = arith.constant 3456 : index
    %395 = vector.load %arg15[%c0_269, %c3456] : memref<2x4096xbf16, #tpu.memory_space<vmem>>, vector<2x64xbf16>
    tpu.vector_store %arg15[%c0_269, %c3456], %394 {strides = array<i32>} : memref<2x4096xbf16, #tpu.memory_space<vmem>>, vector<2x64xbf16>,
    %c0_270 = arith.constant 0 : index
    %c55 = arith.constant 55 : index
    %c0_271 = arith.constant 0 : index
    %396 = vector.load %arg14[%c0_270, %c55, %c0_271] : memref<2x64x64xbf16, #tpu.memory_space<vmem>>, vector<2x1x64xbf16>
    %397 = vector.shape_cast %396 : vector<2x1x64xbf16> to vector<2x64xbf16>
    %c0_272 = arith.constant 0 : index
    %c3520 = arith.constant 3520 : index
    %398 = vector.load %arg15[%c0_272, %c3520] : memref<2x4096xbf16, #tpu.memory_space<vmem>>, vector<2x64xbf16>
    tpu.vector_store %arg15[%c0_272, %c3520], %397 {strides = array<i32>} : memref<2x4096xbf16, #tpu.memory_space<vmem>>, vector<2x64xbf16>,
    %c0_273 = arith.constant 0 : index
    %c56 = arith.constant 56 : index
    %c0_274 = arith.constant 0 : index
    %399 = vector.load %arg14[%c0_273, %c56, %c0_274] : memref<2x64x64xbf16, #tpu.memory_space<vmem>>, vector<2x1x64xbf16>
    %400 = vector.shape_cast %399 : vector<2x1x64xbf16> to vector<2x64xbf16>
    %c0_275 = arith.constant 0 : index
    %c3584 = arith.constant 3584 : index
    %401 = vector.load %arg15[%c0_275, %c3584] : memref<2x4096xbf16, #tpu.memory_space<vmem>>, vector<2x64xbf16>
    tpu.vector_store %arg15[%c0_275, %c3584], %400 {strides = array<i32>} : memref<2x4096xbf16, #tpu.memory_space<vmem>>, vector<2x64xbf16>,
    %c0_276 = arith.constant 0 : index
    %c57 = arith.constant 57 : index
    %c0_277 = arith.constant 0 : index
    %402 = vector.load %arg14[%c0_276, %c57, %c0_277] : memref<2x64x64xbf16, #tpu.memory_space<vmem>>, vector<2x1x64xbf16>
    %403 = vector.shape_cast %402 : vector<2x1x64xbf16> to vector<2x64xbf16>
    %c0_278 = arith.constant 0 : index
    %c3648 = arith.constant 3648 : index
    %404 = vector.load %arg15[%c0_278, %c3648] : memref<2x4096xbf16, #tpu.memory_space<vmem>>, vector<2x64xbf16>
    tpu.vector_store %arg15[%c0_278, %c3648], %403 {strides = array<i32>} : memref<2x4096xbf16, #tpu.memory_space<vmem>>, vector<2x64xbf16>,
    %c0_279 = arith.constant 0 : index
    %c58 = arith.constant 58 : index
    %c0_280 = arith.constant 0 : index
    %405 = vector.load %arg14[%c0_279, %c58, %c0_280] : memref<2x64x64xbf16, #tpu.memory_space<vmem>>, vector<2x1x64xbf16>
    %406 = vector.shape_cast %405 : vector<2x1x64xbf16> to vector<2x64xbf16>
    %c0_281 = arith.constant 0 : index
    %c3712 = arith.constant 3712 : index
    %407 = vector.load %arg15[%c0_281, %c3712] : memref<2x4096xbf16, #tpu.memory_space<vmem>>, vector<2x64xbf16>
    tpu.vector_store %arg15[%c0_281, %c3712], %406 {strides = array<i32>} : memref<2x4096xbf16, #tpu.memory_space<vmem>>, vector<2x64xbf16>,
    %c0_282 = arith.constant 0 : index
    %c59 = arith.constant 59 : index
    %c0_283 = arith.constant 0 : index
    %408 = vector.load %arg14[%c0_282, %c59, %c0_283] : memref<2x64x64xbf16, #tpu.memory_space<vmem>>, vector<2x1x64xbf16>
    %409 = vector.shape_cast %408 : vector<2x1x64xbf16> to vector<2x64xbf16>
    %c0_284 = arith.constant 0 : index
    %c3776 = arith.constant 3776 : index
    %410 = vector.load %arg15[%c0_284, %c3776] : memref<2x4096xbf16, #tpu.memory_space<vmem>>, vector<2x64xbf16>
    tpu.vector_store %arg15[%c0_284, %c3776], %409 {strides = array<i32>} : memref<2x4096xbf16, #tpu.memory_space<vmem>>, vector<2x64xbf16>,
    %c0_285 = arith.constant 0 : index
    %c60 = arith.constant 60 : index
    %c0_286 = arith.constant 0 : index
    %411 = vector.load %arg14[%c0_285, %c60, %c0_286] : memref<2x64x64xbf16, #tpu.memory_space<vmem>>, vector<2x1x64xbf16>
    %412 = vector.shape_cast %411 : vector<2x1x64xbf16> to vector<2x64xbf16>
    %c0_287 = arith.constant 0 : index
    %c3840 = arith.constant 3840 : index
    %413 = vector.load %arg15[%c0_287, %c3840] : memref<2x4096xbf16, #tpu.memory_space<vmem>>, vector<2x64xbf16>
    tpu.vector_store %arg15[%c0_287, %c3840], %412 {strides = array<i32>} : memref<2x4096xbf16, #tpu.memory_space<vmem>>, vector<2x64xbf16>,
    %c0_288 = arith.constant 0 : index
    %c61 = arith.constant 61 : index
    %c0_289 = arith.constant 0 : index
    %414 = vector.load %arg14[%c0_288, %c61, %c0_289] : memref<2x64x64xbf16, #tpu.memory_space<vmem>>, vector<2x1x64xbf16>
    %415 = vector.shape_cast %414 : vector<2x1x64xbf16> to vector<2x64xbf16>
    %c0_290 = arith.constant 0 : index
    %c3904 = arith.constant 3904 : index
    %416 = vector.load %arg15[%c0_290, %c3904] : memref<2x4096xbf16, #tpu.memory_space<vmem>>, vector<2x64xbf16>
    tpu.vector_store %arg15[%c0_290, %c3904], %415 {strides = array<i32>} : memref<2x4096xbf16, #tpu.memory_space<vmem>>, vector<2x64xbf16>,
    %c0_291 = arith.constant 0 : index
    %c62 = arith.constant 62 : index
    %c0_292 = arith.constant 0 : index
    %417 = vector.load %arg14[%c0_291, %c62, %c0_292] : memref<2x64x64xbf16, #tpu.memory_space<vmem>>, vector<2x1x64xbf16>
    %418 = vector.shape_cast %417 : vector<2x1x64xbf16> to vector<2x64xbf16>
    %c0_293 = arith.constant 0 : index
    %c3968 = arith.constant 3968 : index
    %419 = vector.load %arg15[%c0_293, %c3968] : memref<2x4096xbf16, #tpu.memory_space<vmem>>, vector<2x64xbf16>
    tpu.vector_store %arg15[%c0_293, %c3968], %418 {strides = array<i32>} : memref<2x4096xbf16, #tpu.memory_space<vmem>>, vector<2x64xbf16>,
    %c0_294 = arith.constant 0 : index
    %c63 = arith.constant 63 : index
    %c0_295 = arith.constant 0 : index
    %420 = vector.load %arg14[%c0_294, %c63, %c0_295] : memref<2x64x64xbf16, #tpu.memory_space<vmem>>, vector<2x1x64xbf16>
    %421 = vector.shape_cast %420 : vector<2x1x64xbf16> to vector<2x64xbf16>
    %c0_296 = arith.constant 0 : index
    %c4032 = arith.constant 4032 : index
    %422 = vector.load %arg15[%c0_296, %c4032] : memref<2x4096xbf16, #tpu.memory_space<vmem>>, vector<2x64xbf16>
    tpu.vector_store %arg15[%c0_296, %c4032], %421 {strides = array<i32>} : memref<2x4096xbf16, #tpu.memory_space<vmem>>, vector<2x64xbf16>,
    %c0_297 = arith.constant 0 : index
    %c0_298 = arith.constant 0 : index
    %423 = vector.load %arg15[%c0_297, %c0_298] : memref<2x4096xbf16, #tpu.memory_space<vmem>>, vector<2x4096xbf16>
    %c0_299 = arith.constant 0 : index
    %c0_300 = arith.constant 0 : index
    %424 = vector.load %arg6[%c0_299, %c0_300] : memref<4096x128xbf16, #tpu.memory_space<vmem>>, vector<4096x128xbf16>
    %cst_301 = arith.constant dense<0.000000e+00> : vector<2x128xf32>
    %425 = tpu.matmul %423, %424, %cst_301 {dimension_numbers = #tpu.dot_dimension_numbers<[1], [0], [0], [1], [0, 0, 1, 1], [], []>} : vector<2x4096xbf16>, vector<4096x128xbf16>, vector<2x128xf32> -> vector<2x128xf32>
    %c0_302 = arith.constant 0 : index
    %c0_303 = arith.constant 0 : index
    %426 = vector.load %arg7[%c0_302, %c0_303] : memref<1x128xf32, #tpu.memory_space<vmem>>, vector<1x128xf32>
    %427 = vector.broadcast %426 : vector<1x128xf32> to vector<2x128xf32>
    %428 = arith.addf %425, %427 : vector<2x128xf32>
    %cst_304 = arith.constant 0.000000e+00 : f32
    %429 = vector.broadcast %cst_304 : f32 to vector<2x128xf32>
    %430 = arith.maximumf %428, %429 : vector<2x128xf32>
    %431 = arith.truncf %430 : vector<2x128xf32> to vector<2x128xbf16>
    %c0_305 = arith.constant 0 : index
    %c0_306 = arith.constant 0 : index
    %432 = vector.load %arg8[%c0_305, %c0_306] : memref<128x64xbf16, #tpu.memory_space<vmem>>, vector<128x64xbf16>
    %cst_307 = arith.constant dense<0.000000e+00> : vector<2x64xf32>
    %433 = tpu.matmul %431, %432, %cst_307 {dimension_numbers = #tpu.dot_dimension_numbers<[1], [0], [0], [1], [0, 0, 1, 1], [], []>} : vector<2x128xbf16>, vector<128x64xbf16>, vector<2x64xf32> -> vector<2x64xf32>
    %c0_308 = arith.constant 0 : index
    %c0_309 = arith.constant 0 : index
    %434 = vector.load %arg9[%c0_308, %c0_309] : memref<1x64xf32, #tpu.memory_space<vmem>>, vector<1x64xf32>
    %435 = vector.broadcast %434 : vector<1x64xf32> to vector<2x64xf32>
    %436 = arith.addf %433, %435 : vector<2x64xf32>
    %cst_310 = arith.constant 0.000000e+00 : f32
    %437 = vector.broadcast %cst_310 : f32 to vector<2x64xf32>
    %438 = arith.maximumf %436, %437 : vector<2x64xf32>
    %439 = arith.truncf %438 : vector<2x64xf32> to vector<2x64xbf16>
    %c0_311 = arith.constant 0 : index
    %c0_312 = arith.constant 0 : index
    %440 = vector.load %arg10[%c0_311, %c0_312] : memref<64x4xbf16, #tpu.memory_space<vmem>>, vector<64x4xbf16>
    %cst_313 = arith.constant dense<0.000000e+00> : vector<2x4xf32>
    %441 = tpu.matmul %439, %440, %cst_313 {dimension_numbers = #tpu.dot_dimension_numbers<[1], [0], [0], [1], [0, 0, 1, 1], [], []>} : vector<2x64xbf16>, vector<64x4xbf16>, vector<2x4xf32> -> vector<2x4xf32>
    %c0_314 = arith.constant 0 : index
    %c0_315 = arith.constant 0 : index
    %442 = vector.load %arg11[%c0_314, %c0_315] : memref<1x4xf32, #tpu.memory_space<vmem>>, vector<1x4xf32>
    %443 = vector.broadcast %442 : vector<1x4xf32> to vector<2x4xf32>
    %444 = arith.addf %441, %443 : vector<2x4xf32>
    %c0_316 = arith.constant 0 : index
    %c0_317 = arith.constant 0 : index
    %445 = vector.load %arg12[%c0_316, %c0_317] : memref<2x4xf32, #tpu.memory_space<vmem>>, vector<2x4xf32>
    tpu.vector_store %arg12[%c0_316, %c0_317], %444 {strides = array<i32>} : memref<2x4xf32, #tpu.memory_space<vmem>>, vector<2x4xf32>,
    return
  }
  func.func @transform_0(%arg0: i32) -> (i32, i32) {
    %c0_i32 = arith.constant 0 : i32
    %c0_i32_0 = arith.constant 0 : i32
    %c0_i32_1 = arith.constant 0 : i32
    return %c0_i32, %c0_i32_0 : i32, i32
  }
  func.func @transform_1(%arg0: i32) -> (i32, i32) {
    %c0_i32 = arith.constant 0 : i32
    %c0_i32_0 = arith.constant 0 : i32
    %c0_i32_1 = arith.constant 0 : i32
    return %c0_i32, %c0_i32_0 : i32, i32
  }
  func.func @transform_2(%arg0: i32) -> (i32, i32) {
    %c0_i32 = arith.constant 0 : i32
    %c0_i32_0 = arith.constant 0 : i32
    %c0_i32_1 = arith.constant 0 : i32
    return %c0_i32, %c0_i32_0 : i32, i32
  }
  func.func @transform_3(%arg0: i32) -> (i32, i32) {
    %c0_i32 = arith.constant 0 : i32
    %c0_i32_0 = arith.constant 0 : i32
    %c0_i32_1 = arith.constant 0 : i32
    return %c0_i32, %c0_i32_0 : i32, i32
  }
  func.func @transform_4(%arg0: i32) -> (i32, i32) {
    %c0_i32 = arith.constant 0 : i32
    %c0_i32_0 = arith.constant 0 : i32
    %c0_i32_1 = arith.constant 0 : i32
    return %c0_i32, %c0_i32_0 : i32, i32
  }
  func.func @transform_5(%arg0: i32) -> (i32, i32) {
    %c0_i32 = arith.constant 0 : i32
    %c0_i32_0 = arith.constant 0 : i32
    %c0_i32_1 = arith.constant 0 : i32
    return %c0_i32, %c0_i32_0 : i32, i32
  }
  func.func @transform_6(%arg0: i32) -> (i32, i32) {
    %c0_i32 = arith.constant 0 : i32
    %c0_i32_0 = arith.constant 0 : i32
    %c0_i32_1 = arith.constant 0 : i32
    return %c0_i32, %c0_i32_0 : i32, i32
  }
  func.func @transform_7(%arg0: i32) -> (i32, i32) {
    %c0_i32 = arith.constant 0 : i32
    %c0_i32_0 = arith.constant 0 : i32
    %c0_i32_1 = arith.constant 0 : i32
    return %c0_i32, %c0_i32_0 : i32, i32
  }
  func.func @transform_8(%arg0: i32) -> (i32, i32) {
    %c0_i32 = arith.constant 0 : i32
    %c0_i32_0 = arith.constant 0 : i32
    %c0_i32_1 = arith.constant 0 : i32
    return %c0_i32, %c0_i32_0 : i32, i32
  }
  func.func @transform_9(%arg0: i32) -> (i32, i32) {
    %c0_i32 = arith.constant 0 : i32
    %c0_i32_0 = arith.constant 0 : i32
    %c0_i32_1 = arith.constant 0 : i32
    return %c0_i32, %c0_i32_0 : i32, i32
  }
  func.func @transform_10(%arg0: i32) -> (i32, i32) {
    %c0_i32 = arith.constant 0 : i32
    %c0_i32_0 = arith.constant 0 : i32
    %c0_i32_1 = arith.constant 0 : i32
    return %c0_i32, %c0_i32_0 : i32, i32
  }
  func.func @transform_11(%arg0: i32) -> (i32, i32) {
    %c0_i32 = arith.constant 0 : i32
    %c0_i32_0 = arith.constant 0 : i32
    %c0_i32_1 = arith.constant 0 : i32
    return %c0_i32, %c0_i32_0 : i32, i32
  }
}

</mosaic_0001>

<llo_original>
// kernel: tpu_custom_call.1
$region0: #{tpu_custom_call.1}
  #allocation0 [shape = 'u32[]', space=smem, size = 0x4, offset = 0x4, fixed_abs, tag = 'smem constant byte address 0x4 - core index']
  #allocation1 [shape = 'u32[144,128]{1,0:T(1,128)}', space=vmem, size = 0x12000, scoped, tag = 'internal scratch']
  #allocation2 [shape = 'f32[146,32]{1,0:T(8,128)}', space=vmem, size = 0x13000, scoped, tag = 'scratch operand']
  #allocation3 [shape = 'bf16[2,64,64]{2,1,0:T(8,128)(2,1)}', space=vmem, size = 0x8000, scoped, tag = 'scratch operand']
  #allocation4 [shape = 'bf16[2,4096]{1,0:T(2,128)(2,1)}', space=vmem, size = 0x4000, scoped, tag = 'scratch operand']
  %s0 = inlined_call_operand.vmem [shape: bf16[128,36], index: 0, kind: input, shape index: {}]
  %s1 = inlined_call_operand.vmem [shape: bf16[36,32], index: 1, kind: input, shape index: {}]
  %s2 = inlined_call_operand.vmem [shape: f32[1,32], index: 2, kind: input, shape index: {}]
  %s3 = inlined_call_operand.vmem [shape: bf16[288,64], index: 3, kind: input, shape index: {}]
  %s4 = inlined_call_operand.vmem [shape: f32[1,64], index: 4, kind: input, shape index: {}]
  %s5 = inlined_call_operand.hbm [shape: bf16[4096,128], index: 5, kind: input, shape index: {}]
  %s6 = inlined_call_operand.vmem [shape: f32[1,128], index: 6, kind: input, shape index: {}]
  %s7 = inlined_call_operand.vmem [shape: bf16[128,64], index: 7, kind: input, shape index: {}]
  %s8 = inlined_call_operand.vmem [shape: f32[1,64], index: 8, kind: input, shape index: {}]
  %s9 = inlined_call_operand.vmem [shape: bf16[64,4], index: 9, kind: input, shape index: {}]
  %s10 = inlined_call_operand.vmem [shape: f32[1,4], index: 10, kind: input, shape index: {}]
  %s11 = inlined_call_operand.hbm [shape: f32[2,4], index: 11, kind: output, shape index: {}]
  %s12 = sld [smem:[#allocation0]]
  $region58: #{tpu_custom_call.1} parent=0
    _
  %s14 = ssub.s32 1, %s12
  %s15 = scalar_select 0, %s14, %s12
  $region1: #{tpu_custom_call.1} parent=0
    #allocation5 [shape = 'u8[1048576]{0}', space=vmem, size = 0x100000, scoped, tag = 'input window, operand 5, single buffered']
    #allocation6 [shape = 's32[1]{0}', space=sflag, size = 0x4, scoped, tag = 'scoped memory for tpu_custom_call.1']
    #allocation7 [shape = 's32[1]{0}', space=sflag, size = 0x4, scoped, tag = 'scoped memory for tpu_custom_call.1']
    #allocation8 [shape = 'u8[1024]{0}', space=vmem, size = 0x400, scoped, tag = 'output window, operand 0, single buffered']
    %16 = vsyncpa [#allocation6], 0
    %17 = vsyncpa [#allocation7], 0
    // Predicated region
    $region2: #{tpu_custom_call.1} parent=1 // pred_check
      _
    $region3: #{tpu_custom_call.1} parent=1 // pred_check_branch
      %19 = sbr.rel (0) target = $region5
    $region4: #{tpu_custom_call.1} parent=1 // pred_region
      _
    $region5: #{tpu_custom_call.1} parent=1 // pred_fallthru
      _
    // Predicated region
    $region6: #{tpu_custom_call.1} parent=1 // pred_check
      _
    $region7: #{tpu_custom_call.1} parent=1 // pred_check_branch
      %21 = sbr.rel (0) target = $region9
    $region8: #{tpu_custom_call.1} parent=1 // pred_region
      _
    $region9: #{tpu_custom_call.1} parent=1 // pred_fallthru
      _
    // Predicated region
    $region10: #{tpu_custom_call.1} parent=1 // pred_check
      _
    $region11: #{tpu_custom_call.1} parent=1 // pred_check_branch
      %23 = sbr.rel (0) target = $region13
    $region12: #{tpu_custom_call.1} parent=1 // pred_region
      _
    $region13: #{tpu_custom_call.1} parent=1 // pred_fallthru
      _
    // Predicated region
    $region14: #{tpu_custom_call.1} parent=1 // pred_check
      _
    $region15: #{tpu_custom_call.1} parent=1 // pred_check_branch
      %25 = sbr.rel (0) target = $region17
    $region16: #{tpu_custom_call.1} parent=1 // pred_region
      _
    $region17: #{tpu_custom_call.1} parent=1 // pred_fallthru
      _
    // Predicated region
    $region18: #{tpu_custom_call.1} parent=1 // pred_check
      _
    $region19: #{tpu_custom_call.1} parent=1 // pred_check_branch
      %27 = sbr.rel (0) target = $region21
    $region20: #{tpu_custom_call.1} parent=1 // pred_region
      _
    $region21: #{tpu_custom_call.1} parent=1 // pred_fallthru
      _
    // Predicated region
    $region22: #{tpu_custom_call.1} parent=1 // pred_check
      _
    $region23: #{tpu_custom_call.1} parent=1 // pred_check_branch
      %29 = sbr.rel (0) target = $region25
    $region24: #{tpu_custom_call.1} parent=1 // pred_region
      %s31 = ssub.s32 32768, 32768
      %32 = vsyncadd [#allocation6], %s31
      %s33 = sshll.u32 [#allocation5], 4
      %s34 = int_to_ptr.vmem [resolvable:$true] %s33
      %39 = dma.hbm_to_vmem [thread:$0]  %s5, 32768, %s34, [#allocation6], 64, 64, 4
    $region25: #{tpu_custom_call.1} parent=1 // pred_fallthru
      _
    // Predicated region
    $region26: #{tpu_custom_call.1} parent=1 // pred_check
      _
    $region27: #{tpu_custom_call.1} parent=1 // pred_check_branch
      %41 = sbr.rel (0) target = $region29
    $region28: #{tpu_custom_call.1} parent=1 // pred_region
      _
    $region29: #{tpu_custom_call.1} parent=1 // pred_fallthru
      _
    // Predicated region
    $region30: #{tpu_custom_call.1} parent=1 // pred_check
      _
    $region31: #{tpu_custom_call.1} parent=1 // pred_check_branch
      %43 = sbr.rel (0) target = $region33
    $region32: #{tpu_custom_call.1} parent=1 // pred_region
      _
    $region33: #{tpu_custom_call.1} parent=1 // pred_fallthru
      _
    // Predicated region
    $region34: #{tpu_custom_call.1} parent=1 // pred_check
      _
    $region35: #{tpu_custom_call.1} parent=1 // pred_check_branch
      %45 = sbr.rel (0) target = $region37
    $region36: #{tpu_custom_call.1} parent=1 // pred_region
      _
    $region37: #{tpu_custom_call.1} parent=1 // pred_fallthru
      _
    // Predicated region
    $region38: #{tpu_custom_call.1} parent=1 // pred_check
      _
    $region39: #{tpu_custom_call.1} parent=1 // pred_check_branch
      %47 = sbr.rel (0) target = $region41
    $region40: #{tpu_custom_call.1} parent=1 // pred_region
      _
    $region41: #{tpu_custom_call.1} parent=1 // pred_fallthru
      _
    // Predicated region
    $region42: #{tpu_custom_call.1} parent=1 // pred_check
      _
    $region43: #{tpu_custom_call.1} parent=1 // pred_check_branch
      %49 = sbr.rel (0) target = $region45
    $region44: #{tpu_custom_call.1} parent=1 // pred_region
      _
    $region45: #{tpu_custom_call.1} parent=1 // pred_fallthru
      _
    // Predicated region
    $region46: #{tpu_custom_call.1} parent=1 // pred_check
      _
    $region47: #{tpu_custom_call.1} parent=1 // pred_check_branch
      %51 = sbr.rel (0) target = $region49
    $region48: #{tpu_custom_call.1} parent=1 // pred_region
      %52 = dma.done [#allocation6], 32768
    $region49: #{tpu_custom_call.1} parent=1 // pred_fallthru
      _
    %v54 = vld [vmem:[%s0] sm:$0xf]
    %v55 = vld [vmem:[%s0 + $0x4] sm:$0xf]
    %v56 = vld [vmem:[%s0 + $0x8] sm:$0xf]
    %v57 = vld [vmem:[%s0 + $0xc] sm:$0xf]
    %v58 = vld [vmem:[%s0 + $0x10] sm:$0xf]
    %v59 = vld [vmem:[%s0 + $0x14] sm:$0xf]
    %v60 = vld [vmem:[%s0 + $0x18] sm:$0xf]
    %v61 = vld [vmem:[%s0 + $0x1c] sm:$0xf]
    %v62 = vld [vmem:[%s0 + $0x20] sm:$0xf]
    %v63 = vld [vmem:[%s0 + $0x24] sm:$0xf]
    %v64 = vld [vmem:[%s0 + $0x28] sm:$0xf]
    %v65 = vld [vmem:[%s0 + $0x2c] sm:$0xf]
    %v66 = vld [vmem:[%s0 + $0x30] sm:$0xf]
    %v67 = vld [vmem:[%s0 + $0x34] sm:$0xf]
    %v68 = vld [vmem:[%s0 + $0x38] sm:$0xf]
    %v69 = vld [vmem:[%s0 + $0x3c] sm:$0xf]
    %v70 = vld [vmem:[%s1] sm:$0xf]
    %v71 = vld [vmem:[%s1 + $0x4] sm:$0xf]
    %v72 = vld [vmem:[%s1 + $0x8] sm:$0xf]
    %v73 = vld [vmem:[%s1 + $0xc] sm:$0xf]
    %v74 = vld [vmem:[%s1 + $0x10] sm:$0x3]
    %v75 = vld [vmem:[%s2] sm:$0x1]
    %v77 = vlaneseq
    %v78 = vshrl.u32 %v77, 7
    %v79 = vsub.s32 0, %v78
    %v80 = vrot.slane %v75, %v79
    %v98 = vunpack.c.l.b16 %v54
    %v99 = vunpack.c.l.b16 %v55
    %v100 = vunpack.c.l.b16 %v56
    %v101 = vunpack.c.l.b16 %v57
    %v102 = vunpack.c.l.b16 %v58
    %v103 = vunpack.c.l.b16 %v59
    %v104 = vunpack.c.l.b16 %v60
    %v105 = vunpack.c.l.b16 %v61
    %v106 = vunpack.c.l.b16 %v62
    %v107 = vunpack.c.l.b16 %v63
    %v108 = vunpack.c.l.b16 %v64
    %v109 = vunpack.c.l.b16 %v65
    %v110 = vunpack.c.l.b16 %v66
    %v111 = vunpack.c.l.b16 %v67
    %v112 = vunpack.c.l.b16 %v68
    %v113 = vunpack.c.l.b16 %v69
    %v114 = vpack.c.b16 %v99, %v98
    %v115 = vpack.c.b16 %v101, %v100
    %v116 = vpack.c.b16 %v103, %v102
    %v117 = vpack.c.b16 %v105, %v104
    %v118 = vpack.c.b16 %v107, %v106
    %v119 = vpack.c.b16 %v109, %v108
    %v120 = vpack.c.b16 %v111, %v110
    %v121 = vpack.c.b16 %v113, %v112
    %v127 = vunpack.c.l.b16 %v70
    %v128 = vunpack.c.l.b16 %v71
    %v129 = vunpack.c.l.b16 %v72
    %v130 = vunpack.c.l.b16 %v73
    %v131 = vunpack.c.l.b16 %v74
    %v132 = vpack.c.b16 %v128, %v127
    %v133 = vpack.c.b16 %v130, %v129
    %v134 = vpack.c.b16 %v131, %v131
    %vm137 = vcmask 293888
    %v139 = vsel %vm137, %v114, 0
    %v142 = vsel %vm137, %v115, 0
    %v145 = vsel %vm137, %v116, 0
    %v148 = vsel %vm137, %v117, 0
    %v151 = vsel %vm137, %v118, 0
    %v154 = vsel %vm137, %v119, 0
    %v157 = vsel %vm137, %v120, 0
    %v160 = vsel %vm137, %v121, 0
    %vm162 = vcmask 1041408
    %v164 = vsel %vm162, %v134, 0
    %166 = vmatprep.subr.bf16.mxu0 0
    %167 = vmatpush1.bf16.msra.mxu0 0
    %168 = vmatprep.subr.bf16.mxu0 0
    %169 = vmatpush1.bf16.msra.mxu0 0
    %170 = vmatprep.subr.bf16.mxu0 0
    %171 = vmatpush1.bf16.msra.mxu0 0
    %172 = vmatprep.subr.bf16.mxu0 0
    %173 = vmatpush1.bf16.msra.mxu0 0
    %174 = vmatprep.subr.bf16.mxu0 0
    %175 = vmatpush1.bf16.msra.mxu0 0
    %176 = vmatprep.subr.bf16.mxu0 0
    %177 = vmatpush1.bf16.msra.mxu0 %v164
    %178 = vmatprep.subr.bf16.mxu0 0
    %179 = vmatpush1.bf16.msra.mxu0 %v133
    %180 = vmatprep.subr.bf16.mxu0 0
    %181 = vmatpush1.bf16.msra.mxu0 %v132
    %182 = vmatprep.subr.bf16.mxu0 0
    %183 = vmatpush2.bf16.msra.mxu0 0
    %184 = vmatprep.subr.bf16.mxu0 0
    %185 = vmatpush2.bf16.msra.mxu0 0
    %186 = vmatprep.subr.bf16.mxu0 0
    %187 = vmatpush2.bf16.msra.mxu0 0
    %188 = vmatprep.subr.bf16.mxu0 0
    %189 = vmatpush2.bf16.msra.mxu0 0
    %190 = vmatprep.subr.bf16.mxu0 0
    %191 = vmatpush2.bf16.msra.mxu0 0
    %192 = vmatprep.subr.bf16.mxu0 0
    %193 = vmatpush2.bf16.msra.mxu0 0
    %194 = vmatprep.subr.bf16.mxu0 0
    %195 = vmatpush2.bf16.msra.mxu0 0
    %196 = vmatprep.subr.bf16.mxu0 0
    %197 = vmatpush2.bf16.msra.mxu0 0
    %198 = vmatprep.mubr.bf16.mxu0 0
    %199 = vmatmul.mubr.bf16.gmra.mxu0 %v139
    %v200 = vpop.f32.mrf.mxu0
    %v201 = vadd.f32 %v80, %v200
    %v202 = vpop.f32.mrf.mxu0
    %v203 = vpop.f32.mrf.mxu0
    %v204 = vadd.f32 %v80, %v203
    %v205 = vpop.f32.mrf.mxu0
    %206 = vmatprep.mubr.bf16.mxu0 0
    %207 = vmatmul.mubr.bf16.gmra.mxu0 %v142
    %v208 = vpop.f32.mrf.mxu0
    %v209 = vadd.f32 %v80, %v208
    %v210 = vpop.f32.mrf.mxu0
    %v211 = vpop.f32.mrf.mxu0
    %v212 = vadd.f32 %v80, %v211
    %v213 = vpop.f32.mrf.mxu0
    %214 = vmatprep.mubr.bf16.mxu0 0
    %215 = vmatmul.mubr.bf16.gmra.mxu0 %v145
    %v216 = vpop.f32.mrf.mxu0
    %v217 = vadd.f32 %v80, %v216
    %v218 = vpop.f32.mrf.mxu0
    %v219 = vpop.f32.mrf.mxu0
    %v220 = vadd.f32 %v80, %v219
    %v221 = vpop.f32.mrf.mxu0
    %222 = vmatprep.mubr.bf16.mxu0 0
    %223 = vmatmul.mubr.bf16.gmra.mxu0 %v148
    %v224 = vpop.f32.mrf.mxu0
    %v225 = vadd.f32 %v80, %v224
    %v226 = vpop.f32.mrf.mxu0
    %v227 = vpop.f32.mrf.mxu0
    %v228 = vadd.f32 %v80, %v227
    %v229 = vpop.f32.mrf.mxu0
    %230 = vmatprep.mubr.bf16.mxu0 0
    %231 = vmatmul.mubr.bf16.gmra.mxu0 %v151
    %v232 = vpop.f32.mrf.mxu0
    %v233 = vadd.f32 %v80, %v232
    %v234 = vpop.f32.mrf.mxu0
    %v235 = vpop.f32.mrf.mxu0
    %v236 = vadd.f32 %v80, %v235
    %v237 = vpop.f32.mrf.mxu0
    %238 = vmatprep.mubr.bf16.mxu0 0
    %239 = vmatmul.mubr.bf16.gmra.mxu0 %v154
    %v240 = vpop.f32.mrf.mxu0
    %v241 = vadd.f32 %v80, %v240
    %v242 = vpop.f32.mrf.mxu0
    %v243 = vpop.f32.mrf.mxu0
    %v244 = vadd.f32 %v80, %v243
    %v245 = vpop.f32.mrf.mxu0
    %246 = vmatprep.mubr.bf16.mxu0 0
    %247 = vmatmul.mubr.bf16.gmra.mxu0 %v157
    %v248 = vpop.f32.mrf.mxu0
    %v249 = vadd.f32 %v80, %v248
    %v250 = vpop.f32.mrf.mxu0
    %v251 = vpop.f32.mrf.mxu0
    %v252 = vadd.f32 %v80, %v251
    %v253 = vpop.f32.mrf.mxu0
    %254 = vmatprep.mubr.bf16.mxu0 0
    %255 = vmatmul.mubr.bf16.gmra.mxu0 %v160
    %v256 = vpop.f32.mrf.mxu0
    %v257 = vadd.f32 %v80, %v256
    %v258 = vpop.f32.mrf.mxu0
    %v259 = vpop.f32.mrf.mxu0
    %v260 = vadd.f32 %v80, %v259
    %v261 = vpop.f32.mrf.mxu0
    %262 = vdwg.mxu0
    %v263 = vmax.f32 %v201, 0.0
    %v264 = vmax.f32 %v204, 0.0
    %v265 = vmax.f32 %v209, 0.0
    %v266 = vmax.f32 %v212, 0.0
    %v267 = vmax.f32 %v217, 0.0
    %v268 = vmax.f32 %v220, 0.0
    %v269 = vmax.f32 %v225, 0.0
    %v270 = vmax.f32 %v228, 0.0
    %v271 = vmax.f32 %v233, 0.0
    %v272 = vmax.f32 %v236, 0.0
    %v273 = vmax.f32 %v241, 0.0
    %v274 = vmax.f32 %v244, 0.0
    %v275 = vmax.f32 %v249, 0.0
    %v276 = vmax.f32 %v252, 0.0
    %v277 = vmax.f32 %v257, 0.0
    %v278 = vmax.f32 %v260, 0.0
    %vm279 = vcmask 261120
    %280 = vst.msk [vmem:[#allocation2] sm:$0xff] %vm279, 0.0
    %vm281 = vcmask 253952
    %282 = vst.msk [vmem:[#allocation2 + $0x8] sm:$0x1] %vm281, 0.0
    %283 = vst.msk [vmem:[#allocation2 + $0x89] sm:$0xff] %vm279, 0.0
    %284 = vst.msk [vmem:[#allocation2 + $0x91] sm:$0x1] %vm281, 0.0
    %285 = vst.msk [vmem:[#allocation2 + $0x9] sm:$0xff] %vm279, %v263
    %286 = vst.msk [vmem:[#allocation2 + $0x11] sm:$0xff] %vm279, %v264
    %287 = vst.msk [vmem:[#allocation2 + $0x19] sm:$0xff] %vm279, %v265
    %288 = vst.msk [vmem:[#allocation2 + $0x21] sm:$0xff] %vm279, %v266
    %289 = vst.msk [vmem:[#allocation2 + $0x29] sm:$0xff] %vm279, %v267
    %290 = vst.msk [vmem:[#allocation2 + $0x31] sm:$0xff] %vm279, %v268
    %291 = vst.msk [vmem:[#allocation2 + $0x39] sm:$0xff] %vm279, %v269
    %292 = vst.msk [vmem:[#allocation2 + $0x41] sm:$0xff] %vm279, %v270
    %293 = vst.msk [vmem:[#allocation2 + $0x49] sm:$0xff] %vm279, %v271
    %294 = vst.msk [vmem:[#allocation2 + $0x51] sm:$0xff] %vm279, %v272
    %295 = vst.msk [vmem:[#allocation2 + $0x59] sm:$0xff] %vm279, %v273
    %296 = vst.msk [vmem:[#allocation2 + $0x61] sm:$0xff] %vm279, %v274
    %297 = vst.msk [vmem:[#allocation2 + $0x69] sm:$0xff] %vm279, %v275
    %298 = vst.msk [vmem:[#allocation2 + $0x71] sm:$0xff] %vm279, %v276
    %299 = vst.msk [vmem:[#allocation2 + $0x79] sm:$0xff] %vm279, %v277
    %300 = vst.msk [vmem:[#allocation2 + $0x81] sm:$0xff] %vm279, %v278
    %v301 = vlaneseq
    %v302 = vshrl.u32 %v301, 7
    %v303 = vadd.s32 %v302, 8
    %v304 = vadd.s32 %v302, 16
    %v305 = vadd.s32 %v302, 24
    %v306 = vadd.s32 %v302, 32
    %v307 = vadd.s32 %v302, 40
    %v308 = vadd.s32 %v302, 48
    %v309 = vadd.s32 %v302, 56
    %v310 = vadd.s32 %v302, 64
    %v311 = vadd.s32 %v302, 72
    %v312 = vadd.s32 %v302, 80
    %v313 = vadd.s32 %v302, 88
    %v314 = vadd.s32 %v302, 96
    %v315 = vadd.s32 %v302, 104
    %v316 = vadd.s32 %v302, 112
    %v317 = vadd.s32 %v302, 120
    %v318 = vand.u32 %v302, 63
    %v319 = vand.u32 %v303, 63
    %v320 = vand.u32 %v304, 63
    %v321 = vand.u32 %v305, 63
    %v322 = vand.u32 %v306, 63
    %v323 = vand.u32 %v307, 63
    %v324 = vand.u32 %v308, 63
    %v325 = vand.u32 %v309, 63
    %v326 = vand.u32 %v310, 63
    %v327 = vand.u32 %v311, 63
    %v328 = vand.u32 %v312, 63
    %v329 = vand.u32 %v313, 63
    %v330 = vand.u32 %v314, 63
    %v331 = vand.u32 %v315, 63
    %v332 = vand.u32 %v316, 63
    %v333 = vand.u32 %v317, 63
    %v334 = vand.u32 %v318, 7
    %v335 = vand.u32 %v319, 7
    %v336 = vand.u32 %v320, 7
    %v337 = vand.u32 %v321, 7
    %v338 = vand.u32 %v322, 7
    %v339 = vand.u32 %v323, 7
    %v340 = vand.u32 %v324, 7
    %v341 = vand.u32 %v325, 7
    %v342 = vand.u32 %v326, 7
    %v343 = vand.u32 %v327, 7
    %v344 = vand.u32 %v328, 7
    %v345 = vand.u32 %v329, 7
    %v346 = vand.u32 %v330, 7
    %v347 = vand.u32 %v331, 7
    %v348 = vand.u32 %v332, 7
    %v349 = vand.u32 %v333, 7
    %v350 = vshra.s32 %v318, 3
    %v351 = vshra.s32 %v319, 3
    %v352 = vshra.s32 %v320, 3
    %v353 = vshra.s32 %v321, 3
    %v354 = vshra.s32 %v322, 3
    %v355 = vshra.s32 %v323, 3
    %v356 = vshra.s32 %v324, 3
    %v357 = vshra.s32 %v325, 3
    %v358 = vshra.s32 %v326, 3
    %v359 = vshra.s32 %v327, 3
    %v360 = vshra.s32 %v328, 3
    %v361 = vshra.s32 %v329, 3
    %v362 = vshra.s32 %v330, 3
    %v363 = vshra.s32 %v331, 3
    %v364 = vshra.s32 %v332, 3
    %v365 = vshra.s32 %v333, 3
    %v366 = vld [vmem:[#allocation2] sm:$0xff]
    %v367 = vld [vmem:[#allocation2 + $0x8] sm:$0xff]
    %v368 = vld [vmem:[#allocation2 + $0x10] sm:$0xff]
    %v369 = vld [vmem:[#allocation2 + $0x18] sm:$0xff]
    %v370 = vld [vmem:[#allocation2 + $0x20] sm:$0xff]
    %v371 = vld [vmem:[#allocation2 + $0x28] sm:$0xff]
    %v372 = vld [vmem:[#allocation2 + $0x30] sm:$0xff]
    %v373 = vld [vmem:[#allocation2 + $0x38] sm:$0xff]
    %v374 = vld [vmem:[#allocation2 + $0x40] sm:$0xff]
    %v375 = vld [vmem:[#allocation2 + $0x48] sm:$0xff]
    %v376 = vld [vmem:[#allocation2 + $0x50] sm:$0xff]
    %v377 = vld [vmem:[#allocation2 + $0x58] sm:$0xff]
    %v378 = vld [vmem:[#allocation2 + $0x60] sm:$0xff]
    %v379 = vld [vmem:[#allocation2 + $0x68] sm:$0xff]
    %v380 = vld [vmem:[#allocation2 + $0x70] sm:$0xff]
    %v381 = vld [vmem:[#allocation2 + $0x78] sm:$0xff]
    %v382 = vadd.s32 %v350, 4294967295
    %v383 = vadd.s32 %v351, 4294967295
    %v384 = vadd.s32 %v352, 4294967295
    %v385 = vadd.s32 %v353, 4294967295
    %v386 = vadd.s32 %v354, 4294967295
    %v387 = vadd.s32 %v355, 4294967295
    %v388 = vadd.s32 %v356, 4294967295
    %v389 = vadd.s32 %v357, 4294967295
    %v390 = vadd.s32 %v358, 4294967295
    %v391 = vadd.s32 %v359, 4294967295
    %v392 = vadd.s32 %v360, 4294967295
    %v393 = vadd.s32 %v361, 4294967295
    %v394 = vadd.s32 %v362, 4294967295
    %v395 = vadd.s32 %v363, 4294967295
    %v396 = vadd.s32 %v364, 4294967295
    %v397 = vadd.s32 %v365, 4294967295
    %vm398 = vcmp.ge.s32.totalorder %v382, 0
    %vm399 = vcmp.ge.s32.totalorder %v383, 0
    %vm400 = vcmp.ge.s32.totalorder %v384, 0
    %vm401 = vcmp.ge.s32.totalorder %v385, 0
    %vm402 = vcmp.ge.s32.totalorder %v386, 0
    %vm403 = vcmp.ge.s32.totalorder %v387, 0
    %vm404 = vcmp.ge.s32.totalorder %v388, 0
    %vm405 = vcmp.ge.s32.totalorder %v389, 0
    %vm406 = vcmp.ge.s32.totalorder %v390, 0
    %vm407 = vcmp.ge.s32.totalorder %v391, 0
    %vm408 = vcmp.ge.s32.totalorder %v392, 0
    %vm409 = vcmp.ge.s32.totalorder %v393, 0
    %vm410 = vcmp.ge.s32.totalorder %v394, 0
    %vm411 = vcmp.ge.s32.totalorder %v395, 0
    %vm412 = vcmp.ge.s32.totalorder %v396, 0
    %vm413 = vcmp.ge.s32.totalorder %v397, 0
    %vm414 = vcmp.lt.s32.totalorder %v382, 8
    %vm415 = vcmp.lt.s32.totalorder %v383, 8
    %vm416 = vcmp.lt.s32.totalorder %v384, 8
    %vm417 = vcmp.lt.s32.totalorder %v385, 8
    %vm418 = vcmp.lt.s32.totalorder %v386, 8
    %vm419 = vcmp.lt.s32.totalorder %v387, 8
    %vm420 = vcmp.lt.s32.totalorder %v388, 8
    %vm421 = vcmp.lt.s32.totalorder %v389, 8
    %vm422 = vcmp.lt.s32.totalorder %v390, 8
    %vm423 = vcmp.lt.s32.totalorder %v391, 8
    %vm424 = vcmp.lt.s32.totalorder %v392, 8
    %vm425 = vcmp.lt.s32.totalorder %v393, 8
    %vm426 = vcmp.lt.s32.totalorder %v394, 8
    %vm427 = vcmp.lt.s32.totalorder %v395, 8
    %vm428 = vcmp.lt.s32.totalorder %v396, 8
    %vm429 = vcmp.lt.s32.totalorder %v397, 8
    %vm430 = vmand %vm398, %vm414
    %vm431 = vmand %vm399, %vm415
    %vm432 = vmand %vm400, %vm416
    %vm433 = vmand %vm401, %vm417
    %vm434 = vmand %vm402, %vm418
    %vm435 = vmand %vm403, %vm419
    %vm436 = vmand %vm404, %vm420
    %vm437 = vmand %vm405, %vm421
    %vm438 = vmand %vm406, %vm422
    %vm439 = vmand %vm407, %vm423
    %vm440 = vmand %vm408, %vm424
    %vm441 = vmand %vm409, %vm425
    %vm442 = vmand %vm410, %vm426
    %vm443 = vmand %vm411, %vm427
    %vm444 = vmand %vm412, %vm428
    %vm445 = vmand %vm413, %vm429
    %v446 = vadd.s32 %v334, 4294967295
    %v447 = vadd.s32 %v335, 4294967295
    %v448 = vadd.s32 %v336, 4294967295
    %v449 = vadd.s32 %v337, 4294967295
    %v450 = vadd.s32 %v338, 4294967295
    %v451 = vadd.s32 %v339, 4294967295
    %v452 = vadd.s32 %v340, 4294967295
    %v453 = vadd.s32 %v341, 4294967295
    %v454 = vadd.s32 %v342, 4294967295
    %v455 = vadd.s32 %v343, 4294967295
    %v456 = vadd.s32 %v344, 4294967295
    %v457 = vadd.s32 %v345, 4294967295
    %v458 = vadd.s32 %v346, 4294967295
    %v459 = vadd.s32 %v347, 4294967295
    %v460 = vadd.s32 %v348, 4294967295
    %v461 = vadd.s32 %v349, 4294967295
    %vm462 = vcmp.ge.s32.totalorder %v446, 0
    %vm463 = vcmp.ge.s32.totalorder %v447, 0
    %vm464 = vcmp.ge.s32.totalorder %v448, 0
    %vm465 = vcmp.ge.s32.totalorder %v449, 0
    %vm466 = vcmp.ge.s32.totalorder %v450, 0
    %vm467 = vcmp.ge.s32.totalorder %v451, 0
    %vm468 = vcmp.ge.s32.totalorder %v452, 0
    %vm469 = vcmp.ge.s32.totalorder %v453, 0
    %vm470 = vcmp.ge.s32.totalorder %v454, 0
    %vm471 = vcmp.ge.s32.totalorder %v455, 0
    %vm472 = vcmp.ge.s32.totalorder %v456, 0
    %vm473 = vcmp.ge.s32.totalorder %v457, 0
    %vm474 = vcmp.ge.s32.totalorder %v458, 0
    %vm475 = vcmp.ge.s32.totalorder %v459, 0
    %vm476 = vcmp.ge.s32.totalorder %v460, 0
    %vm477 = vcmp.ge.s32.totalorder %v461, 0
    %vm478 = vmand %vm430, %vm462
    %vm479 = vmand %vm431, %vm463
    %vm480 = vmand %vm432, %vm464
    %vm481 = vmand %vm433, %vm465
    %vm482 = vmand %vm434, %vm466
    %vm483 = vmand %vm435, %vm467
    %vm484 = vmand %vm436, %vm468
    %vm485 = vmand %vm437, %vm469
    %vm486 = vmand %vm438, %vm470
    %vm487 = vmand %vm439, %vm471
    %vm488 = vmand %vm440, %vm472
    %vm489 = vmand %vm441, %vm473
    %vm490 = vmand %vm442, %vm474
    %vm491 = vmand %vm443, %vm475
    %vm492 = vmand %vm444, %vm476
    %vm493 = vmand %vm445, %vm477
    %vm494 = vcmp.lt.s32.totalorder %v446, 8
    %vm495 = vcmp.lt.s32.totalorder %v447, 8
    %vm496 = vcmp.lt.s32.totalorder %v448, 8
    %vm497 = vcmp.lt.s32.totalorder %v449, 8
    %vm498 = vcmp.lt.s32.totalorder %v450, 8
    %vm499 = vcmp.lt.s32.totalorder %v451, 8
    %vm500 = vcmp.lt.s32.totalorder %v452, 8
    %vm501 = vcmp.lt.s32.totalorder %v453, 8
    %vm502 = vcmp.lt.s32.totalorder %v454, 8
    %vm503 = vcmp.lt.s32.totalorder %v455, 8
    %vm504 = vcmp.lt.s32.totalorder %v456, 8
    %vm505 = vcmp.lt.s32.totalorder %v457, 8
    %vm506 = vcmp.lt.s32.totalorder %v458, 8
    %vm507 = vcmp.lt.s32.totalorder %v459, 8
    %vm508 = vcmp.lt.s32.totalorder %v460, 8
    %vm509 = vcmp.lt.s32.totalorder %v461, 8
    %vm510 = vmand %vm478, %vm494
    %vm511 = vmand %vm479, %vm495
    %vm512 = vmand %vm480, %vm496
    %vm513 = vmand %vm481, %vm497
    %vm514 = vmand %vm482, %vm498
    %vm515 = vmand %vm483, %vm499
    %vm516 = vmand %vm484, %vm500
    %vm517 = vmand %vm485, %vm501
    %vm518 = vmand %vm486, %vm502
    %vm519 = vmand %vm487, %vm503
    %vm520 = vmand %vm488, %vm504
    %vm521 = vmand %vm489, %vm505
    %vm522 = vmand %vm490, %vm506
    %vm523 = vmand %vm491, %vm507
    %vm524 = vmand %vm492, %vm508
    %vm525 = vmand %vm493, %vm509
    %v526 = vsel %vm510, 1, 0
    %v527 = vsel %vm511, 1, 0
    %v528 = vsel %vm512, 1, 0
    %v529 = vsel %vm513, 1, 0
    %v530 = vsel %vm514, 1, 0
    %v531 = vsel %vm515, 1, 0
    %v532 = vsel %vm516, 1, 0
    %v533 = vsel %vm517, 1, 0
    %v534 = vsel %vm518, 1, 0
    %v535 = vsel %vm519, 1, 0
    %v536 = vsel %vm520, 1, 0
    %v537 = vsel %vm521, 1, 0
    %v538 = vsel %vm522, 1, 0
    %v539 = vsel %vm523, 1, 0
    %v540 = vsel %vm524, 1, 0
    %v541 = vsel %vm525, 1, 0
    %v542 = vcvt.s32.f32 %v526
    %v543 = vcvt.s32.f32 %v527
    %v544 = vcvt.s32.f32 %v528
    %v545 = vcvt.s32.f32 %v529
    %v546 = vcvt.s32.f32 %v530
    %v547 = vcvt.s32.f32 %v531
    %v548 = vcvt.s32.f32 %v532
    %v549 = vcvt.s32.f32 %v533
    %v550 = vcvt.s32.f32 %v534
    %v551 = vcvt.s32.f32 %v535
    %v552 = vcvt.s32.f32 %v536
    %v553 = vcvt.s32.f32 %v537
    %v554 = vcvt.s32.f32 %v538
    %v555 = vcvt.s32.f32 %v539
    %v556 = vcvt.s32.f32 %v540
    %v557 = vcvt.s32.f32 %v541
    %v558 = vmul.f32 %v366, %v542
    %v559 = vmul.f32 %v367, %v543
    %v560 = vmul.f32 %v368, %v544
    %v561 = vmul.f32 %v369, %v545
    %v562 = vmul.f32 %v370, %v546
    %v563 = vmul.f32 %v371, %v547
    %v564 = vmul.f32 %v372, %v548
    %v565 = vmul.f32 %v373, %v549
    %v566 = vmul.f32 %v374, %v550
    %v567 = vmul.f32 %v375, %v551
    %v568 = vmul.f32 %v376, %v552
    %v569 = vmul.f32 %v377, %v553
    %v570 = vmul.f32 %v378, %v554
    %v571 = vmul.f32 %v379, %v555
    %v572 = vmul.f32 %v380, %v556
    %v573 = vmul.f32 %v381, %v557
    %v574 = vld [vmem:[#allocation2 + $0x1] sm:$0xff]
    %v575 = vld [vmem:[#allocation2 + $0x9] sm:$0xff]
    %v576 = vld [vmem:[#allocation2 + $0x11] sm:$0xff]
    %v577 = vld [vmem:[#allocation2 + $0x19] sm:$0xff]
    %v578 = vld [vmem:[#allocation2 + $0x21] sm:$0xff]
    %v579 = vld [vmem:[#allocation2 + $0x29] sm:$0xff]
    %v580 = vld [vmem:[#allocation2 + $0x31] sm:$0xff]
    %v581 = vld [vmem:[#allocation2 + $0x39] sm:$0xff]
    %v582 = vld [vmem:[#allocation2 + $0x41] sm:$0xff]
    %v583 = vld [vmem:[#allocation2 + $0x49] sm:$0xff]
    %v584 = vld [vmem:[#allocation2 + $0x51] sm:$0xff]
    %v585 = vld [vmem:[#allocation2 + $0x59] sm:$0xff]
    %v586 = vld [vmem:[#allocation2 + $0x61] sm:$0xff]
    %v587 = vld [vmem:[#allocation2 + $0x69] sm:$0xff]
    %v588 = vld [vmem:[#allocation2 + $0x71] sm:$0xff]
    %v589 = vld [vmem:[#allocation2 + $0x79] sm:$0xff]
    %vm590 = vcmp.ge.s32.totalorder %v334, 0
    %vm591 = vcmp.ge.s32.totalorder %v335, 0
    %vm592 = vcmp.ge.s32.totalorder %v336, 0
    %vm593 = vcmp.ge.s32.totalorder %v337, 0
    %vm594 = vcmp.ge.s32.totalorder %v338, 0
    %vm595 = vcmp.ge.s32.totalorder %v339, 0
    %vm596 = vcmp.ge.s32.totalorder %v340, 0
    %vm597 = vcmp.ge.s32.totalorder %v341, 0
    %vm598 = vcmp.ge.s32.totalorder %v342, 0
    %vm599 = vcmp.ge.s32.totalorder %v343, 0
    %vm600 = vcmp.ge.s32.totalorder %v344, 0
    %vm601 = vcmp.ge.s32.totalorder %v345, 0
    %vm602 = vcmp.ge.s32.totalorder %v346, 0
    %vm603 = vcmp.ge.s32.totalorder %v347, 0
    %vm604 = vcmp.ge.s32.totalorder %v348, 0
    %vm605 = vcmp.ge.s32.totalorder %v349, 0
    %vm606 = vmand %vm430, %vm590
    %vm607 = vmand %vm431, %vm591
    %vm608 = vmand %vm432, %vm592
    %vm609 = vmand %vm433, %vm593
    %vm610 = vmand %vm434, %vm594
    %vm611 = vmand %vm435, %vm595
    %vm612 = vmand %vm436, %vm596
    %vm613 = vmand %vm437, %vm597
    %vm614 = vmand %vm438, %vm598
    %vm615 = vmand %vm439, %vm599
    %vm616 = vmand %vm440, %vm600
    %vm617 = vmand %vm441, %vm601
    %vm618 = vmand %vm442, %vm602
    %vm619 = vmand %vm443, %vm603
    %vm620 = vmand %vm444, %vm604
    %vm621 = vmand %vm445, %vm605
    %vm622 = vcmp.lt.s32.totalorder %v334, 8
    %vm623 = vcmp.lt.s32.totalorder %v335, 8
    %vm624 = vcmp.lt.s32.totalorder %v336, 8
    %vm625 = vcmp.lt.s32.totalorder %v337, 8
    %vm626 = vcmp.lt.s32.totalorder %v338, 8
    %vm627 = vcmp.lt.s32.totalorder %v339, 8
    %vm628 = vcmp.lt.s32.totalorder %v340, 8
    %vm629 = vcmp.lt.s32.totalorder %v341, 8
    %vm630 = vcmp.lt.s32.totalorder %v342, 8
    %vm631 = vcmp.lt.s32.totalorder %v343, 8
    %vm632 = vcmp.lt.s32.totalorder %v344, 8
    %vm633 = vcmp.lt.s32.totalorder %v345, 8
    %vm634 = vcmp.lt.s32.totalorder %v346, 8
    %vm635 = vcmp.lt.s32.totalorder %v347, 8
    %vm636 = vcmp.lt.s32.totalorder %v348, 8
    %vm637 = vcmp.lt.s32.totalorder %v349, 8
    %vm638 = vmand %vm606, %vm622
    %vm639 = vmand %vm607, %vm623
    %vm640 = vmand %vm608, %vm624
    %vm641 = vmand %vm609, %vm625
    %vm642 = vmand %vm610, %vm626
    %vm643 = vmand %vm611, %vm627
    %vm644 = vmand %vm612, %vm628
    %vm645 = vmand %vm613, %vm629
    %vm646 = vmand %vm614, %vm630
    %vm647 = vmand %vm615, %vm631
    %vm648 = vmand %vm616, %vm632
    %vm649 = vmand %vm617, %vm633
    %vm650 = vmand %vm618, %vm634
    %vm651 = vmand %vm619, %vm635
    %vm652 = vmand %vm620, %vm636
    %vm653 = vmand %vm621, %vm637
    %v654 = vsel %vm638, 1, 0
    %v655 = vsel %vm639, 1, 0
    %v656 = vsel %vm640, 1, 0
    %v657 = vsel %vm641, 1, 0
    %v658 = vsel %vm642, 1, 0
    %v659 = vsel %vm643, 1, 0
    %v660 = vsel %vm644, 1, 0
    %v661 = vsel %vm645, 1, 0
    %v662 = vsel %vm646, 1, 0
    %v663 = vsel %vm647, 1, 0
    %v664 = vsel %vm648, 1, 0
    %v665 = vsel %vm649, 1, 0
    %v666 = vsel %vm650, 1, 0
    %v667 = vsel %vm651, 1, 0
    %v668 = vsel %vm652, 1, 0
    %v669 = vsel %vm653, 1, 0
    %v670 = vcvt.s32.f32 %v654
    %v671 = vcvt.s32.f32 %v655
    %v672 = vcvt.s32.f32 %v656
    %v673 = vcvt.s32.f32 %v657
    %v674 = vcvt.s32.f32 %v658
    %v675 = vcvt.s32.f32 %v659
    %v676 = vcvt.s32.f32 %v660
    %v677 = vcvt.s32.f32 %v661
    %v678 = vcvt.s32.f32 %v662
    %v679 = vcvt.s32.f32 %v663
    %v680 = vcvt.s32.f32 %v664
    %v681 = vcvt.s32.f32 %v665
    %v682 = vcvt.s32.f32 %v666
    %v683 = vcvt.s32.f32 %v667
    %v684 = vcvt.s32.f32 %v668
    %v685 = vcvt.s32.f32 %v669
    %v686 = vmul.f32 %v574, %v670
    %v687 = vmul.f32 %v575, %v671
    %v688 = vmul.f32 %v576, %v672
    %v689 = vmul.f32 %v577, %v673
    %v690 = vmul.f32 %v578, %v674
    %v691 = vmul.f32 %v579, %v675
    %v692 = vmul.f32 %v580, %v676
    %v693 = vmul.f32 %v581, %v677
    %v694 = vmul.f32 %v582, %v678
    %v695 = vmul.f32 %v583, %v679
    %v696 = vmul.f32 %v584, %v680
    %v697 = vmul.f32 %v585, %v681
    %v698 = vmul.f32 %v586, %v682
    %v699 = vmul.f32 %v587, %v683
    %v700 = vmul.f32 %v588, %v684
    %v701 = vmul.f32 %v589, %v685
    %v702 = vld [vmem:[#allocation2 + $0x2] sm:$0xff]
    %v703 = vld [vmem:[#allocation2 + $0xa] sm:$0xff]
    %v704 = vld [vmem:[#allocation2 + $0x12] sm:$0xff]
    %v705 = vld [vmem:[#allocation2 + $0x1a] sm:$0xff]
    %v706 = vld [vmem:[#allocation2 + $0x22] sm:$0xff]
    %v707 = vld [vmem:[#allocation2 + $0x2a] sm:$0xff]
    %v708 = vld [vmem:[#allocation2 + $0x32] sm:$0xff]
    %v709 = vld [vmem:[#allocation2 + $0x3a] sm:$0xff]
    %v710 = vld [vmem:[#allocation2 + $0x42] sm:$0xff]
    %v711 = vld [vmem:[#allocation2 + $0x4a] sm:$0xff]
    %v712 = vld [vmem:[#allocation2 + $0x52] sm:$0xff]
    %v713 = vld [vmem:[#allocation2 + $0x5a] sm:$0xff]
    %v714 = vld [vmem:[#allocation2 + $0x62] sm:$0xff]
    %v715 = vld [vmem:[#allocation2 + $0x6a] sm:$0xff]
    %v716 = vld [vmem:[#allocation2 + $0x72] sm:$0xff]
    %v717 = vld [vmem:[#allocation2 + $0x7a] sm:$0xff]
    %v718 = vadd.s32 %v334, 1
    %v719 = vadd.s32 %v335, 1
    %v720 = vadd.s32 %v336, 1
    %v721 = vadd.s32 %v337, 1
    %v722 = vadd.s32 %v338, 1
    %v723 = vadd.s32 %v339, 1
    %v724 = vadd.s32 %v340, 1
    %v725 = vadd.s32 %v341, 1
    %v726 = vadd.s32 %v342, 1
    %v727 = vadd.s32 %v343, 1
    %v728 = vadd.s32 %v344, 1
    %v729 = vadd.s32 %v345, 1
    %v730 = vadd.s32 %v346, 1
    %v731 = vadd.s32 %v347, 1
    %v732 = vadd.s32 %v348, 1
    %v733 = vadd.s32 %v349, 1
    %vm734 = vcmp.ge.s32.totalorder %v718, 0
    %vm735 = vcmp.ge.s32.totalorder %v719, 0
    %vm736 = vcmp.ge.s32.totalorder %v720, 0
    %vm737 = vcmp.ge.s32.totalorder %v721, 0
    %vm738 = vcmp.ge.s32.totalorder %v722, 0
    %vm739 = vcmp.ge.s32.totalorder %v723, 0
    %vm740 = vcmp.ge.s32.totalorder %v724, 0
    %vm741 = vcmp.ge.s32.totalorder %v725, 0
    %vm742 = vcmp.ge.s32.totalorder %v726, 0
    %vm743 = vcmp.ge.s32.totalorder %v727, 0
    %vm744 = vcmp.ge.s32.totalorder %v728, 0
    %vm745 = vcmp.ge.s32.totalorder %v729, 0
    %vm746 = vcmp.ge.s32.totalorder %v730, 0
    %vm747 = vcmp.ge.s32.totalorder %v731, 0
    %vm748 = vcmp.ge.s32.totalorder %v732, 0
    %vm749 = vcmp.ge.s32.totalorder %v733, 0
    %vm750 = vmand %vm430, %vm734
    %vm751 = vmand %vm431, %vm735
    %vm752 = vmand %vm432, %vm736
    %vm753 = vmand %vm433, %vm737
    %vm754 = vmand %vm434, %vm738
    %vm755 = vmand %vm435, %vm739
    %vm756 = vmand %vm436, %vm740
    %vm757 = vmand %vm437, %vm741
    %vm758 = vmand %vm438, %vm742
    %vm759 = vmand %vm439, %vm743
    %vm760 = vmand %vm440, %vm744
    %vm761 = vmand %vm441, %vm745
    %vm762 = vmand %vm442, %vm746
    %vm763 = vmand %vm443, %vm747
    %vm764 = vmand %vm444, %vm748
    %vm765 = vmand %vm445, %vm749
    %vm766 = vcmp.lt.s32.totalorder %v718, 8
    %vm767 = vcmp.lt.s32.totalorder %v719, 8
    %vm768 = vcmp.lt.s32.totalorder %v720, 8
    %vm769 = vcmp.lt.s32.totalorder %v721, 8
    %vm770 = vcmp.lt.s32.totalorder %v722, 8
    %vm771 = vcmp.lt.s32.totalorder %v723, 8
    %vm772 = vcmp.lt.s32.totalorder %v724, 8
    %vm773 = vcmp.lt.s32.totalorder %v725, 8
    %vm774 = vcmp.lt.s32.totalorder %v726, 8
    %vm775 = vcmp.lt.s32.totalorder %v727, 8
    %vm776 = vcmp.lt.s32.totalorder %v728, 8
    %vm777 = vcmp.lt.s32.totalorder %v729, 8
    %vm778 = vcmp.lt.s32.totalorder %v730, 8
    %vm779 = vcmp.lt.s32.totalorder %v731, 8
    %vm780 = vcmp.lt.s32.totalorder %v732, 8
    %vm781 = vcmp.lt.s32.totalorder %v733, 8
    %vm782 = vmand %vm750, %vm766
    %vm783 = vmand %vm751, %vm767
    %vm784 = vmand %vm752, %vm768
    %vm785 = vmand %vm753, %vm769
    %vm786 = vmand %vm754, %vm770
    %vm787 = vmand %vm755, %vm771
    %vm788 = vmand %vm756, %vm772
    %vm789 = vmand %vm757, %vm773
    %vm790 = vmand %vm758, %vm774
    %vm791 = vmand %vm759, %vm775
    %vm792 = vmand %vm760, %vm776
    %vm793 = vmand %vm761, %vm777
    %vm794 = vmand %vm762, %vm778
    %vm795 = vmand %vm763, %vm779
    %vm796 = vmand %vm764, %vm780
    %vm797 = vmand %vm765, %vm781
    %v798 = vsel %vm782, 1, 0
    %v799 = vsel %vm783, 1, 0
    %v800 = vsel %vm784, 1, 0
    %v801 = vsel %vm785, 1, 0
    %v802 = vsel %vm786, 1, 0
    %v803 = vsel %vm787, 1, 0
    %v804 = vsel %vm788, 1, 0
    %v805 = vsel %vm789, 1, 0
    %v806 = vsel %vm790, 1, 0
    %v807 = vsel %vm791, 1, 0
    %v808 = vsel %vm792, 1, 0
    %v809 = vsel %vm793, 1, 0
    %v810 = vsel %vm794, 1, 0
    %v811 = vsel %vm795, 1, 0
    %v812 = vsel %vm796, 1, 0
    %v813 = vsel %vm797, 1, 0
    %v814 = vcvt.s32.f32 %v798
    %v815 = vcvt.s32.f32 %v799
    %v816 = vcvt.s32.f32 %v800
    %v817 = vcvt.s32.f32 %v801
    %v818 = vcvt.s32.f32 %v802
    %v819 = vcvt.s32.f32 %v803
    %v820 = vcvt.s32.f32 %v804
    %v821 = vcvt.s32.f32 %v805
    %v822 = vcvt.s32.f32 %v806
    %v823 = vcvt.s32.f32 %v807
    %v824 = vcvt.s32.f32 %v808
    %v825 = vcvt.s32.f32 %v809
    %v826 = vcvt.s32.f32 %v810
    %v827 = vcvt.s32.f32 %v811
    %v828 = vcvt.s32.f32 %v812
    %v829 = vcvt.s32.f32 %v813
    %v830 = vmul.f32 %v702, %v814
    %v831 = vmul.f32 %v703, %v815
    %v832 = vmul.f32 %v704, %v816
    %v833 = vmul.f32 %v705, %v817
    %v834 = vmul.f32 %v706, %v818
    %v835 = vmul.f32 %v707, %v819
    %v836 = vmul.f32 %v708, %v820
    %v837 = vmul.f32 %v709, %v821
    %v838 = vmul.f32 %v710, %v822
    %v839 = vmul.f32 %v711, %v823
    %v840 = vmul.f32 %v712, %v824
    %v841 = vmul.f32 %v713, %v825
    %v842 = vmul.f32 %v714, %v826
    %v843 = vmul.f32 %v715, %v827
    %v844 = vmul.f32 %v716, %v828
    %v845 = vmul.f32 %v717, %v829
    %v846 = vld [vmem:[#allocation2 + $0x80] sm:$0xff]
    %vm847 = vcmp.ge.s32.totalorder %v350, 0
    %vm848 = vcmp.ge.s32.totalorder %v351, 0
    %vm849 = vcmp.ge.s32.totalorder %v352, 0
    %vm850 = vcmp.ge.s32.totalorder %v353, 0
    %vm851 = vcmp.ge.s32.totalorder %v354, 0
    %vm852 = vcmp.ge.s32.totalorder %v355, 0
    %vm853 = vcmp.ge.s32.totalorder %v356, 0
    %vm854 = vcmp.ge.s32.totalorder %v357, 0
    %vm855 = vcmp.ge.s32.totalorder %v358, 0
    %vm856 = vcmp.ge.s32.totalorder %v359, 0
    %vm857 = vcmp.ge.s32.totalorder %v360, 0
    %vm858 = vcmp.ge.s32.totalorder %v361, 0
    %vm859 = vcmp.ge.s32.totalorder %v362, 0
    %vm860 = vcmp.ge.s32.totalorder %v363, 0
    %vm861 = vcmp.ge.s32.totalorder %v364, 0
    %vm862 = vcmp.ge.s32.totalorder %v365, 0
    %vm863 = vcmp.lt.s32.totalorder %v350, 8
    %vm864 = vcmp.lt.s32.totalorder %v351, 8
    %vm865 = vcmp.lt.s32.totalorder %v352, 8
    %vm866 = vcmp.lt.s32.totalorder %v353, 8
    %vm867 = vcmp.lt.s32.totalorder %v354, 8
    %vm868 = vcmp.lt.s32.totalorder %v355, 8
    %vm869 = vcmp.lt.s32.totalorder %v356, 8
    %vm870 = vcmp.lt.s32.totalorder %v357, 8
    %vm871 = vcmp.lt.s32.totalorder %v358, 8
    %vm872 = vcmp.lt.s32.totalorder %v359, 8
    %vm873 = vcmp.lt.s32.totalorder %v360, 8
    %vm874 = vcmp.lt.s32.totalorder %v361, 8
    %vm875 = vcmp.lt.s32.totalorder %v362, 8
    %vm876 = vcmp.lt.s32.totalorder %v363, 8
    %vm877 = vcmp.lt.s32.totalorder %v364, 8
    %vm878 = vcmp.lt.s32.totalorder %v365, 8
    %vm879 = vmand %vm847, %vm863
    %vm880 = vmand %vm848, %vm864
    %vm881 = vmand %vm849, %vm865
    %vm882 = vmand %vm850, %vm866
    %vm883 = vmand %vm851, %vm867
    %vm884 = vmand %vm852, %vm868
    %vm885 = vmand %vm853, %vm869
    %vm886 = vmand %vm854, %vm870
    %vm887 = vmand %vm855, %vm871
    %vm888 = vmand %vm856, %vm872
    %vm889 = vmand %vm857, %vm873
    %vm890 = vmand %vm858, %vm874
    %vm891 = vmand %vm859, %vm875
    %vm892 = vmand %vm860, %vm876
    %vm893 = vmand %vm861, %vm877
    %vm894 = vmand %vm862, %vm878
    %vm895 = vmand %vm879, %vm462
    %vm896 = vmand %vm880, %vm463
    %vm897 = vmand %vm881, %vm464
    %vm898 = vmand %vm882, %vm465
    %vm899 = vmand %vm883, %vm466
    %vm900 = vmand %vm884, %vm467
    %vm901 = vmand %vm885, %vm468
    %vm902 = vmand %vm886, %vm469
    %vm903 = vmand %vm887, %vm470
    %vm904 = vmand %vm888, %vm471
    %vm905 = vmand %vm889, %vm472
    %vm906 = vmand %vm890, %vm473
    %vm907 = vmand %vm891, %vm474
    %vm908 = vmand %vm892, %vm475
    %vm909 = vmand %vm893, %vm476
    %vm910 = vmand %vm894, %vm477
    %vm911 = vmand %vm895, %vm494
    %vm912 = vmand %vm896, %vm495
    %vm913 = vmand %vm897, %vm496
    %vm914 = vmand %vm898, %vm497
    %vm915 = vmand %vm899, %vm498
    %vm916 = vmand %vm900, %vm499
    %vm917 = vmand %vm901, %vm500
    %vm918 = vmand %vm902, %vm501
    %vm919 = vmand %vm903, %vm502
    %vm920 = vmand %vm904, %vm503
    %vm921 = vmand %vm905, %vm504
    %vm922 = vmand %vm906, %vm505
    %vm923 = vmand %vm907, %vm506
    %vm924 = vmand %vm908, %vm507
    %vm925 = vmand %vm909, %vm508
    %vm926 = vmand %vm910, %vm509
    %v927 = vsel %vm911, 1, 0
    %v928 = vsel %vm912, 1, 0
    %v929 = vsel %vm913, 1, 0
    %v930 = vsel %vm914, 1, 0
    %v931 = vsel %vm915, 1, 0
    %v932 = vsel %vm916, 1, 0
    %v933 = vsel %vm917, 1, 0
    %v934 = vsel %vm918, 1, 0
    %v935 = vsel %vm919, 1, 0
    %v936 = vsel %vm920, 1, 0
    %v937 = vsel %vm921, 1, 0
    %v938 = vsel %vm922, 1, 0
    %v939 = vsel %vm923, 1, 0
    %v940 = vsel %vm924, 1, 0
    %v941 = vsel %vm925, 1, 0
    %v942 = vsel %vm926, 1, 0
    %v943 = vcvt.s32.f32 %v927
    %v944 = vcvt.s32.f32 %v928
    %v945 = vcvt.s32.f32 %v929
    %v946 = vcvt.s32.f32 %v930
    %v947 = vcvt.s32.f32 %v931
    %v948 = vcvt.s32.f32 %v932
    %v949 = vcvt.s32.f32 %v933
    %v950 = vcvt.s32.f32 %v934
    %v951 = vcvt.s32.f32 %v935
    %v952 = vcvt.s32.f32 %v936
    %v953 = vcvt.s32.f32 %v937
    %v954 = vcvt.s32.f32 %v938
    %v955 = vcvt.s32.f32 %v939
    %v956 = vcvt.s32.f32 %v940
    %v957 = vcvt.s32.f32 %v941
    %v958 = vcvt.s32.f32 %v942
    %v959 = vmul.f32 %v367, %v943
    %v960 = vmul.f32 %v368, %v944
    %v961 = vmul.f32 %v369, %v945
    %v962 = vmul.f32 %v370, %v946
    %v963 = vmul.f32 %v371, %v947
    %v964 = vmul.f32 %v372, %v948
    %v965 = vmul.f32 %v373, %v949
    %v966 = vmul.f32 %v374, %v950
    %v967 = vmul.f32 %v375, %v951
    %v968 = vmul.f32 %v376, %v952
    %v969 = vmul.f32 %v377, %v953
    %v970 = vmul.f32 %v378, %v954
    %v971 = vmul.f32 %v379, %v955
    %v972 = vmul.f32 %v380, %v956
    %v973 = vmul.f32 %v381, %v957
    %v974 = vmul.f32 %v846, %v958
    %v975 = vld [vmem:[#allocation2 + $0x81] sm:$0xff]
    %v976 = vld [vmem:[#allocation2 + $0x82] sm:$0xff]
    %vm977 = vmand %vm879, %vm734
    %vm978 = vmand %vm880, %vm735
    %vm979 = vmand %vm881, %vm736
    %vm980 = vmand %vm882, %vm737
    %vm981 = vmand %vm883, %vm738
    %vm982 = vmand %vm884, %vm739
    %vm983 = vmand %vm885, %vm740
    %vm984 = vmand %vm886, %vm741
    %vm985 = vmand %vm887, %vm742
    %vm986 = vmand %vm888, %vm743
    %vm987 = vmand %vm889, %vm744
    %vm988 = vmand %vm890, %vm745
    %vm989 = vmand %vm891, %vm746
    %vm990 = vmand %vm892, %vm747
    %vm991 = vmand %vm893, %vm748
    %vm992 = vmand %vm894, %vm749
    %vm993 = vmand %vm977, %vm766
    %vm994 = vmand %vm978, %vm767
    %vm995 = vmand %vm979, %vm768
    %vm996 = vmand %vm980, %vm769
    %vm997 = vmand %vm981, %vm770
    %vm998 = vmand %vm982, %vm771
    %vm999 = vmand %vm983, %vm772
    %vm1000 = vmand %vm984, %vm773
    %vm1001 = vmand %vm985, %vm774
    %vm1002 = vmand %vm986, %vm775
    %vm1003 = vmand %vm987, %vm776
    %vm1004 = vmand %vm988, %vm777
    %vm1005 = vmand %vm989, %vm778
    %vm1006 = vmand %vm990, %vm779
    %vm1007 = vmand %vm991, %vm780
    %vm1008 = vmand %vm992, %vm781
    %v1009 = vsel %vm993, 1, 0
    %v1010 = vsel %vm994, 1, 0
    %v1011 = vsel %vm995, 1, 0
    %v1012 = vsel %vm996, 1, 0
    %v1013 = vsel %vm997, 1, 0
    %v1014 = vsel %vm998, 1, 0
    %v1015 = vsel %vm999, 1, 0
    %v1016 = vsel %vm1000, 1, 0
    %v1017 = vsel %vm1001, 1, 0
    %v1018 = vsel %vm1002, 1, 0
    %v1019 = vsel %vm1003, 1, 0
    %v1020 = vsel %vm1004, 1, 0
    %v1021 = vsel %vm1005, 1, 0
    %v1022 = vsel %vm1006, 1, 0
    %v1023 = vsel %vm1007, 1, 0
    %v1024 = vsel %vm1008, 1, 0
    %v1025 = vcvt.s32.f32 %v1009
    %v1026 = vcvt.s32.f32 %v1010
    %v1027 = vcvt.s32.f32 %v1011
    %v1028 = vcvt.s32.f32 %v1012
    %v1029 = vcvt.s32.f32 %v1013
    %v1030 = vcvt.s32.f32 %v1014
    %v1031 = vcvt.s32.f32 %v1015
    %v1032 = vcvt.s32.f32 %v1016
    %v1033 = vcvt.s32.f32 %v1017
    %v1034 = vcvt.s32.f32 %v1018
    %v1035 = vcvt.s32.f32 %v1019
    %v1036 = vcvt.s32.f32 %v1020
    %v1037 = vcvt.s32.f32 %v1021
    %v1038 = vcvt.s32.f32 %v1022
    %v1039 = vcvt.s32.f32 %v1023
    %v1040 = vcvt.s32.f32 %v1024
    %v1041 = vmul.f32 %v703, %v1025
    %v1042 = vmul.f32 %v704, %v1026
    %v1043 = vmul.f32 %v705, %v1027
    %v1044 = vmul.f32 %v706, %v1028
    %v1045 = vmul.f32 %v707, %v1029
    %v1046 = vmul.f32 %v708, %v1030
    %v1047 = vmul.f32 %v709, %v1031
    %v1048 = vmul.f32 %v710, %v1032
    %v1049 = vmul.f32 %v711, %v1033
    %v1050 = vmul.f32 %v712, %v1034
    %v1051 = vmul.f32 %v713, %v1035
    %v1052 = vmul.f32 %v714, %v1036
    %v1053 = vmul.f32 %v715, %v1037
    %v1054 = vmul.f32 %v716, %v1038
    %v1055 = vmul.f32 %v717, %v1039
    %v1056 = vmul.f32 %v976, %v1040
    %v1057 = vld [vmem:[#allocation2 + $0x88] sm:$0xff]
    %v1058 = vadd.s32 %v350, 1
    %v1059 = vadd.s32 %v351, 1
    %v1060 = vadd.s32 %v352, 1
    %v1061 = vadd.s32 %v353, 1
    %v1062 = vadd.s32 %v354, 1
    %v1063 = vadd.s32 %v355, 1
    %v1064 = vadd.s32 %v356, 1
    %v1065 = vadd.s32 %v357, 1
    %v1066 = vadd.s32 %v358, 1
    %v1067 = vadd.s32 %v359, 1
    %v1068 = vadd.s32 %v360, 1
    %v1069 = vadd.s32 %v361, 1
    %v1070 = vadd.s32 %v362, 1
    %v1071 = vadd.s32 %v363, 1
    %v1072 = vadd.s32 %v364, 1
    %v1073 = vadd.s32 %v365, 1
    %vm1074 = vcmp.ge.s32.totalorder %v1058, 0
    %vm1075 = vcmp.ge.s32.totalorder %v1059, 0
    %vm1076 = vcmp.ge.s32.totalorder %v1060, 0
    %vm1077 = vcmp.ge.s32.totalorder %v1061, 0
    %vm1078 = vcmp.ge.s32.totalorder %v1062, 0
    %vm1079 = vcmp.ge.s32.totalorder %v1063, 0
    %vm1080 = vcmp.ge.s32.totalorder %v1064, 0
    %vm1081 = vcmp.ge.s32.totalorder %v1065, 0
    %vm1082 = vcmp.ge.s32.totalorder %v1066, 0
    %vm1083 = vcmp.ge.s32.totalorder %v1067, 0
    %vm1084 = vcmp.ge.s32.totalorder %v1068, 0
    %vm1085 = vcmp.ge.s32.totalorder %v1069, 0
    %vm1086 = vcmp.ge.s32.totalorder %v1070, 0
    %vm1087 = vcmp.ge.s32.totalorder %v1071, 0
    %vm1088 = vcmp.ge.s32.totalorder %v1072, 0
    %vm1089 = vcmp.ge.s32.totalorder %v1073, 0
    %vm1090 = vcmp.lt.s32.totalorder %v1058, 8
    %vm1091 = vcmp.lt.s32.totalorder %v1059, 8
    %vm1092 = vcmp.lt.s32.totalorder %v1060, 8
    %vm1093 = vcmp.lt.s32.totalorder %v1061, 8
    %vm1094 = vcmp.lt.s32.totalorder %v1062, 8
    %vm1095 = vcmp.lt.s32.totalorder %v1063, 8
    %vm1096 = vcmp.lt.s32.totalorder %v1064, 8
    %vm1097 = vcmp.lt.s32.totalorder %v1065, 8
    %vm1098 = vcmp.lt.s32.totalorder %v1066, 8
    %vm1099 = vcmp.lt.s32.totalorder %v1067, 8
    %vm1100 = vcmp.lt.s32.totalorder %v1068, 8
    %vm1101 = vcmp.lt.s32.totalorder %v1069, 8
    %vm1102 = vcmp.lt.s32.totalorder %v1070, 8
    %vm1103 = vcmp.lt.s32.totalorder %v1071, 8
    %vm1104 = vcmp.lt.s32.totalorder %v1072, 8
    %vm1105 = vcmp.lt.s32.totalorder %v1073, 8
    %vm1106 = vmand %vm1074, %vm1090
    %vm1107 = vmand %vm1075, %vm1091
    %vm1108 = vmand %vm1076, %vm1092
    %vm1109 = vmand %vm1077, %vm1093
    %vm1110 = vmand %vm1078, %vm1094
    %vm1111 = vmand %vm1079, %vm1095
    %vm1112 = vmand %vm1080, %vm1096
    %vm1113 = vmand %vm1081, %vm1097
    %vm1114 = vmand %vm1082, %vm1098
    %vm1115 = vmand %vm1083, %vm1099
    %vm1116 = vmand %vm1084, %vm1100
    %vm1117 = vmand %vm1085, %vm1101
    %vm1118 = vmand %vm1086, %vm1102
    %vm1119 = vmand %vm1087, %vm1103
    %vm1120 = vmand %vm1088, %vm1104
    %vm1121 = vmand %vm1089, %vm1105
    %vm1122 = vmand %vm1106, %vm462
    %vm1123 = vmand %vm1107, %vm463
    %vm1124 = vmand %vm1108, %vm464
    %vm1125 = vmand %vm1109, %vm465
    %vm1126 = vmand %vm1110, %vm466
    %vm1127 = vmand %vm1111, %vm467
    %vm1128 = vmand %vm1112, %vm468
    %vm1129 = vmand %vm1113, %vm469
    %vm1130 = vmand %vm1114, %vm470
    %vm1131 = vmand %vm1115, %vm471
    %vm1132 = vmand %vm1116, %vm472
    %vm1133 = vmand %vm1117, %vm473
    %vm1134 = vmand %vm1118, %vm474
    %vm1135 = vmand %vm1119, %vm475
    %vm1136 = vmand %vm1120, %vm476
    %vm1137 = vmand %vm1121, %vm477
    %vm1138 = vmand %vm1122, %vm494
    %vm1139 = vmand %vm1123, %vm495
    %vm1140 = vmand %vm1124, %vm496
    %vm1141 = vmand %vm1125, %vm497
    %vm1142 = vmand %vm1126, %vm498
    %vm1143 = vmand %vm1127, %vm499
    %vm1144 = vmand %vm1128, %vm500
    %vm1145 = vmand %vm1129, %vm501
    %vm1146 = vmand %vm1130, %vm502
    %vm1147 = vmand %vm1131, %vm503
    %vm1148 = vmand %vm1132, %vm504
    %vm1149 = vmand %vm1133, %vm505
    %vm1150 = vmand %vm1134, %vm506
    %vm1151 = vmand %vm1135, %vm507
    %vm1152 = vmand %vm1136, %vm508
    %vm1153 = vmand %vm1137, %vm509
    %v1154 = vsel %vm1138, 1, 0
    %v1155 = vsel %vm1139, 1, 0
    %v1156 = vsel %vm1140, 1, 0
    %v1157 = vsel %vm1141, 1, 0
    %v1158 = vsel %vm1142, 1, 0
    %v1159 = vsel %vm1143, 1, 0
    %v1160 = vsel %vm1144, 1, 0
    %v1161 = vsel %vm1145, 1, 0
    %v1162 = vsel %vm1146, 1, 0
    %v1163 = vsel %vm1147, 1, 0
    %v1164 = vsel %vm1148, 1, 0
    %v1165 = vsel %vm1149, 1, 0
    %v1166 = vsel %vm1150, 1, 0
    %v1167 = vsel %vm1151, 1, 0
    %v1168 = vsel %vm1152, 1, 0
    %v1169 = vsel %vm1153, 1, 0
    %v1170 = vcvt.s32.f32 %v1154
    %v1171 = vcvt.s32.f32 %v1155
    %v1172 = vcvt.s32.f32 %v1156
    %v1173 = vcvt.s32.f32 %v1157
    %v1174 = vcvt.s32.f32 %v1158
    %v1175 = vcvt.s32.f32 %v1159
    %v1176 = vcvt.s32.f32 %v1160
    %v1177 = vcvt.s32.f32 %v1161
    %v1178 = vcvt.s32.f32 %v1162
    %v1179 = vcvt.s32.f32 %v1163
    %v1180 = vcvt.s32.f32 %v1164
    %v1181 = vcvt.s32.f32 %v1165
    %v1182 = vcvt.s32.f32 %v1166
    %v1183 = vcvt.s32.f32 %v1167
    %v1184 = vcvt.s32.f32 %v1168
    %v1185 = vcvt.s32.f32 %v1169
    %v1186 = vmul.f32 %v368, %v1170
    %v1187 = vmul.f32 %v369, %v1171
    %v1188 = vmul.f32 %v370, %v1172
    %v1189 = vmul.f32 %v371, %v1173
    %v1190 = vmul.f32 %v372, %v1174
    %v1191 = vmul.f32 %v373, %v1175
    %v1192 = vmul.f32 %v374, %v1176
    %v1193 = vmul.f32 %v375, %v1177
    %v1194 = vmul.f32 %v376, %v1178
    %v1195 = vmul.f32 %v377, %v1179
    %v1196 = vmul.f32 %v378, %v1180
    %v1197 = vmul.f32 %v379, %v1181
    %v1198 = vmul.f32 %v380, %v1182
    %v1199 = vmul.f32 %v381, %v1183
    %v1200 = vmul.f32 %v846, %v1184
    %v1201 = vmul.f32 %v1057, %v1185
    %v1202 = vld [vmem:[#allocation2 + $0x89] sm:$0xff]
    %vm1203 = vmand %vm1106, %vm590
    %vm1204 = vmand %vm1107, %vm591
    %vm1205 = vmand %vm1108, %vm592
    %vm1206 = vmand %vm1109, %vm593
    %vm1207 = vmand %vm1110, %vm594
    %vm1208 = vmand %vm1111, %vm595
    %vm1209 = vmand %vm1112, %vm596
    %vm1210 = vmand %vm1113, %vm597
    %vm1211 = vmand %vm1114, %vm598
    %vm1212 = vmand %vm1115, %vm599
    %vm1213 = vmand %vm1116, %vm600
    %vm1214 = vmand %vm1117, %vm601
    %vm1215 = vmand %vm1118, %vm602
    %vm1216 = vmand %vm1119, %vm603
    %vm1217 = vmand %vm1120, %vm604
    %vm1218 = vmand %vm1121, %vm605
    %vm1219 = vmand %vm1203, %vm622
    %vm1220 = vmand %vm1204, %vm623
    %vm1221 = vmand %vm1205, %vm624
    %vm1222 = vmand %vm1206, %vm625
    %vm1223 = vmand %vm1207, %vm626
    %vm1224 = vmand %vm1208, %vm627
    %vm1225 = vmand %vm1209, %vm628
    %vm1226 = vmand %vm1210, %vm629
    %vm1227 = vmand %vm1211, %vm630
    %vm1228 = vmand %vm1212, %vm631
    %vm1229 = vmand %vm1213, %vm632
    %vm1230 = vmand %vm1214, %vm633
    %vm1231 = vmand %vm1215, %vm634
    %vm1232 = vmand %vm1216, %vm635
    %vm1233 = vmand %vm1217, %vm636
    %vm1234 = vmand %vm1218, %vm637
    %v1235 = vsel %vm1219, 1, 0
    %v1236 = vsel %vm1220, 1, 0
    %v1237 = vsel %vm1221, 1, 0
    %v1238 = vsel %vm1222, 1, 0
    %v1239 = vsel %vm1223, 1, 0
    %v1240 = vsel %vm1224, 1, 0
    %v1241 = vsel %vm1225, 1, 0
    %v1242 = vsel %vm1226, 1, 0
    %v1243 = vsel %vm1227, 1, 0
    %v1244 = vsel %vm1228, 1, 0
    %v1245 = vsel %vm1229, 1, 0
    %v1246 = vsel %vm1230, 1, 0
    %v1247 = vsel %vm1231, 1, 0
    %v1248 = vsel %vm1232, 1, 0
    %v1249 = vsel %vm1233, 1, 0
    %v1250 = vsel %vm1234, 1, 0
    %v1251 = vcvt.s32.f32 %v1235
    %v1252 = vcvt.s32.f32 %v1236
    %v1253 = vcvt.s32.f32 %v1237
    %v1254 = vcvt.s32.f32 %v1238
    %v1255 = vcvt.s32.f32 %v1239
    %v1256 = vcvt.s32.f32 %v1240
    %v1257 = vcvt.s32.f32 %v1241
    %v1258 = vcvt.s32.f32 %v1242
    %v1259 = vcvt.s32.f32 %v1243
    %v1260 = vcvt.s32.f32 %v1244
    %v1261 = vcvt.s32.f32 %v1245
    %v1262 = vcvt.s32.f32 %v1246
    %v1263 = vcvt.s32.f32 %v1247
    %v1264 = vcvt.s32.f32 %v1248
    %v1265 = vcvt.s32.f32 %v1249
    %v1266 = vcvt.s32.f32 %v1250
    %v1267 = vmul.f32 %v576, %v1251
    %v1268 = vmul.f32 %v577, %v1252
    %v1269 = vmul.f32 %v578, %v1253
    %v1270 = vmul.f32 %v579, %v1254
    %v1271 = vmul.f32 %v580, %v1255
    %v1272 = vmul.f32 %v581, %v1256
    %v1273 = vmul.f32 %v582, %v1257
    %v1274 = vmul.f32 %v583, %v1258
    %v1275 = vmul.f32 %v584, %v1259
    %v1276 = vmul.f32 %v585, %v1260
    %v1277 = vmul.f32 %v586, %v1261
    %v1278 = vmul.f32 %v587, %v1262
    %v1279 = vmul.f32 %v588, %v1263
    %v1280 = vmul.f32 %v589, %v1264
    %v1281 = vmul.f32 %v975, %v1265
    %v1282 = vmul.f32 %v1202, %v1266
    %v1283 = vld [vmem:[#allocation2 + $0x8a] sm:$0xff]
    %vm1284 = vmand %vm1106, %vm734
    %vm1285 = vmand %vm1107, %vm735
    %vm1286 = vmand %vm1108, %vm736
    %vm1287 = vmand %vm1109, %vm737
    %vm1288 = vmand %vm1110, %vm738
    %vm1289 = vmand %vm1111, %vm739
    %vm1290 = vmand %vm1112, %vm740
    %vm1291 = vmand %vm1113, %vm741
    %vm1292 = vmand %vm1114, %vm742
    %vm1293 = vmand %vm1115, %vm743
    %vm1294 = vmand %vm1116, %vm744
    %vm1295 = vmand %vm1117, %vm745
    %vm1296 = vmand %vm1118, %vm746
    %vm1297 = vmand %vm1119, %vm747
    %vm1298 = vmand %vm1120, %vm748
    %vm1299 = vmand %vm1121, %vm749
    %vm1300 = vmand %vm1284, %vm766
    %vm1301 = vmand %vm1285, %vm767
    %vm1302 = vmand %vm1286, %vm768
    %vm1303 = vmand %vm1287, %vm769
    %vm1304 = vmand %vm1288, %vm770
    %vm1305 = vmand %vm1289, %vm771
    %vm1306 = vmand %vm1290, %vm772
    %vm1307 = vmand %vm1291, %vm773
    %vm1308 = vmand %vm1292, %vm774
    %vm1309 = vmand %vm1293, %vm775
    %vm1310 = vmand %vm1294, %vm776
    %vm1311 = vmand %vm1295, %vm777
    %vm1312 = vmand %vm1296, %vm778
    %vm1313 = vmand %vm1297, %vm779
    %vm1314 = vmand %vm1298, %vm780
    %vm1315 = vmand %vm1299, %vm781
    %v1316 = vsel %vm1300, 1, 0
    %v1317 = vsel %vm1301, 1, 0
    %v1318 = vsel %vm1302, 1, 0
    %v1319 = vsel %vm1303, 1, 0
    %v1320 = vsel %vm1304, 1, 0
    %v1321 = vsel %vm1305, 1, 0
    %v1322 = vsel %vm1306, 1, 0
    %v1323 = vsel %vm1307, 1, 0
    %v1324 = vsel %vm1308, 1, 0
    %v1325 = vsel %vm1309, 1, 0
    %v1326 = vsel %vm1310, 1, 0
    %v1327 = vsel %vm1311, 1, 0
    %v1328 = vsel %vm1312, 1, 0
    %v1329 = vsel %vm1313, 1, 0
    %v1330 = vsel %vm1314, 1, 0
    %v1331 = vsel %vm1315, 1, 0
    %v1332 = vcvt.s32.f32 %v1316
    %v1333 = vcvt.s32.f32 %v1317
    %v1334 = vcvt.s32.f32 %v1318
    %v1335 = vcvt.s32.f32 %v1319
    %v1336 = vcvt.s32.f32 %v1320
    %v1337 = vcvt.s32.f32 %v1321
    %v1338 = vcvt.s32.f32 %v1322
    %v1339 = vcvt.s32.f32 %v1323
    %v1340 = vcvt.s32.f32 %v1324
    %v1341 = vcvt.s32.f32 %v1325
    %v1342 = vcvt.s32.f32 %v1326
    %v1343 = vcvt.s32.f32 %v1327
    %v1344 = vcvt.s32.f32 %v1328
    %v1345 = vcvt.s32.f32 %v1329
    %v1346 = vcvt.s32.f32 %v1330
    %v1347 = vcvt.s32.f32 %v1331
    %v1348 = vmul.f32 %v704, %v1332
    %v1349 = vmul.f32 %v705, %v1333
    %v1350 = vmul.f32 %v706, %v1334
    %v1351 = vmul.f32 %v707, %v1335
    %v1352 = vmul.f32 %v708, %v1336
    %v1353 = vmul.f32 %v709, %v1337
    %v1354 = vmul.f32 %v710, %v1338
    %v1355 = vmul.f32 %v711, %v1339
    %v1356 = vmul.f32 %v712, %v1340
    %v1357 = vmul.f32 %v713, %v1341
    %v1358 = vmul.f32 %v714, %v1342
    %v1359 = vmul.f32 %v715, %v1343
    %v1360 = vmul.f32 %v716, %v1344
    %v1361 = vmul.f32 %v717, %v1345
    %v1362 = vmul.f32 %v976, %v1346
    %v1363 = vmul.f32 %v1283, %v1347
    %1380 = vrot.lane.b32.xlu0 %v686, 32
    %v1381 = vpop.permute.xlu0 %1380
    %1382 = vrot.lane.b32.xlu0 %v687, 32
    %v1383 = vpop.permute.xlu0 %1382
    %1384 = vrot.lane.b32.xlu0 %v688, 32
    %v1385 = vpop.permute.xlu0 %1384
    %1386 = vrot.lane.b32.xlu0 %v689, 32
    %v1387 = vpop.permute.xlu0 %1386
    %1388 = vrot.lane.b32.xlu0 %v690, 32
    %v1389 = vpop.permute.xlu0 %1388
    %1390 = vrot.lane.b32.xlu0 %v691, 32
    %v1391 = vpop.permute.xlu0 %1390
    %1392 = vrot.lane.b32.xlu0 %v692, 32
    %v1393 = vpop.permute.xlu0 %1392
    %1394 = vrot.lane.b32.xlu0 %v693, 32
    %v1395 = vpop.permute.xlu0 %1394
    %1396 = vrot.lane.b32.xlu0 %v694, 32
    %v1397 = vpop.permute.xlu0 %1396
    %1398 = vrot.lane.b32.xlu0 %v695, 32
    %v1399 = vpop.permute.xlu0 %1398
    %1400 = vrot.lane.b32.xlu0 %v696, 32
    %v1401 = vpop.permute.xlu0 %1400
    %1402 = vrot.lane.b32.xlu0 %v697, 32
    %v1403 = vpop.permute.xlu0 %1402
    %1404 = vrot.lane.b32.xlu0 %v698, 32
    %v1405 = vpop.permute.xlu0 %1404
    %1406 = vrot.lane.b32.xlu0 %v699, 32
    %v1407 = vpop.permute.xlu0 %1406
    %1408 = vrot.lane.b32.xlu0 %v700, 32
    %v1409 = vpop.permute.xlu0 %1408
    %1410 = vrot.lane.b32.xlu0 %v701, 32
    %v1411 = vpop.permute.xlu0 %1410
    %1444 = vrot.lane.b32.xlu0 %v830, 64
    %v1445 = vpop.permute.xlu0 %1444
    %1446 = vrot.lane.b32.xlu0 %v831, 64
    %v1447 = vpop.permute.xlu0 %1446
    %1448 = vrot.lane.b32.xlu0 %v832, 64
    %v1449 = vpop.permute.xlu0 %1448
    %1450 = vrot.lane.b32.xlu0 %v833, 64
    %v1451 = vpop.permute.xlu0 %1450
    %1452 = vrot.lane.b32.xlu0 %v834, 64
    %v1453 = vpop.permute.xlu0 %1452
    %1454 = vrot.lane.b32.xlu0 %v835, 64
    %v1455 = vpop.permute.xlu0 %1454
    %1456 = vrot.lane.b32.xlu0 %v836, 64
    %v1457 = vpop.permute.xlu0 %1456
    %1458 = vrot.lane.b32.xlu0 %v837, 64
    %v1459 = vpop.permute.xlu0 %1458
    %1460 = vrot.lane.b32.xlu0 %v838, 64
    %v1461 = vpop.permute.xlu0 %1460
    %1462 = vrot.lane.b32.xlu0 %v839, 64
    %v1463 = vpop.permute.xlu0 %1462
    %1464 = vrot.lane.b32.xlu0 %v840, 64
    %v1465 = vpop.permute.xlu0 %1464
    %1466 = vrot.lane.b32.xlu0 %v841, 64
    %v1467 = vpop.permute.xlu0 %1466
    %1468 = vrot.lane.b32.xlu0 %v842, 64
    %v1469 = vpop.permute.xlu0 %1468
    %1470 = vrot.lane.b32.xlu0 %v843, 64
    %v1471 = vpop.permute.xlu0 %1470
    %1472 = vrot.lane.b32.xlu0 %v844, 64
    %v1473 = vpop.permute.xlu0 %1472
    %1474 = vrot.lane.b32.xlu0 %v845, 64
    %v1475 = vpop.permute.xlu0 %1474
    %1508 = vrot.lane.b32.xlu0 %v959, 96
    %v1509 = vpop.permute.xlu0 %1508
    %1510 = vrot.lane.b32.xlu0 %v960, 96
    %v1511 = vpop.permute.xlu0 %1510
    %1512 = vrot.lane.b32.xlu0 %v961, 96
    %v1513 = vpop.permute.xlu0 %1512
    %1514 = vrot.lane.b32.xlu0 %v962, 96
    %v1515 = vpop.permute.xlu0 %1514
    %1516 = vrot.lane.b32.xlu0 %v963, 96
    %v1517 = vpop.permute.xlu0 %1516
    %1518 = vrot.lane.b32.xlu0 %v964, 96
    %v1519 = vpop.permute.xlu0 %1518
    %1520 = vrot.lane.b32.xlu0 %v965, 96
    %v1521 = vpop.permute.xlu0 %1520
    %1522 = vrot.lane.b32.xlu0 %v966, 96
    %v1523 = vpop.permute.xlu0 %1522
    %1524 = vrot.lane.b32.xlu0 %v967, 96
    %v1525 = vpop.permute.xlu0 %1524
    %1526 = vrot.lane.b32.xlu0 %v968, 96
    %v1527 = vpop.permute.xlu0 %1526
    %1528 = vrot.lane.b32.xlu0 %v969, 96
    %v1529 = vpop.permute.xlu0 %1528
    %1530 = vrot.lane.b32.xlu0 %v970, 96
    %v1531 = vpop.permute.xlu0 %1530
    %1532 = vrot.lane.b32.xlu0 %v971, 96
    %v1533 = vpop.permute.xlu0 %1532
    %1534 = vrot.lane.b32.xlu0 %v972, 96
    %v1535 = vpop.permute.xlu0 %1534
    %1536 = vrot.lane.b32.xlu0 %v973, 96
    %v1537 = vpop.permute.xlu0 %1536
    %1538 = vrot.lane.b32.xlu0 %v974, 96
    %v1539 = vpop.permute.xlu0 %1538
    %1572 = vrot.lane.b32.xlu0 %v1041, 32
    %v1573 = vpop.permute.xlu0 %1572
    %1574 = vrot.lane.b32.xlu0 %v1042, 32
    %v1575 = vpop.permute.xlu0 %1574
    %1576 = vrot.lane.b32.xlu0 %v1043, 32
    %v1577 = vpop.permute.xlu0 %1576
    %1578 = vrot.lane.b32.xlu0 %v1044, 32
    %v1579 = vpop.permute.xlu0 %1578
    %1580 = vrot.lane.b32.xlu0 %v1045, 32
    %v1581 = vpop.permute.xlu0 %1580
    %1582 = vrot.lane.b32.xlu0 %v1046, 32
    %v1583 = vpop.permute.xlu0 %1582
    %1584 = vrot.lane.b32.xlu0 %v1047, 32
    %v1585 = vpop.permute.xlu0 %1584
    %1586 = vrot.lane.b32.xlu0 %v1048, 32
    %v1587 = vpop.permute.xlu0 %1586
    %1588 = vrot.lane.b32.xlu0 %v1049, 32
    %v1589 = vpop.permute.xlu0 %1588
    %1590 = vrot.lane.b32.xlu0 %v1050, 32
    %v1591 = vpop.permute.xlu0 %1590
    %1592 = vrot.lane.b32.xlu0 %v1051, 32
    %v1593 = vpop.permute.xlu0 %1592
    %1594 = vrot.lane.b32.xlu0 %v1052, 32
    %v1595 = vpop.permute.xlu0 %1594
    %1596 = vrot.lane.b32.xlu0 %v1053, 32
    %v1597 = vpop.permute.xlu0 %1596
    %1598 = vrot.lane.b32.xlu0 %v1054, 32
    %v1599 = vpop.permute.xlu0 %1598
    %1600 = vrot.lane.b32.xlu0 %v1055, 32
    %v1601 = vpop.permute.xlu0 %1600
    %1602 = vrot.lane.b32.xlu0 %v1056, 32
    %v1603 = vpop.permute.xlu0 %1602
    %1636 = vrot.lane.b32.xlu0 %v1186, 64
    %v1637 = vpop.permute.xlu0 %1636
    %1638 = vrot.lane.b32.xlu0 %v1187, 64
    %v1639 = vpop.permute.xlu0 %1638
    %1640 = vrot.lane.b32.xlu0 %v1188, 64
    %v1641 = vpop.permute.xlu0 %1640
    %1642 = vrot.lane.b32.xlu0 %v1189, 64
    %v1643 = vpop.permute.xlu0 %1642
    %1644 = vrot.lane.b32.xlu0 %v1190, 64
    %v1645 = vpop.permute.xlu0 %1644
    %1646 = vrot.lane.b32.xlu0 %v1191, 64
    %v1647 = vpop.permute.xlu0 %1646
    %1648 = vrot.lane.b32.xlu0 %v1192, 64
    %v1649 = vpop.permute.xlu0 %1648
    %1650 = vrot.lane.b32.xlu0 %v1193, 64
    %v1651 = vpop.permute.xlu0 %1650
    %1652 = vrot.lane.b32.xlu0 %v1194, 64
    %v1653 = vpop.permute.xlu0 %1652
    %1654 = vrot.lane.b32.xlu0 %v1195, 64
    %v1655 = vpop.permute.xlu0 %1654
    %1656 = vrot.lane.b32.xlu0 %v1196, 64
    %v1657 = vpop.permute.xlu0 %1656
    %1658 = vrot.lane.b32.xlu0 %v1197, 64
    %v1659 = vpop.permute.xlu0 %1658
    %1660 = vrot.lane.b32.xlu0 %v1198, 64
    %v1661 = vpop.permute.xlu0 %1660
    %1662 = vrot.lane.b32.xlu0 %v1199, 64
    %v1663 = vpop.permute.xlu0 %1662
    %1664 = vrot.lane.b32.xlu0 %v1200, 64
    %v1665 = vpop.permute.xlu0 %1664
    %1666 = vrot.lane.b32.xlu0 %v1201, 64
    %v1667 = vpop.permute.xlu0 %1666
    %1700 = vrot.lane.b32.xlu0 %v1267, 96
    %v1701 = vpop.permute.xlu0 %1700
    %1702 = vrot.lane.b32.xlu0 %v1268, 96
    %v1703 = vpop.permute.xlu0 %1702
    %1704 = vrot.lane.b32.xlu0 %v1269, 96
    %v1705 = vpop.permute.xlu0 %1704
    %1706 = vrot.lane.b32.xlu0 %v1270, 96
    %v1707 = vpop.permute.xlu0 %1706
    %1708 = vrot.lane.b32.xlu0 %v1271, 96
    %v1709 = vpop.permute.xlu0 %1708
    %1710 = vrot.lane.b32.xlu0 %v1272, 96
    %v1711 = vpop.permute.xlu0 %1710
    %1712 = vrot.lane.b32.xlu0 %v1273, 96
    %v1713 = vpop.permute.xlu0 %1712
    %1714 = vrot.lane.b32.xlu0 %v1274, 96
    %v1715 = vpop.permute.xlu0 %1714
    %1716 = vrot.lane.b32.xlu0 %v1275, 96
    %v1717 = vpop.permute.xlu0 %1716
    %1718 = vrot.lane.b32.xlu0 %v1276, 96
    %v1719 = vpop.permute.xlu0 %1718
    %1720 = vrot.lane.b32.xlu0 %v1277, 96
    %v1721 = vpop.permute.xlu0 %1720
    %1722 = vrot.lane.b32.xlu0 %v1278, 96
    %v1723 = vpop.permute.xlu0 %1722
    %1724 = vrot.lane.b32.xlu0 %v1279, 96
    %v1725 = vpop.permute.xlu0 %1724
    %1726 = vrot.lane.b32.xlu0 %v1280, 96
    %v1727 = vpop.permute.xlu0 %1726
    %1728 = vrot.lane.b32.xlu0 %v1281, 96
    %v1729 = vpop.permute.xlu0 %1728
    %1730 = vrot.lane.b32.xlu0 %v1282, 96
    %v1731 = vpop.permute.xlu0 %1730
    %v1748 = vsel %vm279, %v558, %v1381
    %v1749 = vsel %vm279, %v559, %v1383
    %v1750 = vsel %vm279, %v560, %v1385
    %v1751 = vsel %vm279, %v561, %v1387
    %v1752 = vsel %vm279, %v562, %v1389
    %v1753 = vsel %vm279, %v563, %v1391
    %v1754 = vsel %vm279, %v564, %v1393
    %v1755 = vsel %vm279, %v565, %v1395
    %v1756 = vsel %vm279, %v566, %v1397
    %v1757 = vsel %vm279, %v567, %v1399
    %v1758 = vsel %vm279, %v568, %v1401
    %v1759 = vsel %vm279, %v569, %v1403
    %v1760 = vsel %vm279, %v570, %v1405
    %v1761 = vsel %vm279, %v571, %v1407
    %v1762 = vsel %vm279, %v572, %v1409
    %v1763 = vsel %vm279, %v573, %v1411
    %vm1764 = vcmask 523264
    %v1765 = vsel %vm1764, %v1748, %v1445
    %v1766 = vsel %vm1764, %v1749, %v1447
    %v1767 = vsel %vm1764, %v1750, %v1449
    %v1768 = vsel %vm1764, %v1751, %v1451
    %v1769 = vsel %vm1764, %v1752, %v1453
    %v1770 = vsel %vm1764, %v1753, %v1455
    %v1771 = vsel %vm1764, %v1754, %v1457
    %v1772 = vsel %vm1764, %v1755, %v1459
    %v1773 = vsel %vm1764, %v1756, %v1461
    %v1774 = vsel %vm1764, %v1757, %v1463
    %v1775 = vsel %vm1764, %v1758, %v1465
    %v1776 = vsel %vm1764, %v1759, %v1467
    %v1777 = vsel %vm1764, %v1760, %v1469
    %v1778 = vsel %vm1764, %v1761, %v1471
    %v1779 = vsel %vm1764, %v1762, %v1473
    %v1780 = vsel %vm1764, %v1763, %v1475
    %vm1781 = vcmask 785408
    %v1782 = vsel %vm1781, %v1765, %v1509
    %v1783 = vsel %vm1781, %v1766, %v1511
    %v1784 = vsel %vm1781, %v1767, %v1513
    %v1785 = vsel %vm1781, %v1768, %v1515
    %v1786 = vsel %vm1781, %v1769, %v1517
    %v1787 = vsel %vm1781, %v1770, %v1519
    %v1788 = vsel %vm1781, %v1771, %v1521
    %v1789 = vsel %vm1781, %v1772, %v1523
    %v1790 = vsel %vm1781, %v1773, %v1525
    %v1791 = vsel %vm1781, %v1774, %v1527
    %v1792 = vsel %vm1781, %v1775, %v1529
    %v1793 = vsel %vm1781, %v1776, %v1531
    %v1794 = vsel %vm1781, %v1777, %v1533
    %v1795 = vsel %vm1781, %v1778, %v1535
    %v1796 = vsel %vm1781, %v1779, %v1537
    %v1797 = vsel %vm1781, %v1780, %v1539
    %v1798 = vsel %vm279, %v575, %v1573
    %v1799 = vsel %vm279, %v576, %v1575
    %v1800 = vsel %vm279, %v577, %v1577
    %v1801 = vsel %vm279, %v578, %v1579
    %v1802 = vsel %vm279, %v579, %v1581
    %v1803 = vsel %vm279, %v580, %v1583
    %v1804 = vsel %vm279, %v581, %v1585
    %v1805 = vsel %vm279, %v582, %v1587
    %v1806 = vsel %vm279, %v583, %v1589
    %v1807 = vsel %vm279, %v584, %v1591
    %v1808 = vsel %vm279, %v585, %v1593
    %v1809 = vsel %vm279, %v586, %v1595
    %v1810 = vsel %vm279, %v587, %v1597
    %v1811 = vsel %vm279, %v588, %v1599
    %v1812 = vsel %vm279, %v589, %v1601
    %v1813 = vsel %vm279, %v975, %v1603
    %v1814 = vsel %vm1764, %v1798, %v1637
    %v1815 = vsel %vm1764, %v1799, %v1639
    %v1816 = vsel %vm1764, %v1800, %v1641
    %v1817 = vsel %vm1764, %v1801, %v1643
    %v1818 = vsel %vm1764, %v1802, %v1645
    %v1819 = vsel %vm1764, %v1803, %v1647
    %v1820 = vsel %vm1764, %v1804, %v1649
    %v1821 = vsel %vm1764, %v1805, %v1651
    %v1822 = vsel %vm1764, %v1806, %v1653
    %v1823 = vsel %vm1764, %v1807, %v1655
    %v1824 = vsel %vm1764, %v1808, %v1657
    %v1825 = vsel %vm1764, %v1809, %v1659
    %v1826 = vsel %vm1764, %v1810, %v1661
    %v1827 = vsel %vm1764, %v1811, %v1663
    %v1828 = vsel %vm1764, %v1812, %v1665
    %v1829 = vsel %vm1764, %v1813, %v1667
    %v1830 = vsel %vm1781, %v1814, %v1701
    %v1831 = vsel %vm1781, %v1815, %v1703
    %v1832 = vsel %vm1781, %v1816, %v1705
    %v1833 = vsel %vm1781, %v1817, %v1707
    %v1834 = vsel %vm1781, %v1818, %v1709
    %v1835 = vsel %vm1781, %v1819, %v1711
    %v1836 = vsel %vm1781, %v1820, %v1713
    %v1837 = vsel %vm1781, %v1821, %v1715
    %v1838 = vsel %vm1781, %v1822, %v1717
    %v1839 = vsel %vm1781, %v1823, %v1719
    %v1840 = vsel %vm1781, %v1824, %v1721
    %v1841 = vsel %vm1781, %v1825, %v1723
    %v1842 = vsel %vm1781, %v1826, %v1725
    %v1843 = vsel %vm1781, %v1827, %v1727
    %v1844 = vsel %vm1781, %v1828, %v1729
    %v1845 = vsel %vm1781, %v1829, %v1731
    %v1846 = vpack.c.bf16 %v1783, %v1782
    %v1847 = vpack.c.bf16 %v1831, %v1830
    %v1848 = vpack.c.bf16 %v1349, %v1348
    %v1849 = vpack.c.bf16 %v1785, %v1784
    %v1850 = vpack.c.bf16 %v1833, %v1832
    %v1851 = vpack.c.bf16 %v1351, %v1350
    %v1852 = vpack.c.bf16 %v1787, %v1786
    %v1853 = vpack.c.bf16 %v1835, %v1834
    %v1854 = vpack.c.bf16 %v1353, %v1352
    %v1855 = vpack.c.bf16 %v1789, %v1788
    %v1856 = vpack.c.bf16 %v1837, %v1836
    %v1857 = vpack.c.bf16 %v1355, %v1354
    %v1858 = vpack.c.bf16 %v1791, %v1790
    %v1859 = vpack.c.bf16 %v1839, %v1838
    %v1860 = vpack.c.bf16 %v1357, %v1356
    %v1861 = vpack.c.bf16 %v1793, %v1792
    %v1862 = vpack.c.bf16 %v1841, %v1840
    %v1863 = vpack.c.bf16 %v1359, %v1358
    %v1864 = vpack.c.bf16 %v1795, %v1794
    %v1865 = vpack.c.bf16 %v1843, %v1842
    %v1866 = vpack.c.bf16 %v1361, %v1360
    %v1867 = vpack.c.bf16 %v1797, %v1796
    %v1868 = vpack.c.bf16 %v1845, %v1844
    %v1869 = vpack.c.bf16 %v1363, %v1362
    %v1870 = vld [vmem:[%s3] sm:$0xf]
    %v1871 = vld [vmem:[%s3 + $0x4] sm:$0xf]
    %v1872 = vld [vmem:[%s3 + $0x8] sm:$0xf]
    %v1873 = vld [vmem:[%s3 + $0xc] sm:$0xf]
    %v1874 = vld [vmem:[%s3 + $0x10] sm:$0xf]
    %v1875 = vld [vmem:[%s3 + $0x14] sm:$0xf]
    %v1876 = vld [vmem:[%s3 + $0x18] sm:$0xf]
    %v1877 = vld [vmem:[%s3 + $0x1c] sm:$0xf]
    %v1878 = vld [vmem:[%s3 + $0x20] sm:$0xf]
    %v1879 = vld [vmem:[%s3 + $0x24] sm:$0xf]
    %v1880 = vld [vmem:[%s3 + $0x28] sm:$0xf]
    %v1881 = vld [vmem:[%s3 + $0x2c] sm:$0xf]
    %v1882 = vld [vmem:[%s3 + $0x30] sm:$0xf]
    %v1883 = vld [vmem:[%s3 + $0x34] sm:$0xf]
    %v1884 = vld [vmem:[%s3 + $0x38] sm:$0xf]
    %v1885 = vld [vmem:[%s3 + $0x3c] sm:$0xf]
    %v1886 = vld [vmem:[%s3 + $0x40] sm:$0xf]
    %v1887 = vld [vmem:[%s3 + $0x44] sm:$0xf]
    %v1888 = vld [vmem:[%s3 + $0x48] sm:$0xf]
    %v1889 = vld [vmem:[%s3 + $0x4c] sm:$0xf]
    %v1890 = vld [vmem:[%s3 + $0x50] sm:$0xf]
    %v1891 = vld [vmem:[%s3 + $0x54] sm:$0xf]
    %v1892 = vld [vmem:[%s3 + $0x58] sm:$0xf]
    %v1893 = vld [vmem:[%s3 + $0x5c] sm:$0xf]
    %v1894 = vld [vmem:[%s3 + $0x60] sm:$0xf]
    %v1895 = vld [vmem:[%s3 + $0x64] sm:$0xf]
    %v1896 = vld [vmem:[%s3 + $0x68] sm:$0xf]
    %v1897 = vld [vmem:[%s3 + $0x6c] sm:$0xf]
    %v1898 = vld [vmem:[%s3 + $0x70] sm:$0xf]
    %v1899 = vld [vmem:[%s3 + $0x74] sm:$0xf]
    %v1900 = vld [vmem:[%s3 + $0x78] sm:$0xf]
    %v1901 = vld [vmem:[%s3 + $0x7c] sm:$0xf]
    %v1902 = vld [vmem:[%s3 + $0x80] sm:$0xf]
    %v1903 = vld [vmem:[%s3 + $0x84] sm:$0xf]
    %v1904 = vld [vmem:[%s3 + $0x88] sm:$0xf]
    %v1905 = vld [vmem:[%s3 + $0x8c] sm:$0xf]
    %v1906 = vld [vmem:[%s4] sm:$0x1]
    %v1908 = vlaneseq
    %v1909 = vshrl.u32 %v1908, 7
    %v1910 = vsub.s32 0, %v1909
    %v1911 = vrot.slane %v1906, %v1910
    %v1949 = vunpack.c.l.b16 %v1870
    %v1950 = vunpack.c.l.b16 %v1871
    %v1951 = vunpack.c.l.b16 %v1872
    %v1952 = vunpack.c.l.b16 %v1873
    %v1953 = vunpack.c.l.b16 %v1874
    %v1954 = vunpack.c.l.b16 %v1875
    %v1955 = vunpack.c.l.b16 %v1876
    %v1956 = vunpack.c.l.b16 %v1877
    %v1957 = vunpack.c.l.b16 %v1878
    %v1958 = vunpack.c.l.b16 %v1879
    %v1959 = vunpack.c.l.b16 %v1880
    %v1960 = vunpack.c.l.b16 %v1881
    %v1961 = vunpack.c.l.b16 %v1882
    %v1962 = vunpack.c.l.b16 %v1883
    %v1963 = vunpack.c.l.b16 %v1884
    %v1964 = vunpack.c.l.b16 %v1885
    %v1965 = vunpack.c.l.b16 %v1886
    %v1966 = vunpack.c.l.b16 %v1887
    %v1967 = vunpack.c.l.b16 %v1888
    %v1968 = vunpack.c.l.b16 %v1889
    %v1969 = vunpack.c.l.b16 %v1890
    %v1970 = vunpack.c.l.b16 %v1891
    %v1971 = vunpack.c.l.b16 %v1892
    %v1972 = vunpack.c.l.b16 %v1893
    %v1973 = vunpack.c.l.b16 %v1894
    %v1974 = vunpack.c.l.b16 %v1895
    %v1975 = vunpack.c.l.b16 %v1896
    %v1976 = vunpack.c.l.b16 %v1897
    %v1977 = vunpack.c.l.b16 %v1898
    %v1978 = vunpack.c.l.b16 %v1899
    %v1979 = vunpack.c.l.b16 %v1900
    %v1980 = vunpack.c.l.b16 %v1901
    %v1981 = vunpack.c.l.b16 %v1902
    %v1982 = vunpack.c.l.b16 %v1903
    %v1983 = vunpack.c.l.b16 %v1904
    %v1984 = vunpack.c.l.b16 %v1905
    %v1985 = vpack.c.b16 %v1950, %v1949
    %v1986 = vpack.c.b16 %v1952, %v1951
    %v1987 = vpack.c.b16 %v1954, %v1953
    %v1988 = vpack.c.b16 %v1956, %v1955
    %v1989 = vpack.c.b16 %v1958, %v1957
    %v1990 = vpack.c.b16 %v1960, %v1959
    %v1991 = vpack.c.b16 %v1962, %v1961
    %v1992 = vpack.c.b16 %v1964, %v1963
    %v1993 = vpack.c.b16 %v1966, %v1965
    %v1994 = vpack.c.b16 %v1968, %v1967
    %v1995 = vpack.c.b16 %v1970, %v1969
    %v1996 = vpack.c.b16 %v1972, %v1971
    %v1997 = vpack.c.b16 %v1974, %v1973
    %v1998 = vpack.c.b16 %v1976, %v1975
    %v1999 = vpack.c.b16 %v1978, %v1977
    %v2000 = vpack.c.b16 %v1980, %v1979
    %v2001 = vpack.c.b16 %v1982, %v1981
    %v2002 = vpack.c.b16 %v1984, %v1983
    %v2022 = vsel %vm279, %v1848, 0
    %v2025 = vsel %vm279, %v1851, 0
    %v2028 = vsel %vm279, %v1854, 0
    %v2031 = vsel %vm279, %v1857, 0
    %v2034 = vsel %vm279, %v1860, 0
    %v2037 = vsel %vm279, %v1863, 0
    %v2040 = vsel %vm279, %v1866, 0
    %v2043 = vsel %vm279, %v1869, 0
    %2045 = vmatprep.subr.bf16.mxu0 0
    %2046 = vmatpush1.bf16.msra.mxu0 %v1992
    %2047 = vmatprep.subr.bf16.mxu0 0
    %2048 = vmatpush1.bf16.msra.mxu0 %v1991
    %2049 = vmatprep.subr.bf16.mxu0 0
    %2050 = vmatpush1.bf16.msra.mxu0 %v1990
    %2051 = vmatprep.subr.bf16.mxu0 0
    %2052 = vmatpush1.bf16.msra.mxu0 %v1989
    %2053 = vmatprep.subr.bf16.mxu0 0
    %2054 = vmatpush1.bf16.msra.mxu0 %v1988
    %2055 = vmatprep.subr.bf16.mxu0 0
    %2056 = vmatpush1.bf16.msra.mxu0 %v1987
    %2057 = vmatprep.subr.bf16.mxu0 0
    %2058 = vmatpush1.bf16.msra.mxu0 %v1986
    %2059 = vmatprep.subr.bf16.mxu0 0
    %2060 = vmatpush1.bf16.msra.mxu0 %v1985
    %2061 = vmatprep.subr.bf16.mxu0 0
    %2062 = vmatpush2.bf16.msra.mxu0 %v2000
    %2063 = vmatprep.subr.bf16.mxu0 0
    %2064 = vmatpush2.bf16.msra.mxu0 %v1999
    %2065 = vmatprep.subr.bf16.mxu0 0
    %2066 = vmatpush2.bf16.msra.mxu0 %v1998
    %2067 = vmatprep.subr.bf16.mxu0 0
    %2068 = vmatpush2.bf16.msra.mxu0 %v1997
    %2069 = vmatprep.subr.bf16.mxu0 0
    %2070 = vmatpush2.bf16.msra.mxu0 %v1996
    %2071 = vmatprep.subr.bf16.mxu0 0
    %2072 = vmatpush2.bf16.msra.mxu0 %v1995
    %2073 = vmatprep.subr.bf16.mxu0 0
    %2074 = vmatpush2.bf16.msra.mxu0 %v1994
    %2075 = vmatprep.subr.bf16.mxu0 0
    %2076 = vmatpush2.bf16.msra.mxu0 %v1993
    %2077 = vmatprep.mubr.bf16.mxu0 %v1847
    %2078 = vmatmul.mubr.bf16.gmra.mxu0 %v1846
    %v2079 = vpop.f32.mrf.mxu0
    %v2080 = vadd.f32 %v1911, %v2079
    %v2081 = vpop.f32.mrf.mxu0
    %v2082 = vpop.f32.mrf.mxu0
    %v2083 = vadd.f32 %v1911, %v2082
    %v2084 = vpop.f32.mrf.mxu0
    %2085 = vmatprep.mubr.bf16.mxu0 %v1850
    %2086 = vmatmul.mubr.bf16.gmra.mxu0 %v1849
    %v2087 = vpop.f32.mrf.mxu0
    %v2088 = vadd.f32 %v1911, %v2087
    %v2089 = vpop.f32.mrf.mxu0
    %v2090 = vpop.f32.mrf.mxu0
    %v2091 = vadd.f32 %v1911, %v2090
    %v2092 = vpop.f32.mrf.mxu0
    %2093 = vmatprep.mubr.bf16.mxu0 %v1853
    %2094 = vmatmul.mubr.bf16.gmra.mxu0 %v1852
    %v2095 = vpop.f32.mrf.mxu0
    %v2096 = vadd.f32 %v1911, %v2095
    %v2097 = vpop.f32.mrf.mxu0
    %v2098 = vpop.f32.mrf.mxu0
    %v2099 = vadd.f32 %v1911, %v2098
    %v2100 = vpop.f32.mrf.mxu0
    %2101 = vmatprep.mubr.bf16.mxu0 %v1856
    %2102 = vmatmul.mubr.bf16.gmra.mxu0 %v1855
    %v2103 = vpop.f32.mrf.mxu0
    %v2104 = vadd.f32 %v1911, %v2103
    %v2105 = vpop.f32.mrf.mxu0
    %v2106 = vpop.f32.mrf.mxu0
    %v2107 = vadd.f32 %v1911, %v2106
    %v2108 = vpop.f32.mrf.mxu0
    %2109 = vmatprep.mubr.bf16.mxu0 %v1859
    %2110 = vmatmul.mubr.bf16.gmra.mxu0 %v1858
    %v2111 = vpop.f32.mrf.mxu0
    %v2112 = vadd.f32 %v1911, %v2111
    %v2113 = vpop.f32.mrf.mxu0
    %v2114 = vpop.f32.mrf.mxu0
    %v2115 = vadd.f32 %v1911, %v2114
    %v2116 = vpop.f32.mrf.mxu0
    %2117 = vmatprep.mubr.bf16.mxu0 %v1862
    %2118 = vmatmul.mubr.bf16.gmra.mxu0 %v1861
    %v2119 = vpop.f32.mrf.mxu0
    %v2120 = vadd.f32 %v1911, %v2119
    %v2121 = vpop.f32.mrf.mxu0
    %v2122 = vpop.f32.mrf.mxu0
    %v2123 = vadd.f32 %v1911, %v2122
    %v2124 = vpop.f32.mrf.mxu0
    %2125 = vmatprep.mubr.bf16.mxu0 %v1865
    %2126 = vmatmul.mubr.bf16.gmra.mxu0 %v1864
    %v2127 = vpop.f32.mrf.mxu0
    %v2128 = vadd.f32 %v1911, %v2127
    %v2129 = vpop.f32.mrf.mxu0
    %v2130 = vpop.f32.mrf.mxu0
    %v2131 = vadd.f32 %v1911, %v2130
    %v2132 = vpop.f32.mrf.mxu0
    %2133 = vmatprep.mubr.bf16.mxu0 %v1868
    %2134 = vmatmul.mubr.bf16.gmra.mxu0 %v1867
    %v2135 = vpop.f32.mrf.mxu0
    %v2136 = vadd.f32 %v1911, %v2135
    %v2137 = vpop.f32.mrf.mxu0
    %v2138 = vpop.f32.mrf.mxu0
    %v2139 = vadd.f32 %v1911, %v2138
    %v2140 = vpop.f32.mrf.mxu0
    %2141 = vdwg.mxu0
    %2142 = vmatprep.subr.bf16.mxu0 0
    %2143 = vmatpush1.bf16.msra.mxu0 0
    %2144 = vmatprep.subr.bf16.mxu0 0
    %2145 = vmatpush1.bf16.msra.mxu0 0
    %2146 = vmatprep.subr.bf16.mxu0 0
    %2147 = vmatpush1.bf16.msra.mxu0 0
    %2148 = vmatprep.subr.bf16.mxu0 0
    %2149 = vmatpush1.bf16.msra.mxu0 0
    %2150 = vmatprep.subr.bf16.mxu0 0
    %2151 = vmatpush1.bf16.msra.mxu0 0
    %2152 = vmatprep.subr.bf16.mxu0 0
    %2153 = vmatpush1.bf16.msra.mxu0 0
    %2154 = vmatprep.subr.bf16.mxu0 0
    %2155 = vmatpush1.bf16.msra.mxu0 %v2002
    %2156 = vmatprep.subr.bf16.mxu0 0
    %2157 = vmatpush1.bf16.msra.mxu0 %v2001
    %2158 = vmatprep.subr.bf16.mxu0 0
    %2159 = vmatpush2.bf16.msra.mxu0 0
    %2160 = vmatprep.subr.bf16.mxu0 0
    %2161 = vmatpush2.bf16.msra.mxu0 0
    %2162 = vmatprep.subr.bf16.mxu0 0
    %2163 = vmatpush2.bf16.msra.mxu0 0
    %2164 = vmatprep.subr.bf16.mxu0 0
    %2165 = vmatpush2.bf16.msra.mxu0 0
    %2166 = vmatprep.subr.bf16.mxu0 0
    %2167 = vmatpush2.bf16.msra.mxu0 0
    %2168 = vmatprep.subr.bf16.mxu0 0
    %2169 = vmatpush2.bf16.msra.mxu0 0
    %2170 = vmatprep.subr.bf16.mxu0 0
    %2171 = vmatpush2.bf16.msra.mxu0 0
    %2172 = vmatprep.subr.bf16.mxu0 0
    %2173 = vmatpush2.bf16.msra.mxu0 0
    %2174 = vmatprep.mubr.bf16.mxu0 0
    %2175 = vmatmul.mubr.bf16.gmra.mxu0 %v2022
    %v2176 = vpop.f32.mrf.mxu0
    %v2177 = vadd.f32 %v2080, %v2176
    %v2178 = vpop.f32.mrf.mxu0
    %v2179 = vpop.f32.mrf.mxu0
    %v2180 = vadd.f32 %v2083, %v2179
    %v2181 = vpop.f32.mrf.mxu0
    %2182 = vmatprep.mubr.bf16.mxu0 0
    %2183 = vmatmul.mubr.bf16.gmra.mxu0 %v2025
    %v2184 = vpop.f32.mrf.mxu0
    %v2185 = vadd.f32 %v2088, %v2184
    %v2186 = vpop.f32.mrf.mxu0
    %v2187 = vpop.f32.mrf.mxu0
    %v2188 = vadd.f32 %v2091, %v2187
    %v2189 = vpop.f32.mrf.mxu0
    %2190 = vmatprep.mubr.bf16.mxu0 0
    %2191 = vmatmul.mubr.bf16.gmra.mxu0 %v2028
    %v2192 = vpop.f32.mrf.mxu0
    %v2193 = vadd.f32 %v2096, %v2192
    %v2194 = vpop.f32.mrf.mxu0
    %v2195 = vpop.f32.mrf.mxu0
    %v2196 = vadd.f32 %v2099, %v2195
    %v2197 = vpop.f32.mrf.mxu0
    %2198 = vmatprep.mubr.bf16.mxu0 0
    %2199 = vmatmul.mubr.bf16.gmra.mxu0 %v2031
    %v2200 = vpop.f32.mrf.mxu0
    %v2201 = vadd.f32 %v2104, %v2200
    %v2202 = vpop.f32.mrf.mxu0
    %v2203 = vpop.f32.mrf.mxu0
    %v2204 = vadd.f32 %v2107, %v2203
    %v2205 = vpop.f32.mrf.mxu0
    %2206 = vmatprep.mubr.bf16.mxu0 0
    %2207 = vmatmul.mubr.bf16.gmra.mxu0 %v2034
    %v2208 = vpop.f32.mrf.mxu0
    %v2209 = vadd.f32 %v2112, %v2208
    %v2210 = vpop.f32.mrf.mxu0
    %v2211 = vpop.f32.mrf.mxu0
    %v2212 = vadd.f32 %v2115, %v2211
    %v2213 = vpop.f32.mrf.mxu0
    %2214 = vmatprep.mubr.bf16.mxu0 0
    %2215 = vmatmul.mubr.bf16.gmra.mxu0 %v2037
    %v2216 = vpop.f32.mrf.mxu0
    %v2217 = vadd.f32 %v2120, %v2216
    %v2218 = vpop.f32.mrf.mxu0
    %v2219 = vpop.f32.mrf.mxu0
    %v2220 = vadd.f32 %v2123, %v2219
    %v2221 = vpop.f32.mrf.mxu0
    %2222 = vmatprep.mubr.bf16.mxu0 0
    %2223 = vmatmul.mubr.bf16.gmra.mxu0 %v2040
    %v2224 = vpop.f32.mrf.mxu0
    %v2225 = vadd.f32 %v2128, %v2224
    %v2226 = vpop.f32.mrf.mxu0
    %v2227 = vpop.f32.mrf.mxu0
    %v2228 = vadd.f32 %v2131, %v2227
    %v2229 = vpop.f32.mrf.mxu0
    %2230 = vmatprep.mubr.bf16.mxu0 0
    %2231 = vmatmul.mubr.bf16.gmra.mxu0 %v2043
    %v2232 = vpop.f32.mrf.mxu0
    %v2233 = vadd.f32 %v2136, %v2232
    %v2234 = vpop.f32.mrf.mxu0
    %v2235 = vpop.f32.mrf.mxu0
    %v2236 = vadd.f32 %v2139, %v2235
    %v2237 = vpop.f32.mrf.mxu0
    %2238 = vdwg.mxu0
    %v2239 = vmax.f32 %v2177, 0.0
    %v2240 = vmax.f32 %v2180, 0.0
    %v2241 = vmax.f32 %v2185, 0.0
    %v2242 = vmax.f32 %v2188, 0.0
    %v2243 = vmax.f32 %v2193, 0.0
    %v2244 = vmax.f32 %v2196, 0.0
    %v2245 = vmax.f32 %v2201, 0.0
    %v2246 = vmax.f32 %v2204, 0.0
    %v2247 = vmax.f32 %v2209, 0.0
    %v2248 = vmax.f32 %v2212, 0.0
    %v2249 = vmax.f32 %v2217, 0.0
    %v2250 = vmax.f32 %v2220, 0.0
    %v2251 = vmax.f32 %v2225, 0.0
    %v2252 = vmax.f32 %v2228, 0.0
    %v2253 = vmax.f32 %v2233, 0.0
    %v2254 = vmax.f32 %v2236, 0.0
    %v2255 = vpack.c.bf16 %v2240, %v2239
    %v2256 = vpack.c.bf16 %v2242, %v2241
    %v2257 = vpack.c.bf16 %v2244, %v2243
    %v2258 = vpack.c.bf16 %v2246, %v2245
    %v2259 = vpack.c.bf16 %v2248, %v2247
    %v2260 = vpack.c.bf16 %v2250, %v2249
    %v2261 = vpack.c.bf16 %v2252, %v2251
    %v2262 = vpack.c.bf16 %v2254, %v2253
    %v2267 = vunpack.c.l.b16 %v2255
    %v2268 = vunpack.c.h.b16 %v2255
    %v2269 = vunpack.c.l.b16 %v2256
    %v2270 = vunpack.c.h.b16 %v2256
    %v2271 = vunpack.c.l.b16 %v2257
    %v2272 = vunpack.c.h.b16 %v2257
    %v2273 = vunpack.c.l.b16 %v2258
    %v2274 = vunpack.c.h.b16 %v2258
    %v2275 = vpack.c.b16 %v2267, %v2267
    %v2276 = vpack.c.b16 %v2268, %v2268
    %v2277 = vpack.c.b16 %v2269, %v2269
    %v2278 = vpack.c.b16 %v2270, %v2270
    %v2279 = vpack.c.b16 %v2271, %v2271
    %v2280 = vpack.c.b16 %v2272, %v2272
    %v2281 = vpack.c.b16 %v2273, %v2273
    %v2282 = vpack.c.b16 %v2274, %v2274
    %vm2291 = vcmask 519168
    %2292 = vst.msk [vmem:[#allocation3] sm:$0xf] %vm2291, %v2275
    %2293 = vst.msk [vmem:[#allocation3 + $0x4] sm:$0xf] %vm2291, %v2276
    %2294 = vst.msk [vmem:[#allocation3 + $0x8] sm:$0xf] %vm2291, %v2277
    %2295 = vst.msk [vmem:[#allocation3 + $0xc] sm:$0xf] %vm2291, %v2278
    %2296 = vst.msk [vmem:[#allocation3 + $0x10] sm:$0xf] %vm2291, %v2279
    %2297 = vst.msk [vmem:[#allocation3 + $0x14] sm:$0xf] %vm2291, %v2280
    %2298 = vst.msk [vmem:[#allocation3 + $0x18] sm:$0xf] %vm2291, %v2281
    %2299 = vst.msk [vmem:[#allocation3 + $0x1c] sm:$0xf] %vm2291, %v2282
    %v2304 = vunpack.c.l.b16 %v2259
    %v2305 = vunpack.c.h.b16 %v2259
    %v2306 = vunpack.c.l.b16 %v2260
    %v2307 = vunpack.c.h.b16 %v2260
    %v2308 = vunpack.c.l.b16 %v2261
    %v2309 = vunpack.c.h.b16 %v2261
    %v2310 = vunpack.c.l.b16 %v2262
    %v2311 = vunpack.c.h.b16 %v2262
    %v2312 = vpack.c.b16 %v2304, %v2304
    %v2313 = vpack.c.b16 %v2305, %v2305
    %v2314 = vpack.c.b16 %v2306, %v2306
    %v2315 = vpack.c.b16 %v2307, %v2307
    %v2316 = vpack.c.b16 %v2308, %v2308
    %v2317 = vpack.c.b16 %v2309, %v2309
    %v2318 = vpack.c.b16 %v2310, %v2310
    %v2319 = vpack.c.b16 %v2311, %v2311
    %s2328 = scalar_lea.vmem [#allocation3], 32
    %2329 = vst.msk [vmem:[%s2328] sm:$0xf] %vm2291, %v2312
    %2330 = vst.msk [vmem:[%s2328 + $0x4] sm:$0xf] %vm2291, %v2313
    %2331 = vst.msk [vmem:[%s2328 + $0x8] sm:$0xf] %vm2291, %v2314
    %2332 = vst.msk [vmem:[%s2328 + $0xc] sm:$0xf] %vm2291, %v2315
    %2333 = vst.msk [vmem:[%s2328 + $0x10] sm:$0xf] %vm2291, %v2316
    %2334 = vst.msk [vmem:[%s2328 + $0x14] sm:$0xf] %vm2291, %v2317
    %2335 = vst.msk [vmem:[%s2328 + $0x18] sm:$0xf] %vm2291, %v2318
    %2336 = vst.msk [vmem:[%s2328 + $0x1c] sm:$0xf] %vm2291, %v2319
    %v2337 = vld [vmem:[#allocation3] sm:$0x1]
    %v2338 = vld [vmem:[#allocation3 + $0x20] sm:$0x1]
    %v2342 = vunpack.c.l.s4 1966171168
    %v2343 = vunpack.c.0.s8 %v2342
    %v2344 = vlaneseq
    %v2345 = vshrl.u32 %v2344, 7
    %v2346 = vsub.s32 %v2343, %v2345
    %v2347 = vrot.slane %v2337, %v2346
    %v2349 = vunpack.c.l.s4 1966171168
    %v2350 = vunpack.c.0.s8 %v2349
    %v2351 = vlaneseq
    %v2352 = vshrl.u32 %v2351, 7
    %v2353 = vsub.s32 %v2350, %v2352
    %v2354 = vrot.slane %v2347, %v2353
    %v2356 = vunpack.c.l.s4 1966171168
    %v2357 = vunpack.c.0.s8 %v2356
    %v2358 = vlaneseq
    %v2359 = vshrl.u32 %v2358, 7
    %v2360 = vsub.s32 %v2357, %v2359
    %v2361 = vrot.slane %v2338, %v2360
    %v2363 = vunpack.c.l.s4 1966171168
    %v2364 = vunpack.c.0.s8 %v2363
    %v2365 = vlaneseq
    %v2366 = vshrl.u32 %v2365, 7
    %v2367 = vsub.s32 %v2364, %v2366
    %v2368 = vrot.slane %v2361, %v2367
    %v2370 = vunpack.c.l.s4 1935823168
    %v2371 = vunpack.c.0.s8 %v2370
    %v2372 = vlaneseq
    %v2373 = vshrl.u32 %v2372, 7
    %v2374 = vsub.s32 %v2371, %v2373
    %v2375 = vrot.slane %v2354, %v2374
    %v2377 = vunpack.c.l.s4 1935823168
    %v2378 = vunpack.c.0.s8 %v2377
    %v2379 = vlaneseq
    %v2380 = vshrl.u32 %v2379, 7
    %v2381 = vsub.s32 %v2378, %v2380
    %v2382 = vrot.slane %v2375, %v2381
    %v2384 = vunpack.c.l.s4 1935823168
    %v2385 = vunpack.c.0.s8 %v2384
    %v2386 = vlaneseq
    %v2387 = vshrl.u32 %v2386, 7
    %v2388 = vsub.s32 %v2385, %v2387
    %v2389 = vrot.slane %v2368, %v2388
    %v2391 = vunpack.c.l.s4 1935823168
    %v2392 = vunpack.c.0.s8 %v2391
    %v2393 = vlaneseq
    %v2394 = vshrl.u32 %v2393, 7
    %v2395 = vsub.s32 %v2392, %v2394
    %v2396 = vrot.slane %v2389, %v2395
    %v2397 = vunpack.c.l.b16 %v2382
    %v2398 = vunpack.c.l.b16 %v2396
    %v2399 = vrot.slane %v2398, 7
    %vm2400 = vcmask 1041409
    %v2401 = vsel %vm2400, %v2399, %v2397
    %v2402 = vpack.c.b16 %v2401, %v2401
    %v2404 = vunpack.c.l.s4 1966171168
    %v2405 = vunpack.c.0.s8 %v2404
    %v2406 = vlaneseq
    %v2407 = vshrl.u32 %v2406, 7
    %v2408 = vsub.s32 %v2405, %v2407
    %v2409 = vrot.slane %v2402, %v2408
    %v2411 = vunpack.c.l.s4 1966171168
    %v2412 = vunpack.c.0.s8 %v2411
    %v2413 = vlaneseq
    %v2414 = vshrl.u32 %v2413, 7
    %v2415 = vsub.s32 %v2412, %v2414
    %v2416 = vrot.slane %v2409, %v2415
    %vm2418 = vcmask 516096
    %2419 = vst.msk [vmem:[#allocation4] sm:$0x1] %vm2418, %v2416
    %v2420 = vld [vmem:[#allocation3] sm:$0x1]
    %v2421 = vld [vmem:[#allocation3 + $0x20] sm:$0x1]
    %v2425 = vunpack.c.l.s4 1966171168
    %v2426 = vunpack.c.0.s8 %v2425
    %v2427 = vlaneseq
    %v2428 = vshrl.u32 %v2427, 7
    %v2429 = vsub.s32 %v2426, %v2428
    %v2430 = vrot.slane %v2420, %v2429
    %v2432 = vunpack.c.l.s4 1966171168
    %v2433 = vunpack.c.0.s8 %v2432
    %v2434 = vlaneseq
    %v2435 = vshrl.u32 %v2434, 7
    %v2436 = vsub.s32 %v2433, %v2435
    %v2437 = vrot.slane %v2430, %v2436
    %v2439 = vunpack.c.l.s4 1966171168
    %v2440 = vunpack.c.0.s8 %v2439
    %v2441 = vlaneseq
    %v2442 = vshrl.u32 %v2441, 7
    %v2443 = vsub.s32 %v2440, %v2442
    %v2444 = vrot.slane %v2421, %v2443
    %v2446 = vunpack.c.l.s4 1966171168
    %v2447 = vunpack.c.0.s8 %v2446
    %v2448 = vlaneseq
    %v2449 = vshrl.u32 %v2448, 7
    %v2450 = vsub.s32 %v2447, %v2449
    %v2451 = vrot.slane %v2444, %v2450
    %v2453 = vunpack.c.l.s4 1935823168
    %v2454 = vunpack.c.0.s8 %v2453
    %v2455 = vlaneseq
    %v2456 = vshrl.u32 %v2455, 7
    %v2457 = vsub.s32 %v2454, %v2456
    %v2458 = vrot.slane %v2437, %v2457
    %v2460 = vunpack.c.l.s4 1935823168
    %v2461 = vunpack.c.0.s8 %v2460
    %v2462 = vlaneseq
    %v2463 = vshrl.u32 %v2462, 7
    %v2464 = vsub.s32 %v2461, %v2463
    %v2465 = vrot.slane %v2458, %v2464
    %v2467 = vunpack.c.l.s4 1935823168
    %v2468 = vunpack.c.0.s8 %v2467
    %v2469 = vlaneseq
    %v2470 = vshrl.u32 %v2469, 7
    %v2471 = vsub.s32 %v2468, %v2470
    %v2472 = vrot.slane %v2451, %v2471
    %v2474 = vunpack.c.l.s4 1935823168
    %v2475 = vunpack.c.0.s8 %v2474
    %v2476 = vlaneseq
    %v2477 = vshrl.u32 %v2476, 7
    %v2478 = vsub.s32 %v2475, %v2477
    %v2479 = vrot.slane %v2472, %v2478
    %v2480 = vunpack.c.l.b16 %v2465
    %v2481 = vunpack.c.l.b16 %v2479
    %v2482 = vrot.slane %v2480, 1
    %v2483 = vsel %vm2400, %v2481, %v2482
    %v2484 = vpack.c.b16 %v2483, %v2483
    %v2486 = vunpack.c.l.s4 1966171168
    %v2487 = vunpack.c.0.s8 %v2486
    %v2488 = vlaneseq
    %v2489 = vshrl.u32 %v2488, 7
    %v2490 = vsub.s32 %v2487, %v2489
    %v2491 = vrot.slane %v2484, %v2490
    %v2493 = vunpack.c.l.s4 1966171168
    %v2494 = vunpack.c.0.s8 %v2493
    %v2495 = vlaneseq
    %v2496 = vshrl.u32 %v2495, 7
    %v2497 = vsub.s32 %v2494, %v2496
    %v2498 = vrot.slane %v2491, %v2497
    %2499 = vrot.lane.b32.xlu0 %v2498, 64
    %v2500 = vpop.permute.xlu0 %2499
    %vm2502 = vcmask 1040896
    %2503 = vst.msk [vmem:[#allocation4] sm:$0x1] %vm2502, %v2500
    %v2504 = vld [vmem:[#allocation3] sm:$0x2]
    %v2505 = vld [vmem:[#allocation3 + $0x20] sm:$0x2]
    %v2509 = vunpack.c.l.s4 1966171168
    %v2510 = vunpack.c.0.s8 %v2509
    %v2511 = vlaneseq
    %v2512 = vshrl.u32 %v2511, 7
    %v2513 = vsub.s32 %v2510, %v2512
    %v2514 = vrot.slane %v2504, %v2513
    %v2515 = vcombine.high %v2514, %v2514
    %v2517 = vunpack.c.l.s4 1966171168
    %v2518 = vunpack.c.0.s8 %v2517
    %v2519 = vlaneseq
    %v2520 = vshrl.u32 %v2519, 7
    %v2521 = vsub.s32 %v2518, %v2520
    %v2522 = vrot.slane %v2515, %v2521
    %v2524 = vunpack.c.l.s4 1966171168
    %v2525 = vunpack.c.0.s8 %v2524
    %v2526 = vlaneseq
    %v2527 = vshrl.u32 %v2526, 7
    %v2528 = vsub.s32 %v2525, %v2527
    %v2529 = vrot.slane %v2505, %v2528
    %v2530 = vcombine.high %v2529, %v2529
    %v2532 = vunpack.c.l.s4 1966171168
    %v2533 = vunpack.c.0.s8 %v2532
    %v2534 = vlaneseq
    %v2535 = vshrl.u32 %v2534, 7
    %v2536 = vsub.s32 %v2533, %v2535
    %v2537 = vrot.slane %v2530, %v2536
    %v2539 = vunpack.c.l.s4 1935823168
    %v2540 = vunpack.c.0.s8 %v2539
    %v2541 = vlaneseq
    %v2542 = vshrl.u32 %v2541, 7
    %v2543 = vsub.s32 %v2540, %v2542
    %v2544 = vrot.slane %v2522, %v2543
    %v2546 = vunpack.c.l.s4 1935823168
    %v2547 = vunpack.c.0.s8 %v2546
    %v2548 = vlaneseq
    %v2549 = vshrl.u32 %v2548, 7
    %v2550 = vsub.s32 %v2547, %v2549
    %v2551 = vrot.slane %v2544, %v2550
    %v2553 = vunpack.c.l.s4 1935823168
    %v2554 = vunpack.c.0.s8 %v2553
    %v2555 = vlaneseq
    %v2556 = vshrl.u32 %v2555, 7
    %v2557 = vsub.s32 %v2554, %v2556
    %v2558 = vrot.slane %v2537, %v2557
    %v2560 = vunpack.c.l.s4 1935823168
    %v2561 = vunpack.c.0.s8 %v2560
    %v2562 = vlaneseq
    %v2563 = vshrl.u32 %v2562, 7
    %v2564 = vsub.s32 %v2561, %v2563
    %v2565 = vrot.slane %v2558, %v2564
    %v2566 = vunpack.c.l.b16 %v2551
    %v2567 = vunpack.c.l.b16 %v2565
    %v2568 = vrot.slane %v2567, 7
    %v2569 = vsel %vm2400, %v2568, %v2566
    %v2570 = vpack.c.b16 %v2569, %v2569
    %v2572 = vunpack.c.l.s4 1966171168
    %v2573 = vunpack.c.0.s8 %v2572
    %v2574 = vlaneseq
    %v2575 = vshrl.u32 %v2574, 7
    %v2576 = vsub.s32 %v2573, %v2575
    %v2577 = vrot.slane %v2570, %v2576
    %v2579 = vunpack.c.l.s4 1966171168
    %v2580 = vunpack.c.0.s8 %v2579
    %v2581 = vlaneseq
    %v2582 = vshrl.u32 %v2581, 7
    %v2583 = vsub.s32 %v2580, %v2582
    %v2584 = vrot.slane %v2577, %v2583
    %2586 = vst.msk [vmem:[#allocation4 + $0x1] sm:$0x1] %vm2418, %v2584
    %v2587 = vld [vmem:[#allocation3] sm:$0x2]
    %v2588 = vld [vmem:[#allocation3 + $0x20] sm:$0x2]
    %v2592 = vunpack.c.l.s4 1966171168
    %v2593 = vunpack.c.0.s8 %v2592
    %v2594 = vlaneseq
    %v2595 = vshrl.u32 %v2594, 7
    %v2596 = vsub.s32 %v2593, %v2595
    %v2597 = vrot.slane %v2587, %v2596
    %v2598 = vcombine.high %v2597, %v2597
    %v2600 = vunpack.c.l.s4 1966171168
    %v2601 = vunpack.c.0.s8 %v2600
    %v2602 = vlaneseq
    %v2603 = vshrl.u32 %v2602, 7
    %v2604 = vsub.s32 %v2601, %v2603
    %v2605 = vrot.slane %v2598, %v2604
    %v2607 = vunpack.c.l.s4 1966171168
    %v2608 = vunpack.c.0.s8 %v2607
    %v2609 = vlaneseq
    %v2610 = vshrl.u32 %v2609, 7
    %v2611 = vsub.s32 %v2608, %v2610
    %v2612 = vrot.slane %v2588, %v2611
    %v2613 = vcombine.high %v2612, %v2612
    %v2615 = vunpack.c.l.s4 1966171168
    %v2616 = vunpack.c.0.s8 %v2615
    %v2617 = vlaneseq
    %v2618 = vshrl.u32 %v2617, 7
    %v2619 = vsub.s32 %v2616, %v2618
    %v2620 = vrot.slane %v2613, %v2619
    %v2622 = vunpack.c.l.s4 1935823168
    %v2623 = vunpack.c.0.s8 %v2622
    %v2624 = vlaneseq
    %v2625 = vshrl.u32 %v2624, 7
    %v2626 = vsub.s32 %v2623, %v2625
    %v2627 = vrot.slane %v2605, %v2626
    %v2629 = vunpack.c.l.s4 1935823168
    %v2630 = vunpack.c.0.s8 %v2629
    %v2631 = vlaneseq
    %v2632 = vshrl.u32 %v2631, 7
    %v2633 = vsub.s32 %v2630, %v2632
    %v2634 = vrot.slane %v2627, %v2633
    %v2636 = vunpack.c.l.s4 1935823168
    %v2637 = vunpack.c.0.s8 %v2636
    %v2638 = vlaneseq
    %v2639 = vshrl.u32 %v2638, 7
    %v2640 = vsub.s32 %v2637, %v2639
    %v2641 = vrot.slane %v2620, %v2640
    %v2643 = vunpack.c.l.s4 1935823168
    %v2644 = vunpack.c.0.s8 %v2643
    %v2645 = vlaneseq
    %v2646 = vshrl.u32 %v2645, 7
    %v2647 = vsub.s32 %v2644, %v2646
    %v2648 = vrot.slane %v2641, %v2647
    %v2649 = vunpack.c.l.b16 %v2634
    %v2650 = vunpack.c.l.b16 %v2648
    %v2651 = vrot.slane %v2649, 1
    %v2652 = vsel %vm2400, %v2650, %v2651
    %v2653 = vpack.c.b16 %v2652, %v2652
    %v2655 = vunpack.c.l.s4 1966171168
    %v2656 = vunpack.c.0.s8 %v2655
    %v2657 = vlaneseq
    %v2658 = vshrl.u32 %v2657, 7
    %v2659 = vsub.s32 %v2656, %v2658
    %v2660 = vrot.slane %v2653, %v2659
    %v2662 = vunpack.c.l.s4 1966171168
    %v2663 = vunpack.c.0.s8 %v2662
    %v2664 = vlaneseq
    %v2665 = vshrl.u32 %v2664, 7
    %v2666 = vsub.s32 %v2663, %v2665
    %v2667 = vrot.slane %v2660, %v2666
    %2668 = vrot.lane.b32.xlu0 %v2667, 64
    %v2669 = vpop.permute.xlu0 %2668
    %2671 = vst.msk [vmem:[#allocation4 + $0x1] sm:$0x1] %vm2502, %v2669
    %v2672 = vld [vmem:[#allocation3] sm:$0x4]
    %v2673 = vld [vmem:[#allocation3 + $0x20] sm:$0x4]
    %v2677 = vunpack.c.l.s4 1966171168
    %v2678 = vunpack.c.0.s8 %v2677
    %v2679 = vlaneseq
    %v2680 = vshrl.u32 %v2679, 7
    %v2681 = vsub.s32 %v2678, %v2680
    %v2682 = vrot.slane %v2672, %v2681
    %v2684 = vunpack.c.l.s4 1966171168
    %v2685 = vunpack.c.0.s8 %v2684
    %v2686 = vlaneseq
    %v2687 = vshrl.u32 %v2686, 7
    %v2688 = vsub.s32 %v2685, %v2687
    %v2689 = vrot.slane %v2682, %v2688
    %v2690 = vcombine.high %v2689, %v2689
    %v2692 = vunpack.c.l.s4 1966171168
    %v2693 = vunpack.c.0.s8 %v2692
    %v2694 = vlaneseq
    %v2695 = vshrl.u32 %v2694, 7
    %v2696 = vsub.s32 %v2693, %v2695
    %v2697 = vrot.slane %v2673, %v2696
    %v2699 = vunpack.c.l.s4 1966171168
    %v2700 = vunpack.c.0.s8 %v2699
    %v2701 = vlaneseq
    %v2702 = vshrl.u32 %v2701, 7
    %v2703 = vsub.s32 %v2700, %v2702
    %v2704 = vrot.slane %v2697, %v2703
    %v2705 = vcombine.high %v2704, %v2704
    %v2707 = vunpack.c.l.s4 1935823168
    %v2708 = vunpack.c.0.s8 %v2707
    %v2709 = vlaneseq
    %v2710 = vshrl.u32 %v2709, 7
    %v2711 = vsub.s32 %v2708, %v2710
    %v2712 = vrot.slane %v2690, %v2711
    %v2714 = vunpack.c.l.s4 1935823168
    %v2715 = vunpack.c.0.s8 %v2714
    %v2716 = vlaneseq
    %v2717 = vshrl.u32 %v2716, 7
    %v2718 = vsub.s32 %v2715, %v2717
    %v2719 = vrot.slane %v2712, %v2718
    %v2721 = vunpack.c.l.s4 1935823168
    %v2722 = vunpack.c.0.s8 %v2721
    %v2723 = vlaneseq
    %v2724 = vshrl.u32 %v2723, 7
    %v2725 = vsub.s32 %v2722, %v2724
    %v2726 = vrot.slane %v2705, %v2725
    %v2728 = vunpack.c.l.s4 1935823168
    %v2729 = vunpack.c.0.s8 %v2728
    %v2730 = vlaneseq
    %v2731 = vshrl.u32 %v2730, 7
    %v2732 = vsub.s32 %v2729, %v2731
    %v2733 = vrot.slane %v2726, %v2732
    %v2734 = vunpack.c.l.b16 %v2719
    %v2735 = vunpack.c.l.b16 %v2733
    %v2736 = vrot.slane %v2735, 7
    %v2737 = vsel %vm2400, %v2736, %v2734
    %v2738 = vpack.c.b16 %v2737, %v2737
    %v2740 = vunpack.c.l.s4 1966171168
    %v2741 = vunpack.c.0.s8 %v2740
    %v2742 = vlaneseq
    %v2743 = vshrl.u32 %v2742, 7
    %v2744 = vsub.s32 %v2741, %v2743
    %v2745 = vrot.slane %v2738, %v2744
    %v2747 = vunpack.c.l.s4 1966171168
    %v2748 = vunpack.c.0.s8 %v2747
    %v2749 = vlaneseq
    %v2750 = vshrl.u32 %v2749, 7
    %v2751 = vsub.s32 %v2748, %v2750
    %v2752 = vrot.slane %v2745, %v2751
    %2754 = vst.msk [vmem:[#allocation4 + $0x2] sm:$0x1] %vm2418, %v2752
    %v2755 = vld [vmem:[#allocation3] sm:$0x4]
    %v2756 = vld [vmem:[#allocation3 + $0x20] sm:$0x4]
    %v2760 = vunpack.c.l.s4 1966171168
    %v2761 = vunpack.c.0.s8 %v2760
    %v2762 = vlaneseq
    %v2763 = vshrl.u32 %v2762, 7
    %v2764 = vsub.s32 %v2761, %v2763
    %v2765 = vrot.slane %v2755, %v2764
    %v2767 = vunpack.c.l.s4 1966171168
    %v2768 = vunpack.c.0.s8 %v2767
    %v2769 = vlaneseq
    %v2770 = vshrl.u32 %v2769, 7
    %v2771 = vsub.s32 %v2768, %v2770
    %v2772 = vrot.slane %v2765, %v2771
    %v2773 = vcombine.high %v2772, %v2772
    %v2775 = vunpack.c.l.s4 1966171168
    %v2776 = vunpack.c.0.s8 %v2775
    %v2777 = vlaneseq
    %v2778 = vshrl.u32 %v2777, 7
    %v2779 = vsub.s32 %v2776, %v2778
    %v2780 = vrot.slane %v2756, %v2779
    %v2782 = vunpack.c.l.s4 1966171168
    %v2783 = vunpack.c.0.s8 %v2782
    %v2784 = vlaneseq
    %v2785 = vshrl.u32 %v2784, 7
    %v2786 = vsub.s32 %v2783, %v2785
    %v2787 = vrot.slane %v2780, %v2786
    %v2788 = vcombine.high %v2787, %v2787
    %v2790 = vunpack.c.l.s4 1935823168
    %v2791 = vunpack.c.0.s8 %v2790
    %v2792 = vlaneseq
    %v2793 = vshrl.u32 %v2792, 7
    %v2794 = vsub.s32 %v2791, %v2793
    %v2795 = vrot.slane %v2773, %v2794
    %v2797 = vunpack.c.l.s4 1935823168
    %v2798 = vunpack.c.0.s8 %v2797
    %v2799 = vlaneseq
    %v2800 = vshrl.u32 %v2799, 7
    %v2801 = vsub.s32 %v2798, %v2800
    %v2802 = vrot.slane %v2795, %v2801
    %v2804 = vunpack.c.l.s4 1935823168
    %v2805 = vunpack.c.0.s8 %v2804
    %v2806 = vlaneseq
    %v2807 = vshrl.u32 %v2806, 7
    %v2808 = vsub.s32 %v2805, %v2807
    %v2809 = vrot.slane %v2788, %v2808
    %v2811 = vunpack.c.l.s4 1935823168
    %v2812 = vunpack.c.0.s8 %v2811
    %v2813 = vlaneseq
    %v2814 = vshrl.u32 %v2813, 7
    %v2815 = vsub.s32 %v2812, %v2814
    %v2816 = vrot.slane %v2809, %v2815
    %v2817 = vunpack.c.l.b16 %v2802
    %v2818 = vunpack.c.l.b16 %v2816
    %v2819 = vrot.slane %v2817, 1
    %v2820 = vsel %vm2400, %v2818, %v2819
    %v2821 = vpack.c.b16 %v2820, %v2820
    %v2823 = vunpack.c.l.s4 1966171168
    %v2824 = vunpack.c.0.s8 %v2823
    %v2825 = vlaneseq
    %v2826 = vshrl.u32 %v2825, 7
    %v2827 = vsub.s32 %v2824, %v2826
    %v2828 = vrot.slane %v2821, %v2827
    %v2830 = vunpack.c.l.s4 1966171168
    %v2831 = vunpack.c.0.s8 %v2830
    %v2832 = vlaneseq
    %v2833 = vshrl.u32 %v2832, 7
    %v2834 = vsub.s32 %v2831, %v2833
    %v2835 = vrot.slane %v2828, %v2834
    %2836 = vrot.lane.b32.xlu0 %v2835, 64
    %v2837 = vpop.permute.xlu0 %2836
    %2839 = vst.msk [vmem:[#allocation4 + $0x2] sm:$0x1] %vm2502, %v2837
    %v2840 = vld [vmem:[#allocation3] sm:$0x8]
    %v2841 = vld [vmem:[#allocation3 + $0x20] sm:$0x8]
    %v2845 = vunpack.c.l.s4 1966171168
    %v2846 = vunpack.c.0.s8 %v2845
    %v2847 = vlaneseq
    %v2848 = vshrl.u32 %v2847, 7
    %v2849 = vsub.s32 %v2846, %v2848
    %v2850 = vrot.slane %v2840, %v2849
    %v2851 = vcombine.high %v2850, %v2850
    %v2853 = vunpack.c.l.s4 1966171168
    %v2854 = vunpack.c.0.s8 %v2853
    %v2855 = vlaneseq
    %v2856 = vshrl.u32 %v2855, 7
    %v2857 = vsub.s32 %v2854, %v2856
    %v2858 = vrot.slane %v2851, %v2857
    %v2859 = vcombine.high %v2858, %v2858
    %v2861 = vunpack.c.l.s4 1966171168
    %v2862 = vunpack.c.0.s8 %v2861
    %v2863 = vlaneseq
    %v2864 = vshrl.u32 %v2863, 7
    %v2865 = vsub.s32 %v2862, %v2864
    %v2866 = vrot.slane %v2841, %v2865
    %v2867 = vcombine.high %v2866, %v2866
    %v2869 = vunpack.c.l.s4 1966171168
    %v2870 = vunpack.c.0.s8 %v2869
    %v2871 = vlaneseq
    %v2872 = vshrl.u32 %v2871, 7
    %v2873 = vsub.s32 %v2870, %v2872
    %v2874 = vrot.slane %v2867, %v2873
    %v2875 = vcombine.high %v2874, %v2874
    %v2877 = vunpack.c.l.s4 1935823168
    %v2878 = vunpack.c.0.s8 %v2877
    %v2879 = vlaneseq
    %v2880 = vshrl.u32 %v2879, 7
    %v2881 = vsub.s32 %v2878, %v2880
    %v2882 = vrot.slane %v2859, %v2881
    %v2884 = vunpack.c.l.s4 1935823168
    %v2885 = vunpack.c.0.s8 %v2884
    %v2886 = vlaneseq
    %v2887 = vshrl.u32 %v2886, 7
    %v2888 = vsub.s32 %v2885, %v2887
    %v2889 = vrot.slane %v2882, %v2888
    %v2891 = vunpack.c.l.s4 1935823168
    %v2892 = vunpack.c.0.s8 %v2891
    %v2893 = vlaneseq
    %v2894 = vshrl.u32 %v2893, 7
    %v2895 = vsub.s32 %v2892, %v2894
    %v2896 = vrot.slane %v2875, %v2895
    %v2898 = vunpack.c.l.s4 1935823168
    %v2899 = vunpack.c.0.s8 %v2898
    %v2900 = vlaneseq
    %v2901 = vshrl.u32 %v2900, 7
    %v2902 = vsub.s32 %v2899, %v2901
    %v2903 = vrot.slane %v2896, %v2902
    %v2904 = vunpack.c.l.b16 %v2889
    %v2905 = vunpack.c.l.b16 %v2903
    %v2906 = vrot.slane %v2905, 7
    %v2907 = vsel %vm2400, %v2906, %v2904
    %v2908 = vpack.c.b16 %v2907, %v2907
    %v2910 = vunpack.c.l.s4 1966171168
    %v2911 = vunpack.c.0.s8 %v2910
    %v2912 = vlaneseq
    %v2913 = vshrl.u32 %v2912, 7
    %v2914 = vsub.s32 %v2911, %v2913
    %v2915 = vrot.slane %v2908, %v2914
    %v2917 = vunpack.c.l.s4 1966171168
    %v2918 = vunpack.c.0.s8 %v2917
    %v2919 = vlaneseq
    %v2920 = vshrl.u32 %v2919, 7
    %v2921 = vsub.s32 %v2918, %v2920
    %v2922 = vrot.slane %v2915, %v2921
    %2924 = vst.msk [vmem:[#allocation4 + $0x3] sm:$0x1] %vm2418, %v2922
    %v2925 = vld [vmem:[#allocation3] sm:$0x8]
    %v2926 = vld [vmem:[#allocation3 + $0x20] sm:$0x8]
    %v2930 = vunpack.c.l.s4 1966171168
    %v2931 = vunpack.c.0.s8 %v2930
    %v2932 = vlaneseq
    %v2933 = vshrl.u32 %v2932, 7
    %v2934 = vsub.s32 %v2931, %v2933
    %v2935 = vrot.slane %v2925, %v2934
    %v2936 = vcombine.high %v2935, %v2935
    %v2938 = vunpack.c.l.s4 1966171168
    %v2939 = vunpack.c.0.s8 %v2938
    %v2940 = vlaneseq
    %v2941 = vshrl.u32 %v2940, 7
    %v2942 = vsub.s32 %v2939, %v2941
    %v2943 = vrot.slane %v2936, %v2942
    %v2944 = vcombine.high %v2943, %v2943
    %v2946 = vunpack.c.l.s4 1966171168
    %v2947 = vunpack.c.0.s8 %v2946
    %v2948 = vlaneseq
    %v2949 = vshrl.u32 %v2948, 7
    %v2950 = vsub.s32 %v2947, %v2949
    %v2951 = vrot.slane %v2926, %v2950
    %v2952 = vcombine.high %v2951, %v2951
    %v2954 = vunpack.c.l.s4 1966171168
    %v2955 = vunpack.c.0.s8 %v2954
    %v2956 = vlaneseq
    %v2957 = vshrl.u32 %v2956, 7
    %v2958 = vsub.s32 %v2955, %v2957
    %v2959 = vrot.slane %v2952, %v2958
    %v2960 = vcombine.high %v2959, %v2959
    %v2962 = vunpack.c.l.s4 1935823168
    %v2963 = vunpack.c.0.s8 %v2962
    %v2964 = vlaneseq
    %v2965 = vshrl.u32 %v2964, 7
    %v2966 = vsub.s32 %v2963, %v2965
    %v2967 = vrot.slane %v2944, %v2966
    %v2969 = vunpack.c.l.s4 1935823168
    %v2970 = vunpack.c.0.s8 %v2969
    %v2971 = vlaneseq
    %v2972 = vshrl.u32 %v2971, 7
    %v2973 = vsub.s32 %v2970, %v2972
    %v2974 = vrot.slane %v2967, %v2973
    %v2976 = vunpack.c.l.s4 1935823168
    %v2977 = vunpack.c.0.s8 %v2976
    %v2978 = vlaneseq
    %v2979 = vshrl.u32 %v2978, 7
    %v2980 = vsub.s32 %v2977, %v2979
    %v2981 = vrot.slane %v2960, %v2980
    %v2983 = vunpack.c.l.s4 1935823168
    %v2984 = vunpack.c.0.s8 %v2983
    %v2985 = vlaneseq
    %v2986 = vshrl.u32 %v2985, 7
    %v2987 = vsub.s32 %v2984, %v2986
    %v2988 = vrot.slane %v2981, %v2987
    %v2989 = vunpack.c.l.b16 %v2974
    %v2990 = vunpack.c.l.b16 %v2988
    %v2991 = vrot.slane %v2989, 1
    %v2992 = vsel %vm2400, %v2990, %v2991
    %v2993 = vpack.c.b16 %v2992, %v2992
    %v2995 = vunpack.c.l.s4 1966171168
    %v2996 = vunpack.c.0.s8 %v2995
    %v2997 = vlaneseq
    %v2998 = vshrl.u32 %v2997, 7
    %v2999 = vsub.s32 %v2996, %v2998
    %v3000 = vrot.slane %v2993, %v2999
    %v3002 = vunpack.c.l.s4 1966171168
    %v3003 = vunpack.c.0.s8 %v3002
    %v3004 = vlaneseq
    %v3005 = vshrl.u32 %v3004, 7
    %v3006 = vsub.s32 %v3003, %v3005
    %v3007 = vrot.slane %v3000, %v3006
    %3008 = vrot.lane.b32.xlu0 %v3007, 64
    %v3009 = vpop.permute.xlu0 %3008
    %3011 = vst.msk [vmem:[#allocation4 + $0x3] sm:$0x1] %vm2502, %v3009
    %v3012 = vld [vmem:[#allocation3 + $0x4] sm:$0x1]
    %v3013 = vld [vmem:[#allocation3 + $0x24] sm:$0x1]
    %v3017 = vunpack.c.l.s4 1966171168
    %v3018 = vunpack.c.0.s8 %v3017
    %v3019 = vlaneseq
    %v3020 = vshrl.u32 %v3019, 7
    %v3021 = vsub.s32 %v3018, %v3020
    %v3022 = vrot.slane %v3012, %v3021
    %v3024 = vunpack.c.l.s4 1966171168
    %v3025 = vunpack.c.0.s8 %v3024
    %v3026 = vlaneseq
    %v3027 = vshrl.u32 %v3026, 7
    %v3028 = vsub.s32 %v3025, %v3027
    %v3029 = vrot.slane %v3022, %v3028
    %v3031 = vunpack.c.l.s4 1966171168
    %v3032 = vunpack.c.0.s8 %v3031
    %v3033 = vlaneseq
    %v3034 = vshrl.u32 %v3033, 7
    %v3035 = vsub.s32 %v3032, %v3034
    %v3036 = vrot.slane %v3013, %v3035
    %v3038 = vunpack.c.l.s4 1966171168
    %v3039 = vunpack.c.0.s8 %v3038
    %v3040 = vlaneseq
    %v3041 = vshrl.u32 %v3040, 7
    %v3042 = vsub.s32 %v3039, %v3041
    %v3043 = vrot.slane %v3036, %v3042
    %v3045 = vunpack.c.l.s4 1935823168
    %v3046 = vunpack.c.0.s8 %v3045
    %v3047 = vlaneseq
    %v3048 = vshrl.u32 %v3047, 7
    %v3049 = vsub.s32 %v3046, %v3048
    %v3050 = vrot.slane %v3029, %v3049
    %v3052 = vunpack.c.l.s4 1935823168
    %v3053 = vunpack.c.0.s8 %v3052
    %v3054 = vlaneseq
    %v3055 = vshrl.u32 %v3054, 7
    %v3056 = vsub.s32 %v3053, %v3055
    %v3057 = vrot.slane %v3050, %v3056
    %v3059 = vunpack.c.l.s4 1935823168
    %v3060 = vunpack.c.0.s8 %v3059
    %v3061 = vlaneseq
    %v3062 = vshrl.u32 %v3061, 7
    %v3063 = vsub.s32 %v3060, %v3062
    %v3064 = vrot.slane %v3043, %v3063
    %v3066 = vunpack.c.l.s4 1935823168
    %v3067 = vunpack.c.0.s8 %v3066
    %v3068 = vlaneseq
    %v3069 = vshrl.u32 %v3068, 7
    %v3070 = vsub.s32 %v3067, %v3069
    %v3071 = vrot.slane %v3064, %v3070
    %v3072 = vunpack.c.l.b16 %v3057
    %v3073 = vunpack.c.l.b16 %v3071
    %v3074 = vrot.slane %v3073, 7
    %v3075 = vsel %vm2400, %v3074, %v3072
    %v3076 = vpack.c.b16 %v3075, %v3075
    %v3078 = vunpack.c.l.s4 1966171168
    %v3079 = vunpack.c.0.s8 %v3078
    %v3080 = vlaneseq
    %v3081 = vshrl.u32 %v3080, 7
    %v3082 = vsub.s32 %v3079, %v3081
    %v3083 = vrot.slane %v3076, %v3082
    %v3085 = vunpack.c.l.s4 1966171168
    %v3086 = vunpack.c.0.s8 %v3085
    %v3087 = vlaneseq
    %v3088 = vshrl.u32 %v3087, 7
    %v3089 = vsub.s32 %v3086, %v3088
    %v3090 = vrot.slane %v3083, %v3089
    %3092 = vst.msk [vmem:[#allocation4 + $0x4] sm:$0x1] %vm2418, %v3090
    %v3093 = vld [vmem:[#allocation3 + $0x4] sm:$0x1]
    %v3094 = vld [vmem:[#allocation3 + $0x24] sm:$0x1]
    %v3098 = vunpack.c.l.s4 1966171168
    %v3099 = vunpack.c.0.s8 %v3098
    %v3100 = vlaneseq
    %v3101 = vshrl.u32 %v3100, 7
    %v3102 = vsub.s32 %v3099, %v3101
    %v3103 = vrot.slane %v3093, %v3102
    %v3105 = vunpack.c.l.s4 1966171168
    %v3106 = vunpack.c.0.s8 %v3105
    %v3107 = vlaneseq
    %v3108 = vshrl.u32 %v3107, 7
    %v3109 = vsub.s32 %v3106, %v3108
    %v3110 = vrot.slane %v3103, %v3109
    %v3112 = vunpack.c.l.s4 1966171168
    %v3113 = vunpack.c.0.s8 %v3112
    %v3114 = vlaneseq
    %v3115 = vshrl.u32 %v3114, 7
    %v3116 = vsub.s32 %v3113, %v3115
    %v3117 = vrot.slane %v3094, %v3116
    %v3119 = vunpack.c.l.s4 1966171168
    %v3120 = vunpack.c.0.s8 %v3119
    %v3121 = vlaneseq
    %v3122 = vshrl.u32 %v3121, 7
    %v3123 = vsub.s32 %v3120, %v3122
    %v3124 = vrot.slane %v3117, %v3123
    %v3126 = vunpack.c.l.s4 1935823168
    %v3127 = vunpack.c.0.s8 %v3126
    %v3128 = vlaneseq
    %v3129 = vshrl.u32 %v3128, 7
    %v3130 = vsub.s32 %v3127, %v3129
    %v3131 = vrot.slane %v3110, %v3130
    %v3133 = vunpack.c.l.s4 1935823168
    %v3134 = vunpack.c.0.s8 %v3133
    %v3135 = vlaneseq
    %v3136 = vshrl.u32 %v3135, 7
    %v3137 = vsub.s32 %v3134, %v3136
    %v3138 = vrot.slane %v3131, %v3137
    %v3140 = vunpack.c.l.s4 1935823168
    %v3141 = vunpack.c.0.s8 %v3140
    %v3142 = vlaneseq
    %v3143 = vshrl.u32 %v3142, 7
    %v3144 = vsub.s32 %v3141, %v3143
    %v3145 = vrot.slane %v3124, %v3144
    %v3147 = vunpack.c.l.s4 1935823168
    %v3148 = vunpack.c.0.s8 %v3147
    %v3149 = vlaneseq
    %v3150 = vshrl.u32 %v3149, 7
    %v3151 = vsub.s32 %v3148, %v3150
    %v3152 = vrot.slane %v3145, %v3151
    %v3153 = vunpack.c.l.b16 %v3138
    %v3154 = vunpack.c.l.b16 %v3152
    %v3155 = vrot.slane %v3153, 1
    %v3156 = vsel %vm2400, %v3154, %v3155
    %v3157 = vpack.c.b16 %v3156, %v3156
    %v3159 = vunpack.c.l.s4 1966171168
    %v3160 = vunpack.c.0.s8 %v3159
    %v3161 = vlaneseq
    %v3162 = vshrl.u32 %v3161, 7
    %v3163 = vsub.s32 %v3160, %v3162
    %v3164 = vrot.slane %v3157, %v3163
    %v3166 = vunpack.c.l.s4 1966171168
    %v3167 = vunpack.c.0.s8 %v3166
    %v3168 = vlaneseq
    %v3169 = vshrl.u32 %v3168, 7
    %v3170 = vsub.s32 %v3167, %v3169
    %v3171 = vrot.slane %v3164, %v3170
    %3172 = vrot.lane.b32.xlu0 %v3171, 64
    %v3173 = vpop.permute.xlu0 %3172
    %3175 = vst.msk [vmem:[#allocation4 + $0x4] sm:$0x1] %vm2502, %v3173
    %v3176 = vld [vmem:[#allocation3 + $0x4] sm:$0x2]
    %v3177 = vld [vmem:[#allocation3 + $0x24] sm:$0x2]
    %v3181 = vunpack.c.l.s4 1966171168
    %v3182 = vunpack.c.0.s8 %v3181
    %v3183 = vlaneseq
    %v3184 = vshrl.u32 %v3183, 7
    %v3185 = vsub.s32 %v3182, %v3184
    %v3186 = vrot.slane %v3176, %v3185
    %v3187 = vcombine.high %v3186, %v3186
    %v3189 = vunpack.c.l.s4 1966171168
    %v3190 = vunpack.c.0.s8 %v3189
    %v3191 = vlaneseq
    %v3192 = vshrl.u32 %v3191, 7
    %v3193 = vsub.s32 %v3190, %v3192
    %v3194 = vrot.slane %v3187, %v3193
    %v3196 = vunpack.c.l.s4 1966171168
    %v3197 = vunpack.c.0.s8 %v3196
    %v3198 = vlaneseq
    %v3199 = vshrl.u32 %v3198, 7
    %v3200 = vsub.s32 %v3197, %v3199
    %v3201 = vrot.slane %v3177, %v3200
    %v3202 = vcombine.high %v3201, %v3201
    %v3204 = vunpack.c.l.s4 1966171168
    %v3205 = vunpack.c.0.s8 %v3204
    %v3206 = vlaneseq
    %v3207 = vshrl.u32 %v3206, 7
    %v3208 = vsub.s32 %v3205, %v3207
    %v3209 = vrot.slane %v3202, %v3208
    %v3211 = vunpack.c.l.s4 1935823168
    %v3212 = vunpack.c.0.s8 %v3211
    %v3213 = vlaneseq
    %v3214 = vshrl.u32 %v3213, 7
    %v3215 = vsub.s32 %v3212, %v3214
    %v3216 = vrot.slane %v3194, %v3215
    %v3218 = vunpack.c.l.s4 1935823168
    %v3219 = vunpack.c.0.s8 %v3218
    %v3220 = vlaneseq
    %v3221 = vshrl.u32 %v3220, 7
    %v3222 = vsub.s32 %v3219, %v3221
    %v3223 = vrot.slane %v3216, %v3222
    %v3225 = vunpack.c.l.s4 1935823168
    %v3226 = vunpack.c.0.s8 %v3225
    %v3227 = vlaneseq
    %v3228 = vshrl.u32 %v3227, 7
    %v3229 = vsub.s32 %v3226, %v3228
    %v3230 = vrot.slane %v3209, %v3229
    %v3232 = vunpack.c.l.s4 1935823168
    %v3233 = vunpack.c.0.s8 %v3232
    %v3234 = vlaneseq
    %v3235 = vshrl.u32 %v3234, 7
    %v3236 = vsub.s32 %v3233, %v3235
    %v3237 = vrot.slane %v3230, %v3236
    %v3238 = vunpack.c.l.b16 %v3223
    %v3239 = vunpack.c.l.b16 %v3237
    %v3240 = vrot.slane %v3239, 7
    %v3241 = vsel %vm2400, %v3240, %v3238
    %v3242 = vpack.c.b16 %v3241, %v3241
    %v3244 = vunpack.c.l.s4 1966171168
    %v3245 = vunpack.c.0.s8 %v3244
    %v3246 = vlaneseq
    %v3247 = vshrl.u32 %v3246, 7
    %v3248 = vsub.s32 %v3245, %v3247
    %v3249 = vrot.slane %v3242, %v3248
    %v3251 = vunpack.c.l.s4 1966171168
    %v3252 = vunpack.c.0.s8 %v3251
    %v3253 = vlaneseq
    %v3254 = vshrl.u32 %v3253, 7
    %v3255 = vsub.s32 %v3252, %v3254
    %v3256 = vrot.slane %v3249, %v3255
    %3258 = vst.msk [vmem:[#allocation4 + $0x5] sm:$0x1] %vm2418, %v3256
    %v3259 = vld [vmem:[#allocation3 + $0x4] sm:$0x2]
    %v3260 = vld [vmem:[#allocation3 + $0x24] sm:$0x2]
    %v3264 = vunpack.c.l.s4 1966171168
    %v3265 = vunpack.c.0.s8 %v3264
    %v3266 = vlaneseq
    %v3267 = vshrl.u32 %v3266, 7
    %v3268 = vsub.s32 %v3265, %v3267
    %v3269 = vrot.slane %v3259, %v3268
    %v3270 = vcombine.high %v3269, %v3269
    %v3272 = vunpack.c.l.s4 1966171168
    %v3273 = vunpack.c.0.s8 %v3272
    %v3274 = vlaneseq
    %v3275 = vshrl.u32 %v3274, 7
    %v3276 = vsub.s32 %v3273, %v3275
    %v3277 = vrot.slane %v3270, %v3276
    %v3279 = vunpack.c.l.s4 1966171168
    %v3280 = vunpack.c.0.s8 %v3279
    %v3281 = vlaneseq
    %v3282 = vshrl.u32 %v3281, 7
    %v3283 = vsub.s32 %v3280, %v3282
    %v3284 = vrot.slane %v3260, %v3283
    %v3285 = vcombine.high %v3284, %v3284
    %v3287 = vunpack.c.l.s4 1966171168
    %v3288 = vunpack.c.0.s8 %v3287
    %v3289 = vlaneseq
    %v3290 = vshrl.u32 %v3289, 7
    %v3291 = vsub.s32 %v3288, %v3290
    %v3292 = vrot.slane %v3285, %v3291
    %v3294 = vunpack.c.l.s4 1935823168
    %v3295 = vunpack.c.0.s8 %v3294
    %v3296 = vlaneseq
    %v3297 = vshrl.u32 %v3296, 7
    %v3298 = vsub.s32 %v3295, %v3297
    %v3299 = vrot.slane %v3277, %v3298
    %v3301 = vunpack.c.l.s4 1935823168
    %v3302 = vunpack.c.0.s8 %v3301
    %v3303 = vlaneseq
    %v3304 = vshrl.u32 %v3303, 7
    %v3305 = vsub.s32 %v3302, %v3304
    %v3306 = vrot.slane %v3299, %v3305
    %v3308 = vunpack.c.l.s4 1935823168
    %v3309 = vunpack.c.0.s8 %v3308
    %v3310 = vlaneseq
    %v3311 = vshrl.u32 %v3310, 7
    %v3312 = vsub.s32 %v3309, %v3311
    %v3313 = vrot.slane %v3292, %v3312
    %v3315 = vunpack.c.l.s4 1935823168
    %v3316 = vunpack.c.0.s8 %v3315
    %v3317 = vlaneseq
    %v3318 = vshrl.u32 %v3317, 7
    %v3319 = vsub.s32 %v3316, %v3318
    %v3320 = vrot.slane %v3313, %v3319
    %v3321 = vunpack.c.l.b16 %v3306
    %v3322 = vunpack.c.l.b16 %v3320
    %v3323 = vrot.slane %v3321, 1
    %v3324 = vsel %vm2400, %v3322, %v3323
    %v3325 = vpack.c.b16 %v3324, %v3324
    %v3327 = vunpack.c.l.s4 1966171168
    %v3328 = vunpack.c.0.s8 %v3327
    %v3329 = vlaneseq
    %v3330 = vshrl.u32 %v3329, 7
    %v3331 = vsub.s32 %v3328, %v3330
    %v3332 = vrot.slane %v3325, %v3331
    %v3334 = vunpack.c.l.s4 1966171168
    %v3335 = vunpack.c.0.s8 %v3334
    %v3336 = vlaneseq
    %v3337 = vshrl.u32 %v3336, 7
    %v3338 = vsub.s32 %v3335, %v3337
    %v3339 = vrot.slane %v3332, %v3338
    %3340 = vrot.lane.b32.xlu0 %v3339, 64
    %v3341 = vpop.permute.xlu0 %3340
    %3343 = vst.msk [vmem:[#allocation4 + $0x5] sm:$0x1] %vm2502, %v3341
    %v3344 = vld [vmem:[#allocation3 + $0x4] sm:$0x4]
    %v3345 = vld [vmem:[#allocation3 + $0x24] sm:$0x4]
    %v3349 = vunpack.c.l.s4 1966171168
    %v3350 = vunpack.c.0.s8 %v3349
    %v3351 = vlaneseq
    %v3352 = vshrl.u32 %v3351, 7
    %v3353 = vsub.s32 %v3350, %v3352
    %v3354 = vrot.slane %v3344, %v3353
    %v3356 = vunpack.c.l.s4 1966171168
    %v3357 = vunpack.c.0.s8 %v3356
    %v3358 = vlaneseq
    %v3359 = vshrl.u32 %v3358, 7
    %v3360 = vsub.s32 %v3357, %v3359
    %v3361 = vrot.slane %v3354, %v3360
    %v3362 = vcombine.high %v3361, %v3361
    %v3364 = vunpack.c.l.s4 1966171168
    %v3365 = vunpack.c.0.s8 %v3364
    %v3366 = vlaneseq
    %v3367 = vshrl.u32 %v3366, 7
    %v3368 = vsub.s32 %v3365, %v3367
    %v3369 = vrot.slane %v3345, %v3368
    %v3371 = vunpack.c.l.s4 1966171168
    %v3372 = vunpack.c.0.s8 %v3371
    %v3373 = vlaneseq
    %v3374 = vshrl.u32 %v3373, 7
    %v3375 = vsub.s32 %v3372, %v3374
    %v3376 = vrot.slane %v3369, %v3375
    %v3377 = vcombine.high %v3376, %v3376
    %v3379 = vunpack.c.l.s4 1935823168
    %v3380 = vunpack.c.0.s8 %v3379
    %v3381 = vlaneseq
    %v3382 = vshrl.u32 %v3381, 7
    %v3383 = vsub.s32 %v3380, %v3382
    %v3384 = vrot.slane %v3362, %v3383
    %v3386 = vunpack.c.l.s4 1935823168
    %v3387 = vunpack.c.0.s8 %v3386
    %v3388 = vlaneseq
    %v3389 = vshrl.u32 %v3388, 7
    %v3390 = vsub.s32 %v3387, %v3389
    %v3391 = vrot.slane %v3384, %v3390
    %v3393 = vunpack.c.l.s4 1935823168
    %v3394 = vunpack.c.0.s8 %v3393
    %v3395 = vlaneseq
    %v3396 = vshrl.u32 %v3395, 7
    %v3397 = vsub.s32 %v3394, %v3396
    %v3398 = vrot.slane %v3377, %v3397
    %v3400 = vunpack.c.l.s4 1935823168
    %v3401 = vunpack.c.0.s8 %v3400
    %v3402 = vlaneseq
    %v3403 = vshrl.u32 %v3402, 7
    %v3404 = vsub.s32 %v3401, %v3403
    %v3405 = vrot.slane %v3398, %v3404
    %v3406 = vunpack.c.l.b16 %v3391
    %v3407 = vunpack.c.l.b16 %v3405
    %v3408 = vrot.slane %v3407, 7
    %v3409 = vsel %vm2400, %v3408, %v3406
    %v3410 = vpack.c.b16 %v3409, %v3409
    %v3412 = vunpack.c.l.s4 1966171168
    %v3413 = vunpack.c.0.s8 %v3412
    %v3414 = vlaneseq
    %v3415 = vshrl.u32 %v3414, 7
    %v3416 = vsub.s32 %v3413, %v3415
    %v3417 = vrot.slane %v3410, %v3416
    %v3419 = vunpack.c.l.s4 1966171168
    %v3420 = vunpack.c.0.s8 %v3419
    %v3421 = vlaneseq
    %v3422 = vshrl.u32 %v3421, 7
    %v3423 = vsub.s32 %v3420, %v3422
    %v3424 = vrot.slane %v3417, %v3423
    %3426 = vst.msk [vmem:[#allocation4 + $0x6] sm:$0x1] %vm2418, %v3424
    %v3427 = vld [vmem:[#allocation3 + $0x4] sm:$0x4]
    %v3428 = vld [vmem:[#allocation3 + $0x24] sm:$0x4]
    %v3432 = vunpack.c.l.s4 1966171168
    %v3433 = vunpack.c.0.s8 %v3432
    %v3434 = vlaneseq
    %v3435 = vshrl.u32 %v3434, 7
    %v3436 = vsub.s32 %v3433, %v3435
    %v3437 = vrot.slane %v3427, %v3436
    %v3439 = vunpack.c.l.s4 1966171168
    %v3440 = vunpack.c.0.s8 %v3439
    %v3441 = vlaneseq
    %v3442 = vshrl.u32 %v3441, 7
    %v3443 = vsub.s32 %v3440, %v3442
    %v3444 = vrot.slane %v3437, %v3443
    %v3445 = vcombine.high %v3444, %v3444
    %v3447 = vunpack.c.l.s4 1966171168
    %v3448 = vunpack.c.0.s8 %v3447
    %v3449 = vlaneseq
    %v3450 = vshrl.u32 %v3449, 7
    %v3451 = vsub.s32 %v3448, %v3450
    %v3452 = vrot.slane %v3428, %v3451
    %v3454 = vunpack.c.l.s4 1966171168
    %v3455 = vunpack.c.0.s8 %v3454
    %v3456 = vlaneseq
    %v3457 = vshrl.u32 %v3456, 7
    %v3458 = vsub.s32 %v3455, %v3457
    %v3459 = vrot.slane %v3452, %v3458
    %v3460 = vcombine.high %v3459, %v3459
    %v3462 = vunpack.c.l.s4 1935823168
    %v3463 = vunpack.c.0.s8 %v3462
    %v3464 = vlaneseq
    %v3465 = vshrl.u32 %v3464, 7
    %v3466 = vsub.s32 %v3463, %v3465
    %v3467 = vrot.slane %v3445, %v3466
    %v3469 = vunpack.c.l.s4 1935823168
    %v3470 = vunpack.c.0.s8 %v3469
    %v3471 = vlaneseq
    %v3472 = vshrl.u32 %v3471, 7
    %v3473 = vsub.s32 %v3470, %v3472
    %v3474 = vrot.slane %v3467, %v3473
    %v3476 = vunpack.c.l.s4 1935823168
    %v3477 = vunpack.c.0.s8 %v3476
    %v3478 = vlaneseq
    %v3479 = vshrl.u32 %v3478, 7
    %v3480 = vsub.s32 %v3477, %v3479
    %v3481 = vrot.slane %v3460, %v3480
    %v3483 = vunpack.c.l.s4 1935823168
    %v3484 = vunpack.c.0.s8 %v3483
    %v3485 = vlaneseq
    %v3486 = vshrl.u32 %v3485, 7
    %v3487 = vsub.s32 %v3484, %v3486
    %v3488 = vrot.slane %v3481, %v3487
    %v3489 = vunpack.c.l.b16 %v3474
    %v3490 = vunpack.c.l.b16 %v3488
    %v3491 = vrot.slane %v3489, 1
    %v3492 = vsel %vm2400, %v3490, %v3491
    %v3493 = vpack.c.b16 %v3492, %v3492
    %v3495 = vunpack.c.l.s4 1966171168
    %v3496 = vunpack.c.0.s8 %v3495
    %v3497 = vlaneseq
    %v3498 = vshrl.u32 %v3497, 7
    %v3499 = vsub.s32 %v3496, %v3498
    %v3500 = vrot.slane %v3493, %v3499
    %v3502 = vunpack.c.l.s4 1966171168
    %v3503 = vunpack.c.0.s8 %v3502
    %v3504 = vlaneseq
    %v3505 = vshrl.u32 %v3504, 7
    %v3506 = vsub.s32 %v3503, %v3505
    %v3507 = vrot.slane %v3500, %v3506
    %3508 = vrot.lane.b32.xlu0 %v3507, 64
    %v3509 = vpop.permute.xlu0 %3508
    %3511 = vst.msk [vmem:[#allocation4 + $0x6] sm:$0x1] %vm2502, %v3509
    %v3512 = vld [vmem:[#allocation3 + $0x4] sm:$0x8]
    %v3513 = vld [vmem:[#allocation3 + $0x24] sm:$0x8]
    %v3517 = vunpack.c.l.s4 1966171168
    %v3518 = vunpack.c.0.s8 %v3517
    %v3519 = vlaneseq
    %v3520 = vshrl.u32 %v3519, 7
    %v3521 = vsub.s32 %v3518, %v3520
    %v3522 = vrot.slane %v3512, %v3521
    %v3523 = vcombine.high %v3522, %v3522
    %v3525 = vunpack.c.l.s4 1966171168
    %v3526 = vunpack.c.0.s8 %v3525
    %v3527 = vlaneseq
    %v3528 = vshrl.u32 %v3527, 7
    %v3529 = vsub.s32 %v3526, %v3528
    %v3530 = vrot.slane %v3523, %v3529
    %v3531 = vcombine.high %v3530, %v3530
    %v3533 = vunpack.c.l.s4 1966171168
    %v3534 = vunpack.c.0.s8 %v3533
    %v3535 = vlaneseq
    %v3536 = vshrl.u32 %v3535, 7
    %v3537 = vsub.s32 %v3534, %v3536
    %v3538 = vrot.slane %v3513, %v3537
    %v3539 = vcombine.high %v3538, %v3538
    %v3541 = vunpack.c.l.s4 1966171168
    %v3542 = vunpack.c.0.s8 %v3541
    %v3543 = vlaneseq
    %v3544 = vshrl.u32 %v3543, 7
    %v3545 = vsub.s32 %v3542, %v3544
    %v3546 = vrot.slane %v3539, %v3545
    %v3547 = vcombine.high %v3546, %v3546
    %v3549 = vunpack.c.l.s4 1935823168
    %v3550 = vunpack.c.0.s8 %v3549
    %v3551 = vlaneseq
    %v3552 = vshrl.u32 %v3551, 7
    %v3553 = vsub.s32 %v3550, %v3552
    %v3554 = vrot.slane %v3531, %v3553
    %v3556 = vunpack.c.l.s4 1935823168
    %v3557 = vunpack.c.0.s8 %v3556
    %v3558 = vlaneseq
    %v3559 = vshrl.u32 %v3558, 7
    %v3560 = vsub.s32 %v3557, %v3559
    %v3561 = vrot.slane %v3554, %v3560
    %v3563 = vunpack.c.l.s4 1935823168
    %v3564 = vunpack.c.0.s8 %v3563
    %v3565 = vlaneseq
    %v3566 = vshrl.u32 %v3565, 7
    %v3567 = vsub.s32 %v3564, %v3566
    %v3568 = vrot.slane %v3547, %v3567
    %v3570 = vunpack.c.l.s4 1935823168
    %v3571 = vunpack.c.0.s8 %v3570
    %v3572 = vlaneseq
    %v3573 = vshrl.u32 %v3572, 7
    %v3574 = vsub.s32 %v3571, %v3573
    %v3575 = vrot.slane %v3568, %v3574
    %v3576 = vunpack.c.l.b16 %v3561
    %v3577 = vunpack.c.l.b16 %v3575
    %v3578 = vrot.slane %v3577, 7
    %v3579 = vsel %vm2400, %v3578, %v3576
    %v3580 = vpack.c.b16 %v3579, %v3579
    %v3582 = vunpack.c.l.s4 1966171168
    %v3583 = vunpack.c.0.s8 %v3582
    %v3584 = vlaneseq
    %v3585 = vshrl.u32 %v3584, 7
    %v3586 = vsub.s32 %v3583, %v3585
    %v3587 = vrot.slane %v3580, %v3586
    %v3589 = vunpack.c.l.s4 1966171168
    %v3590 = vunpack.c.0.s8 %v3589
    %v3591 = vlaneseq
    %v3592 = vshrl.u32 %v3591, 7
    %v3593 = vsub.s32 %v3590, %v3592
    %v3594 = vrot.slane %v3587, %v3593
    %3596 = vst.msk [vmem:[#allocation4 + $0x7] sm:$0x1] %vm2418, %v3594
    %v3597 = vld [vmem:[#allocation3 + $0x4] sm:$0x8]
    %v3598 = vld [vmem:[#allocation3 + $0x24] sm:$0x8]
    %v3602 = vunpack.c.l.s4 1966171168
    %v3603 = vunpack.c.0.s8 %v3602
    %v3604 = vlaneseq
    %v3605 = vshrl.u32 %v3604, 7
    %v3606 = vsub.s32 %v3603, %v3605
    %v3607 = vrot.slane %v3597, %v3606
    %v3608 = vcombine.high %v3607, %v3607
    %v3610 = vunpack.c.l.s4 1966171168
    %v3611 = vunpack.c.0.s8 %v3610
    %v3612 = vlaneseq
    %v3613 = vshrl.u32 %v3612, 7
    %v3614 = vsub.s32 %v3611, %v3613
    %v3615 = vrot.slane %v3608, %v3614
    %v3616 = vcombine.high %v3615, %v3615
    %v3618 = vunpack.c.l.s4 1966171168
    %v3619 = vunpack.c.0.s8 %v3618
    %v3620 = vlaneseq
    %v3621 = vshrl.u32 %v3620, 7
    %v3622 = vsub.s32 %v3619, %v3621
    %v3623 = vrot.slane %v3598, %v3622
    %v3624 = vcombine.high %v3623, %v3623
    %v3626 = vunpack.c.l.s4 1966171168
    %v3627 = vunpack.c.0.s8 %v3626
    %v3628 = vlaneseq
    %v3629 = vshrl.u32 %v3628, 7
    %v3630 = vsub.s32 %v3627, %v3629
    %v3631 = vrot.slane %v3624, %v3630
    %v3632 = vcombine.high %v3631, %v3631
    %v3634 = vunpack.c.l.s4 1935823168
    %v3635 = vunpack.c.0.s8 %v3634
    %v3636 = vlaneseq
    %v3637 = vshrl.u32 %v3636, 7
    %v3638 = vsub.s32 %v3635, %v3637
    %v3639 = vrot.slane %v3616, %v3638
    %v3641 = vunpack.c.l.s4 1935823168
    %v3642 = vunpack.c.0.s8 %v3641
    %v3643 = vlaneseq
    %v3644 = vshrl.u32 %v3643, 7
    %v3645 = vsub.s32 %v3642, %v3644
    %v3646 = vrot.slane %v3639, %v3645
    %v3648 = vunpack.c.l.s4 1935823168
    %v3649 = vunpack.c.0.s8 %v3648
    %v3650 = vlaneseq
    %v3651 = vshrl.u32 %v3650, 7
    %v3652 = vsub.s32 %v3649, %v3651
    %v3653 = vrot.slane %v3632, %v3652
    %v3655 = vunpack.c.l.s4 1935823168
    %v3656 = vunpack.c.0.s8 %v3655
    %v3657 = vlaneseq
    %v3658 = vshrl.u32 %v3657, 7
    %v3659 = vsub.s32 %v3656, %v3658
    %v3660 = vrot.slane %v3653, %v3659
    %v3661 = vunpack.c.l.b16 %v3646
    %v3662 = vunpack.c.l.b16 %v3660
    %v3663 = vrot.slane %v3661, 1
    %v3664 = vsel %vm2400, %v3662, %v3663
    %v3665 = vpack.c.b16 %v3664, %v3664
    %v3667 = vunpack.c.l.s4 1966171168
    %v3668 = vunpack.c.0.s8 %v3667
    %v3669 = vlaneseq
    %v3670 = vshrl.u32 %v3669, 7
    %v3671 = vsub.s32 %v3668, %v3670
    %v3672 = vrot.slane %v3665, %v3671
    %v3674 = vunpack.c.l.s4 1966171168
    %v3675 = vunpack.c.0.s8 %v3674
    %v3676 = vlaneseq
    %v3677 = vshrl.u32 %v3676, 7
    %v3678 = vsub.s32 %v3675, %v3677
    %v3679 = vrot.slane %v3672, %v3678
    %3680 = vrot.lane.b32.xlu0 %v3679, 64
    %v3681 = vpop.permute.xlu0 %3680
    %3683 = vst.msk [vmem:[#allocation4 + $0x7] sm:$0x1] %vm2502, %v3681
    %v3684 = vld [vmem:[#allocation3 + $0x8] sm:$0x1]
    %v3685 = vld [vmem:[#allocation3 + $0x28] sm:$0x1]
    %v3689 = vunpack.c.l.s4 1966171168
    %v3690 = vunpack.c.0.s8 %v3689
    %v3691 = vlaneseq
    %v3692 = vshrl.u32 %v3691, 7
    %v3693 = vsub.s32 %v3690, %v3692
    %v3694 = vrot.slane %v3684, %v3693
    %v3696 = vunpack.c.l.s4 1966171168
    %v3697 = vunpack.c.0.s8 %v3696
    %v3698 = vlaneseq
    %v3699 = vshrl.u32 %v3698, 7
    %v3700 = vsub.s32 %v3697, %v3699
    %v3701 = vrot.slane %v3694, %v3700
    %v3703 = vunpack.c.l.s4 1966171168
    %v3704 = vunpack.c.0.s8 %v3703
    %v3705 = vlaneseq
    %v3706 = vshrl.u32 %v3705, 7
    %v3707 = vsub.s32 %v3704, %v3706
    %v3708 = vrot.slane %v3685, %v3707
    %v3710 = vunpack.c.l.s4 1966171168
    %v3711 = vunpack.c.0.s8 %v3710
    %v3712 = vlaneseq
    %v3713 = vshrl.u32 %v3712, 7
    %v3714 = vsub.s32 %v3711, %v3713
    %v3715 = vrot.slane %v3708, %v3714
    %v3717 = vunpack.c.l.s4 1935823168
    %v3718 = vunpack.c.0.s8 %v3717
    %v3719 = vlaneseq
    %v3720 = vshrl.u32 %v3719, 7
    %v3721 = vsub.s32 %v3718, %v3720
    %v3722 = vrot.slane %v3701, %v3721
    %v3724 = vunpack.c.l.s4 1935823168
    %v3725 = vunpack.c.0.s8 %v3724
    %v3726 = vlaneseq
    %v3727 = vshrl.u32 %v3726, 7
    %v3728 = vsub.s32 %v3725, %v3727
    %v3729 = vrot.slane %v3722, %v3728
    %v3731 = vunpack.c.l.s4 1935823168
    %v3732 = vunpack.c.0.s8 %v3731
    %v3733 = vlaneseq
    %v3734 = vshrl.u32 %v3733, 7
    %v3735 = vsub.s32 %v3732, %v3734
    %v3736 = vrot.slane %v3715, %v3735
    %v3738 = vunpack.c.l.s4 1935823168
    %v3739 = vunpack.c.0.s8 %v3738
    %v3740 = vlaneseq
    %v3741 = vshrl.u32 %v3740, 7
    %v3742 = vsub.s32 %v3739, %v3741
    %v3743 = vrot.slane %v3736, %v3742
    %v3744 = vunpack.c.l.b16 %v3729
    %v3745 = vunpack.c.l.b16 %v3743
    %v3746 = vrot.slane %v3745, 7
    %v3747 = vsel %vm2400, %v3746, %v3744
    %v3748 = vpack.c.b16 %v3747, %v3747
    %v3750 = vunpack.c.l.s4 1966171168
    %v3751 = vunpack.c.0.s8 %v3750
    %v3752 = vlaneseq
    %v3753 = vshrl.u32 %v3752, 7
    %v3754 = vsub.s32 %v3751, %v3753
    %v3755 = vrot.slane %v3748, %v3754
    %v3757 = vunpack.c.l.s4 1966171168
    %v3758 = vunpack.c.0.s8 %v3757
    %v3759 = vlaneseq
    %v3760 = vshrl.u32 %v3759, 7
    %v3761 = vsub.s32 %v3758, %v3760
    %v3762 = vrot.slane %v3755, %v3761
    %3764 = vst.msk [vmem:[#allocation4 + $0x8] sm:$0x1] %vm2418, %v3762
    %v3765 = vld [vmem:[#allocation3 + $0x8] sm:$0x1]
    %v3766 = vld [vmem:[#allocation3 + $0x28] sm:$0x1]
    %v3770 = vunpack.c.l.s4 1966171168
    %v3771 = vunpack.c.0.s8 %v3770
    %v3772 = vlaneseq
    %v3773 = vshrl.u32 %v3772, 7
    %v3774 = vsub.s32 %v3771, %v3773
    %v3775 = vrot.slane %v3765, %v3774
    %v3777 = vunpack.c.l.s4 1966171168
    %v3778 = vunpack.c.0.s8 %v3777
    %v3779 = vlaneseq
    %v3780 = vshrl.u32 %v3779, 7
    %v3781 = vsub.s32 %v3778, %v3780
    %v3782 = vrot.slane %v3775, %v3781
    %v3784 = vunpack.c.l.s4 1966171168
    %v3785 = vunpack.c.0.s8 %v3784
    %v3786 = vlaneseq
    %v3787 = vshrl.u32 %v3786, 7
    %v3788 = vsub.s32 %v3785, %v3787
    %v3789 = vrot.slane %v3766, %v3788
    %v3791 = vunpack.c.l.s4 1966171168
    %v3792 = vunpack.c.0.s8 %v3791
    %v3793 = vlaneseq
    %v3794 = vshrl.u32 %v3793, 7
    %v3795 = vsub.s32 %v3792, %v3794
    %v3796 = vrot.slane %v3789, %v3795
    %v3798 = vunpack.c.l.s4 1935823168
    %v3799 = vunpack.c.0.s8 %v3798
    %v3800 = vlaneseq
    %v3801 = vshrl.u32 %v3800, 7
    %v3802 = vsub.s32 %v3799, %v3801
    %v3803 = vrot.slane %v3782, %v3802
    %v3805 = vunpack.c.l.s4 1935823168
    %v3806 = vunpack.c.0.s8 %v3805
    %v3807 = vlaneseq
    %v3808 = vshrl.u32 %v3807, 7
    %v3809 = vsub.s32 %v3806, %v3808
    %v3810 = vrot.slane %v3803, %v3809
    %v3812 = vunpack.c.l.s4 1935823168
    %v3813 = vunpack.c.0.s8 %v3812
    %v3814 = vlaneseq
    %v3815 = vshrl.u32 %v3814, 7
    %v3816 = vsub.s32 %v3813, %v3815
    %v3817 = vrot.slane %v3796, %v3816
    %v3819 = vunpack.c.l.s4 1935823168
    %v3820 = vunpack.c.0.s8 %v3819
    %v3821 = vlaneseq
    %v3822 = vshrl.u32 %v3821, 7
    %v3823 = vsub.s32 %v3820, %v3822
    %v3824 = vrot.slane %v3817, %v3823
    %v3825 = vunpack.c.l.b16 %v3810
    %v3826 = vunpack.c.l.b16 %v3824
    %v3827 = vrot.slane %v3825, 1
    %v3828 = vsel %vm2400, %v3826, %v3827
    %v3829 = vpack.c.b16 %v3828, %v3828
    %v3831 = vunpack.c.l.s4 1966171168
    %v3832 = vunpack.c.0.s8 %v3831
    %v3833 = vlaneseq
    %v3834 = vshrl.u32 %v3833, 7
    %v3835 = vsub.s32 %v3832, %v3834
    %v3836 = vrot.slane %v3829, %v3835
    %v3838 = vunpack.c.l.s4 1966171168
    %v3839 = vunpack.c.0.s8 %v3838
    %v3840 = vlaneseq
    %v3841 = vshrl.u32 %v3840, 7
    %v3842 = vsub.s32 %v3839, %v3841
    %v3843 = vrot.slane %v3836, %v3842
    %3844 = vrot.lane.b32.xlu0 %v3843, 64
    %v3845 = vpop.permute.xlu0 %3844
    %3847 = vst.msk [vmem:[#allocation4 + $0x8] sm:$0x1] %vm2502, %v3845
    %v3848 = vld [vmem:[#allocation3 + $0x8] sm:$0x2]
    %v3849 = vld [vmem:[#allocation3 + $0x28] sm:$0x2]
    %v3853 = vunpack.c.l.s4 1966171168
    %v3854 = vunpack.c.0.s8 %v3853
    %v3855 = vlaneseq
    %v3856 = vshrl.u32 %v3855, 7
    %v3857 = vsub.s32 %v3854, %v3856
    %v3858 = vrot.slane %v3848, %v3857
    %v3859 = vcombine.high %v3858, %v3858
    %v3861 = vunpack.c.l.s4 1966171168
    %v3862 = vunpack.c.0.s8 %v3861
    %v3863 = vlaneseq
    %v3864 = vshrl.u32 %v3863, 7
    %v3865 = vsub.s32 %v3862, %v3864
    %v3866 = vrot.slane %v3859, %v3865
    %v3868 = vunpack.c.l.s4 1966171168
    %v3869 = vunpack.c.0.s8 %v3868
    %v3870 = vlaneseq
    %v3871 = vshrl.u32 %v3870, 7
    %v3872 = vsub.s32 %v3869, %v3871
    %v3873 = vrot.slane %v3849, %v3872
    %v3874 = vcombine.high %v3873, %v3873
    %v3876 = vunpack.c.l.s4 1966171168
    %v3877 = vunpack.c.0.s8 %v3876
    %v3878 = vlaneseq
    %v3879 = vshrl.u32 %v3878, 7
    %v3880 = vsub.s32 %v3877, %v3879
    %v3881 = vrot.slane %v3874, %v3880
    %v3883 = vunpack.c.l.s4 1935823168
    %v3884 = vunpack.c.0.s8 %v3883
    %v3885 = vlaneseq
    %v3886 = vshrl.u32 %v3885, 7
    %v3887 = vsub.s32 %v3884, %v3886
    %v3888 = vrot.slane %v3866, %v3887
    %v3890 = vunpack.c.l.s4 1935823168
    %v3891 = vunpack.c.0.s8 %v3890
    %v3892 = vlaneseq
    %v3893 = vshrl.u32 %v3892, 7
    %v3894 = vsub.s32 %v3891, %v3893
    %v3895 = vrot.slane %v3888, %v3894
    %v3897 = vunpack.c.l.s4 1935823168
    %v3898 = vunpack.c.0.s8 %v3897
    %v3899 = vlaneseq
    %v3900 = vshrl.u32 %v3899, 7
    %v3901 = vsub.s32 %v3898, %v3900
    %v3902 = vrot.slane %v3881, %v3901
    %v3904 = vunpack.c.l.s4 1935823168
    %v3905 = vunpack.c.0.s8 %v3904
    %v3906 = vlaneseq
    %v3907 = vshrl.u32 %v3906, 7
    %v3908 = vsub.s32 %v3905, %v3907
    %v3909 = vrot.slane %v3902, %v3908
    %v3910 = vunpack.c.l.b16 %v3895
    %v3911 = vunpack.c.l.b16 %v3909
    %v3912 = vrot.slane %v3911, 7
    %v3913 = vsel %vm2400, %v3912, %v3910
    %v3914 = vpack.c.b16 %v3913, %v3913
    %v3916 = vunpack.c.l.s4 1966171168
    %v3917 = vunpack.c.0.s8 %v3916
    %v3918 = vlaneseq
    %v3919 = vshrl.u32 %v3918, 7
    %v3920 = vsub.s32 %v3917, %v3919
    %v3921 = vrot.slane %v3914, %v3920
    %v3923 = vunpack.c.l.s4 1966171168
    %v3924 = vunpack.c.0.s8 %v3923
    %v3925 = vlaneseq
    %v3926 = vshrl.u32 %v3925, 7
    %v3927 = vsub.s32 %v3924, %v3926
    %v3928 = vrot.slane %v3921, %v3927
    %3930 = vst.msk [vmem:[#allocation4 + $0x9] sm:$0x1] %vm2418, %v3928
    %v3931 = vld [vmem:[#allocation3 + $0x8] sm:$0x2]
    %v3932 = vld [vmem:[#allocation3 + $0x28] sm:$0x2]
    %v3936 = vunpack.c.l.s4 1966171168
    %v3937 = vunpack.c.0.s8 %v3936
    %v3938 = vlaneseq
    %v3939 = vshrl.u32 %v3938, 7
    %v3940 = vsub.s32 %v3937, %v3939
    %v3941 = vrot.slane %v3931, %v3940
    %v3942 = vcombine.high %v3941, %v3941
    %v3944 = vunpack.c.l.s4 1966171168
    %v3945 = vunpack.c.0.s8 %v3944
    %v3946 = vlaneseq
    %v3947 = vshrl.u32 %v3946, 7
    %v3948 = vsub.s32 %v3945, %v3947
    %v3949 = vrot.slane %v3942, %v3948
    %v3951 = vunpack.c.l.s4 1966171168
    %v3952 = vunpack.c.0.s8 %v3951
    %v3953 = vlaneseq
    %v3954 = vshrl.u32 %v3953, 7
    %v3955 = vsub.s32 %v3952, %v3954
    %v3956 = vrot.slane %v3932, %v3955
    %v3957 = vcombine.high %v3956, %v3956
    %v3959 = vunpack.c.l.s4 1966171168
    %v3960 = vunpack.c.0.s8 %v3959
    %v3961 = vlaneseq
    %v3962 = vshrl.u32 %v3961, 7
    %v3963 = vsub.s32 %v3960, %v3962
    %v3964 = vrot.slane %v3957, %v3963
    %v3966 = vunpack.c.l.s4 1935823168
    %v3967 = vunpack.c.0.s8 %v3966
    %v3968 = vlaneseq
    %v3969 = vshrl.u32 %v3968, 7
    %v3970 = vsub.s32 %v3967, %v3969
    %v3971 = vrot.slane %v3949, %v3970
    %v3973 = vunpack.c.l.s4 1935823168
    %v3974 = vunpack.c.0.s8 %v3973
    %v3975 = vlaneseq
    %v3976 = vshrl.u32 %v3975, 7
    %v3977 = vsub.s32 %v3974, %v3976
    %v3978 = vrot.slane %v3971, %v3977
    %v3980 = vunpack.c.l.s4 1935823168
    %v3981 = vunpack.c.0.s8 %v3980
    %v3982 = vlaneseq
    %v3983 = vshrl.u32 %v3982, 7
    %v3984 = vsub.s32 %v3981, %v3983
    %v3985 = vrot.slane %v3964, %v3984
    %v3987 = vunpack.c.l.s4 1935823168
    %v3988 = vunpack.c.0.s8 %v3987
    %v3989 = vlaneseq
    %v3990 = vshrl.u32 %v3989, 7
    %v3991 = vsub.s32 %v3988, %v3990
    %v3992 = vrot.slane %v3985, %v3991
    %v3993 = vunpack.c.l.b16 %v3978
    %v3994 = vunpack.c.l.b16 %v3992
    %v3995 = vrot.slane %v3993, 1
    %v3996 = vsel %vm2400, %v3994, %v3995
    %v3997 = vpack.c.b16 %v3996, %v3996
    %v3999 = vunpack.c.l.s4 1966171168
    %v4000 = vunpack.c.0.s8 %v3999
    %v4001 = vlaneseq
    %v4002 = vshrl.u32 %v4001, 7
    %v4003 = vsub.s32 %v4000, %v4002
    %v4004 = vrot.slane %v3997, %v4003
    %v4006 = vunpack.c.l.s4 1966171168
    %v4007 = vunpack.c.0.s8 %v4006
    %v4008 = vlaneseq
    %v4009 = vshrl.u32 %v4008, 7
    %v4010 = vsub.s32 %v4007, %v4009
    %v4011 = vrot.slane %v4004, %v4010
    %4012 = vrot.lane.b32.xlu0 %v4011, 64
    %v4013 = vpop.permute.xlu0 %4012
    %4015 = vst.msk [vmem:[#allocation4 + $0x9] sm:$0x1] %vm2502, %v4013
    %v4016 = vld [vmem:[#allocation3 + $0x8] sm:$0x4]
    %v4017 = vld [vmem:[#allocation3 + $0x28] sm:$0x4]
    %v4021 = vunpack.c.l.s4 1966171168
    %v4022 = vunpack.c.0.s8 %v4021
    %v4023 = vlaneseq
    %v4024 = vshrl.u32 %v4023, 7
    %v4025 = vsub.s32 %v4022, %v4024
    %v4026 = vrot.slane %v4016, %v4025
    %v4028 = vunpack.c.l.s4 1966171168
    %v4029 = vunpack.c.0.s8 %v4028
    %v4030 = vlaneseq
    %v4031 = vshrl.u32 %v4030, 7
    %v4032 = vsub.s32 %v4029, %v4031
    %v4033 = vrot.slane %v4026, %v4032
    %v4034 = vcombine.high %v4033, %v4033
    %v4036 = vunpack.c.l.s4 1966171168
    %v4037 = vunpack.c.0.s8 %v4036
    %v4038 = vlaneseq
    %v4039 = vshrl.u32 %v4038, 7
    %v4040 = vsub.s32 %v4037, %v4039
    %v4041 = vrot.slane %v4017, %v4040
    %v4043 = vunpack.c.l.s4 1966171168
    %v4044 = vunpack.c.0.s8 %v4043
    %v4045 = vlaneseq
    %v4046 = vshrl.u32 %v4045, 7
    %v4047 = vsub.s32 %v4044, %v4046
    %v4048 = vrot.slane %v4041, %v4047
    %v4049 = vcombine.high %v4048, %v4048
    %v4051 = vunpack.c.l.s4 1935823168
    %v4052 = vunpack.c.0.s8 %v4051
    %v4053 = vlaneseq
    %v4054 = vshrl.u32 %v4053, 7
    %v4055 = vsub.s32 %v4052, %v4054
    %v4056 = vrot.slane %v4034, %v4055
    %v4058 = vunpack.c.l.s4 1935823168
    %v4059 = vunpack.c.0.s8 %v4058
    %v4060 = vlaneseq
    %v4061 = vshrl.u32 %v4060, 7
    %v4062 = vsub.s32 %v4059, %v4061
    %v4063 = vrot.slane %v4056, %v4062
    %v4065 = vunpack.c.l.s4 1935823168
    %v4066 = vunpack.c.0.s8 %v4065
    %v4067 = vlaneseq
    %v4068 = vshrl.u32 %v4067, 7
    %v4069 = vsub.s32 %v4066, %v4068
    %v4070 = vrot.slane %v4049, %v4069
    %v4072 = vunpack.c.l.s4 1935823168
    %v4073 = vunpack.c.0.s8 %v4072
    %v4074 = vlaneseq
    %v4075 = vshrl.u32 %v4074, 7
    %v4076 = vsub.s32 %v4073, %v4075
    %v4077 = vrot.slane %v4070, %v4076
    %v4078 = vunpack.c.l.b16 %v4063
    %v4079 = vunpack.c.l.b16 %v4077
    %v4080 = vrot.slane %v4079, 7
    %v4081 = vsel %vm2400, %v4080, %v4078
    %v4082 = vpack.c.b16 %v4081, %v4081
    %v4084 = vunpack.c.l.s4 1966171168
    %v4085 = vunpack.c.0.s8 %v4084
    %v4086 = vlaneseq
    %v4087 = vshrl.u32 %v4086, 7
    %v4088 = vsub.s32 %v4085, %v4087
    %v4089 = vrot.slane %v4082, %v4088
    %v4091 = vunpack.c.l.s4 1966171168
    %v4092 = vunpack.c.0.s8 %v4091
    %v4093 = vlaneseq
    %v4094 = vshrl.u32 %v4093, 7
    %v4095 = vsub.s32 %v4092, %v4094
    %v4096 = vrot.slane %v4089, %v4095
    %4098 = vst.msk [vmem:[#allocation4 + $0xa] sm:$0x1] %vm2418, %v4096
    %v4099 = vld [vmem:[#allocation3 + $0x8] sm:$0x4]
    %v4100 = vld [vmem:[#allocation3 + $0x28] sm:$0x4]
    %v4104 = vunpack.c.l.s4 1966171168
    %v4105 = vunpack.c.0.s8 %v4104
    %v4106 = vlaneseq
    %v4107 = vshrl.u32 %v4106, 7
    %v4108 = vsub.s32 %v4105, %v4107
    %v4109 = vrot.slane %v4099, %v4108
    %v4111 = vunpack.c.l.s4 1966171168
    %v4112 = vunpack.c.0.s8 %v4111
    %v4113 = vlaneseq
    %v4114 = vshrl.u32 %v4113, 7
    %v4115 = vsub.s32 %v4112, %v4114
    %v4116 = vrot.slane %v4109, %v4115
    %v4117 = vcombine.high %v4116, %v4116
    %v4119 = vunpack.c.l.s4 1966171168
    %v4120 = vunpack.c.0.s8 %v4119
    %v4121 = vlaneseq
    %v4122 = vshrl.u32 %v4121, 7
    %v4123 = vsub.s32 %v4120, %v4122
    %v4124 = vrot.slane %v4100, %v4123
    %v4126 = vunpack.c.l.s4 1966171168
    %v4127 = vunpack.c.0.s8 %v4126
    %v4128 = vlaneseq
    %v4129 = vshrl.u32 %v4128, 7
    %v4130 = vsub.s32 %v4127, %v4129
    %v4131 = vrot.slane %v4124, %v4130
    %v4132 = vcombine.high %v4131, %v4131
    %v4134 = vunpack.c.l.s4 1935823168
    %v4135 = vunpack.c.0.s8 %v4134
    %v4136 = vlaneseq
    %v4137 = vshrl.u32 %v4136, 7
    %v4138 = vsub.s32 %v4135, %v4137
    %v4139 = vrot.slane %v4117, %v4138
    %v4141 = vunpack.c.l.s4 1935823168
    %v4142 = vunpack.c.0.s8 %v4141
    %v4143 = vlaneseq
    %v4144 = vshrl.u32 %v4143, 7
    %v4145 = vsub.s32 %v4142, %v4144
    %v4146 = vrot.slane %v4139, %v4145
    %v4148 = vunpack.c.l.s4 1935823168
    %v4149 = vunpack.c.0.s8 %v4148
    %v4150 = vlaneseq
    %v4151 = vshrl.u32 %v4150, 7
    %v4152 = vsub.s32 %v4149, %v4151
    %v4153 = vrot.slane %v4132, %v4152
    %v4155 = vunpack.c.l.s4 1935823168
    %v4156 = vunpack.c.0.s8 %v4155
    %v4157 = vlaneseq
    %v4158 = vshrl.u32 %v4157, 7
    %v4159 = vsub.s32 %v4156, %v4158
    %v4160 = vrot.slane %v4153, %v4159
    %v4161 = vunpack.c.l.b16 %v4146
    %v4162 = vunpack.c.l.b16 %v4160
    %v4163 = vrot.slane %v4161, 1
    %v4164 = vsel %vm2400, %v4162, %v4163
    %v4165 = vpack.c.b16 %v4164, %v4164
    %v4167 = vunpack.c.l.s4 1966171168
    %v4168 = vunpack.c.0.s8 %v4167
    %v4169 = vlaneseq
    %v4170 = vshrl.u32 %v4169, 7
    %v4171 = vsub.s32 %v4168, %v4170
    %v4172 = vrot.slane %v4165, %v4171
    %v4174 = vunpack.c.l.s4 1966171168
    %v4175 = vunpack.c.0.s8 %v4174
    %v4176 = vlaneseq
    %v4177 = vshrl.u32 %v4176, 7
    %v4178 = vsub.s32 %v4175, %v4177
    %v4179 = vrot.slane %v4172, %v4178
    %4180 = vrot.lane.b32.xlu0 %v4179, 64
    %v4181 = vpop.permute.xlu0 %4180
    %4183 = vst.msk [vmem:[#allocation4 + $0xa] sm:$0x1] %vm2502, %v4181
    %v4184 = vld [vmem:[#allocation3 + $0x8] sm:$0x8]
    %v4185 = vld [vmem:[#allocation3 + $0x28] sm:$0x8]
    %v4189 = vunpack.c.l.s4 1966171168
    %v4190 = vunpack.c.0.s8 %v4189
    %v4191 = vlaneseq
    %v4192 = vshrl.u32 %v4191, 7
    %v4193 = vsub.s32 %v4190, %v4192
    %v4194 = vrot.slane %v4184, %v4193
    %v4195 = vcombine.high %v4194, %v4194
    %v4197 = vunpack.c.l.s4 1966171168
    %v4198 = vunpack.c.0.s8 %v4197
    %v4199 = vlaneseq
    %v4200 = vshrl.u32 %v4199, 7
    %v4201 = vsub.s32 %v4198, %v4200
    %v4202 = vrot.slane %v4195, %v4201
    %v4203 = vcombine.high %v4202, %v4202
    %v4205 = vunpack.c.l.s4 1966171168
    %v4206 = vunpack.c.0.s8 %v4205
    %v4207 = vlaneseq
    %v4208 = vshrl.u32 %v4207, 7
    %v4209 = vsub.s32 %v4206, %v4208
    %v4210 = vrot.slane %v4185, %v4209
    %v4211 = vcombine.high %v4210, %v4210
    %v4213 = vunpack.c.l.s4 1966171168
    %v4214 = vunpack.c.0.s8 %v4213
    %v4215 = vlaneseq
    %v4216 = vshrl.u32 %v4215, 7
    %v4217 = vsub.s32 %v4214, %v4216
    %v4218 = vrot.slane %v4211, %v4217
    %v4219 = vcombine.high %v4218, %v4218
    %v4221 = vunpack.c.l.s4 1935823168
    %v4222 = vunpack.c.0.s8 %v4221
    %v4223 = vlaneseq
    %v4224 = vshrl.u32 %v4223, 7
    %v4225 = vsub.s32 %v4222, %v4224
    %v4226 = vrot.slane %v4203, %v4225
    %v4228 = vunpack.c.l.s4 1935823168
    %v4229 = vunpack.c.0.s8 %v4228
    %v4230 = vlaneseq
    %v4231 = vshrl.u32 %v4230, 7
    %v4232 = vsub.s32 %v4229, %v4231
    %v4233 = vrot.slane %v4226, %v4232
    %v4235 = vunpack.c.l.s4 1935823168
    %v4236 = vunpack.c.0.s8 %v4235
    %v4237 = vlaneseq
    %v4238 = vshrl.u32 %v4237, 7
    %v4239 = vsub.s32 %v4236, %v4238
    %v4240 = vrot.slane %v4219, %v4239
    %v4242 = vunpack.c.l.s4 1935823168
    %v4243 = vunpack.c.0.s8 %v4242
    %v4244 = vlaneseq
    %v4245 = vshrl.u32 %v4244, 7
    %v4246 = vsub.s32 %v4243, %v4245
    %v4247 = vrot.slane %v4240, %v4246
    %v4248 = vunpack.c.l.b16 %v4233
    %v4249 = vunpack.c.l.b16 %v4247
    %v4250 = vrot.slane %v4249, 7
    %v4251 = vsel %vm2400, %v4250, %v4248
    %v4252 = vpack.c.b16 %v4251, %v4251
    %v4254 = vunpack.c.l.s4 1966171168
    %v4255 = vunpack.c.0.s8 %v4254
    %v4256 = vlaneseq
    %v4257 = vshrl.u32 %v4256, 7
    %v4258 = vsub.s32 %v4255, %v4257
    %v4259 = vrot.slane %v4252, %v4258
    %v4261 = vunpack.c.l.s4 1966171168
    %v4262 = vunpack.c.0.s8 %v4261
    %v4263 = vlaneseq
    %v4264 = vshrl.u32 %v4263, 7
    %v4265 = vsub.s32 %v4262, %v4264
    %v4266 = vrot.slane %v4259, %v4265
    %4268 = vst.msk [vmem:[#allocation4 + $0xb] sm:$0x1] %vm2418, %v4266
    %v4269 = vld [vmem:[#allocation3 + $0x8] sm:$0x8]
    %v4270 = vld [vmem:[#allocation3 + $0x28] sm:$0x8]
    %v4274 = vunpack.c.l.s4 1966171168
    %v4275 = vunpack.c.0.s8 %v4274
    %v4276 = vlaneseq
    %v4277 = vshrl.u32 %v4276, 7
    %v4278 = vsub.s32 %v4275, %v4277
    %v4279 = vrot.slane %v4269, %v4278
    %v4280 = vcombine.high %v4279, %v4279
    %v4282 = vunpack.c.l.s4 1966171168
    %v4283 = vunpack.c.0.s8 %v4282
    %v4284 = vlaneseq
    %v4285 = vshrl.u32 %v4284, 7
    %v4286 = vsub.s32 %v4283, %v4285
    %v4287 = vrot.slane %v4280, %v4286
    %v4288 = vcombine.high %v4287, %v4287
    %v4290 = vunpack.c.l.s4 1966171168
    %v4291 = vunpack.c.0.s8 %v4290
    %v4292 = vlaneseq
    %v4293 = vshrl.u32 %v4292, 7
    %v4294 = vsub.s32 %v4291, %v4293
    %v4295 = vrot.slane %v4270, %v4294
    %v4296 = vcombine.high %v4295, %v4295
    %v4298 = vunpack.c.l.s4 1966171168
    %v4299 = vunpack.c.0.s8 %v4298
    %v4300 = vlaneseq
    %v4301 = vshrl.u32 %v4300, 7
    %v4302 = vsub.s32 %v4299, %v4301
    %v4303 = vrot.slane %v4296, %v4302
    %v4304 = vcombine.high %v4303, %v4303
    %v4306 = vunpack.c.l.s4 1935823168
    %v4307 = vunpack.c.0.s8 %v4306
    %v4308 = vlaneseq
    %v4309 = vshrl.u32 %v4308, 7
    %v4310 = vsub.s32 %v4307, %v4309
    %v4311 = vrot.slane %v4288, %v4310
    %v4313 = vunpack.c.l.s4 1935823168
    %v4314 = vunpack.c.0.s8 %v4313
    %v4315 = vlaneseq
    %v4316 = vshrl.u32 %v4315, 7
    %v4317 = vsub.s32 %v4314, %v4316
    %v4318 = vrot.slane %v4311, %v4317
    %v4320 = vunpack.c.l.s4 1935823168
    %v4321 = vunpack.c.0.s8 %v4320
    %v4322 = vlaneseq
    %v4323 = vshrl.u32 %v4322, 7
    %v4324 = vsub.s32 %v4321, %v4323
    %v4325 = vrot.slane %v4304, %v4324
    %v4327 = vunpack.c.l.s4 1935823168
    %v4328 = vunpack.c.0.s8 %v4327
    %v4329 = vlaneseq
    %v4330 = vshrl.u32 %v4329, 7
    %v4331 = vsub.s32 %v4328, %v4330
    %v4332 = vrot.slane %v4325, %v4331
    %v4333 = vunpack.c.l.b16 %v4318
    %v4334 = vunpack.c.l.b16 %v4332
    %v4335 = vrot.slane %v4333, 1
    %v4336 = vsel %vm2400, %v4334, %v4335
    %v4337 = vpack.c.b16 %v4336, %v4336
    %v4339 = vunpack.c.l.s4 1966171168
    %v4340 = vunpack.c.0.s8 %v4339
    %v4341 = vlaneseq
    %v4342 = vshrl.u32 %v4341, 7
    %v4343 = vsub.s32 %v4340, %v4342
    %v4344 = vrot.slane %v4337, %v4343
    %v4346 = vunpack.c.l.s4 1966171168
    %v4347 = vunpack.c.0.s8 %v4346
    %v4348 = vlaneseq
    %v4349 = vshrl.u32 %v4348, 7
    %v4350 = vsub.s32 %v4347, %v4349
    %v4351 = vrot.slane %v4344, %v4350
    %4352 = vrot.lane.b32.xlu0 %v4351, 64
    %v4353 = vpop.permute.xlu0 %4352
    %4355 = vst.msk [vmem:[#allocation4 + $0xb] sm:$0x1] %vm2502, %v4353
    %v4356 = vld [vmem:[#allocation3 + $0xc] sm:$0x1]
    %v4357 = vld [vmem:[#allocation3 + $0x2c] sm:$0x1]
    %v4361 = vunpack.c.l.s4 1966171168
    %v4362 = vunpack.c.0.s8 %v4361
    %v4363 = vlaneseq
    %v4364 = vshrl.u32 %v4363, 7
    %v4365 = vsub.s32 %v4362, %v4364
    %v4366 = vrot.slane %v4356, %v4365
    %v4368 = vunpack.c.l.s4 1966171168
    %v4369 = vunpack.c.0.s8 %v4368
    %v4370 = vlaneseq
    %v4371 = vshrl.u32 %v4370, 7
    %v4372 = vsub.s32 %v4369, %v4371
    %v4373 = vrot.slane %v4366, %v4372
    %v4375 = vunpack.c.l.s4 1966171168
    %v4376 = vunpack.c.0.s8 %v4375
    %v4377 = vlaneseq
    %v4378 = vshrl.u32 %v4377, 7
    %v4379 = vsub.s32 %v4376, %v4378
    %v4380 = vrot.slane %v4357, %v4379
    %v4382 = vunpack.c.l.s4 1966171168
    %v4383 = vunpack.c.0.s8 %v4382
    %v4384 = vlaneseq
    %v4385 = vshrl.u32 %v4384, 7
    %v4386 = vsub.s32 %v4383, %v4385
    %v4387 = vrot.slane %v4380, %v4386
    %v4389 = vunpack.c.l.s4 1935823168
    %v4390 = vunpack.c.0.s8 %v4389
    %v4391 = vlaneseq
    %v4392 = vshrl.u32 %v4391, 7
    %v4393 = vsub.s32 %v4390, %v4392
    %v4394 = vrot.slane %v4373, %v4393
    %v4396 = vunpack.c.l.s4 1935823168
    %v4397 = vunpack.c.0.s8 %v4396
    %v4398 = vlaneseq
    %v4399 = vshrl.u32 %v4398, 7
    %v4400 = vsub.s32 %v4397, %v4399
    %v4401 = vrot.slane %v4394, %v4400
    %v4403 = vunpack.c.l.s4 1935823168
    %v4404 = vunpack.c.0.s8 %v4403
    %v4405 = vlaneseq
    %v4406 = vshrl.u32 %v4405, 7
    %v4407 = vsub.s32 %v4404, %v4406
    %v4408 = vrot.slane %v4387, %v4407
    %v4410 = vunpack.c.l.s4 1935823168
    %v4411 = vunpack.c.0.s8 %v4410
    %v4412 = vlaneseq
    %v4413 = vshrl.u32 %v4412, 7
    %v4414 = vsub.s32 %v4411, %v4413
    %v4415 = vrot.slane %v4408, %v4414
    %v4416 = vunpack.c.l.b16 %v4401
    %v4417 = vunpack.c.l.b16 %v4415
    %v4418 = vrot.slane %v4417, 7
    %v4419 = vsel %vm2400, %v4418, %v4416
    %v4420 = vpack.c.b16 %v4419, %v4419
    %v4422 = vunpack.c.l.s4 1966171168
    %v4423 = vunpack.c.0.s8 %v4422
    %v4424 = vlaneseq
    %v4425 = vshrl.u32 %v4424, 7
    %v4426 = vsub.s32 %v4423, %v4425
    %v4427 = vrot.slane %v4420, %v4426
    %v4429 = vunpack.c.l.s4 1966171168
    %v4430 = vunpack.c.0.s8 %v4429
    %v4431 = vlaneseq
    %v4432 = vshrl.u32 %v4431, 7
    %v4433 = vsub.s32 %v4430, %v4432
    %v4434 = vrot.slane %v4427, %v4433
    %4436 = vst.msk [vmem:[#allocation4 + $0xc] sm:$0x1] %vm2418, %v4434
    %v4437 = vld [vmem:[#allocation3 + $0xc] sm:$0x1]
    %v4438 = vld [vmem:[#allocation3 + $0x2c] sm:$0x1]
    %v4442 = vunpack.c.l.s4 1966171168
    %v4443 = vunpack.c.0.s8 %v4442
    %v4444 = vlaneseq
    %v4445 = vshrl.u32 %v4444, 7
    %v4446 = vsub.s32 %v4443, %v4445
    %v4447 = vrot.slane %v4437, %v4446
    %v4449 = vunpack.c.l.s4 1966171168
    %v4450 = vunpack.c.0.s8 %v4449
    %v4451 = vlaneseq
    %v4452 = vshrl.u32 %v4451, 7
    %v4453 = vsub.s32 %v4450, %v4452
    %v4454 = vrot.slane %v4447, %v4453
    %v4456 = vunpack.c.l.s4 1966171168
    %v4457 = vunpack.c.0.s8 %v4456
    %v4458 = vlaneseq
    %v4459 = vshrl.u32 %v4458, 7
    %v4460 = vsub.s32 %v4457, %v4459
    %v4461 = vrot.slane %v4438, %v4460
    %v4463 = vunpack.c.l.s4 1966171168
    %v4464 = vunpack.c.0.s8 %v4463
    %v4465 = vlaneseq
    %v4466 = vshrl.u32 %v4465, 7
    %v4467 = vsub.s32 %v4464, %v4466
    %v4468 = vrot.slane %v4461, %v4467
    %v4470 = vunpack.c.l.s4 1935823168
    %v4471 = vunpack.c.0.s8 %v4470
    %v4472 = vlaneseq
    %v4473 = vshrl.u32 %v4472, 7
    %v4474 = vsub.s32 %v4471, %v4473
    %v4475 = vrot.slane %v4454, %v4474
    %v4477 = vunpack.c.l.s4 1935823168
    %v4478 = vunpack.c.0.s8 %v4477
    %v4479 = vlaneseq
    %v4480 = vshrl.u32 %v4479, 7
    %v4481 = vsub.s32 %v4478, %v4480
    %v4482 = vrot.slane %v4475, %v4481
    %v4484 = vunpack.c.l.s4 1935823168
    %v4485 = vunpack.c.0.s8 %v4484
    %v4486 = vlaneseq
    %v4487 = vshrl.u32 %v4486, 7
    %v4488 = vsub.s32 %v4485, %v4487
    %v4489 = vrot.slane %v4468, %v4488
    %v4491 = vunpack.c.l.s4 1935823168
    %v4492 = vunpack.c.0.s8 %v4491
    %v4493 = vlaneseq
    %v4494 = vshrl.u32 %v4493, 7
    %v4495 = vsub.s32 %v4492, %v4494
    %v4496 = vrot.slane %v4489, %v4495
    %v4497 = vunpack.c.l.b16 %v4482
    %v4498 = vunpack.c.l.b16 %v4496
    %v4499 = vrot.slane %v4497, 1
    %v4500 = vsel %vm2400, %v4498, %v4499
    %v4501 = vpack.c.b16 %v4500, %v4500
    %v4503 = vunpack.c.l.s4 1966171168
    %v4504 = vunpack.c.0.s8 %v4503
    %v4505 = vlaneseq
    %v4506 = vshrl.u32 %v4505, 7
    %v4507 = vsub.s32 %v4504, %v4506
    %v4508 = vrot.slane %v4501, %v4507
    %v4510 = vunpack.c.l.s4 1966171168
    %v4511 = vunpack.c.0.s8 %v4510
    %v4512 = vlaneseq
    %v4513 = vshrl.u32 %v4512, 7
    %v4514 = vsub.s32 %v4511, %v4513
    %v4515 = vrot.slane %v4508, %v4514
    %4516 = vrot.lane.b32.xlu0 %v4515, 64
    %v4517 = vpop.permute.xlu0 %4516
    %4519 = vst.msk [vmem:[#allocation4 + $0xc] sm:$0x1] %vm2502, %v4517
    %v4520 = vld [vmem:[#allocation3 + $0xc] sm:$0x2]
    %v4521 = vld [vmem:[#allocation3 + $0x2c] sm:$0x2]
    %v4525 = vunpack.c.l.s4 1966171168
    %v4526 = vunpack.c.0.s8 %v4525
    %v4527 = vlaneseq
    %v4528 = vshrl.u32 %v4527, 7
    %v4529 = vsub.s32 %v4526, %v4528
    %v4530 = vrot.slane %v4520, %v4529
    %v4531 = vcombine.high %v4530, %v4530
    %v4533 = vunpack.c.l.s4 1966171168
    %v4534 = vunpack.c.0.s8 %v4533
    %v4535 = vlaneseq
    %v4536 = vshrl.u32 %v4535, 7
    %v4537 = vsub.s32 %v4534, %v4536
    %v4538 = vrot.slane %v4531, %v4537
    %v4540 = vunpack.c.l.s4 1966171168
    %v4541 = vunpack.c.0.s8 %v4540
    %v4542 = vlaneseq
    %v4543 = vshrl.u32 %v4542, 7
    %v4544 = vsub.s32 %v4541, %v4543
    %v4545 = vrot.slane %v4521, %v4544
    %v4546 = vcombine.high %v4545, %v4545
    %v4548 = vunpack.c.l.s4 1966171168
    %v4549 = vunpack.c.0.s8 %v4548
    %v4550 = vlaneseq
    %v4551 = vshrl.u32 %v4550, 7
    %v4552 = vsub.s32 %v4549, %v4551
    %v4553 = vrot.slane %v4546, %v4552
    %v4555 = vunpack.c.l.s4 1935823168
    %v4556 = vunpack.c.0.s8 %v4555
    %v4557 = vlaneseq
    %v4558 = vshrl.u32 %v4557, 7
    %v4559 = vsub.s32 %v4556, %v4558
    %v4560 = vrot.slane %v4538, %v4559
    %v4562 = vunpack.c.l.s4 1935823168
    %v4563 = vunpack.c.0.s8 %v4562
    %v4564 = vlaneseq
    %v4565 = vshrl.u32 %v4564, 7
    %v4566 = vsub.s32 %v4563, %v4565
    %v4567 = vrot.slane %v4560, %v4566
    %v4569 = vunpack.c.l.s4 1935823168
    %v4570 = vunpack.c.0.s8 %v4569
    %v4571 = vlaneseq
    %v4572 = vshrl.u32 %v4571, 7
    %v4573 = vsub.s32 %v4570, %v4572
    %v4574 = vrot.slane %v4553, %v4573
    %v4576 = vunpack.c.l.s4 1935823168
    %v4577 = vunpack.c.0.s8 %v4576
    %v4578 = vlaneseq
    %v4579 = vshrl.u32 %v4578, 7
    %v4580 = vsub.s32 %v4577, %v4579
    %v4581 = vrot.slane %v4574, %v4580
    %v4582 = vunpack.c.l.b16 %v4567
    %v4583 = vunpack.c.l.b16 %v4581
    %v4584 = vrot.slane %v4583, 7
    %v4585 = vsel %vm2400, %v4584, %v4582
    %v4586 = vpack.c.b16 %v4585, %v4585
    %v4588 = vunpack.c.l.s4 1966171168
    %v4589 = vunpack.c.0.s8 %v4588
    %v4590 = vlaneseq
    %v4591 = vshrl.u32 %v4590, 7
    %v4592 = vsub.s32 %v4589, %v4591
    %v4593 = vrot.slane %v4586, %v4592
    %v4595 = vunpack.c.l.s4 1966171168
    %v4596 = vunpack.c.0.s8 %v4595
    %v4597 = vlaneseq
    %v4598 = vshrl.u32 %v4597, 7
    %v4599 = vsub.s32 %v4596, %v4598
    %v4600 = vrot.slane %v4593, %v4599
    %4602 = vst.msk [vmem:[#allocation4 + $0xd] sm:$0x1] %vm2418, %v4600
    %v4603 = vld [vmem:[#allocation3 + $0xc] sm:$0x2]
    %v4604 = vld [vmem:[#allocation3 + $0x2c] sm:$0x2]
    %v4608 = vunpack.c.l.s4 1966171168
    %v4609 = vunpack.c.0.s8 %v4608
    %v4610 = vlaneseq
    %v4611 = vshrl.u32 %v4610, 7
    %v4612 = vsub.s32 %v4609, %v4611
    %v4613 = vrot.slane %v4603, %v4612
    %v4614 = vcombine.high %v4613, %v4613
    %v4616 = vunpack.c.l.s4 1966171168
    %v4617 = vunpack.c.0.s8 %v4616
    %v4618 = vlaneseq
    %v4619 = vshrl.u32 %v4618, 7
    %v4620 = vsub.s32 %v4617, %v4619
    %v4621 = vrot.slane %v4614, %v4620
    %v4623 = vunpack.c.l.s4 1966171168
    %v4624 = vunpack.c.0.s8 %v4623
    %v4625 = vlaneseq
    %v4626 = vshrl.u32 %v4625, 7
    %v4627 = vsub.s32 %v4624, %v4626
    %v4628 = vrot.slane %v4604, %v4627
    %v4629 = vcombine.high %v4628, %v4628
    %v4631 = vunpack.c.l.s4 1966171168
    %v4632 = vunpack.c.0.s8 %v4631
    %v4633 = vlaneseq
    %v4634 = vshrl.u32 %v4633, 7
    %v4635 = vsub.s32 %v4632, %v4634
    %v4636 = vrot.slane %v4629, %v4635
    %v4638 = vunpack.c.l.s4 1935823168
    %v4639 = vunpack.c.0.s8 %v4638
    %v4640 = vlaneseq
    %v4641 = vshrl.u32 %v4640, 7
    %v4642 = vsub.s32 %v4639, %v4641
    %v4643 = vrot.slane %v4621, %v4642
    %v4645 = vunpack.c.l.s4 1935823168
    %v4646 = vunpack.c.0.s8 %v4645
    %v4647 = vlaneseq
    %v4648 = vshrl.u32 %v4647, 7
    %v4649 = vsub.s32 %v4646, %v4648
    %v4650 = vrot.slane %v4643, %v4649
    %v4652 = vunpack.c.l.s4 1935823168
    %v4653 = vunpack.c.0.s8 %v4652
    %v4654 = vlaneseq
    %v4655 = vshrl.u32 %v4654, 7
    %v4656 = vsub.s32 %v4653, %v4655
    %v4657 = vrot.slane %v4636, %v4656
    %v4659 = vunpack.c.l.s4 1935823168
    %v4660 = vunpack.c.0.s8 %v4659
    %v4661 = vlaneseq
    %v4662 = vshrl.u32 %v4661, 7
    %v4663 = vsub.s32 %v4660, %v4662
    %v4664 = vrot.slane %v4657, %v4663
    %v4665 = vunpack.c.l.b16 %v4650
    %v4666 = vunpack.c.l.b16 %v4664
    %v4667 = vrot.slane %v4665, 1
    %v4668 = vsel %vm2400, %v4666, %v4667
    %v4669 = vpack.c.b16 %v4668, %v4668
    %v4671 = vunpack.c.l.s4 1966171168
    %v4672 = vunpack.c.0.s8 %v4671
    %v4673 = vlaneseq
    %v4674 = vshrl.u32 %v4673, 7
    %v4675 = vsub.s32 %v4672, %v4674
    %v4676 = vrot.slane %v4669, %v4675
    %v4678 = vunpack.c.l.s4 1966171168
    %v4679 = vunpack.c.0.s8 %v4678
    %v4680 = vlaneseq
    %v4681 = vshrl.u32 %v4680, 7
    %v4682 = vsub.s32 %v4679, %v4681
    %v4683 = vrot.slane %v4676, %v4682
    %4684 = vrot.lane.b32.xlu0 %v4683, 64
    %v4685 = vpop.permute.xlu0 %4684
    %4687 = vst.msk [vmem:[#allocation4 + $0xd] sm:$0x1] %vm2502, %v4685
    %v4688 = vld [vmem:[#allocation3 + $0xc] sm:$0x4]
    %v4689 = vld [vmem:[#allocation3 + $0x2c] sm:$0x4]
    %v4693 = vunpack.c.l.s4 1966171168
    %v4694 = vunpack.c.0.s8 %v4693
    %v4695 = vlaneseq
    %v4696 = vshrl.u32 %v4695, 7
    %v4697 = vsub.s32 %v4694, %v4696
    %v4698 = vrot.slane %v4688, %v4697
    %v4700 = vunpack.c.l.s4 1966171168
    %v4701 = vunpack.c.0.s8 %v4700
    %v4702 = vlaneseq
    %v4703 = vshrl.u32 %v4702, 7
    %v4704 = vsub.s32 %v4701, %v4703
    %v4705 = vrot.slane %v4698, %v4704
    %v4706 = vcombine.high %v4705, %v4705
    %v4708 = vunpack.c.l.s4 1966171168
    %v4709 = vunpack.c.0.s8 %v4708
    %v4710 = vlaneseq
    %v4711 = vshrl.u32 %v4710, 7
    %v4712 = vsub.s32 %v4709, %v4711
    %v4713 = vrot.slane %v4689, %v4712
    %v4715 = vunpack.c.l.s4 1966171168
    %v4716 = vunpack.c.0.s8 %v4715
    %v4717 = vlaneseq
    %v4718 = vshrl.u32 %v4717, 7
    %v4719 = vsub.s32 %v4716, %v4718
    %v4720 = vrot.slane %v4713, %v4719
    %v4721 = vcombine.high %v4720, %v4720
    %v4723 = vunpack.c.l.s4 1935823168
    %v4724 = vunpack.c.0.s8 %v4723
    %v4725 = vlaneseq
    %v4726 = vshrl.u32 %v4725, 7
    %v4727 = vsub.s32 %v4724, %v4726
    %v4728 = vrot.slane %v4706, %v4727
    %v4730 = vunpack.c.l.s4 1935823168
    %v4731 = vunpack.c.0.s8 %v4730
    %v4732 = vlaneseq
    %v4733 = vshrl.u32 %v4732, 7
    %v4734 = vsub.s32 %v4731, %v4733
    %v4735 = vrot.slane %v4728, %v4734
    %v4737 = vunpack.c.l.s4 1935823168
    %v4738 = vunpack.c.0.s8 %v4737
    %v4739 = vlaneseq
    %v4740 = vshrl.u32 %v4739, 7
    %v4741 = vsub.s32 %v4738, %v4740
    %v4742 = vrot.slane %v4721, %v4741
    %v4744 = vunpack.c.l.s4 1935823168
    %v4745 = vunpack.c.0.s8 %v4744
    %v4746 = vlaneseq
    %v4747 = vshrl.u32 %v4746, 7
    %v4748 = vsub.s32 %v4745, %v4747
    %v4749 = vrot.slane %v4742, %v4748
    %v4750 = vunpack.c.l.b16 %v4735
    %v4751 = vunpack.c.l.b16 %v4749
    %v4752 = vrot.slane %v4751, 7
    %v4753 = vsel %vm2400, %v4752, %v4750
    %v4754 = vpack.c.b16 %v4753, %v4753
    %v4756 = vunpack.c.l.s4 1966171168
    %v4757 = vunpack.c.0.s8 %v4756
    %v4758 = vlaneseq
    %v4759 = vshrl.u32 %v4758, 7
    %v4760 = vsub.s32 %v4757, %v4759
    %v4761 = vrot.slane %v4754, %v4760
    %v4763 = vunpack.c.l.s4 1966171168
    %v4764 = vunpack.c.0.s8 %v4763
    %v4765 = vlaneseq
    %v4766 = vshrl.u32 %v4765, 7
    %v4767 = vsub.s32 %v4764, %v4766
    %v4768 = vrot.slane %v4761, %v4767
    %4770 = vst.msk [vmem:[#allocation4 + $0xe] sm:$0x1] %vm2418, %v4768
    %v4771 = vld [vmem:[#allocation3 + $0xc] sm:$0x4]
    %v4772 = vld [vmem:[#allocation3 + $0x2c] sm:$0x4]
    %v4776 = vunpack.c.l.s4 1966171168
    %v4777 = vunpack.c.0.s8 %v4776
    %v4778 = vlaneseq
    %v4779 = vshrl.u32 %v4778, 7
    %v4780 = vsub.s32 %v4777, %v4779
    %v4781 = vrot.slane %v4771, %v4780
    %v4783 = vunpack.c.l.s4 1966171168
    %v4784 = vunpack.c.0.s8 %v4783
    %v4785 = vlaneseq
    %v4786 = vshrl.u32 %v4785, 7
    %v4787 = vsub.s32 %v4784, %v4786
    %v4788 = vrot.slane %v4781, %v4787
    %v4789 = vcombine.high %v4788, %v4788
    %v4791 = vunpack.c.l.s4 1966171168
    %v4792 = vunpack.c.0.s8 %v4791
    %v4793 = vlaneseq
    %v4794 = vshrl.u32 %v4793, 7
    %v4795 = vsub.s32 %v4792, %v4794
    %v4796 = vrot.slane %v4772, %v4795
    %v4798 = vunpack.c.l.s4 1966171168
    %v4799 = vunpack.c.0.s8 %v4798
    %v4800 = vlaneseq
    %v4801 = vshrl.u32 %v4800, 7
    %v4802 = vsub.s32 %v4799, %v4801
    %v4803 = vrot.slane %v4796, %v4802
    %v4804 = vcombine.high %v4803, %v4803
    %v4806 = vunpack.c.l.s4 1935823168
    %v4807 = vunpack.c.0.s8 %v4806
    %v4808 = vlaneseq
    %v4809 = vshrl.u32 %v4808, 7
    %v4810 = vsub.s32 %v4807, %v4809
    %v4811 = vrot.slane %v4789, %v4810
    %v4813 = vunpack.c.l.s4 1935823168
    %v4814 = vunpack.c.0.s8 %v4813
    %v4815 = vlaneseq
    %v4816 = vshrl.u32 %v4815, 7
    %v4817 = vsub.s32 %v4814, %v4816
    %v4818 = vrot.slane %v4811, %v4817
    %v4820 = vunpack.c.l.s4 1935823168
    %v4821 = vunpack.c.0.s8 %v4820
    %v4822 = vlaneseq
    %v4823 = vshrl.u32 %v4822, 7
    %v4824 = vsub.s32 %v4821, %v4823
    %v4825 = vrot.slane %v4804, %v4824
    %v4827 = vunpack.c.l.s4 1935823168
    %v4828 = vunpack.c.0.s8 %v4827
    %v4829 = vlaneseq
    %v4830 = vshrl.u32 %v4829, 7
    %v4831 = vsub.s32 %v4828, %v4830
    %v4832 = vrot.slane %v4825, %v4831
    %v4833 = vunpack.c.l.b16 %v4818
    %v4834 = vunpack.c.l.b16 %v4832
    %v4835 = vrot.slane %v4833, 1
    %v4836 = vsel %vm2400, %v4834, %v4835
    %v4837 = vpack.c.b16 %v4836, %v4836
    %v4839 = vunpack.c.l.s4 1966171168
    %v4840 = vunpack.c.0.s8 %v4839
    %v4841 = vlaneseq
    %v4842 = vshrl.u32 %v4841, 7
    %v4843 = vsub.s32 %v4840, %v4842
    %v4844 = vrot.slane %v4837, %v4843
    %v4846 = vunpack.c.l.s4 1966171168
    %v4847 = vunpack.c.0.s8 %v4846
    %v4848 = vlaneseq
    %v4849 = vshrl.u32 %v4848, 7
    %v4850 = vsub.s32 %v4847, %v4849
    %v4851 = vrot.slane %v4844, %v4850
    %4852 = vrot.lane.b32.xlu0 %v4851, 64
    %v4853 = vpop.permute.xlu0 %4852
    %4855 = vst.msk [vmem:[#allocation4 + $0xe] sm:$0x1] %vm2502, %v4853
    %v4856 = vld [vmem:[#allocation3 + $0xc] sm:$0x8]
    %v4857 = vld [vmem:[#allocation3 + $0x2c] sm:$0x8]
    %v4861 = vunpack.c.l.s4 1966171168
    %v4862 = vunpack.c.0.s8 %v4861
    %v4863 = vlaneseq
    %v4864 = vshrl.u32 %v4863, 7
    %v4865 = vsub.s32 %v4862, %v4864
    %v4866 = vrot.slane %v4856, %v4865
    %v4867 = vcombine.high %v4866, %v4866
    %v4869 = vunpack.c.l.s4 1966171168
    %v4870 = vunpack.c.0.s8 %v4869
    %v4871 = vlaneseq
    %v4872 = vshrl.u32 %v4871, 7
    %v4873 = vsub.s32 %v4870, %v4872
    %v4874 = vrot.slane %v4867, %v4873
    %v4875 = vcombine.high %v4874, %v4874
    %v4877 = vunpack.c.l.s4 1966171168
    %v4878 = vunpack.c.0.s8 %v4877
    %v4879 = vlaneseq
    %v4880 = vshrl.u32 %v4879, 7
    %v4881 = vsub.s32 %v4878, %v4880
    %v4882 = vrot.slane %v4857, %v4881
    %v4883 = vcombine.high %v4882, %v4882
    %v4885 = vunpack.c.l.s4 1966171168
    %v4886 = vunpack.c.0.s8 %v4885
    %v4887 = vlaneseq
    %v4888 = vshrl.u32 %v4887, 7
    %v4889 = vsub.s32 %v4886, %v4888
    %v4890 = vrot.slane %v4883, %v4889
    %v4891 = vcombine.high %v4890, %v4890
    %v4893 = vunpack.c.l.s4 1935823168
    %v4894 = vunpack.c.0.s8 %v4893
    %v4895 = vlaneseq
    %v4896 = vshrl.u32 %v4895, 7
    %v4897 = vsub.s32 %v4894, %v4896
    %v4898 = vrot.slane %v4875, %v4897
    %v4900 = vunpack.c.l.s4 1935823168
    %v4901 = vunpack.c.0.s8 %v4900
    %v4902 = vlaneseq
    %v4903 = vshrl.u32 %v4902, 7
    %v4904 = vsub.s32 %v4901, %v4903
    %v4905 = vrot.slane %v4898, %v4904
    %v4907 = vunpack.c.l.s4 1935823168
    %v4908 = vunpack.c.0.s8 %v4907
    %v4909 = vlaneseq
    %v4910 = vshrl.u32 %v4909, 7
    %v4911 = vsub.s32 %v4908, %v4910
    %v4912 = vrot.slane %v4891, %v4911
    %v4914 = vunpack.c.l.s4 1935823168
    %v4915 = vunpack.c.0.s8 %v4914
    %v4916 = vlaneseq
    %v4917 = vshrl.u32 %v4916, 7
    %v4918 = vsub.s32 %v4915, %v4917
    %v4919 = vrot.slane %v4912, %v4918
    %v4920 = vunpack.c.l.b16 %v4905
    %v4921 = vunpack.c.l.b16 %v4919
    %v4922 = vrot.slane %v4921, 7
    %v4923 = vsel %vm2400, %v4922, %v4920
    %v4924 = vpack.c.b16 %v4923, %v4923
    %v4926 = vunpack.c.l.s4 1966171168
    %v4927 = vunpack.c.0.s8 %v4926
    %v4928 = vlaneseq
    %v4929 = vshrl.u32 %v4928, 7
    %v4930 = vsub.s32 %v4927, %v4929
    %v4931 = vrot.slane %v4924, %v4930
    %v4933 = vunpack.c.l.s4 1966171168
    %v4934 = vunpack.c.0.s8 %v4933
    %v4935 = vlaneseq
    %v4936 = vshrl.u32 %v4935, 7
    %v4937 = vsub.s32 %v4934, %v4936
    %v4938 = vrot.slane %v4931, %v4937
    %4940 = vst.msk [vmem:[#allocation4 + $0xf] sm:$0x1] %vm2418, %v4938
    %v4941 = vld [vmem:[#allocation3 + $0xc] sm:$0x8]
    %v4942 = vld [vmem:[#allocation3 + $0x2c] sm:$0x8]
    %v4946 = vunpack.c.l.s4 1966171168
    %v4947 = vunpack.c.0.s8 %v4946
    %v4948 = vlaneseq
    %v4949 = vshrl.u32 %v4948, 7
    %v4950 = vsub.s32 %v4947, %v4949
    %v4951 = vrot.slane %v4941, %v4950
    %v4952 = vcombine.high %v4951, %v4951
    %v4954 = vunpack.c.l.s4 1966171168
    %v4955 = vunpack.c.0.s8 %v4954
    %v4956 = vlaneseq
    %v4957 = vshrl.u32 %v4956, 7
    %v4958 = vsub.s32 %v4955, %v4957
    %v4959 = vrot.slane %v4952, %v4958
    %v4960 = vcombine.high %v4959, %v4959
    %v4962 = vunpack.c.l.s4 1966171168
    %v4963 = vunpack.c.0.s8 %v4962
    %v4964 = vlaneseq
    %v4965 = vshrl.u32 %v4964, 7
    %v4966 = vsub.s32 %v4963, %v4965
    %v4967 = vrot.slane %v4942, %v4966
    %v4968 = vcombine.high %v4967, %v4967
    %v4970 = vunpack.c.l.s4 1966171168
    %v4971 = vunpack.c.0.s8 %v4970
    %v4972 = vlaneseq
    %v4973 = vshrl.u32 %v4972, 7
    %v4974 = vsub.s32 %v4971, %v4973
    %v4975 = vrot.slane %v4968, %v4974
    %v4976 = vcombine.high %v4975, %v4975
    %v4978 = vunpack.c.l.s4 1935823168
    %v4979 = vunpack.c.0.s8 %v4978
    %v4980 = vlaneseq
    %v4981 = vshrl.u32 %v4980, 7
    %v4982 = vsub.s32 %v4979, %v4981
    %v4983 = vrot.slane %v4960, %v4982
    %v4985 = vunpack.c.l.s4 1935823168
    %v4986 = vunpack.c.0.s8 %v4985
    %v4987 = vlaneseq
    %v4988 = vshrl.u32 %v4987, 7
    %v4989 = vsub.s32 %v4986, %v4988
    %v4990 = vrot.slane %v4983, %v4989
    %v4992 = vunpack.c.l.s4 1935823168
    %v4993 = vunpack.c.0.s8 %v4992
    %v4994 = vlaneseq
    %v4995 = vshrl.u32 %v4994, 7
    %v4996 = vsub.s32 %v4993, %v4995
    %v4997 = vrot.slane %v4976, %v4996
    %v4999 = vunpack.c.l.s4 1935823168
    %v5000 = vunpack.c.0.s8 %v4999
    %v5001 = vlaneseq
    %v5002 = vshrl.u32 %v5001, 7
    %v5003 = vsub.s32 %v5000, %v5002
    %v5004 = vrot.slane %v4997, %v5003
    %v5005 = vunpack.c.l.b16 %v4990
    %v5006 = vunpack.c.l.b16 %v5004
    %v5007 = vrot.slane %v5005, 1
    %v5008 = vsel %vm2400, %v5006, %v5007
    %v5009 = vpack.c.b16 %v5008, %v5008
    %v5011 = vunpack.c.l.s4 1966171168
    %v5012 = vunpack.c.0.s8 %v5011
    %v5013 = vlaneseq
    %v5014 = vshrl.u32 %v5013, 7
    %v5015 = vsub.s32 %v5012, %v5014
    %v5016 = vrot.slane %v5009, %v5015
    %v5018 = vunpack.c.l.s4 1966171168
    %v5019 = vunpack.c.0.s8 %v5018
    %v5020 = vlaneseq
    %v5021 = vshrl.u32 %v5020, 7
    %v5022 = vsub.s32 %v5019, %v5021
    %v5023 = vrot.slane %v5016, %v5022
    %5024 = vrot.lane.b32.xlu0 %v5023, 64
    %v5025 = vpop.permute.xlu0 %5024
    %5027 = vst.msk [vmem:[#allocation4 + $0xf] sm:$0x1] %vm2502, %v5025
    %v5028 = vld [vmem:[#allocation3 + $0x10] sm:$0x1]
    %v5029 = vld [vmem:[#allocation3 + $0x30] sm:$0x1]
    %v5033 = vunpack.c.l.s4 1966171168
    %v5034 = vunpack.c.0.s8 %v5033
    %v5035 = vlaneseq
    %v5036 = vshrl.u32 %v5035, 7
    %v5037 = vsub.s32 %v5034, %v5036
    %v5038 = vrot.slane %v5028, %v5037
    %v5040 = vunpack.c.l.s4 1966171168
    %v5041 = vunpack.c.0.s8 %v5040
    %v5042 = vlaneseq
    %v5043 = vshrl.u32 %v5042, 7
    %v5044 = vsub.s32 %v5041, %v5043
    %v5045 = vrot.slane %v5038, %v5044
    %v5047 = vunpack.c.l.s4 1966171168
    %v5048 = vunpack.c.0.s8 %v5047
    %v5049 = vlaneseq
    %v5050 = vshrl.u32 %v5049, 7
    %v5051 = vsub.s32 %v5048, %v5050
    %v5052 = vrot.slane %v5029, %v5051
    %v5054 = vunpack.c.l.s4 1966171168
    %v5055 = vunpack.c.0.s8 %v5054
    %v5056 = vlaneseq
    %v5057 = vshrl.u32 %v5056, 7
    %v5058 = vsub.s32 %v5055, %v5057
    %v5059 = vrot.slane %v5052, %v5058
    %v5061 = vunpack.c.l.s4 1935823168
    %v5062 = vunpack.c.0.s8 %v5061
    %v5063 = vlaneseq
    %v5064 = vshrl.u32 %v5063, 7
    %v5065 = vsub.s32 %v5062, %v5064
    %v5066 = vrot.slane %v5045, %v5065
    %v5068 = vunpack.c.l.s4 1935823168
    %v5069 = vunpack.c.0.s8 %v5068
    %v5070 = vlaneseq
    %v5071 = vshrl.u32 %v5070, 7
    %v5072 = vsub.s32 %v5069, %v5071
    %v5073 = vrot.slane %v5066, %v5072
    %v5075 = vunpack.c.l.s4 1935823168
    %v5076 = vunpack.c.0.s8 %v5075
    %v5077 = vlaneseq
    %v5078 = vshrl.u32 %v5077, 7
    %v5079 = vsub.s32 %v5076, %v5078
    %v5080 = vrot.slane %v5059, %v5079
    %v5082 = vunpack.c.l.s4 1935823168
    %v5083 = vunpack.c.0.s8 %v5082
    %v5084 = vlaneseq
    %v5085 = vshrl.u32 %v5084, 7
    %v5086 = vsub.s32 %v5083, %v5085
    %v5087 = vrot.slane %v5080, %v5086
    %v5088 = vunpack.c.l.b16 %v5073
    %v5089 = vunpack.c.l.b16 %v5087
    %v5090 = vrot.slane %v5089, 7
    %v5091 = vsel %vm2400, %v5090, %v5088
    %v5092 = vpack.c.b16 %v5091, %v5091
    %v5094 = vunpack.c.l.s4 1966171168
    %v5095 = vunpack.c.0.s8 %v5094
    %v5096 = vlaneseq
    %v5097 = vshrl.u32 %v5096, 7
    %v5098 = vsub.s32 %v5095, %v5097
    %v5099 = vrot.slane %v5092, %v5098
    %v5101 = vunpack.c.l.s4 1966171168
    %v5102 = vunpack.c.0.s8 %v5101
    %v5103 = vlaneseq
    %v5104 = vshrl.u32 %v5103, 7
    %v5105 = vsub.s32 %v5102, %v5104
    %v5106 = vrot.slane %v5099, %v5105
    %5108 = vst.msk [vmem:[#allocation4 + $0x10] sm:$0x1] %vm2418, %v5106
    %v5109 = vld [vmem:[#allocation3 + $0x10] sm:$0x1]
    %v5110 = vld [vmem:[#allocation3 + $0x30] sm:$0x1]
    %v5114 = vunpack.c.l.s4 1966171168
    %v5115 = vunpack.c.0.s8 %v5114
    %v5116 = vlaneseq
    %v5117 = vshrl.u32 %v5116, 7
    %v5118 = vsub.s32 %v5115, %v5117
    %v5119 = vrot.slane %v5109, %v5118
    %v5121 = vunpack.c.l.s4 1966171168
    %v5122 = vunpack.c.0.s8 %v5121
    %v5123 = vlaneseq
    %v5124 = vshrl.u32 %v5123, 7
    %v5125 = vsub.s32 %v5122, %v5124
    %v5126 = vrot.slane %v5119, %v5125
    %v5128 = vunpack.c.l.s4 1966171168
    %v5129 = vunpack.c.0.s8 %v5128
    %v5130 = vlaneseq
    %v5131 = vshrl.u32 %v5130, 7
    %v5132 = vsub.s32 %v5129, %v5131
    %v5133 = vrot.slane %v5110, %v5132
    %v5135 = vunpack.c.l.s4 1966171168
    %v5136 = vunpack.c.0.s8 %v5135
    %v5137 = vlaneseq
    %v5138 = vshrl.u32 %v5137, 7
    %v5139 = vsub.s32 %v5136, %v5138
    %v5140 = vrot.slane %v5133, %v5139
    %v5142 = vunpack.c.l.s4 1935823168
    %v5143 = vunpack.c.0.s8 %v5142
    %v5144 = vlaneseq
    %v5145 = vshrl.u32 %v5144, 7
    %v5146 = vsub.s32 %v5143, %v5145
    %v5147 = vrot.slane %v5126, %v5146
    %v5149 = vunpack.c.l.s4 1935823168
    %v5150 = vunpack.c.0.s8 %v5149
    %v5151 = vlaneseq
    %v5152 = vshrl.u32 %v5151, 7
    %v5153 = vsub.s32 %v5150, %v5152
    %v5154 = vrot.slane %v5147, %v5153
    %v5156 = vunpack.c.l.s4 1935823168
    %v5157 = vunpack.c.0.s8 %v5156
    %v5158 = vlaneseq
    %v5159 = vshrl.u32 %v5158, 7
    %v5160 = vsub.s32 %v5157, %v5159
    %v5161 = vrot.slane %v5140, %v5160
    %v5163 = vunpack.c.l.s4 1935823168
    %v5164 = vunpack.c.0.s8 %v5163
    %v5165 = vlaneseq
    %v5166 = vshrl.u32 %v5165, 7
    %v5167 = vsub.s32 %v5164, %v5166
    %v5168 = vrot.slane %v5161, %v5167
    %v5169 = vunpack.c.l.b16 %v5154
    %v5170 = vunpack.c.l.b16 %v5168
    %v5171 = vrot.slane %v5169, 1
    %v5172 = vsel %vm2400, %v5170, %v5171
    %v5173 = vpack.c.b16 %v5172, %v5172
    %v5175 = vunpack.c.l.s4 1966171168
    %v5176 = vunpack.c.0.s8 %v5175
    %v5177 = vlaneseq
    %v5178 = vshrl.u32 %v5177, 7
    %v5179 = vsub.s32 %v5176, %v5178
    %v5180 = vrot.slane %v5173, %v5179
    %v5182 = vunpack.c.l.s4 1966171168
    %v5183 = vunpack.c.0.s8 %v5182
    %v5184 = vlaneseq
    %v5185 = vshrl.u32 %v5184, 7
    %v5186 = vsub.s32 %v5183, %v5185
    %v5187 = vrot.slane %v5180, %v5186
    %5188 = vrot.lane.b32.xlu0 %v5187, 64
    %v5189 = vpop.permute.xlu0 %5188
    %5191 = vst.msk [vmem:[#allocation4 + $0x10] sm:$0x1] %vm2502, %v5189
    %v5192 = vld [vmem:[#allocation3 + $0x10] sm:$0x2]
    %v5193 = vld [vmem:[#allocation3 + $0x30] sm:$0x2]
    %v5197 = vunpack.c.l.s4 1966171168
    %v5198 = vunpack.c.0.s8 %v5197
    %v5199 = vlaneseq
    %v5200 = vshrl.u32 %v5199, 7
    %v5201 = vsub.s32 %v5198, %v5200
    %v5202 = vrot.slane %v5192, %v5201
    %v5203 = vcombine.high %v5202, %v5202
    %v5205 = vunpack.c.l.s4 1966171168
    %v5206 = vunpack.c.0.s8 %v5205
    %v5207 = vlaneseq
    %v5208 = vshrl.u32 %v5207, 7
    %v5209 = vsub.s32 %v5206, %v5208
    %v5210 = vrot.slane %v5203, %v5209
    %v5212 = vunpack.c.l.s4 1966171168
    %v5213 = vunpack.c.0.s8 %v5212
    %v5214 = vlaneseq
    %v5215 = vshrl.u32 %v5214, 7
    %v5216 = vsub.s32 %v5213, %v5215
    %v5217 = vrot.slane %v5193, %v5216
    %v5218 = vcombine.high %v5217, %v5217
    %v5220 = vunpack.c.l.s4 1966171168
    %v5221 = vunpack.c.0.s8 %v5220
    %v5222 = vlaneseq
    %v5223 = vshrl.u32 %v5222, 7
    %v5224 = vsub.s32 %v5221, %v5223
    %v5225 = vrot.slane %v5218, %v5224
    %v5227 = vunpack.c.l.s4 1935823168
    %v5228 = vunpack.c.0.s8 %v5227
    %v5229 = vlaneseq
    %v5230 = vshrl.u32 %v5229, 7
    %v5231 = vsub.s32 %v5228, %v5230
    %v5232 = vrot.slane %v5210, %v5231
    %v5234 = vunpack.c.l.s4 1935823168
    %v5235 = vunpack.c.0.s8 %v5234
    %v5236 = vlaneseq
    %v5237 = vshrl.u32 %v5236, 7
    %v5238 = vsub.s32 %v5235, %v5237
    %v5239 = vrot.slane %v5232, %v5238
    %v5241 = vunpack.c.l.s4 1935823168
    %v5242 = vunpack.c.0.s8 %v5241
    %v5243 = vlaneseq
    %v5244 = vshrl.u32 %v5243, 7
    %v5245 = vsub.s32 %v5242, %v5244
    %v5246 = vrot.slane %v5225, %v5245
    %v5248 = vunpack.c.l.s4 1935823168
    %v5249 = vunpack.c.0.s8 %v5248
    %v5250 = vlaneseq
    %v5251 = vshrl.u32 %v5250, 7
    %v5252 = vsub.s32 %v5249, %v5251
    %v5253 = vrot.slane %v5246, %v5252
    %v5254 = vunpack.c.l.b16 %v5239
    %v5255 = vunpack.c.l.b16 %v5253
    %v5256 = vrot.slane %v5255, 7
    %v5257 = vsel %vm2400, %v5256, %v5254
    %v5258 = vpack.c.b16 %v5257, %v5257
    %v5260 = vunpack.c.l.s4 1966171168
    %v5261 = vunpack.c.0.s8 %v5260
    %v5262 = vlaneseq
    %v5263 = vshrl.u32 %v5262, 7
    %v5264 = vsub.s32 %v5261, %v5263
    %v5265 = vrot.slane %v5258, %v5264
    %v5267 = vunpack.c.l.s4 1966171168
    %v5268 = vunpack.c.0.s8 %v5267
    %v5269 = vlaneseq
    %v5270 = vshrl.u32 %v5269, 7
    %v5271 = vsub.s32 %v5268, %v5270
    %v5272 = vrot.slane %v5265, %v5271
    %5274 = vst.msk [vmem:[#allocation4 + $0x11] sm:$0x1] %vm2418, %v5272
    %v5275 = vld [vmem:[#allocation3 + $0x10] sm:$0x2]
    %v5276 = vld [vmem:[#allocation3 + $0x30] sm:$0x2]
    %v5280 = vunpack.c.l.s4 1966171168
    %v5281 = vunpack.c.0.s8 %v5280
    %v5282 = vlaneseq
    %v5283 = vshrl.u32 %v5282, 7
    %v5284 = vsub.s32 %v5281, %v5283
    %v5285 = vrot.slane %v5275, %v5284
    %v5286 = vcombine.high %v5285, %v5285
    %v5288 = vunpack.c.l.s4 1966171168
    %v5289 = vunpack.c.0.s8 %v5288
    %v5290 = vlaneseq
    %v5291 = vshrl.u32 %v5290, 7
    %v5292 = vsub.s32 %v5289, %v5291
    %v5293 = vrot.slane %v5286, %v5292
    %v5295 = vunpack.c.l.s4 1966171168
    %v5296 = vunpack.c.0.s8 %v5295
    %v5297 = vlaneseq
    %v5298 = vshrl.u32 %v5297, 7
    %v5299 = vsub.s32 %v5296, %v5298
    %v5300 = vrot.slane %v5276, %v5299
    %v5301 = vcombine.high %v5300, %v5300
    %v5303 = vunpack.c.l.s4 1966171168
    %v5304 = vunpack.c.0.s8 %v5303
    %v5305 = vlaneseq
    %v5306 = vshrl.u32 %v5305, 7
    %v5307 = vsub.s32 %v5304, %v5306
    %v5308 = vrot.slane %v5301, %v5307
    %v5310 = vunpack.c.l.s4 1935823168
    %v5311 = vunpack.c.0.s8 %v5310
    %v5312 = vlaneseq
    %v5313 = vshrl.u32 %v5312, 7
    %v5314 = vsub.s32 %v5311, %v5313
    %v5315 = vrot.slane %v5293, %v5314
    %v5317 = vunpack.c.l.s4 1935823168
    %v5318 = vunpack.c.0.s8 %v5317
    %v5319 = vlaneseq
    %v5320 = vshrl.u32 %v5319, 7
    %v5321 = vsub.s32 %v5318, %v5320
    %v5322 = vrot.slane %v5315, %v5321
    %v5324 = vunpack.c.l.s4 1935823168
    %v5325 = vunpack.c.0.s8 %v5324
    %v5326 = vlaneseq
    %v5327 = vshrl.u32 %v5326, 7
    %v5328 = vsub.s32 %v5325, %v5327
    %v5329 = vrot.slane %v5308, %v5328
    %v5331 = vunpack.c.l.s4 1935823168
    %v5332 = vunpack.c.0.s8 %v5331
    %v5333 = vlaneseq
    %v5334 = vshrl.u32 %v5333, 7
    %v5335 = vsub.s32 %v5332, %v5334
    %v5336 = vrot.slane %v5329, %v5335
    %v5337 = vunpack.c.l.b16 %v5322
    %v5338 = vunpack.c.l.b16 %v5336
    %v5339 = vrot.slane %v5337, 1
    %v5340 = vsel %vm2400, %v5338, %v5339
    %v5341 = vpack.c.b16 %v5340, %v5340
    %v5343 = vunpack.c.l.s4 1966171168
    %v5344 = vunpack.c.0.s8 %v5343
    %v5345 = vlaneseq
    %v5346 = vshrl.u32 %v5345, 7
    %v5347 = vsub.s32 %v5344, %v5346
    %v5348 = vrot.slane %v5341, %v5347
    %v5350 = vunpack.c.l.s4 1966171168
    %v5351 = vunpack.c.0.s8 %v5350
    %v5352 = vlaneseq
    %v5353 = vshrl.u32 %v5352, 7
    %v5354 = vsub.s32 %v5351, %v5353
    %v5355 = vrot.slane %v5348, %v5354
    %5356 = vrot.lane.b32.xlu0 %v5355, 64
    %v5357 = vpop.permute.xlu0 %5356
    %5359 = vst.msk [vmem:[#allocation4 + $0x11] sm:$0x1] %vm2502, %v5357
    %v5360 = vld [vmem:[#allocation3 + $0x10] sm:$0x4]
    %v5361 = vld [vmem:[#allocation3 + $0x30] sm:$0x4]
    %v5365 = vunpack.c.l.s4 1966171168
    %v5366 = vunpack.c.0.s8 %v5365
    %v5367 = vlaneseq
    %v5368 = vshrl.u32 %v5367, 7
    %v5369 = vsub.s32 %v5366, %v5368
    %v5370 = vrot.slane %v5360, %v5369
    %v5372 = vunpack.c.l.s4 1966171168
    %v5373 = vunpack.c.0.s8 %v5372
    %v5374 = vlaneseq
    %v5375 = vshrl.u32 %v5374, 7
    %v5376 = vsub.s32 %v5373, %v5375
    %v5377 = vrot.slane %v5370, %v5376
    %v5378 = vcombine.high %v5377, %v5377
    %v5380 = vunpack.c.l.s4 1966171168
    %v5381 = vunpack.c.0.s8 %v5380
    %v5382 = vlaneseq
    %v5383 = vshrl.u32 %v5382, 7
    %v5384 = vsub.s32 %v5381, %v5383
    %v5385 = vrot.slane %v5361, %v5384
    %v5387 = vunpack.c.l.s4 1966171168
    %v5388 = vunpack.c.0.s8 %v5387
    %v5389 = vlaneseq
    %v5390 = vshrl.u32 %v5389, 7
    %v5391 = vsub.s32 %v5388, %v5390
    %v5392 = vrot.slane %v5385, %v5391
    %v5393 = vcombine.high %v5392, %v5392
    %v5395 = vunpack.c.l.s4 1935823168
    %v5396 = vunpack.c.0.s8 %v5395
    %v5397 = vlaneseq
    %v5398 = vshrl.u32 %v5397, 7
    %v5399 = vsub.s32 %v5396, %v5398
    %v5400 = vrot.slane %v5378, %v5399
    %v5402 = vunpack.c.l.s4 1935823168
    %v5403 = vunpack.c.0.s8 %v5402
    %v5404 = vlaneseq
    %v5405 = vshrl.u32 %v5404, 7
    %v5406 = vsub.s32 %v5403, %v5405
    %v5407 = vrot.slane %v5400, %v5406
    %v5409 = vunpack.c.l.s4 1935823168
    %v5410 = vunpack.c.0.s8 %v5409
    %v5411 = vlaneseq
    %v5412 = vshrl.u32 %v5411, 7
    %v5413 = vsub.s32 %v5410, %v5412
    %v5414 = vrot.slane %v5393, %v5413
    %v5416 = vunpack.c.l.s4 1935823168
    %v5417 = vunpack.c.0.s8 %v5416
    %v5418 = vlaneseq
    %v5419 = vshrl.u32 %v5418, 7
    %v5420 = vsub.s32 %v5417, %v5419
    %v5421 = vrot.slane %v5414, %v5420
    %v5422 = vunpack.c.l.b16 %v5407
    %v5423 = vunpack.c.l.b16 %v5421
    %v5424 = vrot.slane %v5423, 7
    %v5425 = vsel %vm2400, %v5424, %v5422
    %v5426 = vpack.c.b16 %v5425, %v5425
    %v5428 = vunpack.c.l.s4 1966171168
    %v5429 = vunpack.c.0.s8 %v5428
    %v5430 = vlaneseq
    %v5431 = vshrl.u32 %v5430, 7
    %v5432 = vsub.s32 %v5429, %v5431
    %v5433 = vrot.slane %v5426, %v5432
    %v5435 = vunpack.c.l.s4 1966171168
    %v5436 = vunpack.c.0.s8 %v5435
    %v5437 = vlaneseq
    %v5438 = vshrl.u32 %v5437, 7
    %v5439 = vsub.s32 %v5436, %v5438
    %v5440 = vrot.slane %v5433, %v5439
    %5442 = vst.msk [vmem:[#allocation4 + $0x12] sm:$0x1] %vm2418, %v5440
    %v5443 = vld [vmem:[#allocation3 + $0x10] sm:$0x4]
    %v5444 = vld [vmem:[#allocation3 + $0x30] sm:$0x4]
    %v5448 = vunpack.c.l.s4 1966171168
    %v5449 = vunpack.c.0.s8 %v5448
    %v5450 = vlaneseq
    %v5451 = vshrl.u32 %v5450, 7
    %v5452 = vsub.s32 %v5449, %v5451
    %v5453 = vrot.slane %v5443, %v5452
    %v5455 = vunpack.c.l.s4 1966171168
    %v5456 = vunpack.c.0.s8 %v5455
    %v5457 = vlaneseq
    %v5458 = vshrl.u32 %v5457, 7
    %v5459 = vsub.s32 %v5456, %v5458
    %v5460 = vrot.slane %v5453, %v5459
    %v5461 = vcombine.high %v5460, %v5460
    %v5463 = vunpack.c.l.s4 1966171168
    %v5464 = vunpack.c.0.s8 %v5463
    %v5465 = vlaneseq
    %v5466 = vshrl.u32 %v5465, 7
    %v5467 = vsub.s32 %v5464, %v5466
    %v5468 = vrot.slane %v5444, %v5467
    %v5470 = vunpack.c.l.s4 1966171168
    %v5471 = vunpack.c.0.s8 %v5470
    %v5472 = vlaneseq
    %v5473 = vshrl.u32 %v5472, 7
    %v5474 = vsub.s32 %v5471, %v5473
    %v5475 = vrot.slane %v5468, %v5474
    %v5476 = vcombine.high %v5475, %v5475
    %v5478 = vunpack.c.l.s4 1935823168
    %v5479 = vunpack.c.0.s8 %v5478
    %v5480 = vlaneseq
    %v5481 = vshrl.u32 %v5480, 7
    %v5482 = vsub.s32 %v5479, %v5481
    %v5483 = vrot.slane %v5461, %v5482
    %v5485 = vunpack.c.l.s4 1935823168
    %v5486 = vunpack.c.0.s8 %v5485
    %v5487 = vlaneseq
    %v5488 = vshrl.u32 %v5487, 7
    %v5489 = vsub.s32 %v5486, %v5488
    %v5490 = vrot.slane %v5483, %v5489
    %v5492 = vunpack.c.l.s4 1935823168
    %v5493 = vunpack.c.0.s8 %v5492
    %v5494 = vlaneseq
    %v5495 = vshrl.u32 %v5494, 7
    %v5496 = vsub.s32 %v5493, %v5495
    %v5497 = vrot.slane %v5476, %v5496
    %v5499 = vunpack.c.l.s4 1935823168
    %v5500 = vunpack.c.0.s8 %v5499
    %v5501 = vlaneseq
    %v5502 = vshrl.u32 %v5501, 7
    %v5503 = vsub.s32 %v5500, %v5502
    %v5504 = vrot.slane %v5497, %v5503
    %v5505 = vunpack.c.l.b16 %v5490
    %v5506 = vunpack.c.l.b16 %v5504
    %v5507 = vrot.slane %v5505, 1
    %v5508 = vsel %vm2400, %v5506, %v5507
    %v5509 = vpack.c.b16 %v5508, %v5508
    %v5511 = vunpack.c.l.s4 1966171168
    %v5512 = vunpack.c.0.s8 %v5511
    %v5513 = vlaneseq
    %v5514 = vshrl.u32 %v5513, 7
    %v5515 = vsub.s32 %v5512, %v5514
    %v5516 = vrot.slane %v5509, %v5515
    %v5518 = vunpack.c.l.s4 1966171168
    %v5519 = vunpack.c.0.s8 %v5518
    %v5520 = vlaneseq
    %v5521 = vshrl.u32 %v5520, 7
    %v5522 = vsub.s32 %v5519, %v5521
    %v5523 = vrot.slane %v5516, %v5522
    %5524 = vrot.lane.b32.xlu0 %v5523, 64
    %v5525 = vpop.permute.xlu0 %5524
    %5527 = vst.msk [vmem:[#allocation4 + $0x12] sm:$0x1] %vm2502, %v5525
    %v5528 = vld [vmem:[#allocation3 + $0x10] sm:$0x8]
    %v5529 = vld [vmem:[#allocation3 + $0x30] sm:$0x8]
    %v5533 = vunpack.c.l.s4 1966171168
    %v5534 = vunpack.c.0.s8 %v5533
    %v5535 = vlaneseq
    %v5536 = vshrl.u32 %v5535, 7
    %v5537 = vsub.s32 %v5534, %v5536
    %v5538 = vrot.slane %v5528, %v5537
    %v5539 = vcombine.high %v5538, %v5538
    %v5541 = vunpack.c.l.s4 1966171168
    %v5542 = vunpack.c.0.s8 %v5541
    %v5543 = vlaneseq
    %v5544 = vshrl.u32 %v5543, 7
    %v5545 = vsub.s32 %v5542, %v5544
    %v5546 = vrot.slane %v5539, %v5545
    %v5547 = vcombine.high %v5546, %v5546
    %v5549 = vunpack.c.l.s4 1966171168
    %v5550 = vunpack.c.0.s8 %v5549
    %v5551 = vlaneseq
    %v5552 = vshrl.u32 %v5551, 7
    %v5553 = vsub.s32 %v5550, %v5552
    %v5554 = vrot.slane %v5529, %v5553
    %v5555 = vcombine.high %v5554, %v5554
    %v5557 = vunpack.c.l.s4 1966171168
    %v5558 = vunpack.c.0.s8 %v5557
    %v5559 = vlaneseq
    %v5560 = vshrl.u32 %v5559, 7
    %v5561 = vsub.s32 %v5558, %v5560
    %v5562 = vrot.slane %v5555, %v5561
    %v5563 = vcombine.high %v5562, %v5562
    %v5565 = vunpack.c.l.s4 1935823168
    %v5566 = vunpack.c.0.s8 %v5565
    %v5567 = vlaneseq
    %v5568 = vshrl.u32 %v5567, 7
    %v5569 = vsub.s32 %v5566, %v5568
    %v5570 = vrot.slane %v5547, %v5569
    %v5572 = vunpack.c.l.s4 1935823168
    %v5573 = vunpack.c.0.s8 %v5572
    %v5574 = vlaneseq
    %v5575 = vshrl.u32 %v5574, 7
    %v5576 = vsub.s32 %v5573, %v5575
    %v5577 = vrot.slane %v5570, %v5576
    %v5579 = vunpack.c.l.s4 1935823168
    %v5580 = vunpack.c.0.s8 %v5579
    %v5581 = vlaneseq
    %v5582 = vshrl.u32 %v5581, 7
    %v5583 = vsub.s32 %v5580, %v5582
    %v5584 = vrot.slane %v5563, %v5583
    %v5586 = vunpack.c.l.s4 1935823168
    %v5587 = vunpack.c.0.s8 %v5586
    %v5588 = vlaneseq
    %v5589 = vshrl.u32 %v5588, 7
    %v5590 = vsub.s32 %v5587, %v5589
    %v5591 = vrot.slane %v5584, %v5590
    %v5592 = vunpack.c.l.b16 %v5577
    %v5593 = vunpack.c.l.b16 %v5591
    %v5594 = vrot.slane %v5593, 7
    %v5595 = vsel %vm2400, %v5594, %v5592
    %v5596 = vpack.c.b16 %v5595, %v5595
    %v5598 = vunpack.c.l.s4 1966171168
    %v5599 = vunpack.c.0.s8 %v5598
    %v5600 = vlaneseq
    %v5601 = vshrl.u32 %v5600, 7
    %v5602 = vsub.s32 %v5599, %v5601
    %v5603 = vrot.slane %v5596, %v5602
    %v5605 = vunpack.c.l.s4 1966171168
    %v5606 = vunpack.c.0.s8 %v5605
    %v5607 = vlaneseq
    %v5608 = vshrl.u32 %v5607, 7
    %v5609 = vsub.s32 %v5606, %v5608
    %v5610 = vrot.slane %v5603, %v5609
    %5612 = vst.msk [vmem:[#allocation4 + $0x13] sm:$0x1] %vm2418, %v5610
    %v5613 = vld [vmem:[#allocation3 + $0x10] sm:$0x8]
    %v5614 = vld [vmem:[#allocation3 + $0x30] sm:$0x8]
    %v5618 = vunpack.c.l.s4 1966171168
    %v5619 = vunpack.c.0.s8 %v5618
    %v5620 = vlaneseq
    %v5621 = vshrl.u32 %v5620, 7
    %v5622 = vsub.s32 %v5619, %v5621
    %v5623 = vrot.slane %v5613, %v5622
    %v5624 = vcombine.high %v5623, %v5623
    %v5626 = vunpack.c.l.s4 1966171168
    %v5627 = vunpack.c.0.s8 %v5626
    %v5628 = vlaneseq
    %v5629 = vshrl.u32 %v5628, 7
    %v5630 = vsub.s32 %v5627, %v5629
    %v5631 = vrot.slane %v5624, %v5630
    %v5632 = vcombine.high %v5631, %v5631
    %v5634 = vunpack.c.l.s4 1966171168
    %v5635 = vunpack.c.0.s8 %v5634
    %v5636 = vlaneseq
    %v5637 = vshrl.u32 %v5636, 7
    %v5638 = vsub.s32 %v5635, %v5637
    %v5639 = vrot.slane %v5614, %v5638
    %v5640 = vcombine.high %v5639, %v5639
    %v5642 = vunpack.c.l.s4 1966171168
    %v5643 = vunpack.c.0.s8 %v5642
    %v5644 = vlaneseq
    %v5645 = vshrl.u32 %v5644, 7
    %v5646 = vsub.s32 %v5643, %v5645
    %v5647 = vrot.slane %v5640, %v5646
    %v5648 = vcombine.high %v5647, %v5647
    %v5650 = vunpack.c.l.s4 1935823168
    %v5651 = vunpack.c.0.s8 %v5650
    %v5652 = vlaneseq
    %v5653 = vshrl.u32 %v5652, 7
    %v5654 = vsub.s32 %v5651, %v5653
    %v5655 = vrot.slane %v5632, %v5654
    %v5657 = vunpack.c.l.s4 1935823168
    %v5658 = vunpack.c.0.s8 %v5657
    %v5659 = vlaneseq
    %v5660 = vshrl.u32 %v5659, 7
    %v5661 = vsub.s32 %v5658, %v5660
    %v5662 = vrot.slane %v5655, %v5661
    %v5664 = vunpack.c.l.s4 1935823168
    %v5665 = vunpack.c.0.s8 %v5664
    %v5666 = vlaneseq
    %v5667 = vshrl.u32 %v5666, 7
    %v5668 = vsub.s32 %v5665, %v5667
    %v5669 = vrot.slane %v5648, %v5668
    %v5671 = vunpack.c.l.s4 1935823168
    %v5672 = vunpack.c.0.s8 %v5671
    %v5673 = vlaneseq
    %v5674 = vshrl.u32 %v5673, 7
    %v5675 = vsub.s32 %v5672, %v5674
    %v5676 = vrot.slane %v5669, %v5675
    %v5677 = vunpack.c.l.b16 %v5662
    %v5678 = vunpack.c.l.b16 %v5676
    %v5679 = vrot.slane %v5677, 1
    %v5680 = vsel %vm2400, %v5678, %v5679
    %v5681 = vpack.c.b16 %v5680, %v5680
    %v5683 = vunpack.c.l.s4 1966171168
    %v5684 = vunpack.c.0.s8 %v5683
    %v5685 = vlaneseq
    %v5686 = vshrl.u32 %v5685, 7
    %v5687 = vsub.s32 %v5684, %v5686
    %v5688 = vrot.slane %v5681, %v5687
    %v5690 = vunpack.c.l.s4 1966171168
    %v5691 = vunpack.c.0.s8 %v5690
    %v5692 = vlaneseq
    %v5693 = vshrl.u32 %v5692, 7
    %v5694 = vsub.s32 %v5691, %v5693
    %v5695 = vrot.slane %v5688, %v5694
    %5696 = vrot.lane.b32.xlu0 %v5695, 64
    %v5697 = vpop.permute.xlu0 %5696
    %5699 = vst.msk [vmem:[#allocation4 + $0x13] sm:$0x1] %vm2502, %v5697
    %v5700 = vld [vmem:[#allocation3 + $0x14] sm:$0x1]
    %v5701 = vld [vmem:[#allocation3 + $0x34] sm:$0x1]
    %v5705 = vunpack.c.l.s4 1966171168
    %v5706 = vunpack.c.0.s8 %v5705
    %v5707 = vlaneseq
    %v5708 = vshrl.u32 %v5707, 7
    %v5709 = vsub.s32 %v5706, %v5708
    %v5710 = vrot.slane %v5700, %v5709
    %v5712 = vunpack.c.l.s4 1966171168
    %v5713 = vunpack.c.0.s8 %v5712
    %v5714 = vlaneseq
    %v5715 = vshrl.u32 %v5714, 7
    %v5716 = vsub.s32 %v5713, %v5715
    %v5717 = vrot.slane %v5710, %v5716
    %v5719 = vunpack.c.l.s4 1966171168
    %v5720 = vunpack.c.0.s8 %v5719
    %v5721 = vlaneseq
    %v5722 = vshrl.u32 %v5721, 7
    %v5723 = vsub.s32 %v5720, %v5722
    %v5724 = vrot.slane %v5701, %v5723
    %v5726 = vunpack.c.l.s4 1966171168
    %v5727 = vunpack.c.0.s8 %v5726
    %v5728 = vlaneseq
    %v5729 = vshrl.u32 %v5728, 7
    %v5730 = vsub.s32 %v5727, %v5729
    %v5731 = vrot.slane %v5724, %v5730
    %v5733 = vunpack.c.l.s4 1935823168
    %v5734 = vunpack.c.0.s8 %v5733
    %v5735 = vlaneseq
    %v5736 = vshrl.u32 %v5735, 7
    %v5737 = vsub.s32 %v5734, %v5736
    %v5738 = vrot.slane %v5717, %v5737
    %v5740 = vunpack.c.l.s4 1935823168
    %v5741 = vunpack.c.0.s8 %v5740
    %v5742 = vlaneseq
    %v5743 = vshrl.u32 %v5742, 7
    %v5744 = vsub.s32 %v5741, %v5743
    %v5745 = vrot.slane %v5738, %v5744
    %v5747 = vunpack.c.l.s4 1935823168
    %v5748 = vunpack.c.0.s8 %v5747
    %v5749 = vlaneseq
    %v5750 = vshrl.u32 %v5749, 7
    %v5751 = vsub.s32 %v5748, %v5750
    %v5752 = vrot.slane %v5731, %v5751
    %v5754 = vunpack.c.l.s4 1935823168
    %v5755 = vunpack.c.0.s8 %v5754
    %v5756 = vlaneseq
    %v5757 = vshrl.u32 %v5756, 7
    %v5758 = vsub.s32 %v5755, %v5757
    %v5759 = vrot.slane %v5752, %v5758
    %v5760 = vunpack.c.l.b16 %v5745
    %v5761 = vunpack.c.l.b16 %v5759
    %v5762 = vrot.slane %v5761, 7
    %v5763 = vsel %vm2400, %v5762, %v5760
    %v5764 = vpack.c.b16 %v5763, %v5763
    %v5766 = vunpack.c.l.s4 1966171168
    %v5767 = vunpack.c.0.s8 %v5766
    %v5768 = vlaneseq
    %v5769 = vshrl.u32 %v5768, 7
    %v5770 = vsub.s32 %v5767, %v5769
    %v5771 = vrot.slane %v5764, %v5770
    %v5773 = vunpack.c.l.s4 1966171168
    %v5774 = vunpack.c.0.s8 %v5773
    %v5775 = vlaneseq
    %v5776 = vshrl.u32 %v5775, 7
    %v5777 = vsub.s32 %v5774, %v5776
    %v5778 = vrot.slane %v5771, %v5777
    %5780 = vst.msk [vmem:[#allocation4 + $0x14] sm:$0x1] %vm2418, %v5778
    %v5781 = vld [vmem:[#allocation3 + $0x14] sm:$0x1]
    %v5782 = vld [vmem:[#allocation3 + $0x34] sm:$0x1]
    %v5786 = vunpack.c.l.s4 1966171168
    %v5787 = vunpack.c.0.s8 %v5786
    %v5788 = vlaneseq
    %v5789 = vshrl.u32 %v5788, 7
    %v5790 = vsub.s32 %v5787, %v5789
    %v5791 = vrot.slane %v5781, %v5790
    %v5793 = vunpack.c.l.s4 1966171168
    %v5794 = vunpack.c.0.s8 %v5793
    %v5795 = vlaneseq
    %v5796 = vshrl.u32 %v5795, 7
    %v5797 = vsub.s32 %v5794, %v5796
    %v5798 = vrot.slane %v5791, %v5797
    %v5800 = vunpack.c.l.s4 1966171168
    %v5801 = vunpack.c.0.s8 %v5800
    %v5802 = vlaneseq
    %v5803 = vshrl.u32 %v5802, 7
    %v5804 = vsub.s32 %v5801, %v5803
    %v5805 = vrot.slane %v5782, %v5804
    %v5807 = vunpack.c.l.s4 1966171168
    %v5808 = vunpack.c.0.s8 %v5807
    %v5809 = vlaneseq
    %v5810 = vshrl.u32 %v5809, 7
    %v5811 = vsub.s32 %v5808, %v5810
    %v5812 = vrot.slane %v5805, %v5811
    %v5814 = vunpack.c.l.s4 1935823168
    %v5815 = vunpack.c.0.s8 %v5814
    %v5816 = vlaneseq
    %v5817 = vshrl.u32 %v5816, 7
    %v5818 = vsub.s32 %v5815, %v5817
    %v5819 = vrot.slane %v5798, %v5818
    %v5821 = vunpack.c.l.s4 1935823168
    %v5822 = vunpack.c.0.s8 %v5821
    %v5823 = vlaneseq
    %v5824 = vshrl.u32 %v5823, 7
    %v5825 = vsub.s32 %v5822, %v5824
    %v5826 = vrot.slane %v5819, %v5825
    %v5828 = vunpack.c.l.s4 1935823168
    %v5829 = vunpack.c.0.s8 %v5828
    %v5830 = vlaneseq
    %v5831 = vshrl.u32 %v5830, 7
    %v5832 = vsub.s32 %v5829, %v5831
    %v5833 = vrot.slane %v5812, %v5832
    %v5835 = vunpack.c.l.s4 1935823168
    %v5836 = vunpack.c.0.s8 %v5835
    %v5837 = vlaneseq
    %v5838 = vshrl.u32 %v5837, 7
    %v5839 = vsub.s32 %v5836, %v5838
    %v5840 = vrot.slane %v5833, %v5839
    %v5841 = vunpack.c.l.b16 %v5826
    %v5842 = vunpack.c.l.b16 %v5840
    %v5843 = vrot.slane %v5841, 1
    %v5844 = vsel %vm2400, %v5842, %v5843
    %v5845 = vpack.c.b16 %v5844, %v5844
    %v5847 = vunpack.c.l.s4 1966171168
    %v5848 = vunpack.c.0.s8 %v5847
    %v5849 = vlaneseq
    %v5850 = vshrl.u32 %v5849, 7
    %v5851 = vsub.s32 %v5848, %v5850
    %v5852 = vrot.slane %v5845, %v5851
    %v5854 = vunpack.c.l.s4 1966171168
    %v5855 = vunpack.c.0.s8 %v5854
    %v5856 = vlaneseq
    %v5857 = vshrl.u32 %v5856, 7
    %v5858 = vsub.s32 %v5855, %v5857
    %v5859 = vrot.slane %v5852, %v5858
    %5860 = vrot.lane.b32.xlu0 %v5859, 64
    %v5861 = vpop.permute.xlu0 %5860
    %5863 = vst.msk [vmem:[#allocation4 + $0x14] sm:$0x1] %vm2502, %v5861
    %v5864 = vld [vmem:[#allocation3 + $0x14] sm:$0x2]
    %v5865 = vld [vmem:[#allocation3 + $0x34] sm:$0x2]
    %v5869 = vunpack.c.l.s4 1966171168
    %v5870 = vunpack.c.0.s8 %v5869
    %v5871 = vlaneseq
    %v5872 = vshrl.u32 %v5871, 7
    %v5873 = vsub.s32 %v5870, %v5872
    %v5874 = vrot.slane %v5864, %v5873
    %v5875 = vcombine.high %v5874, %v5874
    %v5877 = vunpack.c.l.s4 1966171168
    %v5878 = vunpack.c.0.s8 %v5877
    %v5879 = vlaneseq
    %v5880 = vshrl.u32 %v5879, 7
    %v5881 = vsub.s32 %v5878, %v5880
    %v5882 = vrot.slane %v5875, %v5881
    %v5884 = vunpack.c.l.s4 1966171168
    %v5885 = vunpack.c.0.s8 %v5884
    %v5886 = vlaneseq
    %v5887 = vshrl.u32 %v5886, 7
    %v5888 = vsub.s32 %v5885, %v5887
    %v5889 = vrot.slane %v5865, %v5888
    %v5890 = vcombine.high %v5889, %v5889
    %v5892 = vunpack.c.l.s4 1966171168
    %v5893 = vunpack.c.0.s8 %v5892
    %v5894 = vlaneseq
    %v5895 = vshrl.u32 %v5894, 7
    %v5896 = vsub.s32 %v5893, %v5895
    %v5897 = vrot.slane %v5890, %v5896
    %v5899 = vunpack.c.l.s4 1935823168
    %v5900 = vunpack.c.0.s8 %v5899
    %v5901 = vlaneseq
    %v5902 = vshrl.u32 %v5901, 7
    %v5903 = vsub.s32 %v5900, %v5902
    %v5904 = vrot.slane %v5882, %v5903
    %v5906 = vunpack.c.l.s4 1935823168
    %v5907 = vunpack.c.0.s8 %v5906
    %v5908 = vlaneseq
    %v5909 = vshrl.u32 %v5908, 7
    %v5910 = vsub.s32 %v5907, %v5909
    %v5911 = vrot.slane %v5904, %v5910
    %v5913 = vunpack.c.l.s4 1935823168
    %v5914 = vunpack.c.0.s8 %v5913
    %v5915 = vlaneseq
    %v5916 = vshrl.u32 %v5915, 7
    %v5917 = vsub.s32 %v5914, %v5916
    %v5918 = vrot.slane %v5897, %v5917
    %v5920 = vunpack.c.l.s4 1935823168
    %v5921 = vunpack.c.0.s8 %v5920
    %v5922 = vlaneseq
    %v5923 = vshrl.u32 %v5922, 7
    %v5924 = vsub.s32 %v5921, %v5923
    %v5925 = vrot.slane %v5918, %v5924
    %v5926 = vunpack.c.l.b16 %v5911
    %v5927 = vunpack.c.l.b16 %v5925
    %v5928 = vrot.slane %v5927, 7
    %v5929 = vsel %vm2400, %v5928, %v5926
    %v5930 = vpack.c.b16 %v5929, %v5929
    %v5932 = vunpack.c.l.s4 1966171168
    %v5933 = vunpack.c.0.s8 %v5932
    %v5934 = vlaneseq
    %v5935 = vshrl.u32 %v5934, 7
    %v5936 = vsub.s32 %v5933, %v5935
    %v5937 = vrot.slane %v5930, %v5936
    %v5939 = vunpack.c.l.s4 1966171168
    %v5940 = vunpack.c.0.s8 %v5939
    %v5941 = vlaneseq
    %v5942 = vshrl.u32 %v5941, 7
    %v5943 = vsub.s32 %v5940, %v5942
    %v5944 = vrot.slane %v5937, %v5943
    %5946 = vst.msk [vmem:[#allocation4 + $0x15] sm:$0x1] %vm2418, %v5944
    %v5947 = vld [vmem:[#allocation3 + $0x14] sm:$0x2]
    %v5948 = vld [vmem:[#allocation3 + $0x34] sm:$0x2]
    %v5952 = vunpack.c.l.s4 1966171168
    %v5953 = vunpack.c.0.s8 %v5952
    %v5954 = vlaneseq
    %v5955 = vshrl.u32 %v5954, 7
    %v5956 = vsub.s32 %v5953, %v5955
    %v5957 = vrot.slane %v5947, %v5956
    %v5958 = vcombine.high %v5957, %v5957
    %v5960 = vunpack.c.l.s4 1966171168
    %v5961 = vunpack.c.0.s8 %v5960
    %v5962 = vlaneseq
    %v5963 = vshrl.u32 %v5962, 7
    %v5964 = vsub.s32 %v5961, %v5963
    %v5965 = vrot.slane %v5958, %v5964
    %v5967 = vunpack.c.l.s4 1966171168
    %v5968 = vunpack.c.0.s8 %v5967
    %v5969 = vlaneseq
    %v5970 = vshrl.u32 %v5969, 7
    %v5971 = vsub.s32 %v5968, %v5970
    %v5972 = vrot.slane %v5948, %v5971
    %v5973 = vcombine.high %v5972, %v5972
    %v5975 = vunpack.c.l.s4 1966171168
    %v5976 = vunpack.c.0.s8 %v5975
    %v5977 = vlaneseq
    %v5978 = vshrl.u32 %v5977, 7
    %v5979 = vsub.s32 %v5976, %v5978
    %v5980 = vrot.slane %v5973, %v5979
    %v5982 = vunpack.c.l.s4 1935823168
    %v5983 = vunpack.c.0.s8 %v5982
    %v5984 = vlaneseq
    %v5985 = vshrl.u32 %v5984, 7
    %v5986 = vsub.s32 %v5983, %v5985
    %v5987 = vrot.slane %v5965, %v5986
    %v5989 = vunpack.c.l.s4 1935823168
    %v5990 = vunpack.c.0.s8 %v5989
    %v5991 = vlaneseq
    %v5992 = vshrl.u32 %v5991, 7
    %v5993 = vsub.s32 %v5990, %v5992
    %v5994 = vrot.slane %v5987, %v5993
    %v5996 = vunpack.c.l.s4 1935823168
    %v5997 = vunpack.c.0.s8 %v5996
    %v5998 = vlaneseq
    %v5999 = vshrl.u32 %v5998, 7
    %v6000 = vsub.s32 %v5997, %v5999
    %v6001 = vrot.slane %v5980, %v6000
    %v6003 = vunpack.c.l.s4 1935823168
    %v6004 = vunpack.c.0.s8 %v6003
    %v6005 = vlaneseq
    %v6006 = vshrl.u32 %v6005, 7
    %v6007 = vsub.s32 %v6004, %v6006
    %v6008 = vrot.slane %v6001, %v6007
    %v6009 = vunpack.c.l.b16 %v5994
    %v6010 = vunpack.c.l.b16 %v6008
    %v6011 = vrot.slane %v6009, 1
    %v6012 = vsel %vm2400, %v6010, %v6011
    %v6013 = vpack.c.b16 %v6012, %v6012
    %v6015 = vunpack.c.l.s4 1966171168
    %v6016 = vunpack.c.0.s8 %v6015
    %v6017 = vlaneseq
    %v6018 = vshrl.u32 %v6017, 7
    %v6019 = vsub.s32 %v6016, %v6018
    %v6020 = vrot.slane %v6013, %v6019
    %v6022 = vunpack.c.l.s4 1966171168
    %v6023 = vunpack.c.0.s8 %v6022
    %v6024 = vlaneseq
    %v6025 = vshrl.u32 %v6024, 7
    %v6026 = vsub.s32 %v6023, %v6025
    %v6027 = vrot.slane %v6020, %v6026
    %6028 = vrot.lane.b32.xlu0 %v6027, 64
    %v6029 = vpop.permute.xlu0 %6028
    %6031 = vst.msk [vmem:[#allocation4 + $0x15] sm:$0x1] %vm2502, %v6029
    %v6032 = vld [vmem:[#allocation3 + $0x14] sm:$0x4]
    %v6033 = vld [vmem:[#allocation3 + $0x34] sm:$0x4]
    %v6037 = vunpack.c.l.s4 1966171168
    %v6038 = vunpack.c.0.s8 %v6037
    %v6039 = vlaneseq
    %v6040 = vshrl.u32 %v6039, 7
    %v6041 = vsub.s32 %v6038, %v6040
    %v6042 = vrot.slane %v6032, %v6041
    %v6044 = vunpack.c.l.s4 1966171168
    %v6045 = vunpack.c.0.s8 %v6044
    %v6046 = vlaneseq
    %v6047 = vshrl.u32 %v6046, 7
    %v6048 = vsub.s32 %v6045, %v6047
    %v6049 = vrot.slane %v6042, %v6048
    %v6050 = vcombine.high %v6049, %v6049
    %v6052 = vunpack.c.l.s4 1966171168
    %v6053 = vunpack.c.0.s8 %v6052
    %v6054 = vlaneseq
    %v6055 = vshrl.u32 %v6054, 7
    %v6056 = vsub.s32 %v6053, %v6055
    %v6057 = vrot.slane %v6033, %v6056
    %v6059 = vunpack.c.l.s4 1966171168
    %v6060 = vunpack.c.0.s8 %v6059
    %v6061 = vlaneseq
    %v6062 = vshrl.u32 %v6061, 7
    %v6063 = vsub.s32 %v6060, %v6062
    %v6064 = vrot.slane %v6057, %v6063
    %v6065 = vcombine.high %v6064, %v6064
    %v6067 = vunpack.c.l.s4 1935823168
    %v6068 = vunpack.c.0.s8 %v6067
    %v6069 = vlaneseq
    %v6070 = vshrl.u32 %v6069, 7
    %v6071 = vsub.s32 %v6068, %v6070
    %v6072 = vrot.slane %v6050, %v6071
    %v6074 = vunpack.c.l.s4 1935823168
    %v6075 = vunpack.c.0.s8 %v6074
    %v6076 = vlaneseq
    %v6077 = vshrl.u32 %v6076, 7
    %v6078 = vsub.s32 %v6075, %v6077
    %v6079 = vrot.slane %v6072, %v6078
    %v6081 = vunpack.c.l.s4 1935823168
    %v6082 = vunpack.c.0.s8 %v6081
    %v6083 = vlaneseq
    %v6084 = vshrl.u32 %v6083, 7
    %v6085 = vsub.s32 %v6082, %v6084
    %v6086 = vrot.slane %v6065, %v6085
    %v6088 = vunpack.c.l.s4 1935823168
    %v6089 = vunpack.c.0.s8 %v6088
    %v6090 = vlaneseq
    %v6091 = vshrl.u32 %v6090, 7
    %v6092 = vsub.s32 %v6089, %v6091
    %v6093 = vrot.slane %v6086, %v6092
    %v6094 = vunpack.c.l.b16 %v6079
    %v6095 = vunpack.c.l.b16 %v6093
    %v6096 = vrot.slane %v6095, 7
    %v6097 = vsel %vm2400, %v6096, %v6094
    %v6098 = vpack.c.b16 %v6097, %v6097
    %v6100 = vunpack.c.l.s4 1966171168
    %v6101 = vunpack.c.0.s8 %v6100
    %v6102 = vlaneseq
    %v6103 = vshrl.u32 %v6102, 7
    %v6104 = vsub.s32 %v6101, %v6103
    %v6105 = vrot.slane %v6098, %v6104
    %v6107 = vunpack.c.l.s4 1966171168
    %v6108 = vunpack.c.0.s8 %v6107
    %v6109 = vlaneseq
    %v6110 = vshrl.u32 %v6109, 7
    %v6111 = vsub.s32 %v6108, %v6110
    %v6112 = vrot.slane %v6105, %v6111
    %6114 = vst.msk [vmem:[#allocation4 + $0x16] sm:$0x1] %vm2418, %v6112
    %v6115 = vld [vmem:[#allocation3 + $0x14] sm:$0x4]
    %v6116 = vld [vmem:[#allocation3 + $0x34] sm:$0x4]
    %v6120 = vunpack.c.l.s4 1966171168
    %v6121 = vunpack.c.0.s8 %v6120
    %v6122 = vlaneseq
    %v6123 = vshrl.u32 %v6122, 7
    %v6124 = vsub.s32 %v6121, %v6123
    %v6125 = vrot.slane %v6115, %v6124
    %v6127 = vunpack.c.l.s4 1966171168
    %v6128 = vunpack.c.0.s8 %v6127
    %v6129 = vlaneseq
    %v6130 = vshrl.u32 %v6129, 7
    %v6131 = vsub.s32 %v6128, %v6130
    %v6132 = vrot.slane %v6125, %v6131
    %v6133 = vcombine.high %v6132, %v6132
    %v6135 = vunpack.c.l.s4 1966171168
    %v6136 = vunpack.c.0.s8 %v6135
    %v6137 = vlaneseq
    %v6138 = vshrl.u32 %v6137, 7
    %v6139 = vsub.s32 %v6136, %v6138
    %v6140 = vrot.slane %v6116, %v6139
    %v6142 = vunpack.c.l.s4 1966171168
    %v6143 = vunpack.c.0.s8 %v6142
    %v6144 = vlaneseq
    %v6145 = vshrl.u32 %v6144, 7
    %v6146 = vsub.s32 %v6143, %v6145
    %v6147 = vrot.slane %v6140, %v6146
    %v6148 = vcombine.high %v6147, %v6147
    %v6150 = vunpack.c.l.s4 1935823168
    %v6151 = vunpack.c.0.s8 %v6150
    %v6152 = vlaneseq
    %v6153 = vshrl.u32 %v6152, 7
    %v6154 = vsub.s32 %v6151, %v6153
    %v6155 = vrot.slane %v6133, %v6154
    %v6157 = vunpack.c.l.s4 1935823168
    %v6158 = vunpack.c.0.s8 %v6157
    %v6159 = vlaneseq
    %v6160 = vshrl.u32 %v6159, 7
    %v6161 = vsub.s32 %v6158, %v6160
    %v6162 = vrot.slane %v6155, %v6161
    %v6164 = vunpack.c.l.s4 1935823168
    %v6165 = vunpack.c.0.s8 %v6164
    %v6166 = vlaneseq
    %v6167 = vshrl.u32 %v6166, 7
    %v6168 = vsub.s32 %v6165, %v6167
    %v6169 = vrot.slane %v6148, %v6168
    %v6171 = vunpack.c.l.s4 1935823168
    %v6172 = vunpack.c.0.s8 %v6171
    %v6173 = vlaneseq
    %v6174 = vshrl.u32 %v6173, 7
    %v6175 = vsub.s32 %v6172, %v6174
    %v6176 = vrot.slane %v6169, %v6175
    %v6177 = vunpack.c.l.b16 %v6162
    %v6178 = vunpack.c.l.b16 %v6176
    %v6179 = vrot.slane %v6177, 1
    %v6180 = vsel %vm2400, %v6178, %v6179
    %v6181 = vpack.c.b16 %v6180, %v6180
    %v6183 = vunpack.c.l.s4 1966171168
    %v6184 = vunpack.c.0.s8 %v6183
    %v6185 = vlaneseq
    %v6186 = vshrl.u32 %v6185, 7
    %v6187 = vsub.s32 %v6184, %v6186
    %v6188 = vrot.slane %v6181, %v6187
    %v6190 = vunpack.c.l.s4 1966171168
    %v6191 = vunpack.c.0.s8 %v6190
    %v6192 = vlaneseq
    %v6193 = vshrl.u32 %v6192, 7
    %v6194 = vsub.s32 %v6191, %v6193
    %v6195 = vrot.slane %v6188, %v6194
    %6196 = vrot.lane.b32.xlu0 %v6195, 64
    %v6197 = vpop.permute.xlu0 %6196
    %6199 = vst.msk [vmem:[#allocation4 + $0x16] sm:$0x1] %vm2502, %v6197
    %v6200 = vld [vmem:[#allocation3 + $0x14] sm:$0x8]
    %v6201 = vld [vmem:[#allocation3 + $0x34] sm:$0x8]
    %v6205 = vunpack.c.l.s4 1966171168
    %v6206 = vunpack.c.0.s8 %v6205
    %v6207 = vlaneseq
    %v6208 = vshrl.u32 %v6207, 7
    %v6209 = vsub.s32 %v6206, %v6208
    %v6210 = vrot.slane %v6200, %v6209
    %v6211 = vcombine.high %v6210, %v6210
    %v6213 = vunpack.c.l.s4 1966171168
    %v6214 = vunpack.c.0.s8 %v6213
    %v6215 = vlaneseq
    %v6216 = vshrl.u32 %v6215, 7
    %v6217 = vsub.s32 %v6214, %v6216
    %v6218 = vrot.slane %v6211, %v6217
    %v6219 = vcombine.high %v6218, %v6218
    %v6221 = vunpack.c.l.s4 1966171168
    %v6222 = vunpack.c.0.s8 %v6221
    %v6223 = vlaneseq
    %v6224 = vshrl.u32 %v6223, 7
    %v6225 = vsub.s32 %v6222, %v6224
    %v6226 = vrot.slane %v6201, %v6225
    %v6227 = vcombine.high %v6226, %v6226
    %v6229 = vunpack.c.l.s4 1966171168
    %v6230 = vunpack.c.0.s8 %v6229
    %v6231 = vlaneseq
    %v6232 = vshrl.u32 %v6231, 7
    %v6233 = vsub.s32 %v6230, %v6232
    %v6234 = vrot.slane %v6227, %v6233
    %v6235 = vcombine.high %v6234, %v6234
    %v6237 = vunpack.c.l.s4 1935823168
    %v6238 = vunpack.c.0.s8 %v6237
    %v6239 = vlaneseq
    %v6240 = vshrl.u32 %v6239, 7
    %v6241 = vsub.s32 %v6238, %v6240
    %v6242 = vrot.slane %v6219, %v6241
    %v6244 = vunpack.c.l.s4 1935823168
    %v6245 = vunpack.c.0.s8 %v6244
    %v6246 = vlaneseq
    %v6247 = vshrl.u32 %v6246, 7
    %v6248 = vsub.s32 %v6245, %v6247
    %v6249 = vrot.slane %v6242, %v6248
    %v6251 = vunpack.c.l.s4 1935823168
    %v6252 = vunpack.c.0.s8 %v6251
    %v6253 = vlaneseq
    %v6254 = vshrl.u32 %v6253, 7
    %v6255 = vsub.s32 %v6252, %v6254
    %v6256 = vrot.slane %v6235, %v6255
    %v6258 = vunpack.c.l.s4 1935823168
    %v6259 = vunpack.c.0.s8 %v6258
    %v6260 = vlaneseq
    %v6261 = vshrl.u32 %v6260, 7
    %v6262 = vsub.s32 %v6259, %v6261
    %v6263 = vrot.slane %v6256, %v6262
    %v6264 = vunpack.c.l.b16 %v6249
    %v6265 = vunpack.c.l.b16 %v6263
    %v6266 = vrot.slane %v6265, 7
    %v6267 = vsel %vm2400, %v6266, %v6264
    %v6268 = vpack.c.b16 %v6267, %v6267
    %v6270 = vunpack.c.l.s4 1966171168
    %v6271 = vunpack.c.0.s8 %v6270
    %v6272 = vlaneseq
    %v6273 = vshrl.u32 %v6272, 7
    %v6274 = vsub.s32 %v6271, %v6273
    %v6275 = vrot.slane %v6268, %v6274
    %v6277 = vunpack.c.l.s4 1966171168
    %v6278 = vunpack.c.0.s8 %v6277
    %v6279 = vlaneseq
    %v6280 = vshrl.u32 %v6279, 7
    %v6281 = vsub.s32 %v6278, %v6280
    %v6282 = vrot.slane %v6275, %v6281
    %6284 = vst.msk [vmem:[#allocation4 + $0x17] sm:$0x1] %vm2418, %v6282
    %v6285 = vld [vmem:[#allocation3 + $0x14] sm:$0x8]
    %v6286 = vld [vmem:[#allocation3 + $0x34] sm:$0x8]
    %v6290 = vunpack.c.l.s4 1966171168
    %v6291 = vunpack.c.0.s8 %v6290
    %v6292 = vlaneseq
    %v6293 = vshrl.u32 %v6292, 7
    %v6294 = vsub.s32 %v6291, %v6293
    %v6295 = vrot.slane %v6285, %v6294
    %v6296 = vcombine.high %v6295, %v6295
    %v6298 = vunpack.c.l.s4 1966171168
    %v6299 = vunpack.c.0.s8 %v6298
    %v6300 = vlaneseq
    %v6301 = vshrl.u32 %v6300, 7
    %v6302 = vsub.s32 %v6299, %v6301
    %v6303 = vrot.slane %v6296, %v6302
    %v6304 = vcombine.high %v6303, %v6303
    %v6306 = vunpack.c.l.s4 1966171168
    %v6307 = vunpack.c.0.s8 %v6306
    %v6308 = vlaneseq
    %v6309 = vshrl.u32 %v6308, 7
    %v6310 = vsub.s32 %v6307, %v6309
    %v6311 = vrot.slane %v6286, %v6310
    %v6312 = vcombine.high %v6311, %v6311
    %v6314 = vunpack.c.l.s4 1966171168
    %v6315 = vunpack.c.0.s8 %v6314
    %v6316 = vlaneseq
    %v6317 = vshrl.u32 %v6316, 7
    %v6318 = vsub.s32 %v6315, %v6317
    %v6319 = vrot.slane %v6312, %v6318
    %v6320 = vcombine.high %v6319, %v6319
    %v6322 = vunpack.c.l.s4 1935823168
    %v6323 = vunpack.c.0.s8 %v6322
    %v6324 = vlaneseq
    %v6325 = vshrl.u32 %v6324, 7
    %v6326 = vsub.s32 %v6323, %v6325
    %v6327 = vrot.slane %v6304, %v6326
    %v6329 = vunpack.c.l.s4 1935823168
    %v6330 = vunpack.c.0.s8 %v6329
    %v6331 = vlaneseq
    %v6332 = vshrl.u32 %v6331, 7
    %v6333 = vsub.s32 %v6330, %v6332
    %v6334 = vrot.slane %v6327, %v6333
    %v6336 = vunpack.c.l.s4 1935823168
    %v6337 = vunpack.c.0.s8 %v6336
    %v6338 = vlaneseq
    %v6339 = vshrl.u32 %v6338, 7
    %v6340 = vsub.s32 %v6337, %v6339
    %v6341 = vrot.slane %v6320, %v6340
    %v6343 = vunpack.c.l.s4 1935823168
    %v6344 = vunpack.c.0.s8 %v6343
    %v6345 = vlaneseq
    %v6346 = vshrl.u32 %v6345, 7
    %v6347 = vsub.s32 %v6344, %v6346
    %v6348 = vrot.slane %v6341, %v6347
    %v6349 = vunpack.c.l.b16 %v6334
    %v6350 = vunpack.c.l.b16 %v6348
    %v6351 = vrot.slane %v6349, 1
    %v6352 = vsel %vm2400, %v6350, %v6351
    %v6353 = vpack.c.b16 %v6352, %v6352
    %v6355 = vunpack.c.l.s4 1966171168
    %v6356 = vunpack.c.0.s8 %v6355
    %v6357 = vlaneseq
    %v6358 = vshrl.u32 %v6357, 7
    %v6359 = vsub.s32 %v6356, %v6358
    %v6360 = vrot.slane %v6353, %v6359
    %v6362 = vunpack.c.l.s4 1966171168
    %v6363 = vunpack.c.0.s8 %v6362
    %v6364 = vlaneseq
    %v6365 = vshrl.u32 %v6364, 7
    %v6366 = vsub.s32 %v6363, %v6365
    %v6367 = vrot.slane %v6360, %v6366
    %6368 = vrot.lane.b32.xlu0 %v6367, 64
    %v6369 = vpop.permute.xlu0 %6368
    %6371 = vst.msk [vmem:[#allocation4 + $0x17] sm:$0x1] %vm2502, %v6369
    %v6372 = vld [vmem:[#allocation3 + $0x18] sm:$0x1]
    %v6373 = vld [vmem:[#allocation3 + $0x38] sm:$0x1]
    %v6377 = vunpack.c.l.s4 1966171168
    %v6378 = vunpack.c.0.s8 %v6377
    %v6379 = vlaneseq
    %v6380 = vshrl.u32 %v6379, 7
    %v6381 = vsub.s32 %v6378, %v6380
    %v6382 = vrot.slane %v6372, %v6381
    %v6384 = vunpack.c.l.s4 1966171168
    %v6385 = vunpack.c.0.s8 %v6384
    %v6386 = vlaneseq
    %v6387 = vshrl.u32 %v6386, 7
    %v6388 = vsub.s32 %v6385, %v6387
    %v6389 = vrot.slane %v6382, %v6388
    %v6391 = vunpack.c.l.s4 1966171168
    %v6392 = vunpack.c.0.s8 %v6391
    %v6393 = vlaneseq
    %v6394 = vshrl.u32 %v6393, 7
    %v6395 = vsub.s32 %v6392, %v6394
    %v6396 = vrot.slane %v6373, %v6395
    %v6398 = vunpack.c.l.s4 1966171168
    %v6399 = vunpack.c.0.s8 %v6398
    %v6400 = vlaneseq
    %v6401 = vshrl.u32 %v6400, 7
    %v6402 = vsub.s32 %v6399, %v6401
    %v6403 = vrot.slane %v6396, %v6402
    %v6405 = vunpack.c.l.s4 1935823168
    %v6406 = vunpack.c.0.s8 %v6405
    %v6407 = vlaneseq
    %v6408 = vshrl.u32 %v6407, 7
    %v6409 = vsub.s32 %v6406, %v6408
    %v6410 = vrot.slane %v6389, %v6409
    %v6412 = vunpack.c.l.s4 1935823168
    %v6413 = vunpack.c.0.s8 %v6412
    %v6414 = vlaneseq
    %v6415 = vshrl.u32 %v6414, 7
    %v6416 = vsub.s32 %v6413, %v6415
    %v6417 = vrot.slane %v6410, %v6416
    %v6419 = vunpack.c.l.s4 1935823168
    %v6420 = vunpack.c.0.s8 %v6419
    %v6421 = vlaneseq
    %v6422 = vshrl.u32 %v6421, 7
    %v6423 = vsub.s32 %v6420, %v6422
    %v6424 = vrot.slane %v6403, %v6423
    %v6426 = vunpack.c.l.s4 1935823168
    %v6427 = vunpack.c.0.s8 %v6426
    %v6428 = vlaneseq
    %v6429 = vshrl.u32 %v6428, 7
    %v6430 = vsub.s32 %v6427, %v6429
    %v6431 = vrot.slane %v6424, %v6430
    %v6432 = vunpack.c.l.b16 %v6417
    %v6433 = vunpack.c.l.b16 %v6431
    %v6434 = vrot.slane %v6433, 7
    %v6435 = vsel %vm2400, %v6434, %v6432
    %v6436 = vpack.c.b16 %v6435, %v6435
    %v6438 = vunpack.c.l.s4 1966171168
    %v6439 = vunpack.c.0.s8 %v6438
    %v6440 = vlaneseq
    %v6441 = vshrl.u32 %v6440, 7
    %v6442 = vsub.s32 %v6439, %v6441
    %v6443 = vrot.slane %v6436, %v6442
    %v6445 = vunpack.c.l.s4 1966171168
    %v6446 = vunpack.c.0.s8 %v6445
    %v6447 = vlaneseq
    %v6448 = vshrl.u32 %v6447, 7
    %v6449 = vsub.s32 %v6446, %v6448
    %v6450 = vrot.slane %v6443, %v6449
    %6452 = vst.msk [vmem:[#allocation4 + $0x18] sm:$0x1] %vm2418, %v6450
    %v6453 = vld [vmem:[#allocation3 + $0x18] sm:$0x1]
    %v6454 = vld [vmem:[#allocation3 + $0x38] sm:$0x1]
    %v6458 = vunpack.c.l.s4 1966171168
    %v6459 = vunpack.c.0.s8 %v6458
    %v6460 = vlaneseq
    %v6461 = vshrl.u32 %v6460, 7
    %v6462 = vsub.s32 %v6459, %v6461
    %v6463 = vrot.slane %v6453, %v6462
    %v6465 = vunpack.c.l.s4 1966171168
    %v6466 = vunpack.c.0.s8 %v6465
    %v6467 = vlaneseq
    %v6468 = vshrl.u32 %v6467, 7
    %v6469 = vsub.s32 %v6466, %v6468
    %v6470 = vrot.slane %v6463, %v6469
    %v6472 = vunpack.c.l.s4 1966171168
    %v6473 = vunpack.c.0.s8 %v6472
    %v6474 = vlaneseq
    %v6475 = vshrl.u32 %v6474, 7
    %v6476 = vsub.s32 %v6473, %v6475
    %v6477 = vrot.slane %v6454, %v6476
    %v6479 = vunpack.c.l.s4 1966171168
    %v6480 = vunpack.c.0.s8 %v6479
    %v6481 = vlaneseq
    %v6482 = vshrl.u32 %v6481, 7
    %v6483 = vsub.s32 %v6480, %v6482
    %v6484 = vrot.slane %v6477, %v6483
    %v6486 = vunpack.c.l.s4 1935823168
    %v6487 = vunpack.c.0.s8 %v6486
    %v6488 = vlaneseq
    %v6489 = vshrl.u32 %v6488, 7
    %v6490 = vsub.s32 %v6487, %v6489
    %v6491 = vrot.slane %v6470, %v6490
    %v6493 = vunpack.c.l.s4 1935823168
    %v6494 = vunpack.c.0.s8 %v6493
    %v6495 = vlaneseq
    %v6496 = vshrl.u32 %v6495, 7
    %v6497 = vsub.s32 %v6494, %v6496
    %v6498 = vrot.slane %v6491, %v6497
    %v6500 = vunpack.c.l.s4 1935823168
    %v6501 = vunpack.c.0.s8 %v6500
    %v6502 = vlaneseq
    %v6503 = vshrl.u32 %v6502, 7
    %v6504 = vsub.s32 %v6501, %v6503
    %v6505 = vrot.slane %v6484, %v6504
    %v6507 = vunpack.c.l.s4 1935823168
    %v6508 = vunpack.c.0.s8 %v6507
    %v6509 = vlaneseq
    %v6510 = vshrl.u32 %v6509, 7
    %v6511 = vsub.s32 %v6508, %v6510
    %v6512 = vrot.slane %v6505, %v6511
    %v6513 = vunpack.c.l.b16 %v6498
    %v6514 = vunpack.c.l.b16 %v6512
    %v6515 = vrot.slane %v6513, 1
    %v6516 = vsel %vm2400, %v6514, %v6515
    %v6517 = vpack.c.b16 %v6516, %v6516
    %v6519 = vunpack.c.l.s4 1966171168
    %v6520 = vunpack.c.0.s8 %v6519
    %v6521 = vlaneseq
    %v6522 = vshrl.u32 %v6521, 7
    %v6523 = vsub.s32 %v6520, %v6522
    %v6524 = vrot.slane %v6517, %v6523
    %v6526 = vunpack.c.l.s4 1966171168
    %v6527 = vunpack.c.0.s8 %v6526
    %v6528 = vlaneseq
    %v6529 = vshrl.u32 %v6528, 7
    %v6530 = vsub.s32 %v6527, %v6529
    %v6531 = vrot.slane %v6524, %v6530
    %6532 = vrot.lane.b32.xlu0 %v6531, 64
    %v6533 = vpop.permute.xlu0 %6532
    %6535 = vst.msk [vmem:[#allocation4 + $0x18] sm:$0x1] %vm2502, %v6533
    %v6536 = vld [vmem:[#allocation3 + $0x18] sm:$0x2]
    %v6537 = vld [vmem:[#allocation3 + $0x38] sm:$0x2]
    %v6541 = vunpack.c.l.s4 1966171168
    %v6542 = vunpack.c.0.s8 %v6541
    %v6543 = vlaneseq
    %v6544 = vshrl.u32 %v6543, 7
    %v6545 = vsub.s32 %v6542, %v6544
    %v6546 = vrot.slane %v6536, %v6545
    %v6547 = vcombine.high %v6546, %v6546
    %v6549 = vunpack.c.l.s4 1966171168
    %v6550 = vunpack.c.0.s8 %v6549
    %v6551 = vlaneseq
    %v6552 = vshrl.u32 %v6551, 7
    %v6553 = vsub.s32 %v6550, %v6552
    %v6554 = vrot.slane %v6547, %v6553
    %v6556 = vunpack.c.l.s4 1966171168
    %v6557 = vunpack.c.0.s8 %v6556
    %v6558 = vlaneseq
    %v6559 = vshrl.u32 %v6558, 7
    %v6560 = vsub.s32 %v6557, %v6559
    %v6561 = vrot.slane %v6537, %v6560
    %v6562 = vcombine.high %v6561, %v6561
    %v6564 = vunpack.c.l.s4 1966171168
    %v6565 = vunpack.c.0.s8 %v6564
    %v6566 = vlaneseq
    %v6567 = vshrl.u32 %v6566, 7
    %v6568 = vsub.s32 %v6565, %v6567
    %v6569 = vrot.slane %v6562, %v6568
    %v6571 = vunpack.c.l.s4 1935823168
    %v6572 = vunpack.c.0.s8 %v6571
    %v6573 = vlaneseq
    %v6574 = vshrl.u32 %v6573, 7
    %v6575 = vsub.s32 %v6572, %v6574
    %v6576 = vrot.slane %v6554, %v6575
    %v6578 = vunpack.c.l.s4 1935823168
    %v6579 = vunpack.c.0.s8 %v6578
    %v6580 = vlaneseq
    %v6581 = vshrl.u32 %v6580, 7
    %v6582 = vsub.s32 %v6579, %v6581
    %v6583 = vrot.slane %v6576, %v6582
    %v6585 = vunpack.c.l.s4 1935823168
    %v6586 = vunpack.c.0.s8 %v6585
    %v6587 = vlaneseq
    %v6588 = vshrl.u32 %v6587, 7
    %v6589 = vsub.s32 %v6586, %v6588
    %v6590 = vrot.slane %v6569, %v6589
    %v6592 = vunpack.c.l.s4 1935823168
    %v6593 = vunpack.c.0.s8 %v6592
    %v6594 = vlaneseq
    %v6595 = vshrl.u32 %v6594, 7
    %v6596 = vsub.s32 %v6593, %v6595
    %v6597 = vrot.slane %v6590, %v6596
    %v6598 = vunpack.c.l.b16 %v6583
    %v6599 = vunpack.c.l.b16 %v6597
    %v6600 = vrot.slane %v6599, 7
    %v6601 = vsel %vm2400, %v6600, %v6598
    %v6602 = vpack.c.b16 %v6601, %v6601
    %v6604 = vunpack.c.l.s4 1966171168
    %v6605 = vunpack.c.0.s8 %v6604
    %v6606 = vlaneseq
    %v6607 = vshrl.u32 %v6606, 7
    %v6608 = vsub.s32 %v6605, %v6607
    %v6609 = vrot.slane %v6602, %v6608
    %v6611 = vunpack.c.l.s4 1966171168
    %v6612 = vunpack.c.0.s8 %v6611
    %v6613 = vlaneseq
    %v6614 = vshrl.u32 %v6613, 7
    %v6615 = vsub.s32 %v6612, %v6614
    %v6616 = vrot.slane %v6609, %v6615
    %6618 = vst.msk [vmem:[#allocation4 + $0x19] sm:$0x1] %vm2418, %v6616
    %v6619 = vld [vmem:[#allocation3 + $0x18] sm:$0x2]
    %v6620 = vld [vmem:[#allocation3 + $0x38] sm:$0x2]
    %v6624 = vunpack.c.l.s4 1966171168
    %v6625 = vunpack.c.0.s8 %v6624
    %v6626 = vlaneseq
    %v6627 = vshrl.u32 %v6626, 7
    %v6628 = vsub.s32 %v6625, %v6627
    %v6629 = vrot.slane %v6619, %v6628
    %v6630 = vcombine.high %v6629, %v6629
    %v6632 = vunpack.c.l.s4 1966171168
    %v6633 = vunpack.c.0.s8 %v6632
    %v6634 = vlaneseq
    %v6635 = vshrl.u32 %v6634, 7
    %v6636 = vsub.s32 %v6633, %v6635
    %v6637 = vrot.slane %v6630, %v6636
    %v6639 = vunpack.c.l.s4 1966171168
    %v6640 = vunpack.c.0.s8 %v6639
    %v6641 = vlaneseq
    %v6642 = vshrl.u32 %v6641, 7
    %v6643 = vsub.s32 %v6640, %v6642
    %v6644 = vrot.slane %v6620, %v6643
    %v6645 = vcombine.high %v6644, %v6644
    %v6647 = vunpack.c.l.s4 1966171168
    %v6648 = vunpack.c.0.s8 %v6647
    %v6649 = vlaneseq
    %v6650 = vshrl.u32 %v6649, 7
    %v6651 = vsub.s32 %v6648, %v6650
    %v6652 = vrot.slane %v6645, %v6651
    %v6654 = vunpack.c.l.s4 1935823168
    %v6655 = vunpack.c.0.s8 %v6654
    %v6656 = vlaneseq
    %v6657 = vshrl.u32 %v6656, 7
    %v6658 = vsub.s32 %v6655, %v6657
    %v6659 = vrot.slane %v6637, %v6658
    %v6661 = vunpack.c.l.s4 1935823168
    %v6662 = vunpack.c.0.s8 %v6661
    %v6663 = vlaneseq
    %v6664 = vshrl.u32 %v6663, 7
    %v6665 = vsub.s32 %v6662, %v6664
    %v6666 = vrot.slane %v6659, %v6665
    %v6668 = vunpack.c.l.s4 1935823168
    %v6669 = vunpack.c.0.s8 %v6668
    %v6670 = vlaneseq
    %v6671 = vshrl.u32 %v6670, 7
    %v6672 = vsub.s32 %v6669, %v6671
    %v6673 = vrot.slane %v6652, %v6672
    %v6675 = vunpack.c.l.s4 1935823168
    %v6676 = vunpack.c.0.s8 %v6675
    %v6677 = vlaneseq
    %v6678 = vshrl.u32 %v6677, 7
    %v6679 = vsub.s32 %v6676, %v6678
    %v6680 = vrot.slane %v6673, %v6679
    %v6681 = vunpack.c.l.b16 %v6666
    %v6682 = vunpack.c.l.b16 %v6680
    %v6683 = vrot.slane %v6681, 1
    %v6684 = vsel %vm2400, %v6682, %v6683
    %v6685 = vpack.c.b16 %v6684, %v6684
    %v6687 = vunpack.c.l.s4 1966171168
    %v6688 = vunpack.c.0.s8 %v6687
    %v6689 = vlaneseq
    %v6690 = vshrl.u32 %v6689, 7
    %v6691 = vsub.s32 %v6688, %v6690
    %v6692 = vrot.slane %v6685, %v6691
    %v6694 = vunpack.c.l.s4 1966171168
    %v6695 = vunpack.c.0.s8 %v6694
    %v6696 = vlaneseq
    %v6697 = vshrl.u32 %v6696, 7
    %v6698 = vsub.s32 %v6695, %v6697
    %v6699 = vrot.slane %v6692, %v6698
    %6700 = vrot.lane.b32.xlu0 %v6699, 64
    %v6701 = vpop.permute.xlu0 %6700
    %6703 = vst.msk [vmem:[#allocation4 + $0x19] sm:$0x1] %vm2502, %v6701
    %v6704 = vld [vmem:[#allocation3 + $0x18] sm:$0x4]
    %v6705 = vld [vmem:[#allocation3 + $0x38] sm:$0x4]
    %v6709 = vunpack.c.l.s4 1966171168
    %v6710 = vunpack.c.0.s8 %v6709
    %v6711 = vlaneseq
    %v6712 = vshrl.u32 %v6711, 7
    %v6713 = vsub.s32 %v6710, %v6712
    %v6714 = vrot.slane %v6704, %v6713
    %v6716 = vunpack.c.l.s4 1966171168
    %v6717 = vunpack.c.0.s8 %v6716
    %v6718 = vlaneseq
    %v6719 = vshrl.u32 %v6718, 7
    %v6720 = vsub.s32 %v6717, %v6719
    %v6721 = vrot.slane %v6714, %v6720
    %v6722 = vcombine.high %v6721, %v6721
    %v6724 = vunpack.c.l.s4 1966171168
    %v6725 = vunpack.c.0.s8 %v6724
    %v6726 = vlaneseq
    %v6727 = vshrl.u32 %v6726, 7
    %v6728 = vsub.s32 %v6725, %v6727
    %v6729 = vrot.slane %v6705, %v6728
    %v6731 = vunpack.c.l.s4 1966171168
    %v6732 = vunpack.c.0.s8 %v6731
    %v6733 = vlaneseq
    %v6734 = vshrl.u32 %v6733, 7
    %v6735 = vsub.s32 %v6732, %v6734
    %v6736 = vrot.slane %v6729, %v6735
    %v6737 = vcombine.high %v6736, %v6736
    %v6739 = vunpack.c.l.s4 1935823168
    %v6740 = vunpack.c.0.s8 %v6739
    %v6741 = vlaneseq
    %v6742 = vshrl.u32 %v6741, 7
    %v6743 = vsub.s32 %v6740, %v6742
    %v6744 = vrot.slane %v6722, %v6743
    %v6746 = vunpack.c.l.s4 1935823168
    %v6747 = vunpack.c.0.s8 %v6746
    %v6748 = vlaneseq
    %v6749 = vshrl.u32 %v6748, 7
    %v6750 = vsub.s32 %v6747, %v6749
    %v6751 = vrot.slane %v6744, %v6750
    %v6753 = vunpack.c.l.s4 1935823168
    %v6754 = vunpack.c.0.s8 %v6753
    %v6755 = vlaneseq
    %v6756 = vshrl.u32 %v6755, 7
    %v6757 = vsub.s32 %v6754, %v6756
    %v6758 = vrot.slane %v6737, %v6757
    %v6760 = vunpack.c.l.s4 1935823168
    %v6761 = vunpack.c.0.s8 %v6760
    %v6762 = vlaneseq
    %v6763 = vshrl.u32 %v6762, 7
    %v6764 = vsub.s32 %v6761, %v6763
    %v6765 = vrot.slane %v6758, %v6764
    %v6766 = vunpack.c.l.b16 %v6751
    %v6767 = vunpack.c.l.b16 %v6765
    %v6768 = vrot.slane %v6767, 7
    %v6769 = vsel %vm2400, %v6768, %v6766
    %v6770 = vpack.c.b16 %v6769, %v6769
    %v6772 = vunpack.c.l.s4 1966171168
    %v6773 = vunpack.c.0.s8 %v6772
    %v6774 = vlaneseq
    %v6775 = vshrl.u32 %v6774, 7
    %v6776 = vsub.s32 %v6773, %v6775
    %v6777 = vrot.slane %v6770, %v6776
    %v6779 = vunpack.c.l.s4 1966171168
    %v6780 = vunpack.c.0.s8 %v6779
    %v6781 = vlaneseq
    %v6782 = vshrl.u32 %v6781, 7
    %v6783 = vsub.s32 %v6780, %v6782
    %v6784 = vrot.slane %v6777, %v6783
    %6786 = vst.msk [vmem:[#allocation4 + $0x1a] sm:$0x1] %vm2418, %v6784
    %v6787 = vld [vmem:[#allocation3 + $0x18] sm:$0x4]
    %v6788 = vld [vmem:[#allocation3 + $0x38] sm:$0x4]
    %v6792 = vunpack.c.l.s4 1966171168
    %v6793 = vunpack.c.0.s8 %v6792
    %v6794 = vlaneseq
    %v6795 = vshrl.u32 %v6794, 7
    %v6796 = vsub.s32 %v6793, %v6795
    %v6797 = vrot.slane %v6787, %v6796
    %v6799 = vunpack.c.l.s4 1966171168
    %v6800 = vunpack.c.0.s8 %v6799
    %v6801 = vlaneseq
    %v6802 = vshrl.u32 %v6801, 7
    %v6803 = vsub.s32 %v6800, %v6802
    %v6804 = vrot.slane %v6797, %v6803
    %v6805 = vcombine.high %v6804, %v6804
    %v6807 = vunpack.c.l.s4 1966171168
    %v6808 = vunpack.c.0.s8 %v6807
    %v6809 = vlaneseq
    %v6810 = vshrl.u32 %v6809, 7
    %v6811 = vsub.s32 %v6808, %v6810
    %v6812 = vrot.slane %v6788, %v6811
    %v6814 = vunpack.c.l.s4 1966171168
    %v6815 = vunpack.c.0.s8 %v6814
    %v6816 = vlaneseq
    %v6817 = vshrl.u32 %v6816, 7
    %v6818 = vsub.s32 %v6815, %v6817
    %v6819 = vrot.slane %v6812, %v6818
    %v6820 = vcombine.high %v6819, %v6819
    %v6822 = vunpack.c.l.s4 1935823168
    %v6823 = vunpack.c.0.s8 %v6822
    %v6824 = vlaneseq
    %v6825 = vshrl.u32 %v6824, 7
    %v6826 = vsub.s32 %v6823, %v6825
    %v6827 = vrot.slane %v6805, %v6826
    %v6829 = vunpack.c.l.s4 1935823168
    %v6830 = vunpack.c.0.s8 %v6829
    %v6831 = vlaneseq
    %v6832 = vshrl.u32 %v6831, 7
    %v6833 = vsub.s32 %v6830, %v6832
    %v6834 = vrot.slane %v6827, %v6833
    %v6836 = vunpack.c.l.s4 1935823168
    %v6837 = vunpack.c.0.s8 %v6836
    %v6838 = vlaneseq
    %v6839 = vshrl.u32 %v6838, 7
    %v6840 = vsub.s32 %v6837, %v6839
    %v6841 = vrot.slane %v6820, %v6840
    %v6843 = vunpack.c.l.s4 1935823168
    %v6844 = vunpack.c.0.s8 %v6843
    %v6845 = vlaneseq
    %v6846 = vshrl.u32 %v6845, 7
    %v6847 = vsub.s32 %v6844, %v6846
    %v6848 = vrot.slane %v6841, %v6847
    %v6849 = vunpack.c.l.b16 %v6834
    %v6850 = vunpack.c.l.b16 %v6848
    %v6851 = vrot.slane %v6849, 1
    %v6852 = vsel %vm2400, %v6850, %v6851
    %v6853 = vpack.c.b16 %v6852, %v6852
    %v6855 = vunpack.c.l.s4 1966171168
    %v6856 = vunpack.c.0.s8 %v6855
    %v6857 = vlaneseq
    %v6858 = vshrl.u32 %v6857, 7
    %v6859 = vsub.s32 %v6856, %v6858
    %v6860 = vrot.slane %v6853, %v6859
    %v6862 = vunpack.c.l.s4 1966171168
    %v6863 = vunpack.c.0.s8 %v6862
    %v6864 = vlaneseq
    %v6865 = vshrl.u32 %v6864, 7
    %v6866 = vsub.s32 %v6863, %v6865
    %v6867 = vrot.slane %v6860, %v6866
    %6868 = vrot.lane.b32.xlu0 %v6867, 64
    %v6869 = vpop.permute.xlu0 %6868
    %6871 = vst.msk [vmem:[#allocation4 + $0x1a] sm:$0x1] %vm2502, %v6869
    %v6872 = vld [vmem:[#allocation3 + $0x18] sm:$0x8]
    %v6873 = vld [vmem:[#allocation3 + $0x38] sm:$0x8]
    %v6877 = vunpack.c.l.s4 1966171168
    %v6878 = vunpack.c.0.s8 %v6877
    %v6879 = vlaneseq
    %v6880 = vshrl.u32 %v6879, 7
    %v6881 = vsub.s32 %v6878, %v6880
    %v6882 = vrot.slane %v6872, %v6881
    %v6883 = vcombine.high %v6882, %v6882
    %v6885 = vunpack.c.l.s4 1966171168
    %v6886 = vunpack.c.0.s8 %v6885
    %v6887 = vlaneseq
    %v6888 = vshrl.u32 %v6887, 7
    %v6889 = vsub.s32 %v6886, %v6888
    %v6890 = vrot.slane %v6883, %v6889
    %v6891 = vcombine.high %v6890, %v6890
    %v6893 = vunpack.c.l.s4 1966171168
    %v6894 = vunpack.c.0.s8 %v6893
    %v6895 = vlaneseq
    %v6896 = vshrl.u32 %v6895, 7
    %v6897 = vsub.s32 %v6894, %v6896
    %v6898 = vrot.slane %v6873, %v6897
    %v6899 = vcombine.high %v6898, %v6898
    %v6901 = vunpack.c.l.s4 1966171168
    %v6902 = vunpack.c.0.s8 %v6901
    %v6903 = vlaneseq
    %v6904 = vshrl.u32 %v6903, 7
    %v6905 = vsub.s32 %v6902, %v6904
    %v6906 = vrot.slane %v6899, %v6905
    %v6907 = vcombine.high %v6906, %v6906
    %v6909 = vunpack.c.l.s4 1935823168
    %v6910 = vunpack.c.0.s8 %v6909
    %v6911 = vlaneseq
    %v6912 = vshrl.u32 %v6911, 7
    %v6913 = vsub.s32 %v6910, %v6912
    %v6914 = vrot.slane %v6891, %v6913
    %v6916 = vunpack.c.l.s4 1935823168
    %v6917 = vunpack.c.0.s8 %v6916
    %v6918 = vlaneseq
    %v6919 = vshrl.u32 %v6918, 7
    %v6920 = vsub.s32 %v6917, %v6919
    %v6921 = vrot.slane %v6914, %v6920
    %v6923 = vunpack.c.l.s4 1935823168
    %v6924 = vunpack.c.0.s8 %v6923
    %v6925 = vlaneseq
    %v6926 = vshrl.u32 %v6925, 7
    %v6927 = vsub.s32 %v6924, %v6926
    %v6928 = vrot.slane %v6907, %v6927
    %v6930 = vunpack.c.l.s4 1935823168
    %v6931 = vunpack.c.0.s8 %v6930
    %v6932 = vlaneseq
    %v6933 = vshrl.u32 %v6932, 7
    %v6934 = vsub.s32 %v6931, %v6933
    %v6935 = vrot.slane %v6928, %v6934
    %v6936 = vunpack.c.l.b16 %v6921
    %v6937 = vunpack.c.l.b16 %v6935
    %v6938 = vrot.slane %v6937, 7
    %v6939 = vsel %vm2400, %v6938, %v6936
    %v6940 = vpack.c.b16 %v6939, %v6939
    %v6942 = vunpack.c.l.s4 1966171168
    %v6943 = vunpack.c.0.s8 %v6942
    %v6944 = vlaneseq
    %v6945 = vshrl.u32 %v6944, 7
    %v6946 = vsub.s32 %v6943, %v6945
    %v6947 = vrot.slane %v6940, %v6946
    %v6949 = vunpack.c.l.s4 1966171168
    %v6950 = vunpack.c.0.s8 %v6949
    %v6951 = vlaneseq
    %v6952 = vshrl.u32 %v6951, 7
    %v6953 = vsub.s32 %v6950, %v6952
    %v6954 = vrot.slane %v6947, %v6953
    %6956 = vst.msk [vmem:[#allocation4 + $0x1b] sm:$0x1] %vm2418, %v6954
    %v6957 = vld [vmem:[#allocation3 + $0x18] sm:$0x8]
    %v6958 = vld [vmem:[#allocation3 + $0x38] sm:$0x8]
    %v6962 = vunpack.c.l.s4 1966171168
    %v6963 = vunpack.c.0.s8 %v6962
    %v6964 = vlaneseq
    %v6965 = vshrl.u32 %v6964, 7
    %v6966 = vsub.s32 %v6963, %v6965
    %v6967 = vrot.slane %v6957, %v6966
    %v6968 = vcombine.high %v6967, %v6967
    %v6970 = vunpack.c.l.s4 1966171168
    %v6971 = vunpack.c.0.s8 %v6970
    %v6972 = vlaneseq
    %v6973 = vshrl.u32 %v6972, 7
    %v6974 = vsub.s32 %v6971, %v6973
    %v6975 = vrot.slane %v6968, %v6974
    %v6976 = vcombine.high %v6975, %v6975
    %v6978 = vunpack.c.l.s4 1966171168
    %v6979 = vunpack.c.0.s8 %v6978
    %v6980 = vlaneseq
    %v6981 = vshrl.u32 %v6980, 7
    %v6982 = vsub.s32 %v6979, %v6981
    %v6983 = vrot.slane %v6958, %v6982
    %v6984 = vcombine.high %v6983, %v6983
    %v6986 = vunpack.c.l.s4 1966171168
    %v6987 = vunpack.c.0.s8 %v6986
    %v6988 = vlaneseq
    %v6989 = vshrl.u32 %v6988, 7
    %v6990 = vsub.s32 %v6987, %v6989
    %v6991 = vrot.slane %v6984, %v6990
    %v6992 = vcombine.high %v6991, %v6991
    %v6994 = vunpack.c.l.s4 1935823168
    %v6995 = vunpack.c.0.s8 %v6994
    %v6996 = vlaneseq
    %v6997 = vshrl.u32 %v6996, 7
    %v6998 = vsub.s32 %v6995, %v6997
    %v6999 = vrot.slane %v6976, %v6998
    %v7001 = vunpack.c.l.s4 1935823168
    %v7002 = vunpack.c.0.s8 %v7001
    %v7003 = vlaneseq
    %v7004 = vshrl.u32 %v7003, 7
    %v7005 = vsub.s32 %v7002, %v7004
    %v7006 = vrot.slane %v6999, %v7005
    %v7008 = vunpack.c.l.s4 1935823168
    %v7009 = vunpack.c.0.s8 %v7008
    %v7010 = vlaneseq
    %v7011 = vshrl.u32 %v7010, 7
    %v7012 = vsub.s32 %v7009, %v7011
    %v7013 = vrot.slane %v6992, %v7012
    %v7015 = vunpack.c.l.s4 1935823168
    %v7016 = vunpack.c.0.s8 %v7015
    %v7017 = vlaneseq
    %v7018 = vshrl.u32 %v7017, 7
    %v7019 = vsub.s32 %v7016, %v7018
    %v7020 = vrot.slane %v7013, %v7019
    %v7021 = vunpack.c.l.b16 %v7006
    %v7022 = vunpack.c.l.b16 %v7020
    %v7023 = vrot.slane %v7021, 1
    %v7024 = vsel %vm2400, %v7022, %v7023
    %v7025 = vpack.c.b16 %v7024, %v7024
    %v7027 = vunpack.c.l.s4 1966171168
    %v7028 = vunpack.c.0.s8 %v7027
    %v7029 = vlaneseq
    %v7030 = vshrl.u32 %v7029, 7
    %v7031 = vsub.s32 %v7028, %v7030
    %v7032 = vrot.slane %v7025, %v7031
    %v7034 = vunpack.c.l.s4 1966171168
    %v7035 = vunpack.c.0.s8 %v7034
    %v7036 = vlaneseq
    %v7037 = vshrl.u32 %v7036, 7
    %v7038 = vsub.s32 %v7035, %v7037
    %v7039 = vrot.slane %v7032, %v7038
    %7040 = vrot.lane.b32.xlu0 %v7039, 64
    %v7041 = vpop.permute.xlu0 %7040
    %7043 = vst.msk [vmem:[#allocation4 + $0x1b] sm:$0x1] %vm2502, %v7041
    %v7044 = vld [vmem:[#allocation3 + $0x1c] sm:$0x1]
    %v7045 = vld [vmem:[#allocation3 + $0x3c] sm:$0x1]
    %v7049 = vunpack.c.l.s4 1966171168
    %v7050 = vunpack.c.0.s8 %v7049
    %v7051 = vlaneseq
    %v7052 = vshrl.u32 %v7051, 7
    %v7053 = vsub.s32 %v7050, %v7052
    %v7054 = vrot.slane %v7044, %v7053
    %v7056 = vunpack.c.l.s4 1966171168
    %v7057 = vunpack.c.0.s8 %v7056
    %v7058 = vlaneseq
    %v7059 = vshrl.u32 %v7058, 7
    %v7060 = vsub.s32 %v7057, %v7059
    %v7061 = vrot.slane %v7054, %v7060
    %v7063 = vunpack.c.l.s4 1966171168
    %v7064 = vunpack.c.0.s8 %v7063
    %v7065 = vlaneseq
    %v7066 = vshrl.u32 %v7065, 7
    %v7067 = vsub.s32 %v7064, %v7066
    %v7068 = vrot.slane %v7045, %v7067
    %v7070 = vunpack.c.l.s4 1966171168
    %v7071 = vunpack.c.0.s8 %v7070
    %v7072 = vlaneseq
    %v7073 = vshrl.u32 %v7072, 7
    %v7074 = vsub.s32 %v7071, %v7073
    %v7075 = vrot.slane %v7068, %v7074
    %v7077 = vunpack.c.l.s4 1935823168
    %v7078 = vunpack.c.0.s8 %v7077
    %v7079 = vlaneseq
    %v7080 = vshrl.u32 %v7079, 7
    %v7081 = vsub.s32 %v7078, %v7080
    %v7082 = vrot.slane %v7061, %v7081
    %v7084 = vunpack.c.l.s4 1935823168
    %v7085 = vunpack.c.0.s8 %v7084
    %v7086 = vlaneseq
    %v7087 = vshrl.u32 %v7086, 7
    %v7088 = vsub.s32 %v7085, %v7087
    %v7089 = vrot.slane %v7082, %v7088
    %v7091 = vunpack.c.l.s4 1935823168
    %v7092 = vunpack.c.0.s8 %v7091
    %v7093 = vlaneseq
    %v7094 = vshrl.u32 %v7093, 7
    %v7095 = vsub.s32 %v7092, %v7094
    %v7096 = vrot.slane %v7075, %v7095
    %v7098 = vunpack.c.l.s4 1935823168
    %v7099 = vunpack.c.0.s8 %v7098
    %v7100 = vlaneseq
    %v7101 = vshrl.u32 %v7100, 7
    %v7102 = vsub.s32 %v7099, %v7101
    %v7103 = vrot.slane %v7096, %v7102
    %v7104 = vunpack.c.l.b16 %v7089
    %v7105 = vunpack.c.l.b16 %v7103
    %v7106 = vrot.slane %v7105, 7
    %v7107 = vsel %vm2400, %v7106, %v7104
    %v7108 = vpack.c.b16 %v7107, %v7107
    %v7110 = vunpack.c.l.s4 1966171168
    %v7111 = vunpack.c.0.s8 %v7110
    %v7112 = vlaneseq
    %v7113 = vshrl.u32 %v7112, 7
    %v7114 = vsub.s32 %v7111, %v7113
    %v7115 = vrot.slane %v7108, %v7114
    %v7117 = vunpack.c.l.s4 1966171168
    %v7118 = vunpack.c.0.s8 %v7117
    %v7119 = vlaneseq
    %v7120 = vshrl.u32 %v7119, 7
    %v7121 = vsub.s32 %v7118, %v7120
    %v7122 = vrot.slane %v7115, %v7121
    %7124 = vst.msk [vmem:[#allocation4 + $0x1c] sm:$0x1] %vm2418, %v7122
    %v7125 = vld [vmem:[#allocation3 + $0x1c] sm:$0x1]
    %v7126 = vld [vmem:[#allocation3 + $0x3c] sm:$0x1]
    %v7130 = vunpack.c.l.s4 1966171168
    %v7131 = vunpack.c.0.s8 %v7130
    %v7132 = vlaneseq
    %v7133 = vshrl.u32 %v7132, 7
    %v7134 = vsub.s32 %v7131, %v7133
    %v7135 = vrot.slane %v7125, %v7134
    %v7137 = vunpack.c.l.s4 1966171168
    %v7138 = vunpack.c.0.s8 %v7137
    %v7139 = vlaneseq
    %v7140 = vshrl.u32 %v7139, 7
    %v7141 = vsub.s32 %v7138, %v7140
    %v7142 = vrot.slane %v7135, %v7141
    %v7144 = vunpack.c.l.s4 1966171168
    %v7145 = vunpack.c.0.s8 %v7144
    %v7146 = vlaneseq
    %v7147 = vshrl.u32 %v7146, 7
    %v7148 = vsub.s32 %v7145, %v7147
    %v7149 = vrot.slane %v7126, %v7148
    %v7151 = vunpack.c.l.s4 1966171168
    %v7152 = vunpack.c.0.s8 %v7151
    %v7153 = vlaneseq
    %v7154 = vshrl.u32 %v7153, 7
    %v7155 = vsub.s32 %v7152, %v7154
    %v7156 = vrot.slane %v7149, %v7155
    %v7158 = vunpack.c.l.s4 1935823168
    %v7159 = vunpack.c.0.s8 %v7158
    %v7160 = vlaneseq
    %v7161 = vshrl.u32 %v7160, 7
    %v7162 = vsub.s32 %v7159, %v7161
    %v7163 = vrot.slane %v7142, %v7162
    %v7165 = vunpack.c.l.s4 1935823168
    %v7166 = vunpack.c.0.s8 %v7165
    %v7167 = vlaneseq
    %v7168 = vshrl.u32 %v7167, 7
    %v7169 = vsub.s32 %v7166, %v7168
    %v7170 = vrot.slane %v7163, %v7169
    %v7172 = vunpack.c.l.s4 1935823168
    %v7173 = vunpack.c.0.s8 %v7172
    %v7174 = vlaneseq
    %v7175 = vshrl.u32 %v7174, 7
    %v7176 = vsub.s32 %v7173, %v7175
    %v7177 = vrot.slane %v7156, %v7176
    %v7179 = vunpack.c.l.s4 1935823168
    %v7180 = vunpack.c.0.s8 %v7179
    %v7181 = vlaneseq
    %v7182 = vshrl.u32 %v7181, 7
    %v7183 = vsub.s32 %v7180, %v7182
    %v7184 = vrot.slane %v7177, %v7183
    %v7185 = vunpack.c.l.b16 %v7170
    %v7186 = vunpack.c.l.b16 %v7184
    %v7187 = vrot.slane %v7185, 1
    %v7188 = vsel %vm2400, %v7186, %v7187
    %v7189 = vpack.c.b16 %v7188, %v7188
    %v7191 = vunpack.c.l.s4 1966171168
    %v7192 = vunpack.c.0.s8 %v7191
    %v7193 = vlaneseq
    %v7194 = vshrl.u32 %v7193, 7
    %v7195 = vsub.s32 %v7192, %v7194
    %v7196 = vrot.slane %v7189, %v7195
    %v7198 = vunpack.c.l.s4 1966171168
    %v7199 = vunpack.c.0.s8 %v7198
    %v7200 = vlaneseq
    %v7201 = vshrl.u32 %v7200, 7
    %v7202 = vsub.s32 %v7199, %v7201
    %v7203 = vrot.slane %v7196, %v7202
    %7204 = vrot.lane.b32.xlu0 %v7203, 64
    %v7205 = vpop.permute.xlu0 %7204
    %7207 = vst.msk [vmem:[#allocation4 + $0x1c] sm:$0x1] %vm2502, %v7205
    %v7208 = vld [vmem:[#allocation3 + $0x1c] sm:$0x2]
    %v7209 = vld [vmem:[#allocation3 + $0x3c] sm:$0x2]
    %v7213 = vunpack.c.l.s4 1966171168
    %v7214 = vunpack.c.0.s8 %v7213
    %v7215 = vlaneseq
    %v7216 = vshrl.u32 %v7215, 7
    %v7217 = vsub.s32 %v7214, %v7216
    %v7218 = vrot.slane %v7208, %v7217
    %v7219 = vcombine.high %v7218, %v7218
    %v7221 = vunpack.c.l.s4 1966171168
    %v7222 = vunpack.c.0.s8 %v7221
    %v7223 = vlaneseq
    %v7224 = vshrl.u32 %v7223, 7
    %v7225 = vsub.s32 %v7222, %v7224
    %v7226 = vrot.slane %v7219, %v7225
    %v7228 = vunpack.c.l.s4 1966171168
    %v7229 = vunpack.c.0.s8 %v7228
    %v7230 = vlaneseq
    %v7231 = vshrl.u32 %v7230, 7
    %v7232 = vsub.s32 %v7229, %v7231
    %v7233 = vrot.slane %v7209, %v7232
    %v7234 = vcombine.high %v7233, %v7233
    %v7236 = vunpack.c.l.s4 1966171168
    %v7237 = vunpack.c.0.s8 %v7236
    %v7238 = vlaneseq
    %v7239 = vshrl.u32 %v7238, 7
    %v7240 = vsub.s32 %v7237, %v7239
    %v7241 = vrot.slane %v7234, %v7240
    %v7243 = vunpack.c.l.s4 1935823168
    %v7244 = vunpack.c.0.s8 %v7243
    %v7245 = vlaneseq
    %v7246 = vshrl.u32 %v7245, 7
    %v7247 = vsub.s32 %v7244, %v7246
    %v7248 = vrot.slane %v7226, %v7247
    %v7250 = vunpack.c.l.s4 1935823168
    %v7251 = vunpack.c.0.s8 %v7250
    %v7252 = vlaneseq
    %v7253 = vshrl.u32 %v7252, 7
    %v7254 = vsub.s32 %v7251, %v7253
    %v7255 = vrot.slane %v7248, %v7254
    %v7257 = vunpack.c.l.s4 1935823168
    %v7258 = vunpack.c.0.s8 %v7257
    %v7259 = vlaneseq
    %v7260 = vshrl.u32 %v7259, 7
    %v7261 = vsub.s32 %v7258, %v7260
    %v7262 = vrot.slane %v7241, %v7261
    %v7264 = vunpack.c.l.s4 1935823168
    %v7265 = vunpack.c.0.s8 %v7264
    %v7266 = vlaneseq
    %v7267 = vshrl.u32 %v7266, 7
    %v7268 = vsub.s32 %v7265, %v7267
    %v7269 = vrot.slane %v7262, %v7268
    %v7270 = vunpack.c.l.b16 %v7255
    %v7271 = vunpack.c.l.b16 %v7269
    %v7272 = vrot.slane %v7271, 7
    %v7273 = vsel %vm2400, %v7272, %v7270
    %v7274 = vpack.c.b16 %v7273, %v7273
    %v7276 = vunpack.c.l.s4 1966171168
    %v7277 = vunpack.c.0.s8 %v7276
    %v7278 = vlaneseq
    %v7279 = vshrl.u32 %v7278, 7
    %v7280 = vsub.s32 %v7277, %v7279
    %v7281 = vrot.slane %v7274, %v7280
    %v7283 = vunpack.c.l.s4 1966171168
    %v7284 = vunpack.c.0.s8 %v7283
    %v7285 = vlaneseq
    %v7286 = vshrl.u32 %v7285, 7
    %v7287 = vsub.s32 %v7284, %v7286
    %v7288 = vrot.slane %v7281, %v7287
    %7290 = vst.msk [vmem:[#allocation4 + $0x1d] sm:$0x1] %vm2418, %v7288
    %v7291 = vld [vmem:[#allocation3 + $0x1c] sm:$0x2]
    %v7292 = vld [vmem:[#allocation3 + $0x3c] sm:$0x2]
    %v7296 = vunpack.c.l.s4 1966171168
    %v7297 = vunpack.c.0.s8 %v7296
    %v7298 = vlaneseq
    %v7299 = vshrl.u32 %v7298, 7
    %v7300 = vsub.s32 %v7297, %v7299
    %v7301 = vrot.slane %v7291, %v7300
    %v7302 = vcombine.high %v7301, %v7301
    %v7304 = vunpack.c.l.s4 1966171168
    %v7305 = vunpack.c.0.s8 %v7304
    %v7306 = vlaneseq
    %v7307 = vshrl.u32 %v7306, 7
    %v7308 = vsub.s32 %v7305, %v7307
    %v7309 = vrot.slane %v7302, %v7308
    %v7311 = vunpack.c.l.s4 1966171168
    %v7312 = vunpack.c.0.s8 %v7311
    %v7313 = vlaneseq
    %v7314 = vshrl.u32 %v7313, 7
    %v7315 = vsub.s32 %v7312, %v7314
    %v7316 = vrot.slane %v7292, %v7315
    %v7317 = vcombine.high %v7316, %v7316
    %v7319 = vunpack.c.l.s4 1966171168
    %v7320 = vunpack.c.0.s8 %v7319
    %v7321 = vlaneseq
    %v7322 = vshrl.u32 %v7321, 7
    %v7323 = vsub.s32 %v7320, %v7322
    %v7324 = vrot.slane %v7317, %v7323
    %v7326 = vunpack.c.l.s4 1935823168
    %v7327 = vunpack.c.0.s8 %v7326
    %v7328 = vlaneseq
    %v7329 = vshrl.u32 %v7328, 7
    %v7330 = vsub.s32 %v7327, %v7329
    %v7331 = vrot.slane %v7309, %v7330
    %v7333 = vunpack.c.l.s4 1935823168
    %v7334 = vunpack.c.0.s8 %v7333
    %v7335 = vlaneseq
    %v7336 = vshrl.u32 %v7335, 7
    %v7337 = vsub.s32 %v7334, %v7336
    %v7338 = vrot.slane %v7331, %v7337
    %v7340 = vunpack.c.l.s4 1935823168
    %v7341 = vunpack.c.0.s8 %v7340
    %v7342 = vlaneseq
    %v7343 = vshrl.u32 %v7342, 7
    %v7344 = vsub.s32 %v7341, %v7343
    %v7345 = vrot.slane %v7324, %v7344
    %v7347 = vunpack.c.l.s4 1935823168
    %v7348 = vunpack.c.0.s8 %v7347
    %v7349 = vlaneseq
    %v7350 = vshrl.u32 %v7349, 7
    %v7351 = vsub.s32 %v7348, %v7350
    %v7352 = vrot.slane %v7345, %v7351
    %v7353 = vunpack.c.l.b16 %v7338
    %v7354 = vunpack.c.l.b16 %v7352
    %v7355 = vrot.slane %v7353, 1
    %v7356 = vsel %vm2400, %v7354, %v7355
    %v7357 = vpack.c.b16 %v7356, %v7356
    %v7359 = vunpack.c.l.s4 1966171168
    %v7360 = vunpack.c.0.s8 %v7359
    %v7361 = vlaneseq
    %v7362 = vshrl.u32 %v7361, 7
    %v7363 = vsub.s32 %v7360, %v7362
    %v7364 = vrot.slane %v7357, %v7363
    %v7366 = vunpack.c.l.s4 1966171168
    %v7367 = vunpack.c.0.s8 %v7366
    %v7368 = vlaneseq
    %v7369 = vshrl.u32 %v7368, 7
    %v7370 = vsub.s32 %v7367, %v7369
    %v7371 = vrot.slane %v7364, %v7370
    %7372 = vrot.lane.b32.xlu0 %v7371, 64
    %v7373 = vpop.permute.xlu0 %7372
    %7375 = vst.msk [vmem:[#allocation4 + $0x1d] sm:$0x1] %vm2502, %v7373
    %v7376 = vld [vmem:[#allocation3 + $0x1c] sm:$0x4]
    %v7377 = vld [vmem:[#allocation3 + $0x3c] sm:$0x4]
    %v7381 = vunpack.c.l.s4 1966171168
    %v7382 = vunpack.c.0.s8 %v7381
    %v7383 = vlaneseq
    %v7384 = vshrl.u32 %v7383, 7
    %v7385 = vsub.s32 %v7382, %v7384
    %v7386 = vrot.slane %v7376, %v7385
    %v7388 = vunpack.c.l.s4 1966171168
    %v7389 = vunpack.c.0.s8 %v7388
    %v7390 = vlaneseq
    %v7391 = vshrl.u32 %v7390, 7
    %v7392 = vsub.s32 %v7389, %v7391
    %v7393 = vrot.slane %v7386, %v7392
    %v7394 = vcombine.high %v7393, %v7393
    %v7396 = vunpack.c.l.s4 1966171168
    %v7397 = vunpack.c.0.s8 %v7396
    %v7398 = vlaneseq
    %v7399 = vshrl.u32 %v7398, 7
    %v7400 = vsub.s32 %v7397, %v7399
    %v7401 = vrot.slane %v7377, %v7400
    %v7403 = vunpack.c.l.s4 1966171168
    %v7404 = vunpack.c.0.s8 %v7403
    %v7405 = vlaneseq
    %v7406 = vshrl.u32 %v7405, 7
    %v7407 = vsub.s32 %v7404, %v7406
    %v7408 = vrot.slane %v7401, %v7407
    %v7409 = vcombine.high %v7408, %v7408
    %v7411 = vunpack.c.l.s4 1935823168
    %v7412 = vunpack.c.0.s8 %v7411
    %v7413 = vlaneseq
    %v7414 = vshrl.u32 %v7413, 7
    %v7415 = vsub.s32 %v7412, %v7414
    %v7416 = vrot.slane %v7394, %v7415
    %v7418 = vunpack.c.l.s4 1935823168
    %v7419 = vunpack.c.0.s8 %v7418
    %v7420 = vlaneseq
    %v7421 = vshrl.u32 %v7420, 7
    %v7422 = vsub.s32 %v7419, %v7421
    %v7423 = vrot.slane %v7416, %v7422
    %v7425 = vunpack.c.l.s4 1935823168
    %v7426 = vunpack.c.0.s8 %v7425
    %v7427 = vlaneseq
    %v7428 = vshrl.u32 %v7427, 7
    %v7429 = vsub.s32 %v7426, %v7428
    %v7430 = vrot.slane %v7409, %v7429
    %v7432 = vunpack.c.l.s4 1935823168
    %v7433 = vunpack.c.0.s8 %v7432
    %v7434 = vlaneseq
    %v7435 = vshrl.u32 %v7434, 7
    %v7436 = vsub.s32 %v7433, %v7435
    %v7437 = vrot.slane %v7430, %v7436
    %v7438 = vunpack.c.l.b16 %v7423
    %v7439 = vunpack.c.l.b16 %v7437
    %v7440 = vrot.slane %v7439, 7
    %v7441 = vsel %vm2400, %v7440, %v7438
    %v7442 = vpack.c.b16 %v7441, %v7441
    %v7444 = vunpack.c.l.s4 1966171168
    %v7445 = vunpack.c.0.s8 %v7444
    %v7446 = vlaneseq
    %v7447 = vshrl.u32 %v7446, 7
    %v7448 = vsub.s32 %v7445, %v7447
    %v7449 = vrot.slane %v7442, %v7448
    %v7451 = vunpack.c.l.s4 1966171168
    %v7452 = vunpack.c.0.s8 %v7451
    %v7453 = vlaneseq
    %v7454 = vshrl.u32 %v7453, 7
    %v7455 = vsub.s32 %v7452, %v7454
    %v7456 = vrot.slane %v7449, %v7455
    %7458 = vst.msk [vmem:[#allocation4 + $0x1e] sm:$0x1] %vm2418, %v7456
    %v7459 = vld [vmem:[#allocation3 + $0x1c] sm:$0x4]
    %v7460 = vld [vmem:[#allocation3 + $0x3c] sm:$0x4]
    %v7464 = vunpack.c.l.s4 1966171168
    %v7465 = vunpack.c.0.s8 %v7464
    %v7466 = vlaneseq
    %v7467 = vshrl.u32 %v7466, 7
    %v7468 = vsub.s32 %v7465, %v7467
    %v7469 = vrot.slane %v7459, %v7468
    %v7471 = vunpack.c.l.s4 1966171168
    %v7472 = vunpack.c.0.s8 %v7471
    %v7473 = vlaneseq
    %v7474 = vshrl.u32 %v7473, 7
    %v7475 = vsub.s32 %v7472, %v7474
    %v7476 = vrot.slane %v7469, %v7475
    %v7477 = vcombine.high %v7476, %v7476
    %v7479 = vunpack.c.l.s4 1966171168
    %v7480 = vunpack.c.0.s8 %v7479
    %v7481 = vlaneseq
    %v7482 = vshrl.u32 %v7481, 7
    %v7483 = vsub.s32 %v7480, %v7482
    %v7484 = vrot.slane %v7460, %v7483
    %v7486 = vunpack.c.l.s4 1966171168
    %v7487 = vunpack.c.0.s8 %v7486
    %v7488 = vlaneseq
    %v7489 = vshrl.u32 %v7488, 7
    %v7490 = vsub.s32 %v7487, %v7489
    %v7491 = vrot.slane %v7484, %v7490
    %v7492 = vcombine.high %v7491, %v7491
    %v7494 = vunpack.c.l.s4 1935823168
    %v7495 = vunpack.c.0.s8 %v7494
    %v7496 = vlaneseq
    %v7497 = vshrl.u32 %v7496, 7
    %v7498 = vsub.s32 %v7495, %v7497
    %v7499 = vrot.slane %v7477, %v7498
    %v7501 = vunpack.c.l.s4 1935823168
    %v7502 = vunpack.c.0.s8 %v7501
    %v7503 = vlaneseq
    %v7504 = vshrl.u32 %v7503, 7
    %v7505 = vsub.s32 %v7502, %v7504
    %v7506 = vrot.slane %v7499, %v7505
    %v7508 = vunpack.c.l.s4 1935823168
    %v7509 = vunpack.c.0.s8 %v7508
    %v7510 = vlaneseq
    %v7511 = vshrl.u32 %v7510, 7
    %v7512 = vsub.s32 %v7509, %v7511
    %v7513 = vrot.slane %v7492, %v7512
    %v7515 = vunpack.c.l.s4 1935823168
    %v7516 = vunpack.c.0.s8 %v7515
    %v7517 = vlaneseq
    %v7518 = vshrl.u32 %v7517, 7
    %v7519 = vsub.s32 %v7516, %v7518
    %v7520 = vrot.slane %v7513, %v7519
    %v7521 = vunpack.c.l.b16 %v7506
    %v7522 = vunpack.c.l.b16 %v7520
    %v7523 = vrot.slane %v7521, 1
    %v7524 = vsel %vm2400, %v7522, %v7523
    %v7525 = vpack.c.b16 %v7524, %v7524
    %v7527 = vunpack.c.l.s4 1966171168
    %v7528 = vunpack.c.0.s8 %v7527
    %v7529 = vlaneseq
    %v7530 = vshrl.u32 %v7529, 7
    %v7531 = vsub.s32 %v7528, %v7530
    %v7532 = vrot.slane %v7525, %v7531
    %v7534 = vunpack.c.l.s4 1966171168
    %v7535 = vunpack.c.0.s8 %v7534
    %v7536 = vlaneseq
    %v7537 = vshrl.u32 %v7536, 7
    %v7538 = vsub.s32 %v7535, %v7537
    %v7539 = vrot.slane %v7532, %v7538
    %7540 = vrot.lane.b32.xlu0 %v7539, 64
    %v7541 = vpop.permute.xlu0 %7540
    %7543 = vst.msk [vmem:[#allocation4 + $0x1e] sm:$0x1] %vm2502, %v7541
    %v7544 = vld [vmem:[#allocation3 + $0x1c] sm:$0x8]
    %v7545 = vld [vmem:[#allocation3 + $0x3c] sm:$0x8]
    %v7549 = vunpack.c.l.s4 1966171168
    %v7550 = vunpack.c.0.s8 %v7549
    %v7551 = vlaneseq
    %v7552 = vshrl.u32 %v7551, 7
    %v7553 = vsub.s32 %v7550, %v7552
    %v7554 = vrot.slane %v7544, %v7553
    %v7555 = vcombine.high %v7554, %v7554
    %v7557 = vunpack.c.l.s4 1966171168
    %v7558 = vunpack.c.0.s8 %v7557
    %v7559 = vlaneseq
    %v7560 = vshrl.u32 %v7559, 7
    %v7561 = vsub.s32 %v7558, %v7560
    %v7562 = vrot.slane %v7555, %v7561
    %v7563 = vcombine.high %v7562, %v7562
    %v7565 = vunpack.c.l.s4 1966171168
    %v7566 = vunpack.c.0.s8 %v7565
    %v7567 = vlaneseq
    %v7568 = vshrl.u32 %v7567, 7
    %v7569 = vsub.s32 %v7566, %v7568
    %v7570 = vrot.slane %v7545, %v7569
    %v7571 = vcombine.high %v7570, %v7570
    %v7573 = vunpack.c.l.s4 1966171168
    %v7574 = vunpack.c.0.s8 %v7573
    %v7575 = vlaneseq
    %v7576 = vshrl.u32 %v7575, 7
    %v7577 = vsub.s32 %v7574, %v7576
    %v7578 = vrot.slane %v7571, %v7577
    %v7579 = vcombine.high %v7578, %v7578
    %v7581 = vunpack.c.l.s4 1935823168
    %v7582 = vunpack.c.0.s8 %v7581
    %v7583 = vlaneseq
    %v7584 = vshrl.u32 %v7583, 7
    %v7585 = vsub.s32 %v7582, %v7584
    %v7586 = vrot.slane %v7563, %v7585
    %v7588 = vunpack.c.l.s4 1935823168
    %v7589 = vunpack.c.0.s8 %v7588
    %v7590 = vlaneseq
    %v7591 = vshrl.u32 %v7590, 7
    %v7592 = vsub.s32 %v7589, %v7591
    %v7593 = vrot.slane %v7586, %v7592
    %v7595 = vunpack.c.l.s4 1935823168
    %v7596 = vunpack.c.0.s8 %v7595
    %v7597 = vlaneseq
    %v7598 = vshrl.u32 %v7597, 7
    %v7599 = vsub.s32 %v7596, %v7598
    %v7600 = vrot.slane %v7579, %v7599
    %v7602 = vunpack.c.l.s4 1935823168
    %v7603 = vunpack.c.0.s8 %v7602
    %v7604 = vlaneseq
    %v7605 = vshrl.u32 %v7604, 7
    %v7606 = vsub.s32 %v7603, %v7605
    %v7607 = vrot.slane %v7600, %v7606
    %v7608 = vunpack.c.l.b16 %v7593
    %v7609 = vunpack.c.l.b16 %v7607
    %v7610 = vrot.slane %v7609, 7
    %v7611 = vsel %vm2400, %v7610, %v7608
    %v7612 = vpack.c.b16 %v7611, %v7611
    %v7614 = vunpack.c.l.s4 1966171168
    %v7615 = vunpack.c.0.s8 %v7614
    %v7616 = vlaneseq
    %v7617 = vshrl.u32 %v7616, 7
    %v7618 = vsub.s32 %v7615, %v7617
    %v7619 = vrot.slane %v7612, %v7618
    %v7621 = vunpack.c.l.s4 1966171168
    %v7622 = vunpack.c.0.s8 %v7621
    %v7623 = vlaneseq
    %v7624 = vshrl.u32 %v7623, 7
    %v7625 = vsub.s32 %v7622, %v7624
    %v7626 = vrot.slane %v7619, %v7625
    %7628 = vst.msk [vmem:[#allocation4 + $0x1f] sm:$0x1] %vm2418, %v7626
    %v7629 = vld [vmem:[#allocation3 + $0x1c] sm:$0x8]
    %v7630 = vld [vmem:[#allocation3 + $0x3c] sm:$0x8]
    %v7634 = vunpack.c.l.s4 1966171168
    %v7635 = vunpack.c.0.s8 %v7634
    %v7636 = vlaneseq
    %v7637 = vshrl.u32 %v7636, 7
    %v7638 = vsub.s32 %v7635, %v7637
    %v7639 = vrot.slane %v7629, %v7638
    %v7640 = vcombine.high %v7639, %v7639
    %v7642 = vunpack.c.l.s4 1966171168
    %v7643 = vunpack.c.0.s8 %v7642
    %v7644 = vlaneseq
    %v7645 = vshrl.u32 %v7644, 7
    %v7646 = vsub.s32 %v7643, %v7645
    %v7647 = vrot.slane %v7640, %v7646
    %v7648 = vcombine.high %v7647, %v7647
    %v7650 = vunpack.c.l.s4 1966171168
    %v7651 = vunpack.c.0.s8 %v7650
    %v7652 = vlaneseq
    %v7653 = vshrl.u32 %v7652, 7
    %v7654 = vsub.s32 %v7651, %v7653
    %v7655 = vrot.slane %v7630, %v7654
    %v7656 = vcombine.high %v7655, %v7655
    %v7658 = vunpack.c.l.s4 1966171168
    %v7659 = vunpack.c.0.s8 %v7658
    %v7660 = vlaneseq
    %v7661 = vshrl.u32 %v7660, 7
    %v7662 = vsub.s32 %v7659, %v7661
    %v7663 = vrot.slane %v7656, %v7662
    %v7664 = vcombine.high %v7663, %v7663
    %v7666 = vunpack.c.l.s4 1935823168
    %v7667 = vunpack.c.0.s8 %v7666
    %v7668 = vlaneseq
    %v7669 = vshrl.u32 %v7668, 7
    %v7670 = vsub.s32 %v7667, %v7669
    %v7671 = vrot.slane %v7648, %v7670
    %v7673 = vunpack.c.l.s4 1935823168
    %v7674 = vunpack.c.0.s8 %v7673
    %v7675 = vlaneseq
    %v7676 = vshrl.u32 %v7675, 7
    %v7677 = vsub.s32 %v7674, %v7676
    %v7678 = vrot.slane %v7671, %v7677
    %v7680 = vunpack.c.l.s4 1935823168
    %v7681 = vunpack.c.0.s8 %v7680
    %v7682 = vlaneseq
    %v7683 = vshrl.u32 %v7682, 7
    %v7684 = vsub.s32 %v7681, %v7683
    %v7685 = vrot.slane %v7664, %v7684
    %v7687 = vunpack.c.l.s4 1935823168
    %v7688 = vunpack.c.0.s8 %v7687
    %v7689 = vlaneseq
    %v7690 = vshrl.u32 %v7689, 7
    %v7691 = vsub.s32 %v7688, %v7690
    %v7692 = vrot.slane %v7685, %v7691
    %v7693 = vunpack.c.l.b16 %v7678
    %v7694 = vunpack.c.l.b16 %v7692
    %v7695 = vrot.slane %v7693, 1
    %v7696 = vsel %vm2400, %v7694, %v7695
    %v7697 = vpack.c.b16 %v7696, %v7696
    %v7699 = vunpack.c.l.s4 1966171168
    %v7700 = vunpack.c.0.s8 %v7699
    %v7701 = vlaneseq
    %v7702 = vshrl.u32 %v7701, 7
    %v7703 = vsub.s32 %v7700, %v7702
    %v7704 = vrot.slane %v7697, %v7703
    %v7706 = vunpack.c.l.s4 1966171168
    %v7707 = vunpack.c.0.s8 %v7706
    %v7708 = vlaneseq
    %v7709 = vshrl.u32 %v7708, 7
    %v7710 = vsub.s32 %v7707, %v7709
    %v7711 = vrot.slane %v7704, %v7710
    %7712 = vrot.lane.b32.xlu0 %v7711, 64
    %v7713 = vpop.permute.xlu0 %7712
    %7715 = vst.msk [vmem:[#allocation4 + $0x1f] sm:$0x1] %vm2502, %v7713
    %v7716 = vld [vmem:[#allocation4] sm:$0xff]
    %v7717 = vld [vmem:[#allocation4 + $0x8] sm:$0xff]
    %v7718 = vld [vmem:[#allocation4 + $0x10] sm:$0xff]
    %v7719 = vld [vmem:[#allocation4 + $0x18] sm:$0xff]
    %v7720 = vld [vmem:[#allocation5] sm:$0xf]
    %v7721 = vld [vmem:[#allocation5 + $0x4] sm:$0xf]
    %v7722 = vld [vmem:[#allocation5 + $0x8] sm:$0xf]
    %v7723 = vld [vmem:[#allocation5 + $0xc] sm:$0xf]
    %v7724 = vld [vmem:[#allocation5 + $0x10] sm:$0xf]
    %v7725 = vld [vmem:[#allocation5 + $0x14] sm:$0xf]
    %v7726 = vld [vmem:[#allocation5 + $0x18] sm:$0xf]
    %v7727 = vld [vmem:[#allocation5 + $0x1c] sm:$0xf]
    %v7728 = vld [vmem:[#allocation5 + $0x20] sm:$0xf]
    %v7729 = vld [vmem:[#allocation5 + $0x24] sm:$0xf]
    %v7730 = vld [vmem:[#allocation5 + $0x28] sm:$0xf]
    %v7731 = vld [vmem:[#allocation5 + $0x2c] sm:$0xf]
    %v7732 = vld [vmem:[#allocation5 + $0x30] sm:$0xf]
    %v7733 = vld [vmem:[#allocation5 + $0x34] sm:$0xf]
    %v7734 = vld [vmem:[#allocation5 + $0x38] sm:$0xf]
    %v7735 = vld [vmem:[#allocation5 + $0x3c] sm:$0xf]
    %v7736 = vld [vmem:[#allocation5 + $0x40] sm:$0xf]
    %v7737 = vld [vmem:[#allocation5 + $0x44] sm:$0xf]
    %v7738 = vld [vmem:[#allocation5 + $0x48] sm:$0xf]
    %v7739 = vld [vmem:[#allocation5 + $0x4c] sm:$0xf]
    %v7740 = vld [vmem:[#allocation5 + $0x50] sm:$0xf]
    %v7741 = vld [vmem:[#allocation5 + $0x54] sm:$0xf]
    %v7742 = vld [vmem:[#allocation5 + $0x58] sm:$0xf]
    %v7743 = vld [vmem:[#allocation5 + $0x5c] sm:$0xf]
    %v7744 = vld [vmem:[#allocation5 + $0x60] sm:$0xf]
    %v7745 = vld [vmem:[#allocation5 + $0x64] sm:$0xf]
    %v7746 = vld [vmem:[#allocation5 + $0x68] sm:$0xf]
    %v7747 = vld [vmem:[#allocation5 + $0x6c] sm:$0xf]
    %v7748 = vld [vmem:[#allocation5 + $0x70] sm:$0xf]
    %v7749 = vld [vmem:[#allocation5 + $0x74] sm:$0xf]
    %v7750 = vld [vmem:[#allocation5 + $0x78] sm:$0xf]
    %v7751 = vld [vmem:[#allocation5 + $0x7c] sm:$0xf]
    %v7752 = vld [vmem:[#allocation5 + $0x80] sm:$0xf]
    %v7753 = vld [vmem:[#allocation5 + $0x84] sm:$0xf]
    %v7754 = vld [vmem:[#allocation5 + $0x88] sm:$0xf]
    %v7755 = vld [vmem:[#allocation5 + $0x8c] sm:$0xf]
    %v7756 = vld [vmem:[#allocation5 + $0x90] sm:$0xf]
    %v7757 = vld [vmem:[#allocation5 + $0x94] sm:$0xf]
    %v7758 = vld [vmem:[#allocation5 + $0x98] sm:$0xf]
    %v7759 = vld [vmem:[#allocation5 + $0x9c] sm:$0xf]
    %v7760 = vld [vmem:[#allocation5 + $0xa0] sm:$0xf]
    %v7761 = vld [vmem:[#allocation5 + $0xa4] sm:$0xf]
    %v7762 = vld [vmem:[#allocation5 + $0xa8] sm:$0xf]
    %v7763 = vld [vmem:[#allocation5 + $0xac] sm:$0xf]
    %v7764 = vld [vmem:[#allocation5 + $0xb0] sm:$0xf]
    %v7765 = vld [vmem:[#allocation5 + $0xb4] sm:$0xf]
    %v7766 = vld [vmem:[#allocation5 + $0xb8] sm:$0xf]
    %v7767 = vld [vmem:[#allocation5 + $0xbc] sm:$0xf]
    %v7768 = vld [vmem:[#allocation5 + $0xc0] sm:$0xf]
    %v7769 = vld [vmem:[#allocation5 + $0xc4] sm:$0xf]
    %v7770 = vld [vmem:[#allocation5 + $0xc8] sm:$0xf]
    %v7771 = vld [vmem:[#allocation5 + $0xcc] sm:$0xf]
    %v7772 = vld [vmem:[#allocation5 + $0xd0] sm:$0xf]
    %v7773 = vld [vmem:[#allocation5 + $0xd4] sm:$0xf]
    %v7774 = vld [vmem:[#allocation5 + $0xd8] sm:$0xf]
    %v7775 = vld [vmem:[#allocation5 + $0xdc] sm:$0xf]
    %v7776 = vld [vmem:[#allocation5 + $0xe0] sm:$0xf]
    %v7777 = vld [vmem:[#allocation5 + $0xe4] sm:$0xf]
    %v7778 = vld [vmem:[#allocation5 + $0xe8] sm:$0xf]
    %v7779 = vld [vmem:[#allocation5 + $0xec] sm:$0xf]
    %v7780 = vld [vmem:[#allocation5 + $0xf0] sm:$0xf]
    %v7781 = vld [vmem:[#allocation5 + $0xf4] sm:$0xf]
    %v7782 = vld [vmem:[#allocation5 + $0xf8] sm:$0xf]
    %v7783 = vld [vmem:[#allocation5 + $0xfc] sm:$0xf]
    %v7784 = vld [vmem:[#allocation5 + $0x100] sm:$0xf]
    %v7785 = vld [vmem:[#allocation5 + $0x104] sm:$0xf]
    %v7786 = vld [vmem:[#allocation5 + $0x108] sm:$0xf]
    %v7787 = vld [vmem:[#allocation5 + $0x10c] sm:$0xf]
    %v7788 = vld [vmem:[#allocation5 + $0x110] sm:$0xf]
    %v7789 = vld [vmem:[#allocation5 + $0x114] sm:$0xf]
    %v7790 = vld [vmem:[#allocation5 + $0x118] sm:$0xf]
    %v7791 = vld [vmem:[#allocation5 + $0x11c] sm:$0xf]
    %v7792 = vld [vmem:[#allocation5 + $0x120] sm:$0xf]
    %v7793 = vld [vmem:[#allocation5 + $0x124] sm:$0xf]
    %v7794 = vld [vmem:[#allocation5 + $0x128] sm:$0xf]
    %v7795 = vld [vmem:[#allocation5 + $0x12c] sm:$0xf]
    %v7796 = vld [vmem:[#allocation5 + $0x130] sm:$0xf]
    %v7797 = vld [vmem:[#allocation5 + $0x134] sm:$0xf]
    %v7798 = vld [vmem:[#allocation5 + $0x138] sm:$0xf]
    %v7799 = vld [vmem:[#allocation5 + $0x13c] sm:$0xf]
    %v7800 = vld [vmem:[#allocation5 + $0x140] sm:$0xf]
    %v7801 = vld [vmem:[#allocation5 + $0x144] sm:$0xf]
    %v7802 = vld [vmem:[#allocation5 + $0x148] sm:$0xf]
    %v7803 = vld [vmem:[#allocation5 + $0x14c] sm:$0xf]
    %v7804 = vld [vmem:[#allocation5 + $0x150] sm:$0xf]
    %v7805 = vld [vmem:[#allocation5 + $0x154] sm:$0xf]
    %v7806 = vld [vmem:[#allocation5 + $0x158] sm:$0xf]
    %v7807 = vld [vmem:[#allocation5 + $0x15c] sm:$0xf]
    %v7808 = vld [vmem:[#allocation5 + $0x160] sm:$0xf]
    %v7809 = vld [vmem:[#allocation5 + $0x164] sm:$0xf]
    %v7810 = vld [vmem:[#allocation5 + $0x168] sm:$0xf]
    %v7811 = vld [vmem:[#allocation5 + $0x16c] sm:$0xf]
    %v7812 = vld [vmem:[#allocation5 + $0x170] sm:$0xf]
    %v7813 = vld [vmem:[#allocation5 + $0x174] sm:$0xf]
    %v7814 = vld [vmem:[#allocation5 + $0x178] sm:$0xf]
    %v7815 = vld [vmem:[#allocation5 + $0x17c] sm:$0xf]
    %v7816 = vld [vmem:[#allocation5 + $0x180] sm:$0xf]
    %v7817 = vld [vmem:[#allocation5 + $0x184] sm:$0xf]
    %v7818 = vld [vmem:[#allocation5 + $0x188] sm:$0xf]
    %v7819 = vld [vmem:[#allocation5 + $0x18c] sm:$0xf]
    %v7820 = vld [vmem:[#allocation5 + $0x190] sm:$0xf]
    %v7821 = vld [vmem:[#allocation5 + $0x194] sm:$0xf]
    %v7822 = vld [vmem:[#allocation5 + $0x198] sm:$0xf]
    %v7823 = vld [vmem:[#allocation5 + $0x19c] sm:$0xf]
    %v7824 = vld [vmem:[#allocation5 + $0x1a0] sm:$0xf]
    %v7825 = vld [vmem:[#allocation5 + $0x1a4] sm:$0xf]
    %v7826 = vld [vmem:[#allocation5 + $0x1a8] sm:$0xf]
    %v7827 = vld [vmem:[#allocation5 + $0x1ac] sm:$0xf]
    %v7828 = vld [vmem:[#allocation5 + $0x1b0] sm:$0xf]
    %v7829 = vld [vmem:[#allocation5 + $0x1b4] sm:$0xf]
    %v7830 = vld [vmem:[#allocation5 + $0x1b8] sm:$0xf]
    %v7831 = vld [vmem:[#allocation5 + $0x1bc] sm:$0xf]
    %v7832 = vld [vmem:[#allocation5 + $0x1c0] sm:$0xf]
    %v7833 = vld [vmem:[#allocation5 + $0x1c4] sm:$0xf]
    %v7834 = vld [vmem:[#allocation5 + $0x1c8] sm:$0xf]
    %v7835 = vld [vmem:[#allocation5 + $0x1cc] sm:$0xf]
    %v7836 = vld [vmem:[#allocation5 + $0x1d0] sm:$0xf]
    %v7837 = vld [vmem:[#allocation5 + $0x1d4] sm:$0xf]
    %v7838 = vld [vmem:[#allocation5 + $0x1d8] sm:$0xf]
    %v7839 = vld [vmem:[#allocation5 + $0x1dc] sm:$0xf]
    %v7840 = vld [vmem:[#allocation5 + $0x1e0] sm:$0xf]
    %v7841 = vld [vmem:[#allocation5 + $0x1e4] sm:$0xf]
    %v7842 = vld [vmem:[#allocation5 + $0x1e8] sm:$0xf]
    %v7843 = vld [vmem:[#allocation5 + $0x1ec] sm:$0xf]
    %v7844 = vld [vmem:[#allocation5 + $0x1f0] sm:$0xf]
    %v7845 = vld [vmem:[#allocation5 + $0x1f4] sm:$0xf]
    %v7846 = vld [vmem:[#allocation5 + $0x1f8] sm:$0xf]
    %v7847 = vld [vmem:[#allocation5 + $0x1fc] sm:$0xf]
    %v7848 = vld [vmem:[#allocation5 + $0x200] sm:$0xf]
    %v7849 = vld [vmem:[#allocation5 + $0x204] sm:$0xf]
    %v7850 = vld [vmem:[#allocation5 + $0x208] sm:$0xf]
    %v7851 = vld [vmem:[#allocation5 + $0x20c] sm:$0xf]
    %v7852 = vld [vmem:[#allocation5 + $0x210] sm:$0xf]
    %v7853 = vld [vmem:[#allocation5 + $0x214] sm:$0xf]
    %v7854 = vld [vmem:[#allocation5 + $0x218] sm:$0xf]
    %v7855 = vld [vmem:[#allocation5 + $0x21c] sm:$0xf]
    %v7856 = vld [vmem:[#allocation5 + $0x220] sm:$0xf]
    %v7857 = vld [vmem:[#allocation5 + $0x224] sm:$0xf]
    %v7858 = vld [vmem:[#allocation5 + $0x228] sm:$0xf]
    %v7859 = vld [vmem:[#allocation5 + $0x22c] sm:$0xf]
    %v7860 = vld [vmem:[#allocation5 + $0x230] sm:$0xf]
    %v7861 = vld [vmem:[#allocation5 + $0x234] sm:$0xf]
    %v7862 = vld [vmem:[#allocation5 + $0x238] sm:$0xf]
    %v7863 = vld [vmem:[#allocation5 + $0x23c] sm:$0xf]
    %v7864 = vld [vmem:[#allocation5 + $0x240] sm:$0xf]
    %v7865 = vld [vmem:[#allocation5 + $0x244] sm:$0xf]
    %v7866 = vld [vmem:[#allocation5 + $0x248] sm:$0xf]
    %v7867 = vld [vmem:[#allocation5 + $0x24c] sm:$0xf]
    %v7868 = vld [vmem:[#allocation5 + $0x250] sm:$0xf]
    %v7869 = vld [vmem:[#allocation5 + $0x254] sm:$0xf]
    %v7870 = vld [vmem:[#allocation5 + $0x258] sm:$0xf]
    %v7871 = vld [vmem:[#allocation5 + $0x25c] sm:$0xf]
    %v7872 = vld [vmem:[#allocation5 + $0x260] sm:$0xf]
    %v7873 = vld [vmem:[#allocation5 + $0x264] sm:$0xf]
    %v7874 = vld [vmem:[#allocation5 + $0x268] sm:$0xf]
    %v7875 = vld [vmem:[#allocation5 + $0x26c] sm:$0xf]
    %v7876 = vld [vmem:[#allocation5 + $0x270] sm:$0xf]
    %v7877 = vld [vmem:[#allocation5 + $0x274] sm:$0xf]
    %v7878 = vld [vmem:[#allocation5 + $0x278] sm:$0xf]
    %v7879 = vld [vmem:[#allocation5 + $0x27c] sm:$0xf]
    %v7880 = vld [vmem:[#allocation5 + $0x280] sm:$0xf]
    %v7881 = vld [vmem:[#allocation5 + $0x284] sm:$0xf]
    %v7882 = vld [vmem:[#allocation5 + $0x288] sm:$0xf]
    %v7883 = vld [vmem:[#allocation5 + $0x28c] sm:$0xf]
    %v7884 = vld [vmem:[#allocation5 + $0x290] sm:$0xf]
    %v7885 = vld [vmem:[#allocation5 + $0x294] sm:$0xf]
    %v7886 = vld [vmem:[#allocation5 + $0x298] sm:$0xf]
    %v7887 = vld [vmem:[#allocation5 + $0x29c] sm:$0xf]
    %v7888 = vld [vmem:[#allocation5 + $0x2a0] sm:$0xf]
    %v7889 = vld [vmem:[#allocation5 + $0x2a4] sm:$0xf]
    %v7890 = vld [vmem:[#allocation5 + $0x2a8] sm:$0xf]
    %v7891 = vld [vmem:[#allocation5 + $0x2ac] sm:$0xf]
    %v7892 = vld [vmem:[#allocation5 + $0x2b0] sm:$0xf]
    %v7893 = vld [vmem:[#allocation5 + $0x2b4] sm:$0xf]
    %v7894 = vld [vmem:[#allocation5 + $0x2b8] sm:$0xf]
    %v7895 = vld [vmem:[#allocation5 + $0x2bc] sm:$0xf]
    %v7896 = vld [vmem:[#allocation5 + $0x2c0] sm:$0xf]
    %v7897 = vld [vmem:[#allocation5 + $0x2c4] sm:$0xf]
    %v7898 = vld [vmem:[#allocation5 + $0x2c8] sm:$0xf]
    %v7899 = vld [vmem:[#allocation5 + $0x2cc] sm:$0xf]
    %v7900 = vld [vmem:[#allocation5 + $0x2d0] sm:$0xf]
    %v7901 = vld [vmem:[#allocation5 + $0x2d4] sm:$0xf]
    %v7902 = vld [vmem:[#allocation5 + $0x2d8] sm:$0xf]
    %v7903 = vld [vmem:[#allocation5 + $0x2dc] sm:$0xf]
    %v7904 = vld [vmem:[#allocation5 + $0x2e0] sm:$0xf]
    %v7905 = vld [vmem:[#allocation5 + $0x2e4] sm:$0xf]
    %v7906 = vld [vmem:[#allocation5 + $0x2e8] sm:$0xf]
    %v7907 = vld [vmem:[#allocation5 + $0x2ec] sm:$0xf]
    %v7908 = vld [vmem:[#allocation5 + $0x2f0] sm:$0xf]
    %v7909 = vld [vmem:[#allocation5 + $0x2f4] sm:$0xf]
    %v7910 = vld [vmem:[#allocation5 + $0x2f8] sm:$0xf]
    %v7911 = vld [vmem:[#allocation5 + $0x2fc] sm:$0xf]
    %v7912 = vld [vmem:[#allocation5 + $0x300] sm:$0xf]
    %v7913 = vld [vmem:[#allocation5 + $0x304] sm:$0xf]
    %v7914 = vld [vmem:[#allocation5 + $0x308] sm:$0xf]
    %v7915 = vld [vmem:[#allocation5 + $0x30c] sm:$0xf]
    %v7916 = vld [vmem:[#allocation5 + $0x310] sm:$0xf]
    %v7917 = vld [vmem:[#allocation5 + $0x314] sm:$0xf]
    %v7918 = vld [vmem:[#allocation5 + $0x318] sm:$0xf]
    %v7919 = vld [vmem:[#allocation5 + $0x31c] sm:$0xf]
    %v7920 = vld [vmem:[#allocation5 + $0x320] sm:$0xf]
    %v7921 = vld [vmem:[#allocation5 + $0x324] sm:$0xf]
    %v7922 = vld [vmem:[#allocation5 + $0x328] sm:$0xf]
    %v7923 = vld [vmem:[#allocation5 + $0x32c] sm:$0xf]
    %v7924 = vld [vmem:[#allocation5 + $0x330] sm:$0xf]
    %v7925 = vld [vmem:[#allocation5 + $0x334] sm:$0xf]
    %v7926 = vld [vmem:[#allocation5 + $0x338] sm:$0xf]
    %v7927 = vld [vmem:[#allocation5 + $0x33c] sm:$0xf]
    %v7928 = vld [vmem:[#allocation5 + $0x340] sm:$0xf]
    %v7929 = vld [vmem:[#allocation5 + $0x344] sm:$0xf]
    %v7930 = vld [vmem:[#allocation5 + $0x348] sm:$0xf]
    %v7931 = vld [vmem:[#allocation5 + $0x34c] sm:$0xf]
    %v7932 = vld [vmem:[#allocation5 + $0x350] sm:$0xf]
    %v7933 = vld [vmem:[#allocation5 + $0x354] sm:$0xf]
    %v7934 = vld [vmem:[#allocation5 + $0x358] sm:$0xf]
    %v7935 = vld [vmem:[#allocation5 + $0x35c] sm:$0xf]
    %v7936 = vld [vmem:[#allocation5 + $0x360] sm:$0xf]
    %v7937 = vld [vmem:[#allocation5 + $0x364] sm:$0xf]
    %v7938 = vld [vmem:[#allocation5 + $0x368] sm:$0xf]
    %v7939 = vld [vmem:[#allocation5 + $0x36c] sm:$0xf]
    %v7940 = vld [vmem:[#allocation5 + $0x370] sm:$0xf]
    %v7941 = vld [vmem:[#allocation5 + $0x374] sm:$0xf]
    %v7942 = vld [vmem:[#allocation5 + $0x378] sm:$0xf]
    %v7943 = vld [vmem:[#allocation5 + $0x37c] sm:$0xf]
    %v7944 = vld [vmem:[#allocation5 + $0x380] sm:$0xf]
    %v7945 = vld [vmem:[#allocation5 + $0x384] sm:$0xf]
    %v7946 = vld [vmem:[#allocation5 + $0x388] sm:$0xf]
    %v7947 = vld [vmem:[#allocation5 + $0x38c] sm:$0xf]
    %v7948 = vld [vmem:[#allocation5 + $0x390] sm:$0xf]
    %v7949 = vld [vmem:[#allocation5 + $0x394] sm:$0xf]
    %v7950 = vld [vmem:[#allocation5 + $0x398] sm:$0xf]
    %v7951 = vld [vmem:[#allocation5 + $0x39c] sm:$0xf]
    %v7952 = vld [vmem:[#allocation5 + $0x3a0] sm:$0xf]
    %v7953 = vld [vmem:[#allocation5 + $0x3a4] sm:$0xf]
    %v7954 = vld [vmem:[#allocation5 + $0x3a8] sm:$0xf]
    %v7955 = vld [vmem:[#allocation5 + $0x3ac] sm:$0xf]
    %v7956 = vld [vmem:[#allocation5 + $0x3b0] sm:$0xf]
    %v7957 = vld [vmem:[#allocation5 + $0x3b4] sm:$0xf]
    %v7958 = vld [vmem:[#allocation5 + $0x3b8] sm:$0xf]
    %v7959 = vld [vmem:[#allocation5 + $0x3bc] sm:$0xf]
    %v7960 = vld [vmem:[#allocation5 + $0x3c0] sm:$0xf]
    %v7961 = vld [vmem:[#allocation5 + $0x3c4] sm:$0xf]
    %v7962 = vld [vmem:[#allocation5 + $0x3c8] sm:$0xf]
    %v7963 = vld [vmem:[#allocation5 + $0x3cc] sm:$0xf]
    %v7964 = vld [vmem:[#allocation5 + $0x3d0] sm:$0xf]
    %v7965 = vld [vmem:[#allocation5 + $0x3d4] sm:$0xf]
    %v7966 = vld [vmem:[#allocation5 + $0x3d8] sm:$0xf]
    %v7967 = vld [vmem:[#allocation5 + $0x3dc] sm:$0xf]
    %v7968 = vld [vmem:[#allocation5 + $0x3e0] sm:$0xf]
    %v7969 = vld [vmem:[#allocation5 + $0x3e4] sm:$0xf]
    %v7970 = vld [vmem:[#allocation5 + $0x3e8] sm:$0xf]
    %v7971 = vld [vmem:[#allocation5 + $0x3ec] sm:$0xf]
    %v7972 = vld [vmem:[#allocation5 + $0x3f0] sm:$0xf]
    %v7973 = vld [vmem:[#allocation5 + $0x3f4] sm:$0xf]
    %v7974 = vld [vmem:[#allocation5 + $0x3f8] sm:$0xf]
    %v7975 = vld [vmem:[#allocation5 + $0x3fc] sm:$0xf]
    %v7976 = vld [vmem:[#allocation5 + $0x400] sm:$0xf]
    %v7977 = vld [vmem:[#allocation5 + $0x404] sm:$0xf]
    %v7978 = vld [vmem:[#allocation5 + $0x408] sm:$0xf]
    %v7979 = vld [vmem:[#allocation5 + $0x40c] sm:$0xf]
    %v7980 = vld [vmem:[#allocation5 + $0x410] sm:$0xf]
    %v7981 = vld [vmem:[#allocation5 + $0x414] sm:$0xf]
    %v7982 = vld [vmem:[#allocation5 + $0x418] sm:$0xf]
    %v7983 = vld [vmem:[#allocation5 + $0x41c] sm:$0xf]
    %v7984 = vld [vmem:[#allocation5 + $0x420] sm:$0xf]
    %v7985 = vld [vmem:[#allocation5 + $0x424] sm:$0xf]
    %v7986 = vld [vmem:[#allocation5 + $0x428] sm:$0xf]
    %v7987 = vld [vmem:[#allocation5 + $0x42c] sm:$0xf]
    %v7988 = vld [vmem:[#allocation5 + $0x430] sm:$0xf]
    %v7989 = vld [vmem:[#allocation5 + $0x434] sm:$0xf]
    %v7990 = vld [vmem:[#allocation5 + $0x438] sm:$0xf]
    %v7991 = vld [vmem:[#allocation5 + $0x43c] sm:$0xf]
    %v7992 = vld [vmem:[#allocation5 + $0x440] sm:$0xf]
    %v7993 = vld [vmem:[#allocation5 + $0x444] sm:$0xf]
    %v7994 = vld [vmem:[#allocation5 + $0x448] sm:$0xf]
    %v7995 = vld [vmem:[#allocation5 + $0x44c] sm:$0xf]
    %v7996 = vld [vmem:[#allocation5 + $0x450] sm:$0xf]
    %v7997 = vld [vmem:[#allocation5 + $0x454] sm:$0xf]
    %v7998 = vld [vmem:[#allocation5 + $0x458] sm:$0xf]
    %v7999 = vld [vmem:[#allocation5 + $0x45c] sm:$0xf]
    %v8000 = vld [vmem:[#allocation5 + $0x460] sm:$0xf]
    %v8001 = vld [vmem:[#allocation5 + $0x464] sm:$0xf]
    %v8002 = vld [vmem:[#allocation5 + $0x468] sm:$0xf]
    %v8003 = vld [vmem:[#allocation5 + $0x46c] sm:$0xf]
    %v8004 = vld [vmem:[#allocation5 + $0x470] sm:$0xf]
    %v8005 = vld [vmem:[#allocation5 + $0x474] sm:$0xf]
    %v8006 = vld [vmem:[#allocation5 + $0x478] sm:$0xf]
    %v8007 = vld [vmem:[#allocation5 + $0x47c] sm:$0xf]
    %v8008 = vld [vmem:[#allocation5 + $0x480] sm:$0xf]
    %v8009 = vld [vmem:[#allocation5 + $0x484] sm:$0xf]
    %v8010 = vld [vmem:[#allocation5 + $0x488] sm:$0xf]
    %v8011 = vld [vmem:[#allocation5 + $0x48c] sm:$0xf]
    %v8012 = vld [vmem:[#allocation5 + $0x490] sm:$0xf]
    %v8013 = vld [vmem:[#allocation5 + $0x494] sm:$0xf]
    %v8014 = vld [vmem:[#allocation5 + $0x498] sm:$0xf]
    %v8015 = vld [vmem:[#allocation5 + $0x49c] sm:$0xf]
    %v8016 = vld [vmem:[#allocation5 + $0x4a0] sm:$0xf]
    %v8017 = vld [vmem:[#allocation5 + $0x4a4] sm:$0xf]
    %v8018 = vld [vmem:[#allocation5 + $0x4a8] sm:$0xf]
    %v8019 = vld [vmem:[#allocation5 + $0x4ac] sm:$0xf]
    %v8020 = vld [vmem:[#allocation5 + $0x4b0] sm:$0xf]
    %v8021 = vld [vmem:[#allocation5 + $0x4b4] sm:$0xf]
    %v8022 = vld [vmem:[#allocation5 + $0x4b8] sm:$0xf]
    %v8023 = vld [vmem:[#allocation5 + $0x4bc] sm:$0xf]
    %v8024 = vld [vmem:[#allocation5 + $0x4c0] sm:$0xf]
    %v8025 = vld [vmem:[#allocation5 + $0x4c4] sm:$0xf]
    %v8026 = vld [vmem:[#allocation5 + $0x4c8] sm:$0xf]
    %v8027 = vld [vmem:[#allocation5 + $0x4cc] sm:$0xf]
    %v8028 = vld [vmem:[#allocation5 + $0x4d0] sm:$0xf]
    %v8029 = vld [vmem:[#allocation5 + $0x4d4] sm:$0xf]
    %v8030 = vld [vmem:[#allocation5 + $0x4d8] sm:$0xf]
    %v8031 = vld [vmem:[#allocation5 + $0x4dc] sm:$0xf]
    %v8032 = vld [vmem:[#allocation5 + $0x4e0] sm:$0xf]
    %v8033 = vld [vmem:[#allocation5 + $0x4e4] sm:$0xf]
    %v8034 = vld [vmem:[#allocation5 + $0x4e8] sm:$0xf]
    %v8035 = vld [vmem:[#allocation5 + $0x4ec] sm:$0xf]
    %v8036 = vld [vmem:[#allocation5 + $0x4f0] sm:$0xf]
    %v8037 = vld [vmem:[#allocation5 + $0x4f4] sm:$0xf]
    %v8038 = vld [vmem:[#allocation5 + $0x4f8] sm:$0xf]
    %v8039 = vld [vmem:[#allocation5 + $0x4fc] sm:$0xf]
    %v8040 = vld [vmem:[#allocation5 + $0x500] sm:$0xf]
    %v8041 = vld [vmem:[#allocation5 + $0x504] sm:$0xf]
    %v8042 = vld [vmem:[#allocation5 + $0x508] sm:$0xf]
    %v8043 = vld [vmem:[#allocation5 + $0x50c] sm:$0xf]
    %v8044 = vld [vmem:[#allocation5 + $0x510] sm:$0xf]
    %v8045 = vld [vmem:[#allocation5 + $0x514] sm:$0xf]
    %v8046 = vld [vmem:[#allocation5 + $0x518] sm:$0xf]
    %v8047 = vld [vmem:[#allocation5 + $0x51c] sm:$0xf]
    %v8048 = vld [vmem:[#allocation5 + $0x520] sm:$0xf]
    %v8049 = vld [vmem:[#allocation5 + $0x524] sm:$0xf]
    %v8050 = vld [vmem:[#allocation5 + $0x528] sm:$0xf]
    %v8051 = vld [vmem:[#allocation5 + $0x52c] sm:$0xf]
    %v8052 = vld [vmem:[#allocation5 + $0x530] sm:$0xf]
    %v8053 = vld [vmem:[#allocation5 + $0x534] sm:$0xf]
    %v8054 = vld [vmem:[#allocation5 + $0x538] sm:$0xf]
    %v8055 = vld [vmem:[#allocation5 + $0x53c] sm:$0xf]
    %v8056 = vld [vmem:[#allocation5 + $0x540] sm:$0xf]
    %v8057 = vld [vmem:[#allocation5 + $0x544] sm:$0xf]
    %v8058 = vld [vmem:[#allocation5 + $0x548] sm:$0xf]
    %v8059 = vld [vmem:[#allocation5 + $0x54c] sm:$0xf]
    %v8060 = vld [vmem:[#allocation5 + $0x550] sm:$0xf]
    %v8061 = vld [vmem:[#allocation5 + $0x554] sm:$0xf]
    %v8062 = vld [vmem:[#allocation5 + $0x558] sm:$0xf]
    %v8063 = vld [vmem:[#allocation5 + $0x55c] sm:$0xf]
    %v8064 = vld [vmem:[#allocation5 + $0x560] sm:$0xf]
    %v8065 = vld [vmem:[#allocation5 + $0x564] sm:$0xf]
    %v8066 = vld [vmem:[#allocation5 + $0x568] sm:$0xf]
    %v8067 = vld [vmem:[#allocation5 + $0x56c] sm:$0xf]
    %v8068 = vld [vmem:[#allocation5 + $0x570] sm:$0xf]
    %v8069 = vld [vmem:[#allocation5 + $0x574] sm:$0xf]
    %v8070 = vld [vmem:[#allocation5 + $0x578] sm:$0xf]
    %v8071 = vld [vmem:[#allocation5 + $0x57c] sm:$0xf]
    %v8072 = vld [vmem:[#allocation5 + $0x580] sm:$0xf]
    %v8073 = vld [vmem:[#allocation5 + $0x584] sm:$0xf]
    %v8074 = vld [vmem:[#allocation5 + $0x588] sm:$0xf]
    %v8075 = vld [vmem:[#allocation5 + $0x58c] sm:$0xf]
    %v8076 = vld [vmem:[#allocation5 + $0x590] sm:$0xf]
    %v8077 = vld [vmem:[#allocation5 + $0x594] sm:$0xf]
    %v8078 = vld [vmem:[#allocation5 + $0x598] sm:$0xf]
    %v8079 = vld [vmem:[#allocation5 + $0x59c] sm:$0xf]
    %v8080 = vld [vmem:[#allocation5 + $0x5a0] sm:$0xf]
    %v8081 = vld [vmem:[#allocation5 + $0x5a4] sm:$0xf]
    %v8082 = vld [vmem:[#allocation5 + $0x5a8] sm:$0xf]
    %v8083 = vld [vmem:[#allocation5 + $0x5ac] sm:$0xf]
    %v8084 = vld [vmem:[#allocation5 + $0x5b0] sm:$0xf]
    %v8085 = vld [vmem:[#allocation5 + $0x5b4] sm:$0xf]
    %v8086 = vld [vmem:[#allocation5 + $0x5b8] sm:$0xf]
    %v8087 = vld [vmem:[#allocation5 + $0x5bc] sm:$0xf]
    %v8088 = vld [vmem:[#allocation5 + $0x5c0] sm:$0xf]
    %v8089 = vld [vmem:[#allocation5 + $0x5c4] sm:$0xf]
    %v8090 = vld [vmem:[#allocation5 + $0x5c8] sm:$0xf]
    %v8091 = vld [vmem:[#allocation5 + $0x5cc] sm:$0xf]
    %v8092 = vld [vmem:[#allocation5 + $0x5d0] sm:$0xf]
    %v8093 = vld [vmem:[#allocation5 + $0x5d4] sm:$0xf]
    %v8094 = vld [vmem:[#allocation5 + $0x5d8] sm:$0xf]
    %v8095 = vld [vmem:[#allocation5 + $0x5dc] sm:$0xf]
    %v8096 = vld [vmem:[#allocation5 + $0x5e0] sm:$0xf]
    %v8097 = vld [vmem:[#allocation5 + $0x5e4] sm:$0xf]
    %v8098 = vld [vmem:[#allocation5 + $0x5e8] sm:$0xf]
    %v8099 = vld [vmem:[#allocation5 + $0x5ec] sm:$0xf]
    %v8100 = vld [vmem:[#allocation5 + $0x5f0] sm:$0xf]
    %v8101 = vld [vmem:[#allocation5 + $0x5f4] sm:$0xf]
    %v8102 = vld [vmem:[#allocation5 + $0x5f8] sm:$0xf]
    %v8103 = vld [vmem:[#allocation5 + $0x5fc] sm:$0xf]
    %v8104 = vld [vmem:[#allocation5 + $0x600] sm:$0xf]
    %v8105 = vld [vmem:[#allocation5 + $0x604] sm:$0xf]
    %v8106 = vld [vmem:[#allocation5 + $0x608] sm:$0xf]
    %v8107 = vld [vmem:[#allocation5 + $0x60c] sm:$0xf]
    %v8108 = vld [vmem:[#allocation5 + $0x610] sm:$0xf]
    %v8109 = vld [vmem:[#allocation5 + $0x614] sm:$0xf]
    %v8110 = vld [vmem:[#allocation5 + $0x618] sm:$0xf]
    %v8111 = vld [vmem:[#allocation5 + $0x61c] sm:$0xf]
    %v8112 = vld [vmem:[#allocation5 + $0x620] sm:$0xf]
    %v8113 = vld [vmem:[#allocation5 + $0x624] sm:$0xf]
    %v8114 = vld [vmem:[#allocation5 + $0x628] sm:$0xf]
    %v8115 = vld [vmem:[#allocation5 + $0x62c] sm:$0xf]
    %v8116 = vld [vmem:[#allocation5 + $0x630] sm:$0xf]
    %v8117 = vld [vmem:[#allocation5 + $0x634] sm:$0xf]
    %v8118 = vld [vmem:[#allocation5 + $0x638] sm:$0xf]
    %v8119 = vld [vmem:[#allocation5 + $0x63c] sm:$0xf]
    %v8120 = vld [vmem:[#allocation5 + $0x640] sm:$0xf]
    %v8121 = vld [vmem:[#allocation5 + $0x644] sm:$0xf]
    %v8122 = vld [vmem:[#allocation5 + $0x648] sm:$0xf]
    %v8123 = vld [vmem:[#allocation5 + $0x64c] sm:$0xf]
    %v8124 = vld [vmem:[#allocation5 + $0x650] sm:$0xf]
    %v8125 = vld [vmem:[#allocation5 + $0x654] sm:$0xf]
    %v8126 = vld [vmem:[#allocation5 + $0x658] sm:$0xf]
    %v8127 = vld [vmem:[#allocation5 + $0x65c] sm:$0xf]
    %v8128 = vld [vmem:[#allocation5 + $0x660] sm:$0xf]
    %v8129 = vld [vmem:[#allocation5 + $0x664] sm:$0xf]
    %v8130 = vld [vmem:[#allocation5 + $0x668] sm:$0xf]
    %v8131 = vld [vmem:[#allocation5 + $0x66c] sm:$0xf]
    %v8132 = vld [vmem:[#allocation5 + $0x670] sm:$0xf]
    %v8133 = vld [vmem:[#allocation5 + $0x674] sm:$0xf]
    %v8134 = vld [vmem:[#allocation5 + $0x678] sm:$0xf]
    %v8135 = vld [vmem:[#allocation5 + $0x67c] sm:$0xf]
    %v8136 = vld [vmem:[#allocation5 + $0x680] sm:$0xf]
    %v8137 = vld [vmem:[#allocation5 + $0x684] sm:$0xf]
    %v8138 = vld [vmem:[#allocation5 + $0x688] sm:$0xf]
    %v8139 = vld [vmem:[#allocation5 + $0x68c] sm:$0xf]
    %v8140 = vld [vmem:[#allocation5 + $0x690] sm:$0xf]
    %v8141 = vld [vmem:[#allocation5 + $0x694] sm:$0xf]
    %v8142 = vld [vmem:[#allocation5 + $0x698] sm:$0xf]
    %v8143 = vld [vmem:[#allocation5 + $0x69c] sm:$0xf]
    %v8144 = vld [vmem:[#allocation5 + $0x6a0] sm:$0xf]
    %v8145 = vld [vmem:[#allocation5 + $0x6a4] sm:$0xf]
    %v8146 = vld [vmem:[#allocation5 + $0x6a8] sm:$0xf]
    %v8147 = vld [vmem:[#allocation5 + $0x6ac] sm:$0xf]
    %v8148 = vld [vmem:[#allocation5 + $0x6b0] sm:$0xf]
    %v8149 = vld [vmem:[#allocation5 + $0x6b4] sm:$0xf]
    %v8150 = vld [vmem:[#allocation5 + $0x6b8] sm:$0xf]
    %v8151 = vld [vmem:[#allocation5 + $0x6bc] sm:$0xf]
    %v8152 = vld [vmem:[#allocation5 + $0x6c0] sm:$0xf]
    %v8153 = vld [vmem:[#allocation5 + $0x6c4] sm:$0xf]
    %v8154 = vld [vmem:[#allocation5 + $0x6c8] sm:$0xf]
    %v8155 = vld [vmem:[#allocation5 + $0x6cc] sm:$0xf]
    %v8156 = vld [vmem:[#allocation5 + $0x6d0] sm:$0xf]
    %v8157 = vld [vmem:[#allocation5 + $0x6d4] sm:$0xf]
    %v8158 = vld [vmem:[#allocation5 + $0x6d8] sm:$0xf]
    %v8159 = vld [vmem:[#allocation5 + $0x6dc] sm:$0xf]
    %v8160 = vld [vmem:[#allocation5 + $0x6e0] sm:$0xf]
    %v8161 = vld [vmem:[#allocation5 + $0x6e4] sm:$0xf]
    %v8162 = vld [vmem:[#allocation5 + $0x6e8] sm:$0xf]
    %v8163 = vld [vmem:[#allocation5 + $0x6ec] sm:$0xf]
    %v8164 = vld [vmem:[#allocation5 + $0x6f0] sm:$0xf]
    %v8165 = vld [vmem:[#allocation5 + $0x6f4] sm:$0xf]
    %v8166 = vld [vmem:[#allocation5 + $0x6f8] sm:$0xf]
    %v8167 = vld [vmem:[#allocation5 + $0x6fc] sm:$0xf]
    %v8168 = vld [vmem:[#allocation5 + $0x700] sm:$0xf]
    %v8169 = vld [vmem:[#allocation5 + $0x704] sm:$0xf]
    %v8170 = vld [vmem:[#allocation5 + $0x708] sm:$0xf]
    %v8171 = vld [vmem:[#allocation5 + $0x70c] sm:$0xf]
    %v8172 = vld [vmem:[#allocation5 + $0x710] sm:$0xf]
    %v8173 = vld [vmem:[#allocation5 + $0x714] sm:$0xf]
    %v8174 = vld [vmem:[#allocation5 + $0x718] sm:$0xf]
    %v8175 = vld [vmem:[#allocation5 + $0x71c] sm:$0xf]
    %v8176 = vld [vmem:[#allocation5 + $0x720] sm:$0xf]
    %v8177 = vld [vmem:[#allocation5 + $0x724] sm:$0xf]
    %v8178 = vld [vmem:[#allocation5 + $0x728] sm:$0xf]
    %v8179 = vld [vmem:[#allocation5 + $0x72c] sm:$0xf]
    %v8180 = vld [vmem:[#allocation5 + $0x730] sm:$0xf]
    %v8181 = vld [vmem:[#allocation5 + $0x734] sm:$0xf]
    %v8182 = vld [vmem:[#allocation5 + $0x738] sm:$0xf]
    %v8183 = vld [vmem:[#allocation5 + $0x73c] sm:$0xf]
    %v8184 = vld [vmem:[#allocation5 + $0x740] sm:$0xf]
    %v8185 = vld [vmem:[#allocation5 + $0x744] sm:$0xf]
    %v8186 = vld [vmem:[#allocation5 + $0x748] sm:$0xf]
    %v8187 = vld [vmem:[#allocation5 + $0x74c] sm:$0xf]
    %v8188 = vld [vmem:[#allocation5 + $0x750] sm:$0xf]
    %v8189 = vld [vmem:[#allocation5 + $0x754] sm:$0xf]
    %v8190 = vld [vmem:[#allocation5 + $0x758] sm:$0xf]
    %v8191 = vld [vmem:[#allocation5 + $0x75c] sm:$0xf]
    %v8192 = vld [vmem:[#allocation5 + $0x760] sm:$0xf]
    %v8193 = vld [vmem:[#allocation5 + $0x764] sm:$0xf]
    %v8194 = vld [vmem:[#allocation5 + $0x768] sm:$0xf]
    %v8195 = vld [vmem:[#allocation5 + $0x76c] sm:$0xf]
    %v8196 = vld [vmem:[#allocation5 + $0x770] sm:$0xf]
    %v8197 = vld [vmem:[#allocation5 + $0x774] sm:$0xf]
    %v8198 = vld [vmem:[#allocation5 + $0x778] sm:$0xf]
    %v8199 = vld [vmem:[#allocation5 + $0x77c] sm:$0xf]
    %v8200 = vld [vmem:[#allocation5 + $0x780] sm:$0xf]
    %v8201 = vld [vmem:[#allocation5 + $0x784] sm:$0xf]
    %v8202 = vld [vmem:[#allocation5 + $0x788] sm:$0xf]
    %v8203 = vld [vmem:[#allocation5 + $0x78c] sm:$0xf]
    %v8204 = vld [vmem:[#allocation5 + $0x790] sm:$0xf]
    %v8205 = vld [vmem:[#allocation5 + $0x794] sm:$0xf]
    %v8206 = vld [vmem:[#allocation5 + $0x798] sm:$0xf]
    %v8207 = vld [vmem:[#allocation5 + $0x79c] sm:$0xf]
    %v8208 = vld [vmem:[#allocation5 + $0x7a0] sm:$0xf]
    %v8209 = vld [vmem:[#allocation5 + $0x7a4] sm:$0xf]
    %v8210 = vld [vmem:[#allocation5 + $0x7a8] sm:$0xf]
    %v8211 = vld [vmem:[#allocation5 + $0x7ac] sm:$0xf]
    %v8212 = vld [vmem:[#allocation5 + $0x7b0] sm:$0xf]
    %v8213 = vld [vmem:[#allocation5 + $0x7b4] sm:$0xf]
    %v8214 = vld [vmem:[#allocation5 + $0x7b8] sm:$0xf]
    %v8215 = vld [vmem:[#allocation5 + $0x7bc] sm:$0xf]
    %v8216 = vld [vmem:[#allocation5 + $0x7c0] sm:$0xf]
    %v8217 = vld [vmem:[#allocation5 + $0x7c4] sm:$0xf]
    %v8218 = vld [vmem:[#allocation5 + $0x7c8] sm:$0xf]
    %v8219 = vld [vmem:[#allocation5 + $0x7cc] sm:$0xf]
    %v8220 = vld [vmem:[#allocation5 + $0x7d0] sm:$0xf]
    %v8221 = vld [vmem:[#allocation5 + $0x7d4] sm:$0xf]
    %v8222 = vld [vmem:[#allocation5 + $0x7d8] sm:$0xf]
    %v8223 = vld [vmem:[#allocation5 + $0x7dc] sm:$0xf]
    %v8224 = vld [vmem:[#allocation5 + $0x7e0] sm:$0xf]
    %v8225 = vld [vmem:[#allocation5 + $0x7e4] sm:$0xf]
    %v8226 = vld [vmem:[#allocation5 + $0x7e8] sm:$0xf]
    %v8227 = vld [vmem:[#allocation5 + $0x7ec] sm:$0xf]
    %v8228 = vld [vmem:[#allocation5 + $0x7f0] sm:$0xf]
    %v8229 = vld [vmem:[#allocation5 + $0x7f4] sm:$0xf]
    %v8230 = vld [vmem:[#allocation5 + $0x7f8] sm:$0xf]
    %v8231 = vld [vmem:[#allocation5 + $0x7fc] sm:$0xf]
    %v8232 = vld [vmem:[%s6] sm:$0x1]
    %v8234 = vlaneseq
    %v8235 = vshrl.u32 %v8234, 7
    %v8236 = vsub.s32 0, %v8235
    %v8237 = vrot.slane %v8232, %v8236
    %v8243 = vcombine.high %v7716, %v7716
    %v8245 = vunpack.c.l.s4 1966171168
    %v8246 = vunpack.c.0.s8 %v8245
    %v8247 = vlaneseq
    %v8248 = vshrl.u32 %v8247, 7
    %v8249 = vsub.s32 %v8246, %v8248
    %v8250 = vrot.slane %v7716, %v8249
    %v8252 = vunpack.c.l.s4 1966171168
    %v8253 = vunpack.c.0.s8 %v8252
    %v8254 = vlaneseq
    %v8255 = vshrl.u32 %v8254, 7
    %v8256 = vsub.s32 %v8253, %v8255
    %v8257 = vrot.slane %v8243, %v8256
    %v8258 = vcombine.high %v8250, %v8250
    %v8259 = vcombine.high %v8257, %v8257
    %v8261 = vunpack.c.l.s4 1966171168
    %v8262 = vunpack.c.0.s8 %v8261
    %v8263 = vlaneseq
    %v8264 = vshrl.u32 %v8263, 7
    %v8265 = vsub.s32 %v8262, %v8264
    %v8266 = vrot.slane %v8250, %v8265
    %v8268 = vunpack.c.l.s4 1966171168
    %v8269 = vunpack.c.0.s8 %v8268
    %v8270 = vlaneseq
    %v8271 = vshrl.u32 %v8270, 7
    %v8272 = vsub.s32 %v8269, %v8271
    %v8273 = vrot.slane %v8257, %v8272
    %v8275 = vunpack.c.l.s4 1966171168
    %v8276 = vunpack.c.0.s8 %v8275
    %v8277 = vlaneseq
    %v8278 = vshrl.u32 %v8277, 7
    %v8279 = vsub.s32 %v8276, %v8278
    %v8280 = vrot.slane %v8258, %v8279
    %v8282 = vunpack.c.l.s4 1966171168
    %v8283 = vunpack.c.0.s8 %v8282
    %v8284 = vlaneseq
    %v8285 = vshrl.u32 %v8284, 7
    %v8286 = vsub.s32 %v8283, %v8285
    %v8287 = vrot.slane %v8259, %v8286
    %v8288 = vcombine.high %v8266, %v8266
    %v8289 = vcombine.high %v8273, %v8273
    %v8290 = vcombine.high %v8280, %v8280
    %v8291 = vcombine.high %v8287, %v8287
    %v8292 = vcombine.high %v7717, %v7717
    %v8294 = vunpack.c.l.s4 1966171168
    %v8295 = vunpack.c.0.s8 %v8294
    %v8296 = vlaneseq
    %v8297 = vshrl.u32 %v8296, 7
    %v8298 = vsub.s32 %v8295, %v8297
    %v8299 = vrot.slane %v7717, %v8298
    %v8301 = vunpack.c.l.s4 1966171168
    %v8302 = vunpack.c.0.s8 %v8301
    %v8303 = vlaneseq
    %v8304 = vshrl.u32 %v8303, 7
    %v8305 = vsub.s32 %v8302, %v8304
    %v8306 = vrot.slane %v8292, %v8305
    %v8307 = vcombine.high %v8299, %v8299
    %v8308 = vcombine.high %v8306, %v8306
    %v8310 = vunpack.c.l.s4 1966171168
    %v8311 = vunpack.c.0.s8 %v8310
    %v8312 = vlaneseq
    %v8313 = vshrl.u32 %v8312, 7
    %v8314 = vsub.s32 %v8311, %v8313
    %v8315 = vrot.slane %v8299, %v8314
    %v8317 = vunpack.c.l.s4 1966171168
    %v8318 = vunpack.c.0.s8 %v8317
    %v8319 = vlaneseq
    %v8320 = vshrl.u32 %v8319, 7
    %v8321 = vsub.s32 %v8318, %v8320
    %v8322 = vrot.slane %v8306, %v8321
    %v8324 = vunpack.c.l.s4 1966171168
    %v8325 = vunpack.c.0.s8 %v8324
    %v8326 = vlaneseq
    %v8327 = vshrl.u32 %v8326, 7
    %v8328 = vsub.s32 %v8325, %v8327
    %v8329 = vrot.slane %v8307, %v8328
    %v8331 = vunpack.c.l.s4 1966171168
    %v8332 = vunpack.c.0.s8 %v8331
    %v8333 = vlaneseq
    %v8334 = vshrl.u32 %v8333, 7
    %v8335 = vsub.s32 %v8332, %v8334
    %v8336 = vrot.slane %v8308, %v8335
    %v8337 = vcombine.high %v8315, %v8315
    %v8338 = vcombine.high %v8322, %v8322
    %v8339 = vcombine.high %v8329, %v8329
    %v8340 = vcombine.high %v8336, %v8336
    %v8341 = vcombine.high %v7718, %v7718
    %v8343 = vunpack.c.l.s4 1966171168
    %v8344 = vunpack.c.0.s8 %v8343
    %v8345 = vlaneseq
    %v8346 = vshrl.u32 %v8345, 7
    %v8347 = vsub.s32 %v8344, %v8346
    %v8348 = vrot.slane %v7718, %v8347
    %v8350 = vunpack.c.l.s4 1966171168
    %v8351 = vunpack.c.0.s8 %v8350
    %v8352 = vlaneseq
    %v8353 = vshrl.u32 %v8352, 7
    %v8354 = vsub.s32 %v8351, %v8353
    %v8355 = vrot.slane %v8341, %v8354
    %v8356 = vcombine.high %v8348, %v8348
    %v8357 = vcombine.high %v8355, %v8355
    %v8359 = vunpack.c.l.s4 1966171168
    %v8360 = vunpack.c.0.s8 %v8359
    %v8361 = vlaneseq
    %v8362 = vshrl.u32 %v8361, 7
    %v8363 = vsub.s32 %v8360, %v8362
    %v8364 = vrot.slane %v8348, %v8363
    %v8366 = vunpack.c.l.s4 1966171168
    %v8367 = vunpack.c.0.s8 %v8366
    %v8368 = vlaneseq
    %v8369 = vshrl.u32 %v8368, 7
    %v8370 = vsub.s32 %v8367, %v8369
    %v8371 = vrot.slane %v8355, %v8370
    %v8373 = vunpack.c.l.s4 1966171168
    %v8374 = vunpack.c.0.s8 %v8373
    %v8375 = vlaneseq
    %v8376 = vshrl.u32 %v8375, 7
    %v8377 = vsub.s32 %v8374, %v8376
    %v8378 = vrot.slane %v8356, %v8377
    %v8380 = vunpack.c.l.s4 1966171168
    %v8381 = vunpack.c.0.s8 %v8380
    %v8382 = vlaneseq
    %v8383 = vshrl.u32 %v8382, 7
    %v8384 = vsub.s32 %v8381, %v8383
    %v8385 = vrot.slane %v8357, %v8384
    %v8386 = vcombine.high %v8364, %v8364
    %v8387 = vcombine.high %v8371, %v8371
    %v8388 = vcombine.high %v8378, %v8378
    %v8389 = vcombine.high %v8385, %v8385
    %v8390 = vcombine.high %v7719, %v7719
    %v8392 = vunpack.c.l.s4 1966171168
    %v8393 = vunpack.c.0.s8 %v8392
    %v8394 = vlaneseq
    %v8395 = vshrl.u32 %v8394, 7
    %v8396 = vsub.s32 %v8393, %v8395
    %v8397 = vrot.slane %v7719, %v8396
    %v8399 = vunpack.c.l.s4 1966171168
    %v8400 = vunpack.c.0.s8 %v8399
    %v8401 = vlaneseq
    %v8402 = vshrl.u32 %v8401, 7
    %v8403 = vsub.s32 %v8400, %v8402
    %v8404 = vrot.slane %v8390, %v8403
    %v8405 = vcombine.high %v8397, %v8397
    %v8406 = vcombine.high %v8404, %v8404
    %v8408 = vunpack.c.l.s4 1966171168
    %v8409 = vunpack.c.0.s8 %v8408
    %v8410 = vlaneseq
    %v8411 = vshrl.u32 %v8410, 7
    %v8412 = vsub.s32 %v8409, %v8411
    %v8413 = vrot.slane %v8397, %v8412
    %v8415 = vunpack.c.l.s4 1966171168
    %v8416 = vunpack.c.0.s8 %v8415
    %v8417 = vlaneseq
    %v8418 = vshrl.u32 %v8417, 7
    %v8419 = vsub.s32 %v8416, %v8418
    %v8420 = vrot.slane %v8404, %v8419
    %v8422 = vunpack.c.l.s4 1966171168
    %v8423 = vunpack.c.0.s8 %v8422
    %v8424 = vlaneseq
    %v8425 = vshrl.u32 %v8424, 7
    %v8426 = vsub.s32 %v8423, %v8425
    %v8427 = vrot.slane %v8405, %v8426
    %v8429 = vunpack.c.l.s4 1966171168
    %v8430 = vunpack.c.0.s8 %v8429
    %v8431 = vlaneseq
    %v8432 = vshrl.u32 %v8431, 7
    %v8433 = vsub.s32 %v8430, %v8432
    %v8434 = vrot.slane %v8406, %v8433
    %v8435 = vcombine.high %v8413, %v8413
    %v8436 = vcombine.high %v8420, %v8420
    %v8437 = vcombine.high %v8427, %v8427
    %v8438 = vcombine.high %v8434, %v8434
    %v8983 = vunpack.c.l.b16 %v7720
    %v8984 = vunpack.c.l.b16 %v7721
    %v8985 = vunpack.c.l.b16 %v7722
    %v8986 = vunpack.c.l.b16 %v7723
    %v8987 = vunpack.c.l.b16 %v7724
    %v8988 = vunpack.c.l.b16 %v7725
    %v8989 = vunpack.c.l.b16 %v7726
    %v8990 = vunpack.c.l.b16 %v7727
    %v8991 = vunpack.c.l.b16 %v7728
    %v8992 = vunpack.c.l.b16 %v7729
    %v8993 = vunpack.c.l.b16 %v7730
    %v8994 = vunpack.c.l.b16 %v7731
    %v8995 = vunpack.c.l.b16 %v7732
    %v8996 = vunpack.c.l.b16 %v7733
    %v8997 = vunpack.c.l.b16 %v7734
    %v8998 = vunpack.c.l.b16 %v7735
    %v8999 = vunpack.c.l.b16 %v7736
    %v9000 = vunpack.c.l.b16 %v7737
    %v9001 = vunpack.c.l.b16 %v7738
    %v9002 = vunpack.c.l.b16 %v7739
    %v9003 = vunpack.c.l.b16 %v7740
    %v9004 = vunpack.c.l.b16 %v7741
    %v9005 = vunpack.c.l.b16 %v7742
    %v9006 = vunpack.c.l.b16 %v7743
    %v9007 = vunpack.c.l.b16 %v7744
    %v9008 = vunpack.c.l.b16 %v7745
    %v9009 = vunpack.c.l.b16 %v7746
    %v9010 = vunpack.c.l.b16 %v7747
    %v9011 = vunpack.c.l.b16 %v7748
    %v9012 = vunpack.c.l.b16 %v7749
    %v9013 = vunpack.c.l.b16 %v7750
    %v9014 = vunpack.c.l.b16 %v7751
    %v9015 = vunpack.c.l.b16 %v7752
    %v9016 = vunpack.c.l.b16 %v7753
    %v9017 = vunpack.c.l.b16 %v7754
    %v9018 = vunpack.c.l.b16 %v7755
    %v9019 = vunpack.c.l.b16 %v7756
    %v9020 = vunpack.c.l.b16 %v7757
    %v9021 = vunpack.c.l.b16 %v7758
    %v9022 = vunpack.c.l.b16 %v7759
    %v9023 = vunpack.c.l.b16 %v7760
    %v9024 = vunpack.c.l.b16 %v7761
    %v9025 = vunpack.c.l.b16 %v7762
    %v9026 = vunpack.c.l.b16 %v7763
    %v9027 = vunpack.c.l.b16 %v7764
    %v9028 = vunpack.c.l.b16 %v7765
    %v9029 = vunpack.c.l.b16 %v7766
    %v9030 = vunpack.c.l.b16 %v7767
    %v9031 = vunpack.c.l.b16 %v7768
    %v9032 = vunpack.c.l.b16 %v7769
    %v9033 = vunpack.c.l.b16 %v7770
    %v9034 = vunpack.c.l.b16 %v7771
    %v9035 = vunpack.c.l.b16 %v7772
    %v9036 = vunpack.c.l.b16 %v7773
    %v9037 = vunpack.c.l.b16 %v7774
    %v9038 = vunpack.c.l.b16 %v7775
    %v9039 = vunpack.c.l.b16 %v7776
    %v9040 = vunpack.c.l.b16 %v7777
    %v9041 = vunpack.c.l.b16 %v7778
    %v9042 = vunpack.c.l.b16 %v7779
    %v9043 = vunpack.c.l.b16 %v7780
    %v9044 = vunpack.c.l.b16 %v7781
    %v9045 = vunpack.c.l.b16 %v7782
    %v9046 = vunpack.c.l.b16 %v7783
    %v9047 = vunpack.c.l.b16 %v7784
    %v9048 = vunpack.c.l.b16 %v7785
    %v9049 = vunpack.c.l.b16 %v7786
    %v9050 = vunpack.c.l.b16 %v7787
    %v9051 = vunpack.c.l.b16 %v7788
    %v9052 = vunpack.c.l.b16 %v7789
    %v9053 = vunpack.c.l.b16 %v7790
    %v9054 = vunpack.c.l.b16 %v7791
    %v9055 = vunpack.c.l.b16 %v7792
    %v9056 = vunpack.c.l.b16 %v7793
    %v9057 = vunpack.c.l.b16 %v7794
    %v9058 = vunpack.c.l.b16 %v7795
    %v9059 = vunpack.c.l.b16 %v7796
    %v9060 = vunpack.c.l.b16 %v7797
    %v9061 = vunpack.c.l.b16 %v7798
    %v9062 = vunpack.c.l.b16 %v7799
    %v9063 = vunpack.c.l.b16 %v7800
    %v9064 = vunpack.c.l.b16 %v7801
    %v9065 = vunpack.c.l.b16 %v7802
    %v9066 = vunpack.c.l.b16 %v7803
    %v9067 = vunpack.c.l.b16 %v7804
    %v9068 = vunpack.c.l.b16 %v7805
    %v9069 = vunpack.c.l.b16 %v7806
    %v9070 = vunpack.c.l.b16 %v7807
    %v9071 = vunpack.c.l.b16 %v7808
    %v9072 = vunpack.c.l.b16 %v7809
    %v9073 = vunpack.c.l.b16 %v7810
    %v9074 = vunpack.c.l.b16 %v7811
    %v9075 = vunpack.c.l.b16 %v7812
    %v9076 = vunpack.c.l.b16 %v7813
    %v9077 = vunpack.c.l.b16 %v7814
    %v9078 = vunpack.c.l.b16 %v7815
    %v9079 = vunpack.c.l.b16 %v7816
    %v9080 = vunpack.c.l.b16 %v7817
    %v9081 = vunpack.c.l.b16 %v7818
    %v9082 = vunpack.c.l.b16 %v7819
    %v9083 = vunpack.c.l.b16 %v7820
    %v9084 = vunpack.c.l.b16 %v7821
    %v9085 = vunpack.c.l.b16 %v7822
    %v9086 = vunpack.c.l.b16 %v7823
    %v9087 = vunpack.c.l.b16 %v7824
    %v9088 = vunpack.c.l.b16 %v7825
    %v9089 = vunpack.c.l.b16 %v7826
    %v9090 = vunpack.c.l.b16 %v7827
    %v9091 = vunpack.c.l.b16 %v7828
    %v9092 = vunpack.c.l.b16 %v7829
    %v9093 = vunpack.c.l.b16 %v7830
    %v9094 = vunpack.c.l.b16 %v7831
    %v9095 = vunpack.c.l.b16 %v7832
    %v9096 = vunpack.c.l.b16 %v7833
    %v9097 = vunpack.c.l.b16 %v7834
    %v9098 = vunpack.c.l.b16 %v7835
    %v9099 = vunpack.c.l.b16 %v7836
    %v9100 = vunpack.c.l.b16 %v7837
    %v9101 = vunpack.c.l.b16 %v7838
    %v9102 = vunpack.c.l.b16 %v7839
    %v9103 = vunpack.c.l.b16 %v7840
    %v9104 = vunpack.c.l.b16 %v7841
    %v9105 = vunpack.c.l.b16 %v7842
    %v9106 = vunpack.c.l.b16 %v7843
    %v9107 = vunpack.c.l.b16 %v7844
    %v9108 = vunpack.c.l.b16 %v7845
    %v9109 = vunpack.c.l.b16 %v7846
    %v9110 = vunpack.c.l.b16 %v7847
    %v9111 = vunpack.c.l.b16 %v7848
    %v9112 = vunpack.c.l.b16 %v7849
    %v9113 = vunpack.c.l.b16 %v7850
    %v9114 = vunpack.c.l.b16 %v7851
    %v9115 = vunpack.c.l.b16 %v7852
    %v9116 = vunpack.c.l.b16 %v7853
    %v9117 = vunpack.c.l.b16 %v7854
    %v9118 = vunpack.c.l.b16 %v7855
    %v9119 = vunpack.c.l.b16 %v7856
    %v9120 = vunpack.c.l.b16 %v7857
    %v9121 = vunpack.c.l.b16 %v7858
    %v9122 = vunpack.c.l.b16 %v7859
    %v9123 = vunpack.c.l.b16 %v7860
    %v9124 = vunpack.c.l.b16 %v7861
    %v9125 = vunpack.c.l.b16 %v7862
    %v9126 = vunpack.c.l.b16 %v7863
    %v9127 = vunpack.c.l.b16 %v7864
    %v9128 = vunpack.c.l.b16 %v7865
    %v9129 = vunpack.c.l.b16 %v7866
    %v9130 = vunpack.c.l.b16 %v7867
    %v9131 = vunpack.c.l.b16 %v7868
    %v9132 = vunpack.c.l.b16 %v7869
    %v9133 = vunpack.c.l.b16 %v7870
    %v9134 = vunpack.c.l.b16 %v7871
    %v9135 = vunpack.c.l.b16 %v7872
    %v9136 = vunpack.c.l.b16 %v7873
    %v9137 = vunpack.c.l.b16 %v7874
    %v9138 = vunpack.c.l.b16 %v7875
    %v9139 = vunpack.c.l.b16 %v7876
    %v9140 = vunpack.c.l.b16 %v7877
    %v9141 = vunpack.c.l.b16 %v7878
    %v9142 = vunpack.c.l.b16 %v7879
    %v9143 = vunpack.c.l.b16 %v7880
    %v9144 = vunpack.c.l.b16 %v7881
    %v9145 = vunpack.c.l.b16 %v7882
    %v9146 = vunpack.c.l.b16 %v7883
    %v9147 = vunpack.c.l.b16 %v7884
    %v9148 = vunpack.c.l.b16 %v7885
    %v9149 = vunpack.c.l.b16 %v7886
    %v9150 = vunpack.c.l.b16 %v7887
    %v9151 = vunpack.c.l.b16 %v7888
    %v9152 = vunpack.c.l.b16 %v7889
    %v9153 = vunpack.c.l.b16 %v7890
    %v9154 = vunpack.c.l.b16 %v7891
    %v9155 = vunpack.c.l.b16 %v7892
    %v9156 = vunpack.c.l.b16 %v7893
    %v9157 = vunpack.c.l.b16 %v7894
    %v9158 = vunpack.c.l.b16 %v7895
    %v9159 = vunpack.c.l.b16 %v7896
    %v9160 = vunpack.c.l.b16 %v7897
    %v9161 = vunpack.c.l.b16 %v7898
    %v9162 = vunpack.c.l.b16 %v7899
    %v9163 = vunpack.c.l.b16 %v7900
    %v9164 = vunpack.c.l.b16 %v7901
    %v9165 = vunpack.c.l.b16 %v7902
    %v9166 = vunpack.c.l.b16 %v7903
    %v9167 = vunpack.c.l.b16 %v7904
    %v9168 = vunpack.c.l.b16 %v7905
    %v9169 = vunpack.c.l.b16 %v7906
    %v9170 = vunpack.c.l.b16 %v7907
    %v9171 = vunpack.c.l.b16 %v7908
    %v9172 = vunpack.c.l.b16 %v7909
    %v9173 = vunpack.c.l.b16 %v7910
    %v9174 = vunpack.c.l.b16 %v7911
    %v9175 = vunpack.c.l.b16 %v7912
    %v9176 = vunpack.c.l.b16 %v7913
    %v9177 = vunpack.c.l.b16 %v7914
    %v9178 = vunpack.c.l.b16 %v7915
    %v9179 = vunpack.c.l.b16 %v7916
    %v9180 = vunpack.c.l.b16 %v7917
    %v9181 = vunpack.c.l.b16 %v7918
    %v9182 = vunpack.c.l.b16 %v7919
    %v9183 = vunpack.c.l.b16 %v7920
    %v9184 = vunpack.c.l.b16 %v7921
    %v9185 = vunpack.c.l.b16 %v7922
    %v9186 = vunpack.c.l.b16 %v7923
    %v9187 = vunpack.c.l.b16 %v7924
    %v9188 = vunpack.c.l.b16 %v7925
    %v9189 = vunpack.c.l.b16 %v7926
    %v9190 = vunpack.c.l.b16 %v7927
    %v9191 = vunpack.c.l.b16 %v7928
    %v9192 = vunpack.c.l.b16 %v7929
    %v9193 = vunpack.c.l.b16 %v7930
    %v9194 = vunpack.c.l.b16 %v7931
    %v9195 = vunpack.c.l.b16 %v7932
    %v9196 = vunpack.c.l.b16 %v7933
    %v9197 = vunpack.c.l.b16 %v7934
    %v9198 = vunpack.c.l.b16 %v7935
    %v9199 = vunpack.c.l.b16 %v7936
    %v9200 = vunpack.c.l.b16 %v7937
    %v9201 = vunpack.c.l.b16 %v7938
    %v9202 = vunpack.c.l.b16 %v7939
    %v9203 = vunpack.c.l.b16 %v7940
    %v9204 = vunpack.c.l.b16 %v7941
    %v9205 = vunpack.c.l.b16 %v7942
    %v9206 = vunpack.c.l.b16 %v7943
    %v9207 = vunpack.c.l.b16 %v7944
    %v9208 = vunpack.c.l.b16 %v7945
    %v9209 = vunpack.c.l.b16 %v7946
    %v9210 = vunpack.c.l.b16 %v7947
    %v9211 = vunpack.c.l.b16 %v7948
    %v9212 = vunpack.c.l.b16 %v7949
    %v9213 = vunpack.c.l.b16 %v7950
    %v9214 = vunpack.c.l.b16 %v7951
    %v9215 = vunpack.c.l.b16 %v7952
    %v9216 = vunpack.c.l.b16 %v7953
    %v9217 = vunpack.c.l.b16 %v7954
    %v9218 = vunpack.c.l.b16 %v7955
    %v9219 = vunpack.c.l.b16 %v7956
    %v9220 = vunpack.c.l.b16 %v7957
    %v9221 = vunpack.c.l.b16 %v7958
    %v9222 = vunpack.c.l.b16 %v7959
    %v9223 = vunpack.c.l.b16 %v7960
    %v9224 = vunpack.c.l.b16 %v7961
    %v9225 = vunpack.c.l.b16 %v7962
    %v9226 = vunpack.c.l.b16 %v7963
    %v9227 = vunpack.c.l.b16 %v7964
    %v9228 = vunpack.c.l.b16 %v7965
    %v9229 = vunpack.c.l.b16 %v7966
    %v9230 = vunpack.c.l.b16 %v7967
    %v9231 = vunpack.c.l.b16 %v7968
    %v9232 = vunpack.c.l.b16 %v7969
    %v9233 = vunpack.c.l.b16 %v7970
    %v9234 = vunpack.c.l.b16 %v7971
    %v9235 = vunpack.c.l.b16 %v7972
    %v9236 = vunpack.c.l.b16 %v7973
    %v9237 = vunpack.c.l.b16 %v7974
    %v9238 = vunpack.c.l.b16 %v7975
    %v9239 = vunpack.c.l.b16 %v7976
    %v9240 = vunpack.c.l.b16 %v7977
    %v9241 = vunpack.c.l.b16 %v7978
    %v9242 = vunpack.c.l.b16 %v7979
    %v9243 = vunpack.c.l.b16 %v7980
    %v9244 = vunpack.c.l.b16 %v7981
    %v9245 = vunpack.c.l.b16 %v7982
    %v9246 = vunpack.c.l.b16 %v7983
    %v9247 = vunpack.c.l.b16 %v7984
    %v9248 = vunpack.c.l.b16 %v7985
    %v9249 = vunpack.c.l.b16 %v7986
    %v9250 = vunpack.c.l.b16 %v7987
    %v9251 = vunpack.c.l.b16 %v7988
    %v9252 = vunpack.c.l.b16 %v7989
    %v9253 = vunpack.c.l.b16 %v7990
    %v9254 = vunpack.c.l.b16 %v7991
    %v9255 = vunpack.c.l.b16 %v7992
    %v9256 = vunpack.c.l.b16 %v7993
    %v9257 = vunpack.c.l.b16 %v7994
    %v9258 = vunpack.c.l.b16 %v7995
    %v9259 = vunpack.c.l.b16 %v7996
    %v9260 = vunpack.c.l.b16 %v7997
    %v9261 = vunpack.c.l.b16 %v7998
    %v9262 = vunpack.c.l.b16 %v7999
    %v9263 = vunpack.c.l.b16 %v8000
    %v9264 = vunpack.c.l.b16 %v8001
    %v9265 = vunpack.c.l.b16 %v8002
    %v9266 = vunpack.c.l.b16 %v8003
    %v9267 = vunpack.c.l.b16 %v8004
    %v9268 = vunpack.c.l.b16 %v8005
    %v9269 = vunpack.c.l.b16 %v8006
    %v9270 = vunpack.c.l.b16 %v8007
    %v9271 = vunpack.c.l.b16 %v8008
    %v9272 = vunpack.c.l.b16 %v8009
    %v9273 = vunpack.c.l.b16 %v8010
    %v9274 = vunpack.c.l.b16 %v8011
    %v9275 = vunpack.c.l.b16 %v8012
    %v9276 = vunpack.c.l.b16 %v8013
    %v9277 = vunpack.c.l.b16 %v8014
    %v9278 = vunpack.c.l.b16 %v8015
    %v9279 = vunpack.c.l.b16 %v8016
    %v9280 = vunpack.c.l.b16 %v8017
    %v9281 = vunpack.c.l.b16 %v8018
    %v9282 = vunpack.c.l.b16 %v8019
    %v9283 = vunpack.c.l.b16 %v8020
    %v9284 = vunpack.c.l.b16 %v8021
    %v9285 = vunpack.c.l.b16 %v8022
    %v9286 = vunpack.c.l.b16 %v8023
    %v9287 = vunpack.c.l.b16 %v8024
    %v9288 = vunpack.c.l.b16 %v8025
    %v9289 = vunpack.c.l.b16 %v8026
    %v9290 = vunpack.c.l.b16 %v8027
    %v9291 = vunpack.c.l.b16 %v8028
    %v9292 = vunpack.c.l.b16 %v8029
    %v9293 = vunpack.c.l.b16 %v8030
    %v9294 = vunpack.c.l.b16 %v8031
    %v9295 = vunpack.c.l.b16 %v8032
    %v9296 = vunpack.c.l.b16 %v8033
    %v9297 = vunpack.c.l.b16 %v8034
    %v9298 = vunpack.c.l.b16 %v8035
    %v9299 = vunpack.c.l.b16 %v8036
    %v9300 = vunpack.c.l.b16 %v8037
    %v9301 = vunpack.c.l.b16 %v8038
    %v9302 = vunpack.c.l.b16 %v8039
    %v9303 = vunpack.c.l.b16 %v8040
    %v9304 = vunpack.c.l.b16 %v8041
    %v9305 = vunpack.c.l.b16 %v8042
    %v9306 = vunpack.c.l.b16 %v8043
    %v9307 = vunpack.c.l.b16 %v8044
    %v9308 = vunpack.c.l.b16 %v8045
    %v9309 = vunpack.c.l.b16 %v8046
    %v9310 = vunpack.c.l.b16 %v8047
    %v9311 = vunpack.c.l.b16 %v8048
    %v9312 = vunpack.c.l.b16 %v8049
    %v9313 = vunpack.c.l.b16 %v8050
    %v9314 = vunpack.c.l.b16 %v8051
    %v9315 = vunpack.c.l.b16 %v8052
    %v9316 = vunpack.c.l.b16 %v8053
    %v9317 = vunpack.c.l.b16 %v8054
    %v9318 = vunpack.c.l.b16 %v8055
    %v9319 = vunpack.c.l.b16 %v8056
    %v9320 = vunpack.c.l.b16 %v8057
    %v9321 = vunpack.c.l.b16 %v8058
    %v9322 = vunpack.c.l.b16 %v8059
    %v9323 = vunpack.c.l.b16 %v8060
    %v9324 = vunpack.c.l.b16 %v8061
    %v9325 = vunpack.c.l.b16 %v8062
    %v9326 = vunpack.c.l.b16 %v8063
    %v9327 = vunpack.c.l.b16 %v8064
    %v9328 = vunpack.c.l.b16 %v8065
    %v9329 = vunpack.c.l.b16 %v8066
    %v9330 = vunpack.c.l.b16 %v8067
    %v9331 = vunpack.c.l.b16 %v8068
    %v9332 = vunpack.c.l.b16 %v8069
    %v9333 = vunpack.c.l.b16 %v8070
    %v9334 = vunpack.c.l.b16 %v8071
    %v9335 = vunpack.c.l.b16 %v8072
    %v9336 = vunpack.c.l.b16 %v8073
    %v9337 = vunpack.c.l.b16 %v8074
    %v9338 = vunpack.c.l.b16 %v8075
    %v9339 = vunpack.c.l.b16 %v8076
    %v9340 = vunpack.c.l.b16 %v8077
    %v9341 = vunpack.c.l.b16 %v8078
    %v9342 = vunpack.c.l.b16 %v8079
    %v9343 = vunpack.c.l.b16 %v8080
    %v9344 = vunpack.c.l.b16 %v8081
    %v9345 = vunpack.c.l.b16 %v8082
    %v9346 = vunpack.c.l.b16 %v8083
    %v9347 = vunpack.c.l.b16 %v8084
    %v9348 = vunpack.c.l.b16 %v8085
    %v9349 = vunpack.c.l.b16 %v8086
    %v9350 = vunpack.c.l.b16 %v8087
    %v9351 = vunpack.c.l.b16 %v8088
    %v9352 = vunpack.c.l.b16 %v8089
    %v9353 = vunpack.c.l.b16 %v8090
    %v9354 = vunpack.c.l.b16 %v8091
    %v9355 = vunpack.c.l.b16 %v8092
    %v9356 = vunpack.c.l.b16 %v8093
    %v9357 = vunpack.c.l.b16 %v8094
    %v9358 = vunpack.c.l.b16 %v8095
    %v9359 = vunpack.c.l.b16 %v8096
    %v9360 = vunpack.c.l.b16 %v8097
    %v9361 = vunpack.c.l.b16 %v8098
    %v9362 = vunpack.c.l.b16 %v8099
    %v9363 = vunpack.c.l.b16 %v8100
    %v9364 = vunpack.c.l.b16 %v8101
    %v9365 = vunpack.c.l.b16 %v8102
    %v9366 = vunpack.c.l.b16 %v8103
    %v9367 = vunpack.c.l.b16 %v8104
    %v9368 = vunpack.c.l.b16 %v8105
    %v9369 = vunpack.c.l.b16 %v8106
    %v9370 = vunpack.c.l.b16 %v8107
    %v9371 = vunpack.c.l.b16 %v8108
    %v9372 = vunpack.c.l.b16 %v8109
    %v9373 = vunpack.c.l.b16 %v8110
    %v9374 = vunpack.c.l.b16 %v8111
    %v9375 = vunpack.c.l.b16 %v8112
    %v9376 = vunpack.c.l.b16 %v8113
    %v9377 = vunpack.c.l.b16 %v8114
    %v9378 = vunpack.c.l.b16 %v8115
    %v9379 = vunpack.c.l.b16 %v8116
    %v9380 = vunpack.c.l.b16 %v8117
    %v9381 = vunpack.c.l.b16 %v8118
    %v9382 = vunpack.c.l.b16 %v8119
    %v9383 = vunpack.c.l.b16 %v8120
    %v9384 = vunpack.c.l.b16 %v8121
    %v9385 = vunpack.c.l.b16 %v8122
    %v9386 = vunpack.c.l.b16 %v8123
    %v9387 = vunpack.c.l.b16 %v8124
    %v9388 = vunpack.c.l.b16 %v8125
    %v9389 = vunpack.c.l.b16 %v8126
    %v9390 = vunpack.c.l.b16 %v8127
    %v9391 = vunpack.c.l.b16 %v8128
    %v9392 = vunpack.c.l.b16 %v8129
    %v9393 = vunpack.c.l.b16 %v8130
    %v9394 = vunpack.c.l.b16 %v8131
    %v9395 = vunpack.c.l.b16 %v8132
    %v9396 = vunpack.c.l.b16 %v8133
    %v9397 = vunpack.c.l.b16 %v8134
    %v9398 = vunpack.c.l.b16 %v8135
    %v9399 = vunpack.c.l.b16 %v8136
    %v9400 = vunpack.c.l.b16 %v8137
    %v9401 = vunpack.c.l.b16 %v8138
    %v9402 = vunpack.c.l.b16 %v8139
    %v9403 = vunpack.c.l.b16 %v8140
    %v9404 = vunpack.c.l.b16 %v8141
    %v9405 = vunpack.c.l.b16 %v8142
    %v9406 = vunpack.c.l.b16 %v8143
    %v9407 = vunpack.c.l.b16 %v8144
    %v9408 = vunpack.c.l.b16 %v8145
    %v9409 = vunpack.c.l.b16 %v8146
    %v9410 = vunpack.c.l.b16 %v8147
    %v9411 = vunpack.c.l.b16 %v8148
    %v9412 = vunpack.c.l.b16 %v8149
    %v9413 = vunpack.c.l.b16 %v8150
    %v9414 = vunpack.c.l.b16 %v8151
    %v9415 = vunpack.c.l.b16 %v8152
    %v9416 = vunpack.c.l.b16 %v8153
    %v9417 = vunpack.c.l.b16 %v8154
    %v9418 = vunpack.c.l.b16 %v8155
    %v9419 = vunpack.c.l.b16 %v8156
    %v9420 = vunpack.c.l.b16 %v8157
    %v9421 = vunpack.c.l.b16 %v8158
    %v9422 = vunpack.c.l.b16 %v8159
    %v9423 = vunpack.c.l.b16 %v8160
    %v9424 = vunpack.c.l.b16 %v8161
    %v9425 = vunpack.c.l.b16 %v8162
    %v9426 = vunpack.c.l.b16 %v8163
    %v9427 = vunpack.c.l.b16 %v8164
    %v9428 = vunpack.c.l.b16 %v8165
    %v9429 = vunpack.c.l.b16 %v8166
    %v9430 = vunpack.c.l.b16 %v8167
    %v9431 = vunpack.c.l.b16 %v8168
    %v9432 = vunpack.c.l.b16 %v8169
    %v9433 = vunpack.c.l.b16 %v8170
    %v9434 = vunpack.c.l.b16 %v8171
    %v9435 = vunpack.c.l.b16 %v8172
    %v9436 = vunpack.c.l.b16 %v8173
    %v9437 = vunpack.c.l.b16 %v8174
    %v9438 = vunpack.c.l.b16 %v8175
    %v9439 = vunpack.c.l.b16 %v8176
    %v9440 = vunpack.c.l.b16 %v8177
    %v9441 = vunpack.c.l.b16 %v8178
    %v9442 = vunpack.c.l.b16 %v8179
    %v9443 = vunpack.c.l.b16 %v8180
    %v9444 = vunpack.c.l.b16 %v8181
    %v9445 = vunpack.c.l.b16 %v8182
    %v9446 = vunpack.c.l.b16 %v8183
    %v9447 = vunpack.c.l.b16 %v8184
    %v9448 = vunpack.c.l.b16 %v8185
    %v9449 = vunpack.c.l.b16 %v8186
    %v9450 = vunpack.c.l.b16 %v8187
    %v9451 = vunpack.c.l.b16 %v8188
    %v9452 = vunpack.c.l.b16 %v8189
    %v9453 = vunpack.c.l.b16 %v8190
    %v9454 = vunpack.c.l.b16 %v8191
    %v9455 = vunpack.c.l.b16 %v8192
    %v9456 = vunpack.c.l.b16 %v8193
    %v9457 = vunpack.c.l.b16 %v8194
    %v9458 = vunpack.c.l.b16 %v8195
    %v9459 = vunpack.c.l.b16 %v8196
    %v9460 = vunpack.c.l.b16 %v8197
    %v9461 = vunpack.c.l.b16 %v8198
    %v9462 = vunpack.c.l.b16 %v8199
    %v9463 = vunpack.c.l.b16 %v8200
    %v9464 = vunpack.c.l.b16 %v8201
    %v9465 = vunpack.c.l.b16 %v8202
    %v9466 = vunpack.c.l.b16 %v8203
    %v9467 = vunpack.c.l.b16 %v8204
    %v9468 = vunpack.c.l.b16 %v8205
    %v9469 = vunpack.c.l.b16 %v8206
    %v9470 = vunpack.c.l.b16 %v8207
    %v9471 = vunpack.c.l.b16 %v8208
    %v9472 = vunpack.c.l.b16 %v8209
    %v9473 = vunpack.c.l.b16 %v8210
    %v9474 = vunpack.c.l.b16 %v8211
    %v9475 = vunpack.c.l.b16 %v8212
    %v9476 = vunpack.c.l.b16 %v8213
    %v9477 = vunpack.c.l.b16 %v8214
    %v9478 = vunpack.c.l.b16 %v8215
    %v9479 = vunpack.c.l.b16 %v8216
    %v9480 = vunpack.c.l.b16 %v8217
    %v9481 = vunpack.c.l.b16 %v8218
    %v9482 = vunpack.c.l.b16 %v8219
    %v9483 = vunpack.c.l.b16 %v8220
    %v9484 = vunpack.c.l.b16 %v8221
    %v9485 = vunpack.c.l.b16 %v8222
    %v9486 = vunpack.c.l.b16 %v8223
    %v9487 = vunpack.c.l.b16 %v8224
    %v9488 = vunpack.c.l.b16 %v8225
    %v9489 = vunpack.c.l.b16 %v8226
    %v9490 = vunpack.c.l.b16 %v8227
    %v9491 = vunpack.c.l.b16 %v8228
    %v9492 = vunpack.c.l.b16 %v8229
    %v9493 = vunpack.c.l.b16 %v8230
    %v9494 = vunpack.c.l.b16 %v8231
    %v9495 = vpack.c.b16 %v8984, %v8983
    %v9496 = vpack.c.b16 %v8986, %v8985
    %v9497 = vpack.c.b16 %v8988, %v8987
    %v9498 = vpack.c.b16 %v8990, %v8989
    %v9499 = vpack.c.b16 %v8992, %v8991
    %v9500 = vpack.c.b16 %v8994, %v8993
    %v9501 = vpack.c.b16 %v8996, %v8995
    %v9502 = vpack.c.b16 %v8998, %v8997
    %v9503 = vpack.c.b16 %v9000, %v8999
    %v9504 = vpack.c.b16 %v9002, %v9001
    %v9505 = vpack.c.b16 %v9004, %v9003
    %v9506 = vpack.c.b16 %v9006, %v9005
    %v9507 = vpack.c.b16 %v9008, %v9007
    %v9508 = vpack.c.b16 %v9010, %v9009
    %v9509 = vpack.c.b16 %v9012, %v9011
    %v9510 = vpack.c.b16 %v9014, %v9013
    %v9511 = vpack.c.b16 %v9016, %v9015
    %v9512 = vpack.c.b16 %v9018, %v9017
    %v9513 = vpack.c.b16 %v9020, %v9019
    %v9514 = vpack.c.b16 %v9022, %v9021
    %v9515 = vpack.c.b16 %v9024, %v9023
    %v9516 = vpack.c.b16 %v9026, %v9025
    %v9517 = vpack.c.b16 %v9028, %v9027
    %v9518 = vpack.c.b16 %v9030, %v9029
    %v9519 = vpack.c.b16 %v9032, %v9031
    %v9520 = vpack.c.b16 %v9034, %v9033
    %v9521 = vpack.c.b16 %v9036, %v9035
    %v9522 = vpack.c.b16 %v9038, %v9037
    %v9523 = vpack.c.b16 %v9040, %v9039
    %v9524 = vpack.c.b16 %v9042, %v9041
    %v9525 = vpack.c.b16 %v9044, %v9043
    %v9526 = vpack.c.b16 %v9046, %v9045
    %v9527 = vpack.c.b16 %v9048, %v9047
    %v9528 = vpack.c.b16 %v9050, %v9049
    %v9529 = vpack.c.b16 %v9052, %v9051
    %v9530 = vpack.c.b16 %v9054, %v9053
    %v9531 = vpack.c.b16 %v9056, %v9055
    %v9532 = vpack.c.b16 %v9058, %v9057
    %v9533 = vpack.c.b16 %v9060, %v9059
    %v9534 = vpack.c.b16 %v9062, %v9061
    %v9535 = vpack.c.b16 %v9064, %v9063
    %v9536 = vpack.c.b16 %v9066, %v9065
    %v9537 = vpack.c.b16 %v9068, %v9067
    %v9538 = vpack.c.b16 %v9070, %v9069
    %v9539 = vpack.c.b16 %v9072, %v9071
    %v9540 = vpack.c.b16 %v9074, %v9073
    %v9541 = vpack.c.b16 %v9076, %v9075
    %v9542 = vpack.c.b16 %v9078, %v9077
    %v9543 = vpack.c.b16 %v9080, %v9079
    %v9544 = vpack.c.b16 %v9082, %v9081
    %v9545 = vpack.c.b16 %v9084, %v9083
    %v9546 = vpack.c.b16 %v9086, %v9085
    %v9547 = vpack.c.b16 %v9088, %v9087
    %v9548 = vpack.c.b16 %v9090, %v9089
    %v9549 = vpack.c.b16 %v9092, %v9091
    %v9550 = vpack.c.b16 %v9094, %v9093
    %v9551 = vpack.c.b16 %v9096, %v9095
    %v9552 = vpack.c.b16 %v9098, %v9097
    %v9553 = vpack.c.b16 %v9100, %v9099
    %v9554 = vpack.c.b16 %v9102, %v9101
    %v9555 = vpack.c.b16 %v9104, %v9103
    %v9556 = vpack.c.b16 %v9106, %v9105
    %v9557 = vpack.c.b16 %v9108, %v9107
    %v9558 = vpack.c.b16 %v9110, %v9109
    %v9559 = vpack.c.b16 %v9112, %v9111
    %v9560 = vpack.c.b16 %v9114, %v9113
    %v9561 = vpack.c.b16 %v9116, %v9115
    %v9562 = vpack.c.b16 %v9118, %v9117
    %v9563 = vpack.c.b16 %v9120, %v9119
    %v9564 = vpack.c.b16 %v9122, %v9121
    %v9565 = vpack.c.b16 %v9124, %v9123
    %v9566 = vpack.c.b16 %v9126, %v9125
    %v9567 = vpack.c.b16 %v9128, %v9127
    %v9568 = vpack.c.b16 %v9130, %v9129
    %v9569 = vpack.c.b16 %v9132, %v9131
    %v9570 = vpack.c.b16 %v9134, %v9133
    %v9571 = vpack.c.b16 %v9136, %v9135
    %v9572 = vpack.c.b16 %v9138, %v9137
    %v9573 = vpack.c.b16 %v9140, %v9139
    %v9574 = vpack.c.b16 %v9142, %v9141
    %v9575 = vpack.c.b16 %v9144, %v9143
    %v9576 = vpack.c.b16 %v9146, %v9145
    %v9577 = vpack.c.b16 %v9148, %v9147
    %v9578 = vpack.c.b16 %v9150, %v9149
    %v9579 = vpack.c.b16 %v9152, %v9151
    %v9580 = vpack.c.b16 %v9154, %v9153
    %v9581 = vpack.c.b16 %v9156, %v9155
    %v9582 = vpack.c.b16 %v9158, %v9157
    %v9583 = vpack.c.b16 %v9160, %v9159
    %v9584 = vpack.c.b16 %v9162, %v9161
    %v9585 = vpack.c.b16 %v9164, %v9163
    %v9586 = vpack.c.b16 %v9166, %v9165
    %v9587 = vpack.c.b16 %v9168, %v9167
    %v9588 = vpack.c.b16 %v9170, %v9169
    %v9589 = vpack.c.b16 %v9172, %v9171
    %v9590 = vpack.c.b16 %v9174, %v9173
    %v9591 = vpack.c.b16 %v9176, %v9175
    %v9592 = vpack.c.b16 %v9178, %v9177
    %v9593 = vpack.c.b16 %v9180, %v9179
    %v9594 = vpack.c.b16 %v9182, %v9181
    %v9595 = vpack.c.b16 %v9184, %v9183
    %v9596 = vpack.c.b16 %v9186, %v9185
    %v9597 = vpack.c.b16 %v9188, %v9187
    %v9598 = vpack.c.b16 %v9190, %v9189
    %v9599 = vpack.c.b16 %v9192, %v9191
    %v9600 = vpack.c.b16 %v9194, %v9193
    %v9601 = vpack.c.b16 %v9196, %v9195
    %v9602 = vpack.c.b16 %v9198, %v9197
    %v9603 = vpack.c.b16 %v9200, %v9199
    %v9604 = vpack.c.b16 %v9202, %v9201
    %v9605 = vpack.c.b16 %v9204, %v9203
    %v9606 = vpack.c.b16 %v9206, %v9205
    %v9607 = vpack.c.b16 %v9208, %v9207
    %v9608 = vpack.c.b16 %v9210, %v9209
    %v9609 = vpack.c.b16 %v9212, %v9211
    %v9610 = vpack.c.b16 %v9214, %v9213
    %v9611 = vpack.c.b16 %v9216, %v9215
    %v9612 = vpack.c.b16 %v9218, %v9217
    %v9613 = vpack.c.b16 %v9220, %v9219
    %v9614 = vpack.c.b16 %v9222, %v9221
    %v9615 = vpack.c.b16 %v9224, %v9223
    %v9616 = vpack.c.b16 %v9226, %v9225
    %v9617 = vpack.c.b16 %v9228, %v9227
    %v9618 = vpack.c.b16 %v9230, %v9229
    %v9619 = vpack.c.b16 %v9232, %v9231
    %v9620 = vpack.c.b16 %v9234, %v9233
    %v9621 = vpack.c.b16 %v9236, %v9235
    %v9622 = vpack.c.b16 %v9238, %v9237
    %v9623 = vpack.c.b16 %v9240, %v9239
    %v9624 = vpack.c.b16 %v9242, %v9241
    %v9625 = vpack.c.b16 %v9244, %v9243
    %v9626 = vpack.c.b16 %v9246, %v9245
    %v9627 = vpack.c.b16 %v9248, %v9247
    %v9628 = vpack.c.b16 %v9250, %v9249
    %v9629 = vpack.c.b16 %v9252, %v9251
    %v9630 = vpack.c.b16 %v9254, %v9253
    %v9631 = vpack.c.b16 %v9256, %v9255
    %v9632 = vpack.c.b16 %v9258, %v9257
    %v9633 = vpack.c.b16 %v9260, %v9259
    %v9634 = vpack.c.b16 %v9262, %v9261
    %v9635 = vpack.c.b16 %v9264, %v9263
    %v9636 = vpack.c.b16 %v9266, %v9265
    %v9637 = vpack.c.b16 %v9268, %v9267
    %v9638 = vpack.c.b16 %v9270, %v9269
    %v9639 = vpack.c.b16 %v9272, %v9271
    %v9640 = vpack.c.b16 %v9274, %v9273
    %v9641 = vpack.c.b16 %v9276, %v9275
    %v9642 = vpack.c.b16 %v9278, %v9277
    %v9643 = vpack.c.b16 %v9280, %v9279
    %v9644 = vpack.c.b16 %v9282, %v9281
    %v9645 = vpack.c.b16 %v9284, %v9283
    %v9646 = vpack.c.b16 %v9286, %v9285
    %v9647 = vpack.c.b16 %v9288, %v9287
    %v9648 = vpack.c.b16 %v9290, %v9289
    %v9649 = vpack.c.b16 %v9292, %v9291
    %v9650 = vpack.c.b16 %v9294, %v9293
    %v9651 = vpack.c.b16 %v9296, %v9295
    %v9652 = vpack.c.b16 %v9298, %v9297
    %v9653 = vpack.c.b16 %v9300, %v9299
    %v9654 = vpack.c.b16 %v9302, %v9301
    %v9655 = vpack.c.b16 %v9304, %v9303
    %v9656 = vpack.c.b16 %v9306, %v9305
    %v9657 = vpack.c.b16 %v9308, %v9307
    %v9658 = vpack.c.b16 %v9310, %v9309
    %v9659 = vpack.c.b16 %v9312, %v9311
    %v9660 = vpack.c.b16 %v9314, %v9313
    %v9661 = vpack.c.b16 %v9316, %v9315
    %v9662 = vpack.c.b16 %v9318, %v9317
    %v9663 = vpack.c.b16 %v9320, %v9319
    %v9664 = vpack.c.b16 %v9322, %v9321
    %v9665 = vpack.c.b16 %v9324, %v9323
    %v9666 = vpack.c.b16 %v9326, %v9325
    %v9667 = vpack.c.b16 %v9328, %v9327
    %v9668 = vpack.c.b16 %v9330, %v9329
    %v9669 = vpack.c.b16 %v9332, %v9331
    %v9670 = vpack.c.b16 %v9334, %v9333
    %v9671 = vpack.c.b16 %v9336, %v9335
    %v9672 = vpack.c.b16 %v9338, %v9337
    %v9673 = vpack.c.b16 %v9340, %v9339
    %v9674 = vpack.c.b16 %v9342, %v9341
    %v9675 = vpack.c.b16 %v9344, %v9343
    %v9676 = vpack.c.b16 %v9346, %v9345
    %v9677 = vpack.c.b16 %v9348, %v9347
    %v9678 = vpack.c.b16 %v9350, %v9349
    %v9679 = vpack.c.b16 %v9352, %v9351
    %v9680 = vpack.c.b16 %v9354, %v9353
    %v9681 = vpack.c.b16 %v9356, %v9355
    %v9682 = vpack.c.b16 %v9358, %v9357
    %v9683 = vpack.c.b16 %v9360, %v9359
    %v9684 = vpack.c.b16 %v9362, %v9361
    %v9685 = vpack.c.b16 %v9364, %v9363
    %v9686 = vpack.c.b16 %v9366, %v9365
    %v9687 = vpack.c.b16 %v9368, %v9367
    %v9688 = vpack.c.b16 %v9370, %v9369
    %v9689 = vpack.c.b16 %v9372, %v9371
    %v9690 = vpack.c.b16 %v9374, %v9373
    %v9691 = vpack.c.b16 %v9376, %v9375
    %v9692 = vpack.c.b16 %v9378, %v9377
    %v9693 = vpack.c.b16 %v9380, %v9379
    %v9694 = vpack.c.b16 %v9382, %v9381
    %v9695 = vpack.c.b16 %v9384, %v9383
    %v9696 = vpack.c.b16 %v9386, %v9385
    %v9697 = vpack.c.b16 %v9388, %v9387
    %v9698 = vpack.c.b16 %v9390, %v9389
    %v9699 = vpack.c.b16 %v9392, %v9391
    %v9700 = vpack.c.b16 %v9394, %v9393
    %v9701 = vpack.c.b16 %v9396, %v9395
    %v9702 = vpack.c.b16 %v9398, %v9397
    %v9703 = vpack.c.b16 %v9400, %v9399
    %v9704 = vpack.c.b16 %v9402, %v9401
    %v9705 = vpack.c.b16 %v9404, %v9403
    %v9706 = vpack.c.b16 %v9406, %v9405
    %v9707 = vpack.c.b16 %v9408, %v9407
    %v9708 = vpack.c.b16 %v9410, %v9409
    %v9709 = vpack.c.b16 %v9412, %v9411
    %v9710 = vpack.c.b16 %v9414, %v9413
    %v9711 = vpack.c.b16 %v9416, %v9415
    %v9712 = vpack.c.b16 %v9418, %v9417
    %v9713 = vpack.c.b16 %v9420, %v9419
    %v9714 = vpack.c.b16 %v9422, %v9421
    %v9715 = vpack.c.b16 %v9424, %v9423
    %v9716 = vpack.c.b16 %v9426, %v9425
    %v9717 = vpack.c.b16 %v9428, %v9427
    %v9718 = vpack.c.b16 %v9430, %v9429
    %v9719 = vpack.c.b16 %v9432, %v9431
    %v9720 = vpack.c.b16 %v9434, %v9433
    %v9721 = vpack.c.b16 %v9436, %v9435
    %v9722 = vpack.c.b16 %v9438, %v9437
    %v9723 = vpack.c.b16 %v9440, %v9439
    %v9724 = vpack.c.b16 %v9442, %v9441
    %v9725 = vpack.c.b16 %v9444, %v9443
    %v9726 = vpack.c.b16 %v9446, %v9445
    %v9727 = vpack.c.b16 %v9448, %v9447
    %v9728 = vpack.c.b16 %v9450, %v9449
    %v9729 = vpack.c.b16 %v9452, %v9451
    %v9730 = vpack.c.b16 %v9454, %v9453
    %v9731 = vpack.c.b16 %v9456, %v9455
    %v9732 = vpack.c.b16 %v9458, %v9457
    %v9733 = vpack.c.b16 %v9460, %v9459
    %v9734 = vpack.c.b16 %v9462, %v9461
    %v9735 = vpack.c.b16 %v9464, %v9463
    %v9736 = vpack.c.b16 %v9466, %v9465
    %v9737 = vpack.c.b16 %v9468, %v9467
    %v9738 = vpack.c.b16 %v9470, %v9469
    %v9739 = vpack.c.b16 %v9472, %v9471
    %v9740 = vpack.c.b16 %v9474, %v9473
    %v9741 = vpack.c.b16 %v9476, %v9475
    %v9742 = vpack.c.b16 %v9478, %v9477
    %v9743 = vpack.c.b16 %v9480, %v9479
    %v9744 = vpack.c.b16 %v9482, %v9481
    %v9745 = vpack.c.b16 %v9484, %v9483
    %v9746 = vpack.c.b16 %v9486, %v9485
    %v9747 = vpack.c.b16 %v9488, %v9487
    %v9748 = vpack.c.b16 %v9490, %v9489
    %v9749 = vpack.c.b16 %v9492, %v9491
    %v9750 = vpack.c.b16 %v9494, %v9493
    %10007 = vmatprep.subr.bf16.mxu0 0
    %10008 = vmatpush1.bf16.msra.mxu0 %v9502
    %10009 = vmatprep.subr.bf16.mxu0 0
    %10010 = vmatpush1.bf16.msra.mxu0 %v9501
    %10011 = vmatprep.subr.bf16.mxu0 0
    %10012 = vmatpush1.bf16.msra.mxu0 %v9500
    %10013 = vmatprep.subr.bf16.mxu0 0
    %10014 = vmatpush1.bf16.msra.mxu0 %v9499
    %10015 = vmatprep.subr.bf16.mxu0 0
    %10016 = vmatpush1.bf16.msra.mxu0 %v9498
    %10017 = vmatprep.subr.bf16.mxu0 0
    %10018 = vmatpush1.bf16.msra.mxu0 %v9497
    %10019 = vmatprep.subr.bf16.mxu0 0
    %10020 = vmatpush1.bf16.msra.mxu0 %v9496
    %10021 = vmatprep.subr.bf16.mxu0 0
    %10022 = vmatpush1.bf16.msra.mxu0 %v9495
    %10023 = vmatprep.subr.bf16.mxu0 0
    %10024 = vmatpush2.bf16.msra.mxu0 %v9510
    %10025 = vmatprep.subr.bf16.mxu0 0
    %10026 = vmatpush2.bf16.msra.mxu0 %v9509
    %10027 = vmatprep.subr.bf16.mxu0 0
    %10028 = vmatpush2.bf16.msra.mxu0 %v9508
    %10029 = vmatprep.subr.bf16.mxu0 0
    %10030 = vmatpush2.bf16.msra.mxu0 %v9507
    %10031 = vmatprep.subr.bf16.mxu0 0
    %10032 = vmatpush2.bf16.msra.mxu0 %v9506
    %10033 = vmatprep.subr.bf16.mxu0 0
    %10034 = vmatpush2.bf16.msra.mxu0 %v9505
    %10035 = vmatprep.subr.bf16.mxu0 0
    %10036 = vmatpush2.bf16.msra.mxu0 %v9504
    %10037 = vmatprep.subr.bf16.mxu0 0
    %10038 = vmatpush2.bf16.msra.mxu0 %v9503
    %10039 = vmatprep.mubr.bf16.mxu0 %v8280
    %10040 = vmatmul.mubr.bf16.gmra.mxu0 %v8266
    %v10041 = vpop.f32.mrf.mxu0
    %v10042 = vadd.f32 %v8237, %v10041
    %v10043 = vpop.f32.mrf.mxu0
    %v10044 = vpop.f32.mrf.mxu0
    %v10045 = vpop.f32.mrf.mxu0
    %10046 = vdwg.mxu0
    %10047 = vmatprep.subr.bf16.mxu0 0
    %10048 = vmatpush1.bf16.msra.mxu0 %v9518
    %10049 = vmatprep.subr.bf16.mxu0 0
    %10050 = vmatpush1.bf16.msra.mxu0 %v9517
    %10051 = vmatprep.subr.bf16.mxu0 0
    %10052 = vmatpush1.bf16.msra.mxu0 %v9516
    %10053 = vmatprep.subr.bf16.mxu0 0
    %10054 = vmatpush1.bf16.msra.mxu0 %v9515
    %10055 = vmatprep.subr.bf16.mxu0 0
    %10056 = vmatpush1.bf16.msra.mxu0 %v9514
    %10057 = vmatprep.subr.bf16.mxu0 0
    %10058 = vmatpush1.bf16.msra.mxu0 %v9513
    %10059 = vmatprep.subr.bf16.mxu0 0
    %10060 = vmatpush1.bf16.msra.mxu0 %v9512
    %10061 = vmatprep.subr.bf16.mxu0 0
    %10062 = vmatpush1.bf16.msra.mxu0 %v9511
    %10063 = vmatprep.subr.bf16.mxu0 0
    %10064 = vmatpush2.bf16.msra.mxu0 %v9526
    %10065 = vmatprep.subr.bf16.mxu0 0
    %10066 = vmatpush2.bf16.msra.mxu0 %v9525
    %10067 = vmatprep.subr.bf16.mxu0 0
    %10068 = vmatpush2.bf16.msra.mxu0 %v9524
    %10069 = vmatprep.subr.bf16.mxu0 0
    %10070 = vmatpush2.bf16.msra.mxu0 %v9523
    %10071 = vmatprep.subr.bf16.mxu0 0
    %10072 = vmatpush2.bf16.msra.mxu0 %v9522
    %10073 = vmatprep.subr.bf16.mxu0 0
    %10074 = vmatpush2.bf16.msra.mxu0 %v9521
    %10075 = vmatprep.subr.bf16.mxu0 0
    %10076 = vmatpush2.bf16.msra.mxu0 %v9520
    %10077 = vmatprep.subr.bf16.mxu0 0
    %10078 = vmatpush2.bf16.msra.mxu0 %v9519
    %10079 = vmatprep.mubr.bf16.mxu0 %v8290
    %10080 = vmatmul.mubr.bf16.gmra.mxu0 %v8288
    %v10081 = vpop.f32.mrf.mxu0
    %v10082 = vadd.f32 %v10042, %v10081
    %v10083 = vpop.f32.mrf.mxu0
    %v10084 = vpop.f32.mrf.mxu0
    %v10085 = vpop.f32.mrf.mxu0
    %10086 = vdwg.mxu0
    %10087 = vmatprep.subr.bf16.mxu0 0
    %10088 = vmatpush1.bf16.msra.mxu0 %v9534
    %10089 = vmatprep.subr.bf16.mxu0 0
    %10090 = vmatpush1.bf16.msra.mxu0 %v9533
    %10091 = vmatprep.subr.bf16.mxu0 0
    %10092 = vmatpush1.bf16.msra.mxu0 %v9532
    %10093 = vmatprep.subr.bf16.mxu0 0
    %10094 = vmatpush1.bf16.msra.mxu0 %v9531
    %10095 = vmatprep.subr.bf16.mxu0 0
    %10096 = vmatpush1.bf16.msra.mxu0 %v9530
    %10097 = vmatprep.subr.bf16.mxu0 0
    %10098 = vmatpush1.bf16.msra.mxu0 %v9529
    %10099 = vmatprep.subr.bf16.mxu0 0
    %10100 = vmatpush1.bf16.msra.mxu0 %v9528
    %10101 = vmatprep.subr.bf16.mxu0 0
    %10102 = vmatpush1.bf16.msra.mxu0 %v9527
    %10103 = vmatprep.subr.bf16.mxu0 0
    %10104 = vmatpush2.bf16.msra.mxu0 %v9542
    %10105 = vmatprep.subr.bf16.mxu0 0
    %10106 = vmatpush2.bf16.msra.mxu0 %v9541
    %10107 = vmatprep.subr.bf16.mxu0 0
    %10108 = vmatpush2.bf16.msra.mxu0 %v9540
    %10109 = vmatprep.subr.bf16.mxu0 0
    %10110 = vmatpush2.bf16.msra.mxu0 %v9539
    %10111 = vmatprep.subr.bf16.mxu0 0
    %10112 = vmatpush2.bf16.msra.mxu0 %v9538
    %10113 = vmatprep.subr.bf16.mxu0 0
    %10114 = vmatpush2.bf16.msra.mxu0 %v9537
    %10115 = vmatprep.subr.bf16.mxu0 0
    %10116 = vmatpush2.bf16.msra.mxu0 %v9536
    %10117 = vmatprep.subr.bf16.mxu0 0
    %10118 = vmatpush2.bf16.msra.mxu0 %v9535
    %10119 = vmatprep.mubr.bf16.mxu0 %v8287
    %10120 = vmatmul.mubr.bf16.gmra.mxu0 %v8273
    %v10121 = vpop.f32.mrf.mxu0
    %v10122 = vadd.f32 %v10082, %v10121
    %v10123 = vpop.f32.mrf.mxu0
    %v10124 = vpop.f32.mrf.mxu0
    %v10125 = vpop.f32.mrf.mxu0
    %10126 = vdwg.mxu0
    %10127 = vmatprep.subr.bf16.mxu0 0
    %10128 = vmatpush1.bf16.msra.mxu0 %v9550
    %10129 = vmatprep.subr.bf16.mxu0 0
    %10130 = vmatpush1.bf16.msra.mxu0 %v9549
    %10131 = vmatprep.subr.bf16.mxu0 0
    %10132 = vmatpush1.bf16.msra.mxu0 %v9548
    %10133 = vmatprep.subr.bf16.mxu0 0
    %10134 = vmatpush1.bf16.msra.mxu0 %v9547
    %10135 = vmatprep.subr.bf16.mxu0 0
    %10136 = vmatpush1.bf16.msra.mxu0 %v9546
    %10137 = vmatprep.subr.bf16.mxu0 0
    %10138 = vmatpush1.bf16.msra.mxu0 %v9545
    %10139 = vmatprep.subr.bf16.mxu0 0
    %10140 = vmatpush1.bf16.msra.mxu0 %v9544
    %10141 = vmatprep.subr.bf16.mxu0 0
    %10142 = vmatpush1.bf16.msra.mxu0 %v9543
    %10143 = vmatprep.subr.bf16.mxu0 0
    %10144 = vmatpush2.bf16.msra.mxu0 %v9558
    %10145 = vmatprep.subr.bf16.mxu0 0
    %10146 = vmatpush2.bf16.msra.mxu0 %v9557
    %10147 = vmatprep.subr.bf16.mxu0 0
    %10148 = vmatpush2.bf16.msra.mxu0 %v9556
    %10149 = vmatprep.subr.bf16.mxu0 0
    %10150 = vmatpush2.bf16.msra.mxu0 %v9555
    %10151 = vmatprep.subr.bf16.mxu0 0
    %10152 = vmatpush2.bf16.msra.mxu0 %v9554
    %10153 = vmatprep.subr.bf16.mxu0 0
    %10154 = vmatpush2.bf16.msra.mxu0 %v9553
    %10155 = vmatprep.subr.bf16.mxu0 0
    %10156 = vmatpush2.bf16.msra.mxu0 %v9552
    %10157 = vmatprep.subr.bf16.mxu0 0
    %10158 = vmatpush2.bf16.msra.mxu0 %v9551
    %10159 = vmatprep.mubr.bf16.mxu0 %v8291
    %10160 = vmatmul.mubr.bf16.gmra.mxu0 %v8289
    %v10161 = vpop.f32.mrf.mxu0
    %v10162 = vadd.f32 %v10122, %v10161
    %v10163 = vpop.f32.mrf.mxu0
    %v10164 = vpop.f32.mrf.mxu0
    %v10165 = vpop.f32.mrf.mxu0
    %10166 = vdwg.mxu0
    %10167 = vmatprep.subr.bf16.mxu0 0
    %10168 = vmatpush1.bf16.msra.mxu0 %v9566
    %10169 = vmatprep.subr.bf16.mxu0 0
    %10170 = vmatpush1.bf16.msra.mxu0 %v9565
    %10171 = vmatprep.subr.bf16.mxu0 0
    %10172 = vmatpush1.bf16.msra.mxu0 %v9564
    %10173 = vmatprep.subr.bf16.mxu0 0
    %10174 = vmatpush1.bf16.msra.mxu0 %v9563
    %10175 = vmatprep.subr.bf16.mxu0 0
    %10176 = vmatpush1.bf16.msra.mxu0 %v9562
    %10177 = vmatprep.subr.bf16.mxu0 0
    %10178 = vmatpush1.bf16.msra.mxu0 %v9561
    %10179 = vmatprep.subr.bf16.mxu0 0
    %10180 = vmatpush1.bf16.msra.mxu0 %v9560
    %10181 = vmatprep.subr.bf16.mxu0 0
    %10182 = vmatpush1.bf16.msra.mxu0 %v9559
    %10183 = vmatprep.subr.bf16.mxu0 0
    %10184 = vmatpush2.bf16.msra.mxu0 %v9574
    %10185 = vmatprep.subr.bf16.mxu0 0
    %10186 = vmatpush2.bf16.msra.mxu0 %v9573
    %10187 = vmatprep.subr.bf16.mxu0 0
    %10188 = vmatpush2.bf16.msra.mxu0 %v9572
    %10189 = vmatprep.subr.bf16.mxu0 0
    %10190 = vmatpush2.bf16.msra.mxu0 %v9571
    %10191 = vmatprep.subr.bf16.mxu0 0
    %10192 = vmatpush2.bf16.msra.mxu0 %v9570
    %10193 = vmatprep.subr.bf16.mxu0 0
    %10194 = vmatpush2.bf16.msra.mxu0 %v9569
    %10195 = vmatprep.subr.bf16.mxu0 0
    %10196 = vmatpush2.bf16.msra.mxu0 %v9568
    %10197 = vmatprep.subr.bf16.mxu0 0
    %10198 = vmatpush2.bf16.msra.mxu0 %v9567
    %10199 = vmatprep.mubr.bf16.mxu0 %v8329
    %10200 = vmatmul.mubr.bf16.gmra.mxu0 %v8315
    %v10201 = vpop.f32.mrf.mxu0
    %v10202 = vadd.f32 %v10162, %v10201
    %v10203 = vpop.f32.mrf.mxu0
    %v10204 = vpop.f32.mrf.mxu0
    %v10205 = vpop.f32.mrf.mxu0
    %10206 = vdwg.mxu0
    %10207 = vmatprep.subr.bf16.mxu0 0
    %10208 = vmatpush1.bf16.msra.mxu0 %v9582
    %10209 = vmatprep.subr.bf16.mxu0 0
    %10210 = vmatpush1.bf16.msra.mxu0 %v9581
    %10211 = vmatprep.subr.bf16.mxu0 0
    %10212 = vmatpush1.bf16.msra.mxu0 %v9580
    %10213 = vmatprep.subr.bf16.mxu0 0
    %10214 = vmatpush1.bf16.msra.mxu0 %v9579
    %10215 = vmatprep.subr.bf16.mxu0 0
    %10216 = vmatpush1.bf16.msra.mxu0 %v9578
    %10217 = vmatprep.subr.bf16.mxu0 0
    %10218 = vmatpush1.bf16.msra.mxu0 %v9577
    %10219 = vmatprep.subr.bf16.mxu0 0
    %10220 = vmatpush1.bf16.msra.mxu0 %v9576
    %10221 = vmatprep.subr.bf16.mxu0 0
    %10222 = vmatpush1.bf16.msra.mxu0 %v9575
    %10223 = vmatprep.subr.bf16.mxu0 0
    %10224 = vmatpush2.bf16.msra.mxu0 %v9590
    %10225 = vmatprep.subr.bf16.mxu0 0
    %10226 = vmatpush2.bf16.msra.mxu0 %v9589
    %10227 = vmatprep.subr.bf16.mxu0 0
    %10228 = vmatpush2.bf16.msra.mxu0 %v9588
    %10229 = vmatprep.subr.bf16.mxu0 0
    %10230 = vmatpush2.bf16.msra.mxu0 %v9587
    %10231 = vmatprep.subr.bf16.mxu0 0
    %10232 = vmatpush2.bf16.msra.mxu0 %v9586
    %10233 = vmatprep.subr.bf16.mxu0 0
    %10234 = vmatpush2.bf16.msra.mxu0 %v9585
    %10235 = vmatprep.subr.bf16.mxu0 0
    %10236 = vmatpush2.bf16.msra.mxu0 %v9584
    %10237 = vmatprep.subr.bf16.mxu0 0
    %10238 = vmatpush2.bf16.msra.mxu0 %v9583
    %10239 = vmatprep.mubr.bf16.mxu0 %v8339
    %10240 = vmatmul.mubr.bf16.gmra.mxu0 %v8337
    %v10241 = vpop.f32.mrf.mxu0
    %v10242 = vadd.f32 %v10202, %v10241
    %v10243 = vpop.f32.mrf.mxu0
    %v10244 = vpop.f32.mrf.mxu0
    %v10245 = vpop.f32.mrf.mxu0
    %10246 = vdwg.mxu0
    %10247 = vmatprep.subr.bf16.mxu0 0
    %10248 = vmatpush1.bf16.msra.mxu0 %v9598
    %10249 = vmatprep.subr.bf16.mxu0 0
    %10250 = vmatpush1.bf16.msra.mxu0 %v9597
    %10251 = vmatprep.subr.bf16.mxu0 0
    %10252 = vmatpush1.bf16.msra.mxu0 %v9596
    %10253 = vmatprep.subr.bf16.mxu0 0
    %10254 = vmatpush1.bf16.msra.mxu0 %v9595
    %10255 = vmatprep.subr.bf16.mxu0 0
    %10256 = vmatpush1.bf16.msra.mxu0 %v9594
    %10257 = vmatprep.subr.bf16.mxu0 0
    %10258 = vmatpush1.bf16.msra.mxu0 %v9593
    %10259 = vmatprep.subr.bf16.mxu0 0
    %10260 = vmatpush1.bf16.msra.mxu0 %v9592
    %10261 = vmatprep.subr.bf16.mxu0 0
    %10262 = vmatpush1.bf16.msra.mxu0 %v9591
    %10263 = vmatprep.subr.bf16.mxu0 0
    %10264 = vmatpush2.bf16.msra.mxu0 %v9606
    %10265 = vmatprep.subr.bf16.mxu0 0
    %10266 = vmatpush2.bf16.msra.mxu0 %v9605
    %10267 = vmatprep.subr.bf16.mxu0 0
    %10268 = vmatpush2.bf16.msra.mxu0 %v9604
    %10269 = vmatprep.subr.bf16.mxu0 0
    %10270 = vmatpush2.bf16.msra.mxu0 %v9603
    %10271 = vmatprep.subr.bf16.mxu0 0
    %10272 = vmatpush2.bf16.msra.mxu0 %v9602
    %10273 = vmatprep.subr.bf16.mxu0 0
    %10274 = vmatpush2.bf16.msra.mxu0 %v9601
    %10275 = vmatprep.subr.bf16.mxu0 0
    %10276 = vmatpush2.bf16.msra.mxu0 %v9600
    %10277 = vmatprep.subr.bf16.mxu0 0
    %10278 = vmatpush2.bf16.msra.mxu0 %v9599
    %10279 = vmatprep.mubr.bf16.mxu0 %v8336
    %10280 = vmatmul.mubr.bf16.gmra.mxu0 %v8322
    %v10281 = vpop.f32.mrf.mxu0
    %v10282 = vadd.f32 %v10242, %v10281
    %v10283 = vpop.f32.mrf.mxu0
    %v10284 = vpop.f32.mrf.mxu0
    %v10285 = vpop.f32.mrf.mxu0
    %10286 = vdwg.mxu0
    %10287 = vmatprep.subr.bf16.mxu0 0
    %10288 = vmatpush1.bf16.msra.mxu0 %v9614
    %10289 = vmatprep.subr.bf16.mxu0 0
    %10290 = vmatpush1.bf16.msra.mxu0 %v9613
    %10291 = vmatprep.subr.bf16.mxu0 0
    %10292 = vmatpush1.bf16.msra.mxu0 %v9612
    %10293 = vmatprep.subr.bf16.mxu0 0
    %10294 = vmatpush1.bf16.msra.mxu0 %v9611
    %10295 = vmatprep.subr.bf16.mxu0 0
    %10296 = vmatpush1.bf16.msra.mxu0 %v9610
    %10297 = vmatprep.subr.bf16.mxu0 0
    %10298 = vmatpush1.bf16.msra.mxu0 %v9609
    %10299 = vmatprep.subr.bf16.mxu0 0
    %10300 = vmatpush1.bf16.msra.mxu0 %v9608
    %10301 = vmatprep.subr.bf16.mxu0 0
    %10302 = vmatpush1.bf16.msra.mxu0 %v9607
    %10303 = vmatprep.subr.bf16.mxu0 0
    %10304 = vmatpush2.bf16.msra.mxu0 %v9622
    %10305 = vmatprep.subr.bf16.mxu0 0
    %10306 = vmatpush2.bf16.msra.mxu0 %v9621
    %10307 = vmatprep.subr.bf16.mxu0 0
    %10308 = vmatpush2.bf16.msra.mxu0 %v9620
    %10309 = vmatprep.subr.bf16.mxu0 0
    %10310 = vmatpush2.bf16.msra.mxu0 %v9619
    %10311 = vmatprep.subr.bf16.mxu0 0
    %10312 = vmatpush2.bf16.msra.mxu0 %v9618
    %10313 = vmatprep.subr.bf16.mxu0 0
    %10314 = vmatpush2.bf16.msra.mxu0 %v9617
    %10315 = vmatprep.subr.bf16.mxu0 0
    %10316 = vmatpush2.bf16.msra.mxu0 %v9616
    %10317 = vmatprep.subr.bf16.mxu0 0
    %10318 = vmatpush2.bf16.msra.mxu0 %v9615
    %10319 = vmatprep.mubr.bf16.mxu0 %v8340
    %10320 = vmatmul.mubr.bf16.gmra.mxu0 %v8338
    %v10321 = vpop.f32.mrf.mxu0
    %v10322 = vadd.f32 %v10282, %v10321
    %v10323 = vpop.f32.mrf.mxu0
    %v10324 = vpop.f32.mrf.mxu0
    %v10325 = vpop.f32.mrf.mxu0
    %10326 = vdwg.mxu0
    %10327 = vmatprep.subr.bf16.mxu0 0
    %10328 = vmatpush1.bf16.msra.mxu0 %v9630
    %10329 = vmatprep.subr.bf16.mxu0 0
    %10330 = vmatpush1.bf16.msra.mxu0 %v9629
    %10331 = vmatprep.subr.bf16.mxu0 0
    %10332 = vmatpush1.bf16.msra.mxu0 %v9628
    %10333 = vmatprep.subr.bf16.mxu0 0
    %10334 = vmatpush1.bf16.msra.mxu0 %v9627
    %10335 = vmatprep.subr.bf16.mxu0 0
    %10336 = vmatpush1.bf16.msra.mxu0 %v9626
    %10337 = vmatprep.subr.bf16.mxu0 0
    %10338 = vmatpush1.bf16.msra.mxu0 %v9625
    %10339 = vmatprep.subr.bf16.mxu0 0
    %10340 = vmatpush1.bf16.msra.mxu0 %v9624
    %10341 = vmatprep.subr.bf16.mxu0 0
    %10342 = vmatpush1.bf16.msra.mxu0 %v9623
    %10343 = vmatprep.subr.bf16.mxu0 0
    %10344 = vmatpush2.bf16.msra.mxu0 %v9638
    %10345 = vmatprep.subr.bf16.mxu0 0
    %10346 = vmatpush2.bf16.msra.mxu0 %v9637
    %10347 = vmatprep.subr.bf16.mxu0 0
    %10348 = vmatpush2.bf16.msra.mxu0 %v9636
    %10349 = vmatprep.subr.bf16.mxu0 0
    %10350 = vmatpush2.bf16.msra.mxu0 %v9635
    %10351 = vmatprep.subr.bf16.mxu0 0
    %10352 = vmatpush2.bf16.msra.mxu0 %v9634
    %10353 = vmatprep.subr.bf16.mxu0 0
    %10354 = vmatpush2.bf16.msra.mxu0 %v9633
    %10355 = vmatprep.subr.bf16.mxu0 0
    %10356 = vmatpush2.bf16.msra.mxu0 %v9632
    %10357 = vmatprep.subr.bf16.mxu0 0
    %10358 = vmatpush2.bf16.msra.mxu0 %v9631
    %10359 = vmatprep.mubr.bf16.mxu0 %v8378
    %10360 = vmatmul.mubr.bf16.gmra.mxu0 %v8364
    %v10361 = vpop.f32.mrf.mxu0
    %v10362 = vadd.f32 %v10322, %v10361
    %v10363 = vpop.f32.mrf.mxu0
    %v10364 = vpop.f32.mrf.mxu0
    %v10365 = vpop.f32.mrf.mxu0
    %10366 = vdwg.mxu0
    %10367 = vmatprep.subr.bf16.mxu0 0
    %10368 = vmatpush1.bf16.msra.mxu0 %v9646
    %10369 = vmatprep.subr.bf16.mxu0 0
    %10370 = vmatpush1.bf16.msra.mxu0 %v9645
    %10371 = vmatprep.subr.bf16.mxu0 0
    %10372 = vmatpush1.bf16.msra.mxu0 %v9644
    %10373 = vmatprep.subr.bf16.mxu0 0
    %10374 = vmatpush1.bf16.msra.mxu0 %v9643
    %10375 = vmatprep.subr.bf16.mxu0 0
    %10376 = vmatpush1.bf16.msra.mxu0 %v9642
    %10377 = vmatprep.subr.bf16.mxu0 0
    %10378 = vmatpush1.bf16.msra.mxu0 %v9641
    %10379 = vmatprep.subr.bf16.mxu0 0
    %10380 = vmatpush1.bf16.msra.mxu0 %v9640
    %10381 = vmatprep.subr.bf16.mxu0 0
    %10382 = vmatpush1.bf16.msra.mxu0 %v9639
    %10383 = vmatprep.subr.bf16.mxu0 0
    %10384 = vmatpush2.bf16.msra.mxu0 %v9654
    %10385 = vmatprep.subr.bf16.mxu0 0
    %10386 = vmatpush2.bf16.msra.mxu0 %v9653
    %10387 = vmatprep.subr.bf16.mxu0 0
    %10388 = vmatpush2.bf16.msra.mxu0 %v9652
    %10389 = vmatprep.subr.bf16.mxu0 0
    %10390 = vmatpush2.bf16.msra.mxu0 %v9651
    %10391 = vmatprep.subr.bf16.mxu0 0
    %10392 = vmatpush2.bf16.msra.mxu0 %v9650
    %10393 = vmatprep.subr.bf16.mxu0 0
    %10394 = vmatpush2.bf16.msra.mxu0 %v9649
    %10395 = vmatprep.subr.bf16.mxu0 0
    %10396 = vmatpush2.bf16.msra.mxu0 %v9648
    %10397 = vmatprep.subr.bf16.mxu0 0
    %10398 = vmatpush2.bf16.msra.mxu0 %v9647
    %10399 = vmatprep.mubr.bf16.mxu0 %v8388
    %10400 = vmatmul.mubr.bf16.gmra.mxu0 %v8386
    %v10401 = vpop.f32.mrf.mxu0
    %v10402 = vadd.f32 %v10362, %v10401
    %v10403 = vpop.f32.mrf.mxu0
    %v10404 = vpop.f32.mrf.mxu0
    %v10405 = vpop.f32.mrf.mxu0
    %10406 = vdwg.mxu0
    %10407 = vmatprep.subr.bf16.mxu0 0
    %10408 = vmatpush1.bf16.msra.mxu0 %v9662
    %10409 = vmatprep.subr.bf16.mxu0 0
    %10410 = vmatpush1.bf16.msra.mxu0 %v9661
    %10411 = vmatprep.subr.bf16.mxu0 0
    %10412 = vmatpush1.bf16.msra.mxu0 %v9660
    %10413 = vmatprep.subr.bf16.mxu0 0
    %10414 = vmatpush1.bf16.msra.mxu0 %v9659
    %10415 = vmatprep.subr.bf16.mxu0 0
    %10416 = vmatpush1.bf16.msra.mxu0 %v9658
    %10417 = vmatprep.subr.bf16.mxu0 0
    %10418 = vmatpush1.bf16.msra.mxu0 %v9657
    %10419 = vmatprep.subr.bf16.mxu0 0
    %10420 = vmatpush1.bf16.msra.mxu0 %v9656
    %10421 = vmatprep.subr.bf16.mxu0 0
    %10422 = vmatpush1.bf16.msra.mxu0 %v9655
    %10423 = vmatprep.subr.bf16.mxu0 0
    %10424 = vmatpush2.bf16.msra.mxu0 %v9670
    %10425 = vmatprep.subr.bf16.mxu0 0
    %10426 = vmatpush2.bf16.msra.mxu0 %v9669
    %10427 = vmatprep.subr.bf16.mxu0 0
    %10428 = vmatpush2.bf16.msra.mxu0 %v9668
    %10429 = vmatprep.subr.bf16.mxu0 0
    %10430 = vmatpush2.bf16.msra.mxu0 %v9667
    %10431 = vmatprep.subr.bf16.mxu0 0
    %10432 = vmatpush2.bf16.msra.mxu0 %v9666
    %10433 = vmatprep.subr.bf16.mxu0 0
    %10434 = vmatpush2.bf16.msra.mxu0 %v9665
    %10435 = vmatprep.subr.bf16.mxu0 0
    %10436 = vmatpush2.bf16.msra.mxu0 %v9664
    %10437 = vmatprep.subr.bf16.mxu0 0
    %10438 = vmatpush2.bf16.msra.mxu0 %v9663
    %10439 = vmatprep.mubr.bf16.mxu0 %v8385
    %10440 = vmatmul.mubr.bf16.gmra.mxu0 %v8371
    %v10441 = vpop.f32.mrf.mxu0
    %v10442 = vadd.f32 %v10402, %v10441
    %v10443 = vpop.f32.mrf.mxu0
    %v10444 = vpop.f32.mrf.mxu0
    %v10445 = vpop.f32.mrf.mxu0
    %10446 = vdwg.mxu0
    %10447 = vmatprep.subr.bf16.mxu0 0
    %10448 = vmatpush1.bf16.msra.mxu0 %v9678
    %10449 = vmatprep.subr.bf16.mxu0 0
    %10450 = vmatpush1.bf16.msra.mxu0 %v9677
    %10451 = vmatprep.subr.bf16.mxu0 0
    %10452 = vmatpush1.bf16.msra.mxu0 %v9676
    %10453 = vmatprep.subr.bf16.mxu0 0
    %10454 = vmatpush1.bf16.msra.mxu0 %v9675
    %10455 = vmatprep.subr.bf16.mxu0 0
    %10456 = vmatpush1.bf16.msra.mxu0 %v9674
    %10457 = vmatprep.subr.bf16.mxu0 0
    %10458 = vmatpush1.bf16.msra.mxu0 %v9673
    %10459 = vmatprep.subr.bf16.mxu0 0
    %10460 = vmatpush1.bf16.msra.mxu0 %v9672
    %10461 = vmatprep.subr.bf16.mxu0 0
    %10462 = vmatpush1.bf16.msra.mxu0 %v9671
    %10463 = vmatprep.subr.bf16.mxu0 0
    %10464 = vmatpush2.bf16.msra.mxu0 %v9686
    %10465 = vmatprep.subr.bf16.mxu0 0
    %10466 = vmatpush2.bf16.msra.mxu0 %v9685
    %10467 = vmatprep.subr.bf16.mxu0 0
    %10468 = vmatpush2.bf16.msra.mxu0 %v9684
    %10469 = vmatprep.subr.bf16.mxu0 0
    %10470 = vmatpush2.bf16.msra.mxu0 %v9683
    %10471 = vmatprep.subr.bf16.mxu0 0
    %10472 = vmatpush2.bf16.msra.mxu0 %v9682
    %10473 = vmatprep.subr.bf16.mxu0 0
    %10474 = vmatpush2.bf16.msra.mxu0 %v9681
    %10475 = vmatprep.subr.bf16.mxu0 0
    %10476 = vmatpush2.bf16.msra.mxu0 %v9680
    %10477 = vmatprep.subr.bf16.mxu0 0
    %10478 = vmatpush2.bf16.msra.mxu0 %v9679
    %10479 = vmatprep.mubr.bf16.mxu0 %v8389
    %10480 = vmatmul.mubr.bf16.gmra.mxu0 %v8387
    %v10481 = vpop.f32.mrf.mxu0
    %v10482 = vadd.f32 %v10442, %v10481
    %v10483 = vpop.f32.mrf.mxu0
    %v10484 = vpop.f32.mrf.mxu0
    %v10485 = vpop.f32.mrf.mxu0
    %10486 = vdwg.mxu0
    %10487 = vmatprep.subr.bf16.mxu0 0
    %10488 = vmatpush1.bf16.msra.mxu0 %v9694
    %10489 = vmatprep.subr.bf16.mxu0 0
    %10490 = vmatpush1.bf16.msra.mxu0 %v9693
    %10491 = vmatprep.subr.bf16.mxu0 0
    %10492 = vmatpush1.bf16.msra.mxu0 %v9692
    %10493 = vmatprep.subr.bf16.mxu0 0
    %10494 = vmatpush1.bf16.msra.mxu0 %v9691
    %10495 = vmatprep.subr.bf16.mxu0 0
    %10496 = vmatpush1.bf16.msra.mxu0 %v9690
    %10497 = vmatprep.subr.bf16.mxu0 0
    %10498 = vmatpush1.bf16.msra.mxu0 %v9689
    %10499 = vmatprep.subr.bf16.mxu0 0
    %10500 = vmatpush1.bf16.msra.mxu0 %v9688
    %10501 = vmatprep.subr.bf16.mxu0 0
    %10502 = vmatpush1.bf16.msra.mxu0 %v9687
    %10503 = vmatprep.subr.bf16.mxu0 0
    %10504 = vmatpush2.bf16.msra.mxu0 %v9702
    %10505 = vmatprep.subr.bf16.mxu0 0
    %10506 = vmatpush2.bf16.msra.mxu0 %v9701
    %10507 = vmatprep.subr.bf16.mxu0 0
    %10508 = vmatpush2.bf16.msra.mxu0 %v9700
    %10509 = vmatprep.subr.bf16.mxu0 0
    %10510 = vmatpush2.bf16.msra.mxu0 %v9699
    %10511 = vmatprep.subr.bf16.mxu0 0
    %10512 = vmatpush2.bf16.msra.mxu0 %v9698
    %10513 = vmatprep.subr.bf16.mxu0 0
    %10514 = vmatpush2.bf16.msra.mxu0 %v9697
    %10515 = vmatprep.subr.bf16.mxu0 0
    %10516 = vmatpush2.bf16.msra.mxu0 %v9696
    %10517 = vmatprep.subr.bf16.mxu0 0
    %10518 = vmatpush2.bf16.msra.mxu0 %v9695
    %10519 = vmatprep.mubr.bf16.mxu0 %v8427
    %10520 = vmatmul.mubr.bf16.gmra.mxu0 %v8413
    %v10521 = vpop.f32.mrf.mxu0
    %v10522 = vadd.f32 %v10482, %v10521
    %v10523 = vpop.f32.mrf.mxu0
    %v10524 = vpop.f32.mrf.mxu0
    %v10525 = vpop.f32.mrf.mxu0
    %10526 = vdwg.mxu0
    %10527 = vmatprep.subr.bf16.mxu0 0
    %10528 = vmatpush1.bf16.msra.mxu0 %v9710
    %10529 = vmatprep.subr.bf16.mxu0 0
    %10530 = vmatpush1.bf16.msra.mxu0 %v9709
    %10531 = vmatprep.subr.bf16.mxu0 0
    %10532 = vmatpush1.bf16.msra.mxu0 %v9708
    %10533 = vmatprep.subr.bf16.mxu0 0
    %10534 = vmatpush1.bf16.msra.mxu0 %v9707
    %10535 = vmatprep.subr.bf16.mxu0 0
    %10536 = vmatpush1.bf16.msra.mxu0 %v9706
    %10537 = vmatprep.subr.bf16.mxu0 0
    %10538 = vmatpush1.bf16.msra.mxu0 %v9705
    %10539 = vmatprep.subr.bf16.mxu0 0
    %10540 = vmatpush1.bf16.msra.mxu0 %v9704
    %10541 = vmatprep.subr.bf16.mxu0 0
    %10542 = vmatpush1.bf16.msra.mxu0 %v9703
    %10543 = vmatprep.subr.bf16.mxu0 0
    %10544 = vmatpush2.bf16.msra.mxu0 %v9718
    %10545 = vmatprep.subr.bf16.mxu0 0
    %10546 = vmatpush2.bf16.msra.mxu0 %v9717
    %10547 = vmatprep.subr.bf16.mxu0 0
    %10548 = vmatpush2.bf16.msra.mxu0 %v9716
    %10549 = vmatprep.subr.bf16.mxu0 0
    %10550 = vmatpush2.bf16.msra.mxu0 %v9715
    %10551 = vmatprep.subr.bf16.mxu0 0
    %10552 = vmatpush2.bf16.msra.mxu0 %v9714
    %10553 = vmatprep.subr.bf16.mxu0 0
    %10554 = vmatpush2.bf16.msra.mxu0 %v9713
    %10555 = vmatprep.subr.bf16.mxu0 0
    %10556 = vmatpush2.bf16.msra.mxu0 %v9712
    %10557 = vmatprep.subr.bf16.mxu0 0
    %10558 = vmatpush2.bf16.msra.mxu0 %v9711
    %10559 = vmatprep.mubr.bf16.mxu0 %v8437
    %10560 = vmatmul.mubr.bf16.gmra.mxu0 %v8435
    %v10561 = vpop.f32.mrf.mxu0
    %v10562 = vadd.f32 %v10522, %v10561
    %v10563 = vpop.f32.mrf.mxu0
    %v10564 = vpop.f32.mrf.mxu0
    %v10565 = vpop.f32.mrf.mxu0
    %10566 = vdwg.mxu0
    %10567 = vmatprep.subr.bf16.mxu0 0
    %10568 = vmatpush1.bf16.msra.mxu0 %v9726
    %10569 = vmatprep.subr.bf16.mxu0 0
    %10570 = vmatpush1.bf16.msra.mxu0 %v9725
    %10571 = vmatprep.subr.bf16.mxu0 0
    %10572 = vmatpush1.bf16.msra.mxu0 %v9724
    %10573 = vmatprep.subr.bf16.mxu0 0
    %10574 = vmatpush1.bf16.msra.mxu0 %v9723
    %10575 = vmatprep.subr.bf16.mxu0 0
    %10576 = vmatpush1.bf16.msra.mxu0 %v9722
    %10577 = vmatprep.subr.bf16.mxu0 0
    %10578 = vmatpush1.bf16.msra.mxu0 %v9721
    %10579 = vmatprep.subr.bf16.mxu0 0
    %10580 = vmatpush1.bf16.msra.mxu0 %v9720
    %10581 = vmatprep.subr.bf16.mxu0 0
    %10582 = vmatpush1.bf16.msra.mxu0 %v9719
    %10583 = vmatprep.subr.bf16.mxu0 0
    %10584 = vmatpush2.bf16.msra.mxu0 %v9734
    %10585 = vmatprep.subr.bf16.mxu0 0
    %10586 = vmatpush2.bf16.msra.mxu0 %v9733
    %10587 = vmatprep.subr.bf16.mxu0 0
    %10588 = vmatpush2.bf16.msra.mxu0 %v9732
    %10589 = vmatprep.subr.bf16.mxu0 0
    %10590 = vmatpush2.bf16.msra.mxu0 %v9731
    %10591 = vmatprep.subr.bf16.mxu0 0
    %10592 = vmatpush2.bf16.msra.mxu0 %v9730
    %10593 = vmatprep.subr.bf16.mxu0 0
    %10594 = vmatpush2.bf16.msra.mxu0 %v9729
    %10595 = vmatprep.subr.bf16.mxu0 0
    %10596 = vmatpush2.bf16.msra.mxu0 %v9728
    %10597 = vmatprep.subr.bf16.mxu0 0
    %10598 = vmatpush2.bf16.msra.mxu0 %v9727
    %10599 = vmatprep.mubr.bf16.mxu0 %v8434
    %10600 = vmatmul.mubr.bf16.gmra.mxu0 %v8420
    %v10601 = vpop.f32.mrf.mxu0
    %v10602 = vadd.f32 %v10562, %v10601
    %v10603 = vpop.f32.mrf.mxu0
    %v10604 = vpop.f32.mrf.mxu0
    %v10605 = vpop.f32.mrf.mxu0
    %10606 = vdwg.mxu0
    %10607 = vmatprep.subr.bf16.mxu0 0
    %10608 = vmatpush1.bf16.msra.mxu0 %v9742
    %10609 = vmatprep.subr.bf16.mxu0 0
    %10610 = vmatpush1.bf16.msra.mxu0 %v9741
    %10611 = vmatprep.subr.bf16.mxu0 0
    %10612 = vmatpush1.bf16.msra.mxu0 %v9740
    %10613 = vmatprep.subr.bf16.mxu0 0
    %10614 = vmatpush1.bf16.msra.mxu0 %v9739
    %10615 = vmatprep.subr.bf16.mxu0 0
    %10616 = vmatpush1.bf16.msra.mxu0 %v9738
    %10617 = vmatprep.subr.bf16.mxu0 0
    %10618 = vmatpush1.bf16.msra.mxu0 %v9737
    %10619 = vmatprep.subr.bf16.mxu0 0
    %10620 = vmatpush1.bf16.msra.mxu0 %v9736
    %10621 = vmatprep.subr.bf16.mxu0 0
    %10622 = vmatpush1.bf16.msra.mxu0 %v9735
    %10623 = vmatprep.subr.bf16.mxu0 0
    %10624 = vmatpush2.bf16.msra.mxu0 %v9750
    %10625 = vmatprep.subr.bf16.mxu0 0
    %10626 = vmatpush2.bf16.msra.mxu0 %v9749
    %10627 = vmatprep.subr.bf16.mxu0 0
    %10628 = vmatpush2.bf16.msra.mxu0 %v9748
    %10629 = vmatprep.subr.bf16.mxu0 0
    %10630 = vmatpush2.bf16.msra.mxu0 %v9747
    %10631 = vmatprep.subr.bf16.mxu0 0
    %10632 = vmatpush2.bf16.msra.mxu0 %v9746
    %10633 = vmatprep.subr.bf16.mxu0 0
    %10634 = vmatpush2.bf16.msra.mxu0 %v9745
    %10635 = vmatprep.subr.bf16.mxu0 0
    %10636 = vmatpush2.bf16.msra.mxu0 %v9744
    %10637 = vmatprep.subr.bf16.mxu0 0
    %10638 = vmatpush2.bf16.msra.mxu0 %v9743
    %10639 = vmatprep.mubr.bf16.mxu0 %v8438
    %10640 = vmatmul.mubr.bf16.gmra.mxu0 %v8436
    %v10641 = vpop.f32.mrf.mxu0
    %v10642 = vadd.f32 %v10602, %v10641
    %v10643 = vpop.f32.mrf.mxu0
    %v10644 = vpop.f32.mrf.mxu0
    %v10645 = vpop.f32.mrf.mxu0
    %10646 = vdwg.mxu0
    %v10647 = vmax.f32 %v10642, 0.0
    %v10648 = vpack.c.bf16 %v10647, %v10647
    %v10649 = vld [vmem:[%s7] sm:$0xf]
    %v10650 = vld [vmem:[%s7 + $0x4] sm:$0xf]
    %v10651 = vld [vmem:[%s7 + $0x8] sm:$0xf]
    %v10652 = vld [vmem:[%s7 + $0xc] sm:$0xf]
    %v10653 = vld [vmem:[%s7 + $0x10] sm:$0xf]
    %v10654 = vld [vmem:[%s7 + $0x14] sm:$0xf]
    %v10655 = vld [vmem:[%s7 + $0x18] sm:$0xf]
    %v10656 = vld [vmem:[%s7 + $0x1c] sm:$0xf]
    %v10657 = vld [vmem:[%s7 + $0x20] sm:$0xf]
    %v10658 = vld [vmem:[%s7 + $0x24] sm:$0xf]
    %v10659 = vld [vmem:[%s7 + $0x28] sm:$0xf]
    %v10660 = vld [vmem:[%s7 + $0x2c] sm:$0xf]
    %v10661 = vld [vmem:[%s7 + $0x30] sm:$0xf]
    %v10662 = vld [vmem:[%s7 + $0x34] sm:$0xf]
    %v10663 = vld [vmem:[%s7 + $0x38] sm:$0xf]
    %v10664 = vld [vmem:[%s7 + $0x3c] sm:$0xf]
    %v10665 = vld [vmem:[%s8] sm:$0x1]
    %v10667 = vlaneseq
    %v10668 = vshrl.u32 %v10667, 7
    %v10669 = vsub.s32 0, %v10668
    %v10670 = vrot.slane %v10665, %v10669
    %v10688 = vunpack.c.l.b16 %v10649
    %v10689 = vunpack.c.l.b16 %v10650
    %v10690 = vunpack.c.l.b16 %v10651
    %v10691 = vunpack.c.l.b16 %v10652
    %v10692 = vunpack.c.l.b16 %v10653
    %v10693 = vunpack.c.l.b16 %v10654
    %v10694 = vunpack.c.l.b16 %v10655
    %v10695 = vunpack.c.l.b16 %v10656
    %v10696 = vunpack.c.l.b16 %v10657
    %v10697 = vunpack.c.l.b16 %v10658
    %v10698 = vunpack.c.l.b16 %v10659
    %v10699 = vunpack.c.l.b16 %v10660
    %v10700 = vunpack.c.l.b16 %v10661
    %v10701 = vunpack.c.l.b16 %v10662
    %v10702 = vunpack.c.l.b16 %v10663
    %v10703 = vunpack.c.l.b16 %v10664
    %v10704 = vpack.c.b16 %v10689, %v10688
    %v10705 = vpack.c.b16 %v10691, %v10690
    %v10706 = vpack.c.b16 %v10693, %v10692
    %v10707 = vpack.c.b16 %v10695, %v10694
    %v10708 = vpack.c.b16 %v10697, %v10696
    %v10709 = vpack.c.b16 %v10699, %v10698
    %v10710 = vpack.c.b16 %v10701, %v10700
    %v10711 = vpack.c.b16 %v10703, %v10702
    %10720 = vmatprep.subr.bf16.mxu0 0
    %10721 = vmatpush1.bf16.msra.mxu0 %v10711
    %10722 = vmatprep.subr.bf16.mxu0 0
    %10723 = vmatpush1.bf16.msra.mxu0 %v10710
    %10724 = vmatprep.subr.bf16.mxu0 0
    %10725 = vmatpush1.bf16.msra.mxu0 %v10709
    %10726 = vmatprep.subr.bf16.mxu0 0
    %10727 = vmatpush1.bf16.msra.mxu0 %v10708
    %10728 = vmatprep.subr.bf16.mxu0 0
    %10729 = vmatpush1.bf16.msra.mxu0 %v10707
    %10730 = vmatprep.subr.bf16.mxu0 0
    %10731 = vmatpush1.bf16.msra.mxu0 %v10706
    %10732 = vmatprep.subr.bf16.mxu0 0
    %10733 = vmatpush1.bf16.msra.mxu0 %v10705
    %10734 = vmatprep.subr.bf16.mxu0 0
    %10735 = vmatpush1.bf16.msra.mxu0 %v10704
    %10736 = vmatprep.subr.bf16.mxu0 0
    %10737 = vmatpush2.bf16.msra.mxu0 0
    %10738 = vmatprep.subr.bf16.mxu0 0
    %10739 = vmatpush2.bf16.msra.mxu0 0
    %10740 = vmatprep.subr.bf16.mxu0 0
    %10741 = vmatpush2.bf16.msra.mxu0 0
    %10742 = vmatprep.subr.bf16.mxu0 0
    %10743 = vmatpush2.bf16.msra.mxu0 0
    %10744 = vmatprep.subr.bf16.mxu0 0
    %10745 = vmatpush2.bf16.msra.mxu0 0
    %10746 = vmatprep.subr.bf16.mxu0 0
    %10747 = vmatpush2.bf16.msra.mxu0 0
    %10748 = vmatprep.subr.bf16.mxu0 0
    %10749 = vmatpush2.bf16.msra.mxu0 0
    %10750 = vmatprep.subr.bf16.mxu0 0
    %10751 = vmatpush2.bf16.msra.mxu0 0
    %10752 = vmatprep.mubr.bf16.mxu0 0
    %10753 = vmatmul.mubr.bf16.gmra.mxu0 %v10648
    %v10754 = vpop.f32.mrf.mxu0
    %v10755 = vadd.f32 %v10670, %v10754
    %v10756 = vpop.f32.mrf.mxu0
    %v10757 = vpop.f32.mrf.mxu0
    %v10758 = vpop.f32.mrf.mxu0
    %10759 = vdwg.mxu0
    %v10760 = vmax.f32 %v10755, 0.0
    %v10761 = vpack.c.bf16 %v10760, %v10760
    %v10762 = vld [vmem:[%s9] sm:$0xf]
    %v10763 = vld [vmem:[%s9 + $0x4] sm:$0xf]
    %v10764 = vld [vmem:[%s9 + $0x8] sm:$0xf]
    %v10765 = vld [vmem:[%s9 + $0xc] sm:$0xf]
    %v10766 = vld [vmem:[%s9 + $0x10] sm:$0xf]
    %v10767 = vld [vmem:[%s9 + $0x14] sm:$0xf]
    %v10768 = vld [vmem:[%s9 + $0x18] sm:$0xf]
    %v10769 = vld [vmem:[%s9 + $0x1c] sm:$0xf]
    %v10770 = vld [vmem:[%s10] sm:$0x1]
    %v10772 = vlaneseq
    %v10773 = vshrl.u32 %v10772, 7
    %v10774 = vsub.s32 0, %v10773
    %v10775 = vrot.slane %v10770, %v10774
    %v10785 = vunpack.c.l.b16 %v10762
    %v10786 = vunpack.c.l.b16 %v10763
    %v10787 = vunpack.c.l.b16 %v10764
    %v10788 = vunpack.c.l.b16 %v10765
    %v10789 = vunpack.c.l.b16 %v10766
    %v10790 = vunpack.c.l.b16 %v10767
    %v10791 = vunpack.c.l.b16 %v10768
    %v10792 = vunpack.c.l.b16 %v10769
    %v10793 = vpack.c.b16 %v10786, %v10785
    %v10794 = vpack.c.b16 %v10788, %v10787
    %v10795 = vpack.c.b16 %v10790, %v10789
    %v10796 = vpack.c.b16 %v10792, %v10791
    %v10802 = vsel %vm1764, %v10761, 0
    %10804 = vmatprep.subr.bf16.mxu0 0
    %10805 = vmatpush1.bf16.msra.mxu0 0
    %10806 = vmatprep.subr.bf16.mxu0 0
    %10807 = vmatpush1.bf16.msra.mxu0 0
    %10808 = vmatprep.subr.bf16.mxu0 0
    %10809 = vmatpush1.bf16.msra.mxu0 0
    %10810 = vmatprep.subr.bf16.mxu0 0
    %10811 = vmatpush1.bf16.msra.mxu0 0
    %10812 = vmatprep.subr.bf16.mxu0 0
    %10813 = vmatpush1.bf16.msra.mxu0 %v10796
    %10814 = vmatprep.subr.bf16.mxu0 0
    %10815 = vmatpush1.bf16.msra.mxu0 %v10795
    %10816 = vmatprep.subr.bf16.mxu0 0
    %10817 = vmatpush1.bf16.msra.mxu0 %v10794
    %10818 = vmatprep.subr.bf16.mxu0 0
    %10819 = vmatpush1.bf16.msra.mxu0 %v10793
    %10820 = vmatprep.subr.bf16.mxu0 0
    %10821 = vmatpush2.bf16.msra.mxu0 0
    %10822 = vmatprep.subr.bf16.mxu0 0
    %10823 = vmatpush2.bf16.msra.mxu0 0
    %10824 = vmatprep.subr.bf16.mxu0 0
    %10825 = vmatpush2.bf16.msra.mxu0 0
    %10826 = vmatprep.subr.bf16.mxu0 0
    %10827 = vmatpush2.bf16.msra.mxu0 0
    %10828 = vmatprep.subr.bf16.mxu0 0
    %10829 = vmatpush2.bf16.msra.mxu0 0
    %10830 = vmatprep.subr.bf16.mxu0 0
    %10831 = vmatpush2.bf16.msra.mxu0 0
    %10832 = vmatprep.subr.bf16.mxu0 0
    %10833 = vmatpush2.bf16.msra.mxu0 0
    %10834 = vmatprep.subr.bf16.mxu0 0
    %10835 = vmatpush2.bf16.msra.mxu0 0
    %10836 = vmatprep.mubr.bf16.mxu0 0
    %10837 = vmatmul.mubr.bf16.gmra.mxu0 %v10802
    %v10838 = vpop.f32.mrf.mxu0
    %v10839 = vadd.f32 %v10775, %v10838
    %v10840 = vpop.f32.mrf.mxu0
    %v10841 = vpop.f32.mrf.mxu0
    %v10842 = vpop.f32.mrf.mxu0
    %10843 = vdwg.mxu0
    %vm10844 = vcmask 25600
    %10845 = vst.msk [vmem:[#allocation8] sm:$0x3] %vm10844, %v10839
    // Predicated region
    $region50: #{tpu_custom_call.1} parent=1 // pred_check
      _
    $region51: #{tpu_custom_call.1} parent=1 // pred_check_branch
      %10847 = sbr.rel (0) target = $region53
    $region52: #{tpu_custom_call.1} parent=1 // pred_region
      %s10849 = ssub.s32 32, 32
      %10850 = vsyncadd [#allocation7], %s10849
      %s10852 = sshll.u32 [#allocation8], 4
      %s10853 = int_to_ptr.vmem [resolvable:$true] %s10852
      %10855 = dma.vmem_to_hbm [thread:$0]  %s10853, 32, %s11, [#allocation7]
    $region53: #{tpu_custom_call.1} parent=1 // pred_fallthru
      _
    // Predicated region
    $region54: #{tpu_custom_call.1} parent=1 // pred_check
      _
    $region55: #{tpu_custom_call.1} parent=1 // pred_check_branch
      %10857 = sbr.rel (0) target = $region57
    $region56: #{tpu_custom_call.1} parent=1 // pred_region
      %10858 = dma.done [#allocation7], 32
    $region57: #{tpu_custom_call.1} parent=1 // pred_fallthru
      _
    %10859 = vsyncpa [#allocation6], 1
    %10860 = vsyncpa [#allocation7], 1

</llo_original>
